<compile_context>
chip_gen: v5e
topology: v5e:2x2
jax: 0.10.0
libtpu: 0.0.40
codegen_flags: <defaults>
</compile_context>

<pallas_src>
import jax
import jax.numpy as jnp
from jax import lax
from jax.experimental import pallas as pl
from jax.experimental.pallas import tpu as pltpu

EPS = 1e-5  # PyTorch BatchNorm2d default eps


# ----------------------------------------------------------------------------
# Fused kernel: conv1+BN1+ReLU+MaxPool2 -> conv2+BN2+ReLU -> global max ->
#               1x1-conv head -> sigmoid
# ----------------------------------------------------------------------------
def _fused_kernel(x_ref, w1_ref, g1_ref, be1_ref,
                  w2_ref, g2_ref, be2_ref, w3_ref, b3_ref,
                  out_ref,
                  xpad_ref, pp_ref):
    # x_ref:   (N, H, W, Cin) bf16   unpadded NHWC input
    # w1_ref:  (9*Cin, C1) bf16      im2col-reshaped conv1 weights
    # w2_ref:  (9*C1, C2)  bf16      im2col-reshaped conv2 weights
    # w3_ref:  (C2, n_cls) f32       1x1 conv head as a matrix
    # g*/be*/b3: (1, C) f32          BN gamma / BN beta / head bias
    # scratches: xpad (N,H+2,W+2,Cin) bf16, pp (N,H2+2,W2+2,C1) bf16
    N, H, W, Cin = x_ref.shape
    C1 = w1_ref.shape[-1]
    C2 = w2_ref.shape[-1]
    H2, W2 = H // 2, W // 2
    R1 = N * H * W
    R2 = N * H2 * W2

    # ---------------- stage 1: Conv2d(Cin->C1, 3x3, pad=1), bias-free ------
    # In-kernel padding: zero only the halo ring (interior overwritten next).
    zr = jnp.zeros((N, 1, W + 2, Cin), xpad_ref.dtype)
    zc = jnp.zeros((N, H + 2, 1, Cin), xpad_ref.dtype)
    xpad_ref[:, 0:1, :, :] = zr
    xpad_ref[:, H + 1:H + 2, :, :] = zr
    xpad_ref[:, :, 0:1, :] = zc
    xpad_ref[:, :, W + 1:W + 2, :] = zc
    xpad_ref[:, pl.ds(1, H), pl.ds(1, W), :] = x_ref[...]

    # im2col in registers: 9 shifted (R1, Cin) bf16 taps concatenated along
    # lanes and fed straight to one MXU dot (no VMEM tap stores).
    taps1 = [
        xpad_ref[:, pl.ds(dy, H), pl.ds(dx, W), :].reshape(R1, Cin)
        for dy in range(3) for dx in range(3)
    ]
    patches1 = jnp.concatenate(taps1, axis=-1)                   # (R1, 9*Cin) bf16
    acc1 = jnp.dot(patches1, w1_ref[...],
                   preferred_element_type=jnp.float32)           # (R1, C1) f32

    # BatchNorm2d (training mode, biased batch stats) - one-pass variance.
    # Conv bias is omitted on purpose: mean-subtraction cancels it exactly.
    inv_r1 = 1.0 / R1
    m1 = jnp.sum(acc1, axis=0, keepdims=True) * inv_r1
    v1 = jnp.maximum(
        jnp.sum(acc1 * acc1, axis=0, keepdims=True) * inv_r1 - m1 * m1, 0.0)
    y1 = (acc1 - m1) * lax.rsqrt(v1 + EPS) * g1_ref[...] + be1_ref[...]
    y1 = jnp.maximum(y1, 0.0)                                    # ReLU

    # MaxPool2d(2), fully in registers.  Rows of y1 are ordered (n, h, w):
    #  - W pairs are adjacent rows      -> sublane-pair max via reshape.
    #  - H pairs are rows W2 apart      -> same trick one level up.
    zw = y1.reshape(R1 // 2, 2, C1)
    yw = jnp.maximum(zw[:, 0, :], zw[:, 1, :])                   # (N*H*W2, C1)
    zh = yw.reshape(N * H2, 2, W2, C1)
    pooled = jnp.maximum(zh[:, 0], zh[:, 1])                     # (N*H2, W2, C1)

    # ---------------- stage 2: Conv2d(C1->C2, 3x3, pad=1), bias-free -------
    # Pooled activations never leave VMEM; zero only the halo ring.
    zr2 = jnp.zeros((N, 1, W2 + 2, C1), pp_ref.dtype)
    zc2 = jnp.zeros((N, H2 + 2, 1, C1), pp_ref.dtype)
    pp_ref[:, 0:1, :, :] = zr2
    pp_ref[:, H2 + 1:H2 + 2, :, :] = zr2
    pp_ref[:, :, 0:1, :] = zc2
    pp_ref[:, :, W2 + 1:W2 + 2, :] = zc2
    pp_ref[:, pl.ds(1, H2), pl.ds(1, W2), :] = (
        pooled.reshape(N, H2, W2, C1).astype(pp_ref.dtype))

    taps2 = [
        pp_ref[:, pl.ds(dy, H2), pl.ds(dx, W2), :].reshape(R2, C1)
        for dy in range(3) for dx in range(3)
    ]
    patches2 = jnp.concatenate(taps2, axis=-1)                   # (R2, 9*C1) bf16
    acc2 = jnp.dot(patches2, w2_ref[...],
                   preferred_element_type=jnp.float32)           # (R2, C2) f32

    inv_r2 = 1.0 / R2
    m2 = jnp.sum(acc2, axis=0, keepdims=True) * inv_r2
    v2 = jnp.maximum(
        jnp.sum(acc2 * acc2, axis=0, keepdims=True) * inv_r2 - m2 * m2, 0.0)
    y2 = (acc2 - m2) * lax.rsqrt(v2 + EPS) * g2_ref[...] + be2_ref[...]
    y2 = jnp.maximum(y2, 0.0)                                    # ReLU

    # AdaptiveMaxPool2d(1): global max over H2*W2 per (n, channel).
    gm = jnp.max(y2.reshape(N, H2 * W2, C2), axis=1)             # (N, C2) f32

    # 1x1 conv head + Flatten + Sigmoid (kept in f32).
    logits = jnp.dot(gm, w3_ref[...],
                     preferred_element_type=jnp.float32) + b3_ref[...]
    out_ref[...] = 1.0 / (1.0 + jnp.exp(-logits))                # (N, n_cls)


# ----------------------------------------------------------------------------
# Wrapper
# ----------------------------------------------------------------------------
def _vmem_spec():
    return pl.BlockSpec(memory_space=pltpu.MemorySpace.VMEM)


def cnn_model_2_forward(x_nchw, params):
    """x_nchw: (N, 3, H, W) float32, PyTorch layout. Returns (N, 5)."""
    N, Cin, H, W = x_nchw.shape
    assert H % 2 == 0 and W % 2 == 0, "MaxPool2d(2) path assumes even H, W"
    # bf16 activation path (conv math runs in bf16 on the MXU anyway).
    x = jnp.transpose(x_nchw, (0, 2, 3, 1)).astype(jnp.bfloat16)  # NHWC

    C1 = params["w1"].shape[-1]
    C2 = params["w2"].shape[-1]
    n_cls = params["w3"].shape[-1]
    H2, W2 = H // 2, W // 2

    # im2col weight layout (row index = dy*3*Cin + dx*Cin + cin), bf16 for MXU.
    w1r = params["w1"].reshape(9 * Cin, C1).astype(jnp.bfloat16)
    w2r = params["w2"].reshape(9 * C1, C2).astype(jnp.bfloat16)

    # VMEM budget in TILED allocation sizes (bf16 tiles are (16,128)), not raw
    # bytes: x ~128 KiB, xpad ~294 KiB, pp ~80 KiB, weights/BN params < 64 KiB,
    # plus compiler-managed spill for the in-register patch slabs (< 256 KiB).
    # Everything fits in well under 1 MiB, so one un-gridded call is fastest;
    # the 32 MiB limit is safe on every generation (v7x physical VMEM = 64 MiB).
    # TODO(synk): for large N/H/W add a row-block grid marked "parallel" (uses
    # both v7x TensorCores), switch BN to two-pass partial stats, and fold
    # channels into the lane dim of the padded scratches to stay lane-dense.
    return pl.pallas_call(
        _fused_kernel,
        out_shape=jax.ShapeDtypeStruct((N, n_cls), jnp.float32),
        in_specs=[_vmem_spec() for _ in range(9)],
        out_specs=_vmem_spec(),
        scratch_shapes=[
            pltpu.VMEM((N, H + 2, W + 2, Cin), jnp.bfloat16),     # padded input
            pltpu.VMEM((N, H2 + 2, W2 + 2, C1), jnp.bfloat16),    # padded pooled
        ],
        compiler_params=pltpu.CompilerParams(
            vmem_limit_bytes=32 * 1024 * 1024),
    )(x, w1r,
      params["g1"].reshape(1, -1), params["be1"].reshape(1, -1),
      w2r,
      params["g2"].reshape(1, -1), params["be2"].reshape(1, -1),
      params["w3"], params["b3"].reshape(1, -1))
    # Note: conv biases b1/b2 are intentionally NOT passed - training-mode
    # BatchNorm cancels them exactly, so the forward output is unchanged.


# ----------------------------------------------------------------------------
# Deterministic parameter init (shapes from CNN_model_2.__init__)
# ----------------------------------------------------------------------------
def init_params(key):
    k1, k2, k3, k4, k5, k6 = jax.random.split(key, 6)

    def u(k, shape, fan_in):
        bound = 1.0 / (fan_in ** 0.5)
        return jax.random.uniform(k, shape, jnp.float32, -bound, bound)

    return {
        "w1": u(k1, (3, 3, 3, 32), 3 * 3 * 3),    # Conv2d(3, 32, 3) HWIO
        "b1": u(k2, (32,), 3 * 3 * 3),            # cancelled by BN (kept for ref)
        "g1": jnp.ones((32,), jnp.float32),       # BatchNorm2d(32) default init
        "be1": jnp.zeros((32,), jnp.float32),
        "w2": u(k3, (3, 3, 32, 64), 3 * 3 * 32),  # Conv2d(32, 64, 3) HWIO
        "b2": u(k4, (64,), 3 * 3 * 32),           # cancelled by BN (kept for ref)
        "g2": jnp.ones((64,), jnp.float32),       # BatchNorm2d(64)
        "be2": jnp.zeros((64,), jnp.float32),
        "w3": u(k5, (64, 5), 64),                 # Conv2d(64, 5, 1) as matrix
        "b3": u(k6, (5,), 64),
    }


# ----------------------------------------------------------------------------
# Pure-JAX reference (includes the conv biases; checks the BN-cancellation)
# ----------------------------------------------------------------------------
def reference_forward(x_nchw, params):
    x = jnp.transpose(x_nchw, (0, 2, 3, 1)).astype(jnp.float32)

    def conv(x, w, b):
        y = lax.conv_general_dilated(x, w, (1, 1), "SAME",
                                     dimension_numbers=("NHWC", "HWIO", "NHWC"))
        return y + b

    def bn(y, g, be):
        mean = jnp.mean(y, axis=(0, 1, 2), keepdims=True)
        var = jnp.mean(jnp.square(y - mean), axis=(0, 1, 2), keepdims=True)
        return (y - mean) * lax.rsqrt(var + EPS) * g + be

    y = jnp.maximum(bn(conv(x, params["w1"], params["b1"]),
                       params["g1"], params["be1"]), 0.0)
    y = lax.reduce_window(y, -jnp.inf, lax.max,
                          (1, 2, 2, 1), (1, 2, 2, 1), "VALID")    # MaxPool2d(2)
    y = jnp.maximum(bn(conv(y, params["w2"], params["b2"]),
                       params["g2"], params["be2"]), 0.0)
    gm = jnp.max(y, axis=(1, 2))                                  # AdaptiveMaxPool2d(1)
    logits = gm @ params["w3"] + params["b3"]                     # 1x1 conv + Flatten
    return jax.nn.sigmoid(logits)


if __name__ == "__main__":
    # TODO(synk): training-mode BatchNorm also updates running stats as a side
    # effect; that has no impact on the forward output and is not modeled.
    key = jax.random.PRNGKey(0)
    kx, kp = jax.random.split(key)
    x = jax.random.normal(kx, (2, 3, 16, 16), jnp.float32)   # N=2, C=3, 16x16
    params = init_params(kp)

    fwd = jax.jit(cnn_model_2_forward)
    out = jax.block_until_ready(fwd(x, params))

    assert out.shape == (2, 5), out.shape
    assert bool(jnp.all(jnp.isfinite(out)))
    ref = reference_forward(x, params)
    assert bool(jnp.allclose(out, ref, atol=2e-2, rtol=2e-2)), (out, ref)
    print("KERNEL_OK")
</pallas_src>

<mosaic_0001>
module attributes {stable_mosaic.version = 11 : i64} {
  func.func @_fused_kernel(%arg0: memref<2x16x16x3xbf16, #tpu.memory_space<vmem>>, %arg1: memref<27x32xbf16, #tpu.memory_space<vmem>>, %arg2: memref<1x32xf32, #tpu.memory_space<vmem>>, %arg3: memref<1x32xf32, #tpu.memory_space<vmem>>, %arg4: memref<288x64xbf16, #tpu.memory_space<vmem>>, %arg5: memref<1x64xf32, #tpu.memory_space<vmem>>, %arg6: memref<1x64xf32, #tpu.memory_space<vmem>>, %arg7: memref<64x5xf32, #tpu.memory_space<vmem>>, %arg8: memref<1x5xf32, #tpu.memory_space<vmem>>, %arg9: memref<2x5xf32, #tpu.memory_space<vmem>>, %arg10: memref<2x18x18x3xbf16, #tpu.memory_space<vmem>>, %arg11: memref<2x10x10x32xbf16, #tpu.memory_space<vmem>>) attributes {dimension_semantics = [], scalar_prefetch = 0 : i64, scratch_operands = 2 : i64, tpu.core_type = #tpu.core_type<tc>} {
    %cst = arith.constant 0.000000e+00 : bf16
    %0 = vector.broadcast %cst : bf16 to vector<2x1x18x3xbf16>
    %cst_0 = arith.constant 0.000000e+00 : bf16
    %1 = vector.broadcast %cst_0 : bf16 to vector<2x18x1x3xbf16>
    %c0 = arith.constant 0 : index
    %c0_1 = arith.constant 0 : index
    %c0_2 = arith.constant 0 : index
    %c0_3 = arith.constant 0 : index
    %2 = vector.load %arg10[%c0, %c0_1, %c0_2, %c0_3] : memref<2x18x18x3xbf16, #tpu.memory_space<vmem>>, vector<2x1x18x3xbf16>
    tpu.vector_store %arg10[%c0, %c0_1, %c0_2, %c0_3], %0 {strides = array<i32>} : memref<2x18x18x3xbf16, #tpu.memory_space<vmem>>, vector<2x1x18x3xbf16>,
    %c0_4 = arith.constant 0 : index
    %c17 = arith.constant 17 : index
    %c0_5 = arith.constant 0 : index
    %c0_6 = arith.constant 0 : index
    %3 = vector.load %arg10[%c0_4, %c17, %c0_5, %c0_6] : memref<2x18x18x3xbf16, #tpu.memory_space<vmem>>, vector<2x1x18x3xbf16>
    tpu.vector_store %arg10[%c0_4, %c17, %c0_5, %c0_6], %0 {strides = array<i32>} : memref<2x18x18x3xbf16, #tpu.memory_space<vmem>>, vector<2x1x18x3xbf16>,
    %c0_7 = arith.constant 0 : index
    %c0_8 = arith.constant 0 : index
    %c0_9 = arith.constant 0 : index
    %c0_10 = arith.constant 0 : index
    %4 = vector.load %arg10[%c0_7, %c0_8, %c0_9, %c0_10] : memref<2x18x18x3xbf16, #tpu.memory_space<vmem>>, vector<2x18x1x3xbf16>
    tpu.vector_store %arg10[%c0_7, %c0_8, %c0_9, %c0_10], %1 {strides = array<i32>} : memref<2x18x18x3xbf16, #tpu.memory_space<vmem>>, vector<2x18x1x3xbf16>,
    %c0_11 = arith.constant 0 : index
    %c0_12 = arith.constant 0 : index
    %c17_13 = arith.constant 17 : index
    %c0_14 = arith.constant 0 : index
    %5 = vector.load %arg10[%c0_11, %c0_12, %c17_13, %c0_14] : memref<2x18x18x3xbf16, #tpu.memory_space<vmem>>, vector<2x18x1x3xbf16>
    tpu.vector_store %arg10[%c0_11, %c0_12, %c17_13, %c0_14], %1 {strides = array<i32>} : memref<2x18x18x3xbf16, #tpu.memory_space<vmem>>, vector<2x18x1x3xbf16>,
    %c0_15 = arith.constant 0 : index
    %c0_16 = arith.constant 0 : index
    %c0_17 = arith.constant 0 : index
    %c0_18 = arith.constant 0 : index
    %6 = vector.load %arg0[%c0_15, %c0_16, %c0_17, %c0_18] : memref<2x16x16x3xbf16, #tpu.memory_space<vmem>>, vector<2x16x16x3xbf16>
    %c0_19 = arith.constant 0 : index
    %c1 = arith.constant 1 : index
    %c1_20 = arith.constant 1 : index
    %c0_21 = arith.constant 0 : index
    %7 = vector.load %arg10[%c0_19, %c1, %c1_20, %c0_21] : memref<2x18x18x3xbf16, #tpu.memory_space<vmem>>, vector<2x16x16x3xbf16>
    tpu.vector_store %arg10[%c0_19, %c1, %c1_20, %c0_21], %6 {strides = array<i32>} : memref<2x18x18x3xbf16, #tpu.memory_space<vmem>>, vector<2x16x16x3xbf16>,
    %c0_22 = arith.constant 0 : index
    %c0_23 = arith.constant 0 : index
    %c0_24 = arith.constant 0 : index
    %c0_25 = arith.constant 0 : index
    %8 = vector.load %arg10[%c0_22, %c0_23, %c0_24, %c0_25] : memref<2x18x18x3xbf16, #tpu.memory_space<vmem>>, vector<2x16x16x3xbf16>
    %9 = vector.shape_cast %8 : vector<2x16x16x3xbf16> to vector<512x3xbf16>
    %c0_26 = arith.constant 0 : index
    %c0_27 = arith.constant 0 : index
    %c1_28 = arith.constant 1 : index
    %c0_29 = arith.constant 0 : index
    %10 = vector.load %arg10[%c0_26, %c0_27, %c1_28, %c0_29] : memref<2x18x18x3xbf16, #tpu.memory_space<vmem>>, vector<2x16x16x3xbf16>
    %11 = vector.shape_cast %10 : vector<2x16x16x3xbf16> to vector<512x3xbf16>
    %c0_30 = arith.constant 0 : index
    %c0_31 = arith.constant 0 : index
    %c2 = arith.constant 2 : index
    %c0_32 = arith.constant 0 : index
    %12 = vector.load %arg10[%c0_30, %c0_31, %c2, %c0_32] : memref<2x18x18x3xbf16, #tpu.memory_space<vmem>>, vector<2x16x16x3xbf16>
    %13 = vector.shape_cast %12 : vector<2x16x16x3xbf16> to vector<512x3xbf16>
    %c0_33 = arith.constant 0 : index
    %c1_34 = arith.constant 1 : index
    %c0_35 = arith.constant 0 : index
    %c0_36 = arith.constant 0 : index
    %14 = vector.load %arg10[%c0_33, %c1_34, %c0_35, %c0_36] : memref<2x18x18x3xbf16, #tpu.memory_space<vmem>>, vector<2x16x16x3xbf16>
    %15 = vector.shape_cast %14 : vector<2x16x16x3xbf16> to vector<512x3xbf16>
    %c0_37 = arith.constant 0 : index
    %c1_38 = arith.constant 1 : index
    %c1_39 = arith.constant 1 : index
    %c0_40 = arith.constant 0 : index
    %16 = vector.load %arg10[%c0_37, %c1_38, %c1_39, %c0_40] : memref<2x18x18x3xbf16, #tpu.memory_space<vmem>>, vector<2x16x16x3xbf16>
    %17 = vector.shape_cast %16 : vector<2x16x16x3xbf16> to vector<512x3xbf16>
    %c0_41 = arith.constant 0 : index
    %c1_42 = arith.constant 1 : index
    %c2_43 = arith.constant 2 : index
    %c0_44 = arith.constant 0 : index
    %18 = vector.load %arg10[%c0_41, %c1_42, %c2_43, %c0_44] : memref<2x18x18x3xbf16, #tpu.memory_space<vmem>>, vector<2x16x16x3xbf16>
    %19 = vector.shape_cast %18 : vector<2x16x16x3xbf16> to vector<512x3xbf16>
    %c0_45 = arith.constant 0 : index
    %c2_46 = arith.constant 2 : index
    %c0_47 = arith.constant 0 : index
    %c0_48 = arith.constant 0 : index
    %20 = vector.load %arg10[%c0_45, %c2_46, %c0_47, %c0_48] : memref<2x18x18x3xbf16, #tpu.memory_space<vmem>>, vector<2x16x16x3xbf16>
    %21 = vector.shape_cast %20 : vector<2x16x16x3xbf16> to vector<512x3xbf16>
    %c0_49 = arith.constant 0 : index
    %c2_50 = arith.constant 2 : index
    %c1_51 = arith.constant 1 : index
    %c0_52 = arith.constant 0 : index
    %22 = vector.load %arg10[%c0_49, %c2_50, %c1_51, %c0_52] : memref<2x18x18x3xbf16, #tpu.memory_space<vmem>>, vector<2x16x16x3xbf16>
    %23 = vector.shape_cast %22 : vector<2x16x16x3xbf16> to vector<512x3xbf16>
    %c0_53 = arith.constant 0 : index
    %c2_54 = arith.constant 2 : index
    %c2_55 = arith.constant 2 : index
    %c0_56 = arith.constant 0 : index
    %24 = vector.load %arg10[%c0_53, %c2_54, %c2_55, %c0_56] : memref<2x18x18x3xbf16, #tpu.memory_space<vmem>>, vector<2x16x16x3xbf16>
    %25 = vector.shape_cast %24 : vector<2x16x16x3xbf16> to vector<512x3xbf16>
    %26 = tpu.concatenate %9, %11, %13, %15, %17, %19, %21, %23, %25 in 1 : vector<512x3xbf16>, vector<512x3xbf16>, vector<512x3xbf16>, vector<512x3xbf16>, vector<512x3xbf16>, vector<512x3xbf16>, vector<512x3xbf16>, vector<512x3xbf16>, vector<512x3xbf16> -> vector<512x27xbf16>
    %c0_57 = arith.constant 0 : index
    %c0_58 = arith.constant 0 : index
    %27 = vector.load %arg1[%c0_57, %c0_58] : memref<27x32xbf16, #tpu.memory_space<vmem>>, vector<27x32xbf16>
    %cst_59 = arith.constant dense<0.000000e+00> : vector<512x32xf32>
    %28 = tpu.matmul %26, %27, %cst_59 {dimension_numbers = #tpu.dot_dimension_numbers<[1], [0], [0], [1], [0, 0, 1, 1], [], []>} : vector<512x27xbf16>, vector<27x32xbf16>, vector<512x32xf32> -> vector<512x32xf32>
    %cst_60 = arith.constant dense<0.000000e+00> : vector<32xf32>
    %29 = vector.multi_reduction <add>, %28, %cst_60 [0] : vector<512x32xf32> to vector<32xf32>
    %30 = vector.shape_cast %29 : vector<32xf32> to vector<1x32xf32>
    %cst_61 = arith.constant 0.001953125 : f32
    %31 = vector.broadcast %cst_61 : f32 to vector<1x32xf32>
    %32 = arith.mulf %30, %31 : vector<1x32xf32>
    %33 = arith.mulf %28, %28 : vector<512x32xf32>
    %cst_62 = arith.constant dense<0.000000e+00> : vector<32xf32>
    %34 = vector.multi_reduction <add>, %33, %cst_62 [0] : vector<512x32xf32> to vector<32xf32>
    %35 = vector.shape_cast %34 : vector<32xf32> to vector<1x32xf32>
    %cst_63 = arith.constant 0.001953125 : f32
    %36 = vector.broadcast %cst_63 : f32 to vector<1x32xf32>
    %37 = arith.mulf %35, %36 : vector<1x32xf32>
    %38 = arith.mulf %32, %32 : vector<1x32xf32>
    %39 = arith.subf %37, %38 : vector<1x32xf32>
    %cst_64 = arith.constant 0.000000e+00 : f32
    %40 = vector.broadcast %cst_64 : f32 to vector<1x32xf32>
    %41 = arith.maximumf %39, %40 : vector<1x32xf32>
    %42 = vector.broadcast %32 : vector<1x32xf32> to vector<512x32xf32>
    %43 = arith.subf %28, %42 : vector<512x32xf32>
    %cst_65 = arith.constant 9.99999974E-6 : f32
    %44 = vector.broadcast %cst_65 : f32 to vector<1x32xf32>
    %45 = arith.addf %41, %44 : vector<1x32xf32>
    %46 = math.rsqrt %45 : vector<1x32xf32>
    %47 = vector.broadcast %46 : vector<1x32xf32> to vector<512x32xf32>
    %48 = arith.mulf %43, %47 : vector<512x32xf32>
    %c0_66 = arith.constant 0 : index
    %c0_67 = arith.constant 0 : index
    %49 = vector.load %arg2[%c0_66, %c0_67] : memref<1x32xf32, #tpu.memory_space<vmem>>, vector<1x32xf32>
    %50 = vector.broadcast %49 : vector<1x32xf32> to vector<512x32xf32>
    %51 = arith.mulf %48, %50 : vector<512x32xf32>
    %c0_68 = arith.constant 0 : index
    %c0_69 = arith.constant 0 : index
    %52 = vector.load %arg3[%c0_68, %c0_69] : memref<1x32xf32, #tpu.memory_space<vmem>>, vector<1x32xf32>
    %53 = vector.broadcast %52 : vector<1x32xf32> to vector<512x32xf32>
    %54 = arith.addf %51, %53 : vector<512x32xf32>
    %cst_70 = arith.constant 0.000000e+00 : f32
    %55 = vector.broadcast %cst_70 : f32 to vector<512x32xf32>
    %56 = arith.maximumf %54, %55 : vector<512x32xf32>
    %57 = vector.shape_cast %56 : vector<512x32xf32> to vector<256x2x32xf32>
    %58 = vector.extract_strided_slice %57 {offsets = [0, 0, 0], sizes = [256, 1, 32], strides = [1, 1, 1]} : vector<256x2x32xf32> to vector<256x1x32xf32>
    %59 = vector.shape_cast %58 : vector<256x1x32xf32> to vector<256x32xf32>
    %60 = vector.extract_strided_slice %57 {offsets = [0, 1, 0], sizes = [256, 1, 32], strides = [1, 1, 1]} : vector<256x2x32xf32> to vector<256x1x32xf32>
    %61 = vector.shape_cast %60 : vector<256x1x32xf32> to vector<256x32xf32>
    %62 = arith.maximumf %59, %61 : vector<256x32xf32>
    %63 = vector.shape_cast %62 : vector<256x32xf32> to vector<16x2x8x32xf32>
    %64 = vector.extract_strided_slice %63 {offsets = [0, 0, 0, 0], sizes = [16, 1, 8, 32], strides = [1, 1, 1, 1]} : vector<16x2x8x32xf32> to vector<16x1x8x32xf32>
    %65 = vector.shape_cast %64 : vector<16x1x8x32xf32> to vector<16x8x32xf32>
    %66 = vector.extract_strided_slice %63 {offsets = [0, 1, 0, 0], sizes = [16, 1, 8, 32], strides = [1, 1, 1, 1]} : vector<16x2x8x32xf32> to vector<16x1x8x32xf32>
    %67 = vector.shape_cast %66 : vector<16x1x8x32xf32> to vector<16x8x32xf32>
    %68 = arith.maximumf %65, %67 : vector<16x8x32xf32>
    %cst_71 = arith.constant 0.000000e+00 : bf16
    %69 = vector.broadcast %cst_71 : bf16 to vector<2x1x10x32xbf16>
    %cst_72 = arith.constant 0.000000e+00 : bf16
    %70 = vector.broadcast %cst_72 : bf16 to vector<2x10x1x32xbf16>
    %c0_73 = arith.constant 0 : index
    %c0_74 = arith.constant 0 : index
    %c0_75 = arith.constant 0 : index
    %c0_76 = arith.constant 0 : index
    %71 = vector.load %arg11[%c0_73, %c0_74, %c0_75, %c0_76] : memref<2x10x10x32xbf16, #tpu.memory_space<vmem>>, vector<2x1x10x32xbf16>
    tpu.vector_store %arg11[%c0_73, %c0_74, %c0_75, %c0_76], %69 {strides = array<i32>} : memref<2x10x10x32xbf16, #tpu.memory_space<vmem>>, vector<2x1x10x32xbf16>,
    %c0_77 = arith.constant 0 : index
    %c9 = arith.constant 9 : index
    %c0_78 = arith.constant 0 : index
    %c0_79 = arith.constant 0 : index
    %72 = vector.load %arg11[%c0_77, %c9, %c0_78, %c0_79] : memref<2x10x10x32xbf16, #tpu.memory_space<vmem>>, vector<2x1x10x32xbf16>
    tpu.vector_store %arg11[%c0_77, %c9, %c0_78, %c0_79], %69 {strides = array<i32>} : memref<2x10x10x32xbf16, #tpu.memory_space<vmem>>, vector<2x1x10x32xbf16>,
    %c0_80 = arith.constant 0 : index
    %c0_81 = arith.constant 0 : index
    %c0_82 = arith.constant 0 : index
    %c0_83 = arith.constant 0 : index
    %73 = vector.load %arg11[%c0_80, %c0_81, %c0_82, %c0_83] : memref<2x10x10x32xbf16, #tpu.memory_space<vmem>>, vector<2x10x1x32xbf16>
    tpu.vector_store %arg11[%c0_80, %c0_81, %c0_82, %c0_83], %70 {strides = array<i32>} : memref<2x10x10x32xbf16, #tpu.memory_space<vmem>>, vector<2x10x1x32xbf16>,
    %c0_84 = arith.constant 0 : index
    %c0_85 = arith.constant 0 : index
    %c9_86 = arith.constant 9 : index
    %c0_87 = arith.constant 0 : index
    %74 = vector.load %arg11[%c0_84, %c0_85, %c9_86, %c0_87] : memref<2x10x10x32xbf16, #tpu.memory_space<vmem>>, vector<2x10x1x32xbf16>
    tpu.vector_store %arg11[%c0_84, %c0_85, %c9_86, %c0_87], %70 {strides = array<i32>} : memref<2x10x10x32xbf16, #tpu.memory_space<vmem>>, vector<2x10x1x32xbf16>,
    %75 = vector.shape_cast %68 : vector<16x8x32xf32> to vector<2x8x8x32xf32>
    %76 = arith.truncf %75 : vector<2x8x8x32xf32> to vector<2x8x8x32xbf16>
    %c0_88 = arith.constant 0 : index
    %c1_89 = arith.constant 1 : index
    %c1_90 = arith.constant 1 : index
    %c0_91 = arith.constant 0 : index
    %77 = vector.load %arg11[%c0_88, %c1_89, %c1_90, %c0_91] : memref<2x10x10x32xbf16, #tpu.memory_space<vmem>>, vector<2x8x8x32xbf16>
    tpu.vector_store %arg11[%c0_88, %c1_89, %c1_90, %c0_91], %76 {strides = array<i32>} : memref<2x10x10x32xbf16, #tpu.memory_space<vmem>>, vector<2x8x8x32xbf16>,
    %c0_92 = arith.constant 0 : index
    %c0_93 = arith.constant 0 : index
    %c0_94 = arith.constant 0 : index
    %c0_95 = arith.constant 0 : index
    %78 = vector.load %arg11[%c0_92, %c0_93, %c0_94, %c0_95] : memref<2x10x10x32xbf16, #tpu.memory_space<vmem>>, vector<2x8x8x32xbf16>
    %79 = vector.shape_cast %78 : vector<2x8x8x32xbf16> to vector<128x32xbf16>
    %c0_96 = arith.constant 0 : index
    %c0_97 = arith.constant 0 : index
    %c1_98 = arith.constant 1 : index
    %c0_99 = arith.constant 0 : index
    %80 = vector.load %arg11[%c0_96, %c0_97, %c1_98, %c0_99] : memref<2x10x10x32xbf16, #tpu.memory_space<vmem>>, vector<2x8x8x32xbf16>
    %81 = vector.shape_cast %80 : vector<2x8x8x32xbf16> to vector<128x32xbf16>
    %c0_100 = arith.constant 0 : index
    %c0_101 = arith.constant 0 : index
    %c2_102 = arith.constant 2 : index
    %c0_103 = arith.constant 0 : index
    %82 = vector.load %arg11[%c0_100, %c0_101, %c2_102, %c0_103] : memref<2x10x10x32xbf16, #tpu.memory_space<vmem>>, vector<2x8x8x32xbf16>
    %83 = vector.shape_cast %82 : vector<2x8x8x32xbf16> to vector<128x32xbf16>
    %c0_104 = arith.constant 0 : index
    %c1_105 = arith.constant 1 : index
    %c0_106 = arith.constant 0 : index
    %c0_107 = arith.constant 0 : index
    %84 = vector.load %arg11[%c0_104, %c1_105, %c0_106, %c0_107] : memref<2x10x10x32xbf16, #tpu.memory_space<vmem>>, vector<2x8x8x32xbf16>
    %85 = vector.shape_cast %84 : vector<2x8x8x32xbf16> to vector<128x32xbf16>
    %c0_108 = arith.constant 0 : index
    %c1_109 = arith.constant 1 : index
    %c1_110 = arith.constant 1 : index
    %c0_111 = arith.constant 0 : index
    %86 = vector.load %arg11[%c0_108, %c1_109, %c1_110, %c0_111] : memref<2x10x10x32xbf16, #tpu.memory_space<vmem>>, vector<2x8x8x32xbf16>
    %87 = vector.shape_cast %86 : vector<2x8x8x32xbf16> to vector<128x32xbf16>
    %c0_112 = arith.constant 0 : index
    %c1_113 = arith.constant 1 : index
    %c2_114 = arith.constant 2 : index
    %c0_115 = arith.constant 0 : index
    %88 = vector.load %arg11[%c0_112, %c1_113, %c2_114, %c0_115] : memref<2x10x10x32xbf16, #tpu.memory_space<vmem>>, vector<2x8x8x32xbf16>
    %89 = vector.shape_cast %88 : vector<2x8x8x32xbf16> to vector<128x32xbf16>
    %c0_116 = arith.constant 0 : index
    %c2_117 = arith.constant 2 : index
    %c0_118 = arith.constant 0 : index
    %c0_119 = arith.constant 0 : index
    %90 = vector.load %arg11[%c0_116, %c2_117, %c0_118, %c0_119] : memref<2x10x10x32xbf16, #tpu.memory_space<vmem>>, vector<2x8x8x32xbf16>
    %91 = vector.shape_cast %90 : vector<2x8x8x32xbf16> to vector<128x32xbf16>
    %c0_120 = arith.constant 0 : index
    %c2_121 = arith.constant 2 : index
    %c1_122 = arith.constant 1 : index
    %c0_123 = arith.constant 0 : index
    %92 = vector.load %arg11[%c0_120, %c2_121, %c1_122, %c0_123] : memref<2x10x10x32xbf16, #tpu.memory_space<vmem>>, vector<2x8x8x32xbf16>
    %93 = vector.shape_cast %92 : vector<2x8x8x32xbf16> to vector<128x32xbf16>
    %c0_124 = arith.constant 0 : index
    %c2_125 = arith.constant 2 : index
    %c2_126 = arith.constant 2 : index
    %c0_127 = arith.constant 0 : index
    %94 = vector.load %arg11[%c0_124, %c2_125, %c2_126, %c0_127] : memref<2x10x10x32xbf16, #tpu.memory_space<vmem>>, vector<2x8x8x32xbf16>
    %95 = vector.shape_cast %94 : vector<2x8x8x32xbf16> to vector<128x32xbf16>
    %96 = tpu.concatenate %79, %81, %83, %85, %87, %89, %91, %93, %95 in 1 : vector<128x32xbf16>, vector<128x32xbf16>, vector<128x32xbf16>, vector<128x32xbf16>, vector<128x32xbf16>, vector<128x32xbf16>, vector<128x32xbf16>, vector<128x32xbf16>, vector<128x32xbf16> -> vector<128x288xbf16>
    %c0_128 = arith.constant 0 : index
    %c0_129 = arith.constant 0 : index
    %97 = vector.load %arg4[%c0_128, %c0_129] : memref<288x64xbf16, #tpu.memory_space<vmem>>, vector<288x64xbf16>
    %cst_130 = arith.constant dense<0.000000e+00> : vector<128x64xf32>
    %98 = tpu.matmul %96, %97, %cst_130 {dimension_numbers = #tpu.dot_dimension_numbers<[1], [0], [0], [1], [0, 0, 1, 1], [], []>} : vector<128x288xbf16>, vector<288x64xbf16>, vector<128x64xf32> -> vector<128x64xf32>
    %cst_131 = arith.constant dense<0.000000e+00> : vector<64xf32>
    %99 = vector.multi_reduction <add>, %98, %cst_131 [0] : vector<128x64xf32> to vector<64xf32>
    %100 = vector.shape_cast %99 : vector<64xf32> to vector<1x64xf32>
    %cst_132 = arith.constant 7.812500e-03 : f32
    %101 = vector.broadcast %cst_132 : f32 to vector<1x64xf32>
    %102 = arith.mulf %100, %101 : vector<1x64xf32>
    %103 = arith.mulf %98, %98 : vector<128x64xf32>
    %cst_133 = arith.constant dense<0.000000e+00> : vector<64xf32>
    %104 = vector.multi_reduction <add>, %103, %cst_133 [0] : vector<128x64xf32> to vector<64xf32>
    %105 = vector.shape_cast %104 : vector<64xf32> to vector<1x64xf32>
    %cst_134 = arith.constant 7.812500e-03 : f32
    %106 = vector.broadcast %cst_134 : f32 to vector<1x64xf32>
    %107 = arith.mulf %105, %106 : vector<1x64xf32>
    %108 = arith.mulf %102, %102 : vector<1x64xf32>
    %109 = arith.subf %107, %108 : vector<1x64xf32>
    %cst_135 = arith.constant 0.000000e+00 : f32
    %110 = vector.broadcast %cst_135 : f32 to vector<1x64xf32>
    %111 = arith.maximumf %109, %110 : vector<1x64xf32>
    %112 = vector.broadcast %102 : vector<1x64xf32> to vector<128x64xf32>
    %113 = arith.subf %98, %112 : vector<128x64xf32>
    %cst_136 = arith.constant 9.99999974E-6 : f32
    %114 = vector.broadcast %cst_136 : f32 to vector<1x64xf32>
    %115 = arith.addf %111, %114 : vector<1x64xf32>
    %116 = math.rsqrt %115 : vector<1x64xf32>
    %117 = vector.broadcast %116 : vector<1x64xf32> to vector<128x64xf32>
    %118 = arith.mulf %113, %117 : vector<128x64xf32>
    %c0_137 = arith.constant 0 : index
    %c0_138 = arith.constant 0 : index
    %119 = vector.load %arg5[%c0_137, %c0_138] : memref<1x64xf32, #tpu.memory_space<vmem>>, vector<1x64xf32>
    %120 = vector.broadcast %119 : vector<1x64xf32> to vector<128x64xf32>
    %121 = arith.mulf %118, %120 : vector<128x64xf32>
    %c0_139 = arith.constant 0 : index
    %c0_140 = arith.constant 0 : index
    %122 = vector.load %arg6[%c0_139, %c0_140] : memref<1x64xf32, #tpu.memory_space<vmem>>, vector<1x64xf32>
    %123 = vector.broadcast %122 : vector<1x64xf32> to vector<128x64xf32>
    %124 = arith.addf %121, %123 : vector<128x64xf32>
    %cst_141 = arith.constant 0.000000e+00 : f32
    %125 = vector.broadcast %cst_141 : f32 to vector<128x64xf32>
    %126 = arith.maximumf %124, %125 : vector<128x64xf32>
    %127 = vector.shape_cast %126 : vector<128x64xf32> to vector<2x64x64xf32>
    %cst_142 = arith.constant dense<0xFF800000> : vector<2x64xf32>
    %128 = vector.multi_reduction <maximumf>, %127, %cst_142 [1] : vector<2x64x64xf32> to vector<2x64xf32>
    %c0_143 = arith.constant 0 : index
    %c0_144 = arith.constant 0 : index
    %129 = vector.load %arg7[%c0_143, %c0_144] : memref<64x5xf32, #tpu.memory_space<vmem>>, vector<64x5xf32>
    %cst_145 = arith.constant dense<0.000000e+00> : vector<2x5xf32>
    %130 = tpu.matmul %128, %129, %cst_145 {dimension_numbers = #tpu.dot_dimension_numbers<[1], [0], [0], [1], [0, 0, 1, 1], [], []>} : vector<2x64xf32>, vector<64x5xf32>, vector<2x5xf32> -> vector<2x5xf32>
    %c0_146 = arith.constant 0 : index
    %c0_147 = arith.constant 0 : index
    %131 = vector.load %arg8[%c0_146, %c0_147] : memref<1x5xf32, #tpu.memory_space<vmem>>, vector<1x5xf32>
    %132 = vector.broadcast %131 : vector<1x5xf32> to vector<2x5xf32>
    %133 = arith.addf %130, %132 : vector<2x5xf32>
    %cst_148 = arith.constant 0.000000e+00 : f32
    %134 = vector.broadcast %cst_148 : f32 to vector<2x5xf32>
    %135 = arith.subf %134, %133 : vector<2x5xf32>
    %136 = math.exp %135 : vector<2x5xf32>
    %cst_149 = arith.constant 1.000000e+00 : f32
    %137 = vector.broadcast %cst_149 : f32 to vector<2x5xf32>
    %138 = arith.addf %137, %136 : vector<2x5xf32>
    %cst_150 = arith.constant 1.000000e+00 : f32
    %139 = vector.broadcast %cst_150 : f32 to vector<2x5xf32>
    %140 = arith.divf %139, %138 : vector<2x5xf32>
    %c0_151 = arith.constant 0 : index
    %c0_152 = arith.constant 0 : index
    %141 = vector.load %arg9[%c0_151, %c0_152] : memref<2x5xf32, #tpu.memory_space<vmem>>, vector<2x5xf32>
    tpu.vector_store %arg9[%c0_151, %c0_152], %140 {strides = array<i32>} : memref<2x5xf32, #tpu.memory_space<vmem>>, vector<2x5xf32>,
    return
  }
}

</mosaic_0001>

<llo_original>
// kernel: cnn_model_2_forward.1
$region0: #{cnn_model_2_forward.1}
  #allocation0 [shape = 'u32[]', space=smem, size = 0x4, offset = 0x4, fixed_abs, tag = 'smem constant byte address 0x4 - core index']
  #allocation1 [shape = 'u32[72,128]{1,0:T(1,128)}', space=vmem, size = 0x9000, scoped, tag = 'internal scratch']
  #allocation2 [shape = 'bf16[2,18,18,3]{3,2,1,0:T(8,128)(2,1)}', space=vmem, size = 0x36000, scoped, tag = 'scratch operand']
  #allocation3 [shape = 'bf16[2,10,10,32]{3,2,1,0:T(8,128)(2,1)}', space=vmem, size = 0x14000, scoped, tag = 'scratch operand']
  %s0 = inlined_call_operand.vmem [shape: bf16[2,16,16,3], index: 0, kind: input, shape index: {}]
  %s1 = inlined_call_operand.vmem [shape: bf16[27,32], index: 1, kind: input, shape index: {}]
  %s2 = inlined_call_operand.vmem [shape: f32[1,32], index: 2, kind: input, shape index: {}]
  %s3 = inlined_call_operand.vmem [shape: f32[1,32], index: 3, kind: input, shape index: {}]
  %s4 = inlined_call_operand.vmem [shape: bf16[288,64], index: 4, kind: input, shape index: {}]
  %s5 = inlined_call_operand.vmem [shape: f32[1,64], index: 5, kind: input, shape index: {}]
  %s6 = inlined_call_operand.vmem [shape: f32[1,64], index: 6, kind: input, shape index: {}]
  %s7 = inlined_call_operand.vmem [shape: f32[64,5], index: 7, kind: input, shape index: {}]
  %s8 = inlined_call_operand.vmem [shape: f32[1,5], index: 8, kind: input, shape index: {}]
  %s9 = inlined_call_operand.hbm [shape: f32[2,5], index: 9, kind: output, shape index: {}]
  %s10 = sld [smem:[#allocation0]]
  $region46: #{cnn_model_2_forward.1} parent=0
    _
  %s12 = ssub.s32 1, %s10
  %s13 = scalar_select 0, %s12, %s10
  $region1: #{cnn_model_2_forward.1} parent=0
    #allocation4 [shape = 'u8[1024]{0}', space=vmem, size = 0x400, scoped, tag = 'output window, operand 0, single buffered']
    #allocation5 [shape = 's32[1]{0}', space=sflag, size = 0x4, scoped, tag = 'scoped memory for cnn_model_2_forward.1']
    %14 = vsyncpa [#allocation5], 0
    // Predicated region
    $region2: #{cnn_model_2_forward.1} parent=1 // pred_check
      _
    $region3: #{cnn_model_2_forward.1} parent=1 // pred_check_branch
      %16 = sbr.rel (0) target = $region5
    $region4: #{cnn_model_2_forward.1} parent=1 // pred_region
      _
    $region5: #{cnn_model_2_forward.1} parent=1 // pred_fallthru
      _
    // Predicated region
    $region6: #{cnn_model_2_forward.1} parent=1 // pred_check
      _
    $region7: #{cnn_model_2_forward.1} parent=1 // pred_check_branch
      %18 = sbr.rel (0) target = $region9
    $region8: #{cnn_model_2_forward.1} parent=1 // pred_region
      _
    $region9: #{cnn_model_2_forward.1} parent=1 // pred_fallthru
      _
    // Predicated region
    $region10: #{cnn_model_2_forward.1} parent=1 // pred_check
      _
    $region11: #{cnn_model_2_forward.1} parent=1 // pred_check_branch
      %20 = sbr.rel (0) target = $region13
    $region12: #{cnn_model_2_forward.1} parent=1 // pred_region
      _
    $region13: #{cnn_model_2_forward.1} parent=1 // pred_fallthru
      _
    // Predicated region
    $region14: #{cnn_model_2_forward.1} parent=1 // pred_check
      _
    $region15: #{cnn_model_2_forward.1} parent=1 // pred_check_branch
      %22 = sbr.rel (0) target = $region17
    $region16: #{cnn_model_2_forward.1} parent=1 // pred_region
      _
    $region17: #{cnn_model_2_forward.1} parent=1 // pred_fallthru
      _
    // Predicated region
    $region18: #{cnn_model_2_forward.1} parent=1 // pred_check
      _
    $region19: #{cnn_model_2_forward.1} parent=1 // pred_check_branch
      %24 = sbr.rel (0) target = $region21
    $region20: #{cnn_model_2_forward.1} parent=1 // pred_region
      _
    $region21: #{cnn_model_2_forward.1} parent=1 // pred_fallthru
      _
    // Predicated region
    $region22: #{cnn_model_2_forward.1} parent=1 // pred_check
      _
    $region23: #{cnn_model_2_forward.1} parent=1 // pred_check_branch
      %26 = sbr.rel (0) target = $region25
    $region24: #{cnn_model_2_forward.1} parent=1 // pred_region
      _
    $region25: #{cnn_model_2_forward.1} parent=1 // pred_fallthru
      _
    // Predicated region
    $region26: #{cnn_model_2_forward.1} parent=1 // pred_check
      _
    $region27: #{cnn_model_2_forward.1} parent=1 // pred_check_branch
      %28 = sbr.rel (0) target = $region29
    $region28: #{cnn_model_2_forward.1} parent=1 // pred_region
      _
    $region29: #{cnn_model_2_forward.1} parent=1 // pred_fallthru
      _
    // Predicated region
    $region30: #{cnn_model_2_forward.1} parent=1 // pred_check
      _
    $region31: #{cnn_model_2_forward.1} parent=1 // pred_check_branch
      %30 = sbr.rel (0) target = $region33
    $region32: #{cnn_model_2_forward.1} parent=1 // pred_region
      _
    $region33: #{cnn_model_2_forward.1} parent=1 // pred_fallthru
      _
    // Predicated region
    $region34: #{cnn_model_2_forward.1} parent=1 // pred_check
      _
    $region35: #{cnn_model_2_forward.1} parent=1 // pred_check_branch
      %32 = sbr.rel (0) target = $region37
    $region36: #{cnn_model_2_forward.1} parent=1 // pred_region
      _
    $region37: #{cnn_model_2_forward.1} parent=1 // pred_fallthru
      _
    %vm34 = vcmask 19456
    %35 = vst.msk [vmem:[#allocation2] sm:$0xf] %vm34, 0
    %36 = vst.msk [vmem:[#allocation2 + $0x4] sm:$0xf] %vm34, 0
    %vm37 = vcmask 16384
    %38 = vst.msk [vmem:[#allocation2 + $0x8] sm:$0x1] %vm37, 0
    %39 = vst.msk [vmem:[#allocation2 + $0xd8] sm:$0xf] %vm34, 0
    %40 = vst.msk [vmem:[#allocation2 + $0xdc] sm:$0xf] %vm34, 0
    %41 = vst.msk [vmem:[#allocation2 + $0xe0] sm:$0x1] %vm37, 0
    %s42 = scalar_lea.vmem [#allocation2], 204
    %43 = vst.msk [vmem:[%s42] sm:$0xf] %vm34, 0
    %44 = vst.msk [vmem:[%s42 + $0x4] sm:$0xf] %vm34, 0
    %45 = vst.msk [vmem:[%s42 + $0x8] sm:$0x1] %vm37, 0
    %46 = vst.msk [vmem:[%s42 + $0xd8] sm:$0xf] %vm34, 0
    %47 = vst.msk [vmem:[%s42 + $0xdc] sm:$0xf] %vm34, 0
    %48 = vst.msk [vmem:[%s42 + $0xe0] sm:$0x1] %vm37, 0
    %vm49 = vcmask 16384
    %vm50 = vsmask.f32 256
    %vm51 = vmand %vm49, %vm50
    %v52 = vld [vmem:[#allocation2] sm:$0x1]
    %v53 = vsel %vm51, 0, %v52
    %54 = vst [vmem:[#allocation2] sm:$0x1] %v53
    %v55 = vld [vmem:[#allocation2 + $0xc] sm:$0x1]
    %v56 = vsel %vm51, 0, %v55
    %57 = vst [vmem:[#allocation2 + $0xc] sm:$0x1] %v56
    %v58 = vld [vmem:[#allocation2 + $0x18] sm:$0x1]
    %v59 = vsel %vm51, 0, %v58
    %60 = vst [vmem:[#allocation2 + $0x18] sm:$0x1] %v59
    %v61 = vld [vmem:[#allocation2 + $0x24] sm:$0x1]
    %v62 = vsel %vm51, 0, %v61
    %63 = vst [vmem:[#allocation2 + $0x24] sm:$0x1] %v62
    %v64 = vld [vmem:[#allocation2 + $0x30] sm:$0x1]
    %v65 = vsel %vm51, 0, %v64
    %66 = vst [vmem:[#allocation2 + $0x30] sm:$0x1] %v65
    %v67 = vld [vmem:[#allocation2 + $0x3c] sm:$0x1]
    %v68 = vsel %vm51, 0, %v67
    %69 = vst [vmem:[#allocation2 + $0x3c] sm:$0x1] %v68
    %v70 = vld [vmem:[#allocation2 + $0x48] sm:$0x1]
    %v71 = vsel %vm51, 0, %v70
    %72 = vst [vmem:[#allocation2 + $0x48] sm:$0x1] %v71
    %v73 = vld [vmem:[#allocation2 + $0x54] sm:$0x1]
    %v74 = vsel %vm51, 0, %v73
    %75 = vst [vmem:[#allocation2 + $0x54] sm:$0x1] %v74
    %v76 = vld [vmem:[#allocation2 + $0x60] sm:$0x1]
    %v77 = vsel %vm51, 0, %v76
    %78 = vst [vmem:[#allocation2 + $0x60] sm:$0x1] %v77
    %v79 = vld [vmem:[#allocation2 + $0x6c] sm:$0x1]
    %v80 = vsel %vm51, 0, %v79
    %81 = vst [vmem:[#allocation2 + $0x6c] sm:$0x1] %v80
    %v82 = vld [vmem:[#allocation2 + $0x78] sm:$0x1]
    %v83 = vsel %vm51, 0, %v82
    %84 = vst [vmem:[#allocation2 + $0x78] sm:$0x1] %v83
    %v85 = vld [vmem:[#allocation2 + $0x84] sm:$0x1]
    %v86 = vsel %vm51, 0, %v85
    %87 = vst [vmem:[#allocation2 + $0x84] sm:$0x1] %v86
    %v88 = vld [vmem:[#allocation2 + $0x90] sm:$0x1]
    %v89 = vsel %vm51, 0, %v88
    %90 = vst [vmem:[#allocation2 + $0x90] sm:$0x1] %v89
    %v91 = vld [vmem:[#allocation2 + $0x9c] sm:$0x1]
    %v92 = vsel %vm51, 0, %v91
    %93 = vst [vmem:[#allocation2 + $0x9c] sm:$0x1] %v92
    %v94 = vld [vmem:[#allocation2 + $0xa8] sm:$0x1]
    %v95 = vsel %vm51, 0, %v94
    %96 = vst [vmem:[#allocation2 + $0xa8] sm:$0x1] %v95
    %v97 = vld [vmem:[#allocation2 + $0xb4] sm:$0x1]
    %v98 = vsel %vm51, 0, %v97
    %99 = vst [vmem:[#allocation2 + $0xb4] sm:$0x1] %v98
    %v100 = vld [vmem:[#allocation2 + $0xc0] sm:$0x1]
    %v101 = vsel %vm51, 0, %v100
    %102 = vst [vmem:[#allocation2 + $0xc0] sm:$0x1] %v101
    %v103 = vld [vmem:[#allocation2 + $0xcc] sm:$0x1]
    %v104 = vsel %vm51, 0, %v103
    %105 = vst [vmem:[#allocation2 + $0xcc] sm:$0x1] %v104
    %v106 = vld [vmem:[#allocation2 + $0xd8] sm:$0x1]
    %v107 = vsel %vm51, 0, %v106
    %108 = vst [vmem:[#allocation2 + $0xd8] sm:$0x1] %v107
    %v109 = vld [vmem:[#allocation2 + $0xe4] sm:$0x1]
    %v110 = vsel %vm51, 0, %v109
    %111 = vst [vmem:[#allocation2 + $0xe4] sm:$0x1] %v110
    %v112 = vld [vmem:[#allocation2 + $0xf0] sm:$0x1]
    %v113 = vsel %vm51, 0, %v112
    %114 = vst [vmem:[#allocation2 + $0xf0] sm:$0x1] %v113
    %v115 = vld [vmem:[#allocation2 + $0xfc] sm:$0x1]
    %v116 = vsel %vm51, 0, %v115
    %117 = vst [vmem:[#allocation2 + $0xfc] sm:$0x1] %v116
    %v118 = vld [vmem:[#allocation2 + $0x108] sm:$0x1]
    %v119 = vsel %vm51, 0, %v118
    %120 = vst [vmem:[#allocation2 + $0x108] sm:$0x1] %v119
    %v121 = vld [vmem:[#allocation2 + $0x114] sm:$0x1]
    %v122 = vsel %vm51, 0, %v121
    %123 = vst [vmem:[#allocation2 + $0x114] sm:$0x1] %v122
    %v124 = vld [vmem:[#allocation2 + $0x120] sm:$0x1]
    %v125 = vsel %vm51, 0, %v124
    %126 = vst [vmem:[#allocation2 + $0x120] sm:$0x1] %v125
    %v127 = vld [vmem:[#allocation2 + $0x12c] sm:$0x1]
    %v128 = vsel %vm51, 0, %v127
    %129 = vst [vmem:[#allocation2 + $0x12c] sm:$0x1] %v128
    %v130 = vld [vmem:[#allocation2 + $0x138] sm:$0x1]
    %v131 = vsel %vm51, 0, %v130
    %132 = vst [vmem:[#allocation2 + $0x138] sm:$0x1] %v131
    %v133 = vld [vmem:[#allocation2 + $0x144] sm:$0x1]
    %v134 = vsel %vm51, 0, %v133
    %135 = vst [vmem:[#allocation2 + $0x144] sm:$0x1] %v134
    %v136 = vld [vmem:[#allocation2 + $0x150] sm:$0x1]
    %v137 = vsel %vm51, 0, %v136
    %138 = vst [vmem:[#allocation2 + $0x150] sm:$0x1] %v137
    %v139 = vld [vmem:[#allocation2 + $0x15c] sm:$0x1]
    %v140 = vsel %vm51, 0, %v139
    %141 = vst [vmem:[#allocation2 + $0x15c] sm:$0x1] %v140
    %v142 = vld [vmem:[#allocation2 + $0x168] sm:$0x1]
    %v143 = vsel %vm51, 0, %v142
    %144 = vst [vmem:[#allocation2 + $0x168] sm:$0x1] %v143
    %v145 = vld [vmem:[#allocation2 + $0x174] sm:$0x1]
    %v146 = vsel %vm51, 0, %v145
    %147 = vst [vmem:[#allocation2 + $0x174] sm:$0x1] %v146
    %v148 = vld [vmem:[#allocation2 + $0x180] sm:$0x1]
    %v149 = vsel %vm51, 0, %v148
    %150 = vst [vmem:[#allocation2 + $0x180] sm:$0x1] %v149
    %v151 = vld [vmem:[#allocation2 + $0x18c] sm:$0x1]
    %v152 = vsel %vm51, 0, %v151
    %153 = vst [vmem:[#allocation2 + $0x18c] sm:$0x1] %v152
    %v154 = vld [vmem:[#allocation2 + $0x198] sm:$0x1]
    %v155 = vsel %vm51, 0, %v154
    %156 = vst [vmem:[#allocation2 + $0x198] sm:$0x1] %v155
    %v157 = vld [vmem:[#allocation2 + $0x1a4] sm:$0x1]
    %v158 = vsel %vm51, 0, %v157
    %159 = vst [vmem:[#allocation2 + $0x1a4] sm:$0x1] %v158
    %vm160 = vsmask.f32 7938
    %vm161 = vmand %vm49, %vm160
    %v162 = vld [vmem:[#allocation2 + $0x8] sm:$0x1]
    %v163 = vsel %vm161, 0, %v162
    %164 = vst [vmem:[#allocation2 + $0x8] sm:$0x1] %v163
    %v165 = vld [vmem:[#allocation2 + $0x14] sm:$0x1]
    %v166 = vsel %vm161, 0, %v165
    %167 = vst [vmem:[#allocation2 + $0x14] sm:$0x1] %v166
    %v168 = vld [vmem:[#allocation2 + $0x20] sm:$0x1]
    %v169 = vsel %vm161, 0, %v168
    %170 = vst [vmem:[#allocation2 + $0x20] sm:$0x1] %v169
    %v171 = vld [vmem:[#allocation2 + $0x2c] sm:$0x1]
    %v172 = vsel %vm161, 0, %v171
    %173 = vst [vmem:[#allocation2 + $0x2c] sm:$0x1] %v172
    %v174 = vld [vmem:[#allocation2 + $0x38] sm:$0x1]
    %v175 = vsel %vm161, 0, %v174
    %176 = vst [vmem:[#allocation2 + $0x38] sm:$0x1] %v175
    %v177 = vld [vmem:[#allocation2 + $0x44] sm:$0x1]
    %v178 = vsel %vm161, 0, %v177
    %179 = vst [vmem:[#allocation2 + $0x44] sm:$0x1] %v178
    %v180 = vld [vmem:[#allocation2 + $0x50] sm:$0x1]
    %v181 = vsel %vm161, 0, %v180
    %182 = vst [vmem:[#allocation2 + $0x50] sm:$0x1] %v181
    %v183 = vld [vmem:[#allocation2 + $0x5c] sm:$0x1]
    %v184 = vsel %vm161, 0, %v183
    %185 = vst [vmem:[#allocation2 + $0x5c] sm:$0x1] %v184
    %v186 = vld [vmem:[#allocation2 + $0x68] sm:$0x1]
    %v187 = vsel %vm161, 0, %v186
    %188 = vst [vmem:[#allocation2 + $0x68] sm:$0x1] %v187
    %v189 = vld [vmem:[#allocation2 + $0x74] sm:$0x1]
    %v190 = vsel %vm161, 0, %v189
    %191 = vst [vmem:[#allocation2 + $0x74] sm:$0x1] %v190
    %v192 = vld [vmem:[#allocation2 + $0x80] sm:$0x1]
    %v193 = vsel %vm161, 0, %v192
    %194 = vst [vmem:[#allocation2 + $0x80] sm:$0x1] %v193
    %v195 = vld [vmem:[#allocation2 + $0x8c] sm:$0x1]
    %v196 = vsel %vm161, 0, %v195
    %197 = vst [vmem:[#allocation2 + $0x8c] sm:$0x1] %v196
    %v198 = vld [vmem:[#allocation2 + $0x98] sm:$0x1]
    %v199 = vsel %vm161, 0, %v198
    %200 = vst [vmem:[#allocation2 + $0x98] sm:$0x1] %v199
    %v201 = vld [vmem:[#allocation2 + $0xa4] sm:$0x1]
    %v202 = vsel %vm161, 0, %v201
    %203 = vst [vmem:[#allocation2 + $0xa4] sm:$0x1] %v202
    %v204 = vld [vmem:[#allocation2 + $0xb0] sm:$0x1]
    %v205 = vsel %vm161, 0, %v204
    %206 = vst [vmem:[#allocation2 + $0xb0] sm:$0x1] %v205
    %v207 = vld [vmem:[#allocation2 + $0xbc] sm:$0x1]
    %v208 = vsel %vm161, 0, %v207
    %209 = vst [vmem:[#allocation2 + $0xbc] sm:$0x1] %v208
    %v210 = vld [vmem:[#allocation2 + $0xc8] sm:$0x1]
    %v211 = vsel %vm161, 0, %v210
    %212 = vst [vmem:[#allocation2 + $0xc8] sm:$0x1] %v211
    %v213 = vld [vmem:[#allocation2 + $0xd4] sm:$0x1]
    %v214 = vsel %vm161, 0, %v213
    %215 = vst [vmem:[#allocation2 + $0xd4] sm:$0x1] %v214
    %v216 = vld [vmem:[#allocation2 + $0xe0] sm:$0x1]
    %v217 = vsel %vm161, 0, %v216
    %218 = vst [vmem:[#allocation2 + $0xe0] sm:$0x1] %v217
    %v219 = vld [vmem:[#allocation2 + $0xec] sm:$0x1]
    %v220 = vsel %vm161, 0, %v219
    %221 = vst [vmem:[#allocation2 + $0xec] sm:$0x1] %v220
    %v222 = vld [vmem:[#allocation2 + $0xf8] sm:$0x1]
    %v223 = vsel %vm161, 0, %v222
    %224 = vst [vmem:[#allocation2 + $0xf8] sm:$0x1] %v223
    %v225 = vld [vmem:[#allocation2 + $0x104] sm:$0x1]
    %v226 = vsel %vm161, 0, %v225
    %227 = vst [vmem:[#allocation2 + $0x104] sm:$0x1] %v226
    %v228 = vld [vmem:[#allocation2 + $0x110] sm:$0x1]
    %v229 = vsel %vm161, 0, %v228
    %230 = vst [vmem:[#allocation2 + $0x110] sm:$0x1] %v229
    %v231 = vld [vmem:[#allocation2 + $0x11c] sm:$0x1]
    %v232 = vsel %vm161, 0, %v231
    %233 = vst [vmem:[#allocation2 + $0x11c] sm:$0x1] %v232
    %v234 = vld [vmem:[#allocation2 + $0x128] sm:$0x1]
    %v235 = vsel %vm161, 0, %v234
    %236 = vst [vmem:[#allocation2 + $0x128] sm:$0x1] %v235
    %v237 = vld [vmem:[#allocation2 + $0x134] sm:$0x1]
    %v238 = vsel %vm161, 0, %v237
    %239 = vst [vmem:[#allocation2 + $0x134] sm:$0x1] %v238
    %v240 = vld [vmem:[#allocation2 + $0x140] sm:$0x1]
    %v241 = vsel %vm161, 0, %v240
    %242 = vst [vmem:[#allocation2 + $0x140] sm:$0x1] %v241
    %v243 = vld [vmem:[#allocation2 + $0x14c] sm:$0x1]
    %v244 = vsel %vm161, 0, %v243
    %245 = vst [vmem:[#allocation2 + $0x14c] sm:$0x1] %v244
    %v246 = vld [vmem:[#allocation2 + $0x158] sm:$0x1]
    %v247 = vsel %vm161, 0, %v246
    %248 = vst [vmem:[#allocation2 + $0x158] sm:$0x1] %v247
    %v249 = vld [vmem:[#allocation2 + $0x164] sm:$0x1]
    %v250 = vsel %vm161, 0, %v249
    %251 = vst [vmem:[#allocation2 + $0x164] sm:$0x1] %v250
    %v252 = vld [vmem:[#allocation2 + $0x170] sm:$0x1]
    %v253 = vsel %vm161, 0, %v252
    %254 = vst [vmem:[#allocation2 + $0x170] sm:$0x1] %v253
    %v255 = vld [vmem:[#allocation2 + $0x17c] sm:$0x1]
    %v256 = vsel %vm161, 0, %v255
    %257 = vst [vmem:[#allocation2 + $0x17c] sm:$0x1] %v256
    %v258 = vld [vmem:[#allocation2 + $0x188] sm:$0x1]
    %v259 = vsel %vm161, 0, %v258
    %260 = vst [vmem:[#allocation2 + $0x188] sm:$0x1] %v259
    %v261 = vld [vmem:[#allocation2 + $0x194] sm:$0x1]
    %v262 = vsel %vm161, 0, %v261
    %263 = vst [vmem:[#allocation2 + $0x194] sm:$0x1] %v262
    %v264 = vld [vmem:[#allocation2 + $0x1a0] sm:$0x1]
    %v265 = vsel %vm161, 0, %v264
    %266 = vst [vmem:[#allocation2 + $0x1a0] sm:$0x1] %v265
    %v267 = vld [vmem:[#allocation2 + $0x1ac] sm:$0x1]
    %v268 = vsel %vm161, 0, %v267
    %269 = vst [vmem:[#allocation2 + $0x1ac] sm:$0x1] %v268
    %v270 = vld [vmem:[%s0] sm:$0xf]
    %v271 = vld [vmem:[%s0 + $0x4] sm:$0xf]
    %v272 = vld [vmem:[%s0 + $0x8] sm:$0xf]
    %v273 = vld [vmem:[%s0 + $0xc] sm:$0xf]
    %v274 = vld [vmem:[%s0 + $0x10] sm:$0xf]
    %v275 = vld [vmem:[%s0 + $0x14] sm:$0xf]
    %v276 = vld [vmem:[%s0 + $0x18] sm:$0xf]
    %v277 = vld [vmem:[%s0 + $0x1c] sm:$0xf]
    %v278 = vld [vmem:[%s0 + $0x20] sm:$0xf]
    %v279 = vld [vmem:[%s0 + $0x24] sm:$0xf]
    %v280 = vld [vmem:[%s0 + $0x28] sm:$0xf]
    %v281 = vld [vmem:[%s0 + $0x2c] sm:$0xf]
    %v282 = vld [vmem:[%s0 + $0x30] sm:$0xf]
    %v283 = vld [vmem:[%s0 + $0x34] sm:$0xf]
    %v284 = vld [vmem:[%s0 + $0x38] sm:$0xf]
    %v285 = vld [vmem:[%s0 + $0x3c] sm:$0xf]
    %v286 = vld [vmem:[%s0 + $0x40] sm:$0xf]
    %v287 = vld [vmem:[%s0 + $0x44] sm:$0xf]
    %v288 = vld [vmem:[%s0 + $0x48] sm:$0xf]
    %v289 = vld [vmem:[%s0 + $0x4c] sm:$0xf]
    %v290 = vld [vmem:[%s0 + $0x50] sm:$0xf]
    %v291 = vld [vmem:[%s0 + $0x54] sm:$0xf]
    %v292 = vld [vmem:[%s0 + $0x58] sm:$0xf]
    %v293 = vld [vmem:[%s0 + $0x5c] sm:$0xf]
    %v294 = vld [vmem:[%s0 + $0x60] sm:$0xf]
    %v295 = vld [vmem:[%s0 + $0x64] sm:$0xf]
    %v296 = vld [vmem:[%s0 + $0x68] sm:$0xf]
    %v297 = vld [vmem:[%s0 + $0x6c] sm:$0xf]
    %v298 = vld [vmem:[%s0 + $0x70] sm:$0xf]
    %v299 = vld [vmem:[%s0 + $0x74] sm:$0xf]
    %v300 = vld [vmem:[%s0 + $0x78] sm:$0xf]
    %v301 = vld [vmem:[%s0 + $0x7c] sm:$0xf]
    %v302 = vld [vmem:[%s0 + $0x80] sm:$0xf]
    %v303 = vld [vmem:[%s0 + $0x84] sm:$0xf]
    %v304 = vld [vmem:[%s0 + $0x88] sm:$0xf]
    %v305 = vld [vmem:[%s0 + $0x8c] sm:$0xf]
    %v306 = vld [vmem:[%s0 + $0x90] sm:$0xf]
    %v307 = vld [vmem:[%s0 + $0x94] sm:$0xf]
    %v308 = vld [vmem:[%s0 + $0x98] sm:$0xf]
    %v309 = vld [vmem:[%s0 + $0x9c] sm:$0xf]
    %v310 = vld [vmem:[%s0 + $0xa0] sm:$0xf]
    %v311 = vld [vmem:[%s0 + $0xa4] sm:$0xf]
    %v312 = vld [vmem:[%s0 + $0xa8] sm:$0xf]
    %v313 = vld [vmem:[%s0 + $0xac] sm:$0xf]
    %v314 = vld [vmem:[%s0 + $0xb0] sm:$0xf]
    %v315 = vld [vmem:[%s0 + $0xb4] sm:$0xf]
    %v316 = vld [vmem:[%s0 + $0xb8] sm:$0xf]
    %v317 = vld [vmem:[%s0 + $0xbc] sm:$0xf]
    %v318 = vld [vmem:[%s0 + $0xc0] sm:$0xf]
    %v319 = vld [vmem:[%s0 + $0xc4] sm:$0xf]
    %v320 = vld [vmem:[%s0 + $0xc8] sm:$0xf]
    %v321 = vld [vmem:[%s0 + $0xcc] sm:$0xf]
    %v322 = vld [vmem:[%s0 + $0xd0] sm:$0xf]
    %v323 = vld [vmem:[%s0 + $0xd4] sm:$0xf]
    %v324 = vld [vmem:[%s0 + $0xd8] sm:$0xf]
    %v325 = vld [vmem:[%s0 + $0xdc] sm:$0xf]
    %v326 = vld [vmem:[%s0 + $0xe0] sm:$0xf]
    %v327 = vld [vmem:[%s0 + $0xe4] sm:$0xf]
    %v328 = vld [vmem:[%s0 + $0xe8] sm:$0xf]
    %v329 = vld [vmem:[%s0 + $0xec] sm:$0xf]
    %v330 = vld [vmem:[%s0 + $0xf0] sm:$0xf]
    %v331 = vld [vmem:[%s0 + $0xf4] sm:$0xf]
    %v332 = vld [vmem:[%s0 + $0xf8] sm:$0xf]
    %v333 = vld [vmem:[%s0 + $0xfc] sm:$0xf]
    %vm334 = vsmask.f32 4368
    %vm335 = vmor %vm50, %vm334
    %v337 = vshrl.u32 %v270, 16
    %v339 = vrot.slane %v337, 7
    %v340 = vshll.u32 %v270, 16
    %v342 = vor.u32 %v339, %v340
    %v343 = vrot.slane %v339, 4
    %v345 = vshrl.u32 %v271, 16
    %v347 = vrot.slane %v345, 7
    %v348 = vshll.u32 %v271, 16
    %v350 = vor.u32 %v347, %v348
    %v351 = vsel %vm335, %v343, %v350
    %v352 = vrot.slane %v347, 4
    %v354 = vshrl.u32 %v272, 16
    %v356 = vrot.slane %v354, 7
    %v357 = vshll.u32 %v272, 16
    %v359 = vor.u32 %v356, %v357
    %v360 = vrot.slane %v356, 4
    %v362 = vshrl.u32 %v273, 16
    %v364 = vrot.slane %v362, 7
    %v365 = vshll.u32 %v273, 16
    %v367 = vor.u32 %v364, %v365
    %v368 = vsel %vm335, %v360, %v367
    %v369 = vrot.slane %v364, 4
    %v371 = vshrl.u32 %v274, 16
    %v373 = vrot.slane %v371, 7
    %v374 = vshll.u32 %v274, 16
    %v376 = vor.u32 %v373, %v374
    %v377 = vrot.slane %v373, 4
    %v379 = vshrl.u32 %v275, 16
    %v381 = vrot.slane %v379, 7
    %v382 = vshll.u32 %v275, 16
    %v384 = vor.u32 %v381, %v382
    %v385 = vsel %vm335, %v377, %v384
    %v386 = vrot.slane %v381, 4
    %v388 = vshrl.u32 %v276, 16
    %v390 = vrot.slane %v388, 7
    %v391 = vshll.u32 %v276, 16
    %v393 = vor.u32 %v390, %v391
    %v394 = vrot.slane %v390, 4
    %v396 = vshrl.u32 %v277, 16
    %v398 = vrot.slane %v396, 7
    %v399 = vshll.u32 %v277, 16
    %v401 = vor.u32 %v398, %v399
    %v402 = vsel %vm335, %v394, %v401
    %v403 = vrot.slane %v398, 4
    %v405 = vshrl.u32 %v278, 16
    %v407 = vrot.slane %v405, 7
    %v408 = vshll.u32 %v278, 16
    %v410 = vor.u32 %v407, %v408
    %v411 = vrot.slane %v407, 4
    %v413 = vshrl.u32 %v279, 16
    %v415 = vrot.slane %v413, 7
    %v416 = vshll.u32 %v279, 16
    %v418 = vor.u32 %v415, %v416
    %v419 = vsel %vm335, %v411, %v418
    %v420 = vrot.slane %v415, 4
    %v422 = vshrl.u32 %v280, 16
    %v424 = vrot.slane %v422, 7
    %v425 = vshll.u32 %v280, 16
    %v427 = vor.u32 %v424, %v425
    %v428 = vrot.slane %v424, 4
    %v430 = vshrl.u32 %v281, 16
    %v432 = vrot.slane %v430, 7
    %v433 = vshll.u32 %v281, 16
    %v435 = vor.u32 %v432, %v433
    %v436 = vsel %vm335, %v428, %v435
    %v437 = vrot.slane %v432, 4
    %v439 = vshrl.u32 %v282, 16
    %v441 = vrot.slane %v439, 7
    %v442 = vshll.u32 %v282, 16
    %v444 = vor.u32 %v441, %v442
    %v445 = vrot.slane %v441, 4
    %v447 = vshrl.u32 %v283, 16
    %v449 = vrot.slane %v447, 7
    %v450 = vshll.u32 %v283, 16
    %v452 = vor.u32 %v449, %v450
    %v453 = vsel %vm335, %v445, %v452
    %v454 = vrot.slane %v449, 4
    %v456 = vshrl.u32 %v284, 16
    %v458 = vrot.slane %v456, 7
    %v459 = vshll.u32 %v284, 16
    %v461 = vor.u32 %v458, %v459
    %v462 = vrot.slane %v458, 4
    %v464 = vshrl.u32 %v285, 16
    %v466 = vrot.slane %v464, 7
    %v467 = vshll.u32 %v285, 16
    %v469 = vor.u32 %v466, %v467
    %v470 = vsel %vm335, %v462, %v469
    %v471 = vrot.slane %v466, 4
    %v473 = vshrl.u32 %v286, 16
    %v475 = vrot.slane %v473, 7
    %v476 = vshll.u32 %v286, 16
    %v478 = vor.u32 %v475, %v476
    %v479 = vrot.slane %v475, 4
    %v481 = vshrl.u32 %v287, 16
    %v483 = vrot.slane %v481, 7
    %v484 = vshll.u32 %v287, 16
    %v486 = vor.u32 %v483, %v484
    %v487 = vsel %vm335, %v479, %v486
    %v488 = vrot.slane %v483, 4
    %v490 = vshrl.u32 %v288, 16
    %v492 = vrot.slane %v490, 7
    %v493 = vshll.u32 %v288, 16
    %v495 = vor.u32 %v492, %v493
    %v496 = vrot.slane %v492, 4
    %v498 = vshrl.u32 %v289, 16
    %v500 = vrot.slane %v498, 7
    %v501 = vshll.u32 %v289, 16
    %v503 = vor.u32 %v500, %v501
    %v504 = vsel %vm335, %v496, %v503
    %v505 = vrot.slane %v500, 4
    %v507 = vshrl.u32 %v290, 16
    %v509 = vrot.slane %v507, 7
    %v510 = vshll.u32 %v290, 16
    %v512 = vor.u32 %v509, %v510
    %v513 = vrot.slane %v509, 4
    %v515 = vshrl.u32 %v291, 16
    %v517 = vrot.slane %v515, 7
    %v518 = vshll.u32 %v291, 16
    %v520 = vor.u32 %v517, %v518
    %v521 = vsel %vm335, %v513, %v520
    %v522 = vrot.slane %v517, 4
    %v524 = vshrl.u32 %v292, 16
    %v526 = vrot.slane %v524, 7
    %v527 = vshll.u32 %v292, 16
    %v529 = vor.u32 %v526, %v527
    %v530 = vrot.slane %v526, 4
    %v532 = vshrl.u32 %v293, 16
    %v534 = vrot.slane %v532, 7
    %v535 = vshll.u32 %v293, 16
    %v537 = vor.u32 %v534, %v535
    %v538 = vsel %vm335, %v530, %v537
    %v539 = vrot.slane %v534, 4
    %v541 = vshrl.u32 %v294, 16
    %v543 = vrot.slane %v541, 7
    %v544 = vshll.u32 %v294, 16
    %v546 = vor.u32 %v543, %v544
    %v547 = vrot.slane %v543, 4
    %v549 = vshrl.u32 %v295, 16
    %v551 = vrot.slane %v549, 7
    %v552 = vshll.u32 %v295, 16
    %v554 = vor.u32 %v551, %v552
    %v555 = vsel %vm335, %v547, %v554
    %v556 = vrot.slane %v551, 4
    %v558 = vshrl.u32 %v296, 16
    %v560 = vrot.slane %v558, 7
    %v561 = vshll.u32 %v296, 16
    %v563 = vor.u32 %v560, %v561
    %v564 = vrot.slane %v560, 4
    %v566 = vshrl.u32 %v297, 16
    %v568 = vrot.slane %v566, 7
    %v569 = vshll.u32 %v297, 16
    %v571 = vor.u32 %v568, %v569
    %v572 = vsel %vm335, %v564, %v571
    %v573 = vrot.slane %v568, 4
    %v575 = vshrl.u32 %v298, 16
    %v577 = vrot.slane %v575, 7
    %v578 = vshll.u32 %v298, 16
    %v580 = vor.u32 %v577, %v578
    %v581 = vrot.slane %v577, 4
    %v583 = vshrl.u32 %v299, 16
    %v585 = vrot.slane %v583, 7
    %v586 = vshll.u32 %v299, 16
    %v588 = vor.u32 %v585, %v586
    %v589 = vsel %vm335, %v581, %v588
    %v590 = vrot.slane %v585, 4
    %v592 = vshrl.u32 %v300, 16
    %v594 = vrot.slane %v592, 7
    %v595 = vshll.u32 %v300, 16
    %v597 = vor.u32 %v594, %v595
    %v598 = vrot.slane %v594, 4
    %v600 = vshrl.u32 %v301, 16
    %v602 = vrot.slane %v600, 7
    %v603 = vshll.u32 %v301, 16
    %v605 = vor.u32 %v602, %v603
    %v606 = vsel %vm335, %v598, %v605
    %v607 = vrot.slane %v602, 4
    %v609 = vshrl.u32 %v302, 16
    %v611 = vrot.slane %v609, 7
    %v612 = vshll.u32 %v302, 16
    %v614 = vor.u32 %v611, %v612
    %v615 = vrot.slane %v611, 4
    %v617 = vshrl.u32 %v303, 16
    %v619 = vrot.slane %v617, 7
    %v620 = vshll.u32 %v303, 16
    %v622 = vor.u32 %v619, %v620
    %v623 = vsel %vm335, %v615, %v622
    %v624 = vrot.slane %v619, 4
    %v626 = vshrl.u32 %v304, 16
    %v628 = vrot.slane %v626, 7
    %v629 = vshll.u32 %v304, 16
    %v631 = vor.u32 %v628, %v629
    %v632 = vrot.slane %v628, 4
    %v634 = vshrl.u32 %v305, 16
    %v636 = vrot.slane %v634, 7
    %v637 = vshll.u32 %v305, 16
    %v639 = vor.u32 %v636, %v637
    %v640 = vsel %vm335, %v632, %v639
    %v641 = vrot.slane %v636, 4
    %v643 = vshrl.u32 %v306, 16
    %v645 = vrot.slane %v643, 7
    %v646 = vshll.u32 %v306, 16
    %v648 = vor.u32 %v645, %v646
    %v649 = vrot.slane %v645, 4
    %v651 = vshrl.u32 %v307, 16
    %v653 = vrot.slane %v651, 7
    %v654 = vshll.u32 %v307, 16
    %v656 = vor.u32 %v653, %v654
    %v657 = vsel %vm335, %v649, %v656
    %v658 = vrot.slane %v653, 4
    %v660 = vshrl.u32 %v308, 16
    %v662 = vrot.slane %v660, 7
    %v663 = vshll.u32 %v308, 16
    %v665 = vor.u32 %v662, %v663
    %v666 = vrot.slane %v662, 4
    %v668 = vshrl.u32 %v309, 16
    %v670 = vrot.slane %v668, 7
    %v671 = vshll.u32 %v309, 16
    %v673 = vor.u32 %v670, %v671
    %v674 = vsel %vm335, %v666, %v673
    %v675 = vrot.slane %v670, 4
    %v677 = vshrl.u32 %v310, 16
    %v679 = vrot.slane %v677, 7
    %v680 = vshll.u32 %v310, 16
    %v682 = vor.u32 %v679, %v680
    %v683 = vrot.slane %v679, 4
    %v685 = vshrl.u32 %v311, 16
    %v687 = vrot.slane %v685, 7
    %v688 = vshll.u32 %v311, 16
    %v690 = vor.u32 %v687, %v688
    %v691 = vsel %vm335, %v683, %v690
    %v692 = vrot.slane %v687, 4
    %v694 = vshrl.u32 %v312, 16
    %v696 = vrot.slane %v694, 7
    %v697 = vshll.u32 %v312, 16
    %v699 = vor.u32 %v696, %v697
    %v700 = vrot.slane %v696, 4
    %v702 = vshrl.u32 %v313, 16
    %v704 = vrot.slane %v702, 7
    %v705 = vshll.u32 %v313, 16
    %v707 = vor.u32 %v704, %v705
    %v708 = vsel %vm335, %v700, %v707
    %v709 = vrot.slane %v704, 4
    %v711 = vshrl.u32 %v314, 16
    %v713 = vrot.slane %v711, 7
    %v714 = vshll.u32 %v314, 16
    %v716 = vor.u32 %v713, %v714
    %v717 = vrot.slane %v713, 4
    %v719 = vshrl.u32 %v315, 16
    %v721 = vrot.slane %v719, 7
    %v722 = vshll.u32 %v315, 16
    %v724 = vor.u32 %v721, %v722
    %v725 = vsel %vm335, %v717, %v724
    %v726 = vrot.slane %v721, 4
    %v728 = vshrl.u32 %v316, 16
    %v730 = vrot.slane %v728, 7
    %v731 = vshll.u32 %v316, 16
    %v733 = vor.u32 %v730, %v731
    %v734 = vrot.slane %v730, 4
    %v736 = vshrl.u32 %v317, 16
    %v738 = vrot.slane %v736, 7
    %v739 = vshll.u32 %v317, 16
    %v741 = vor.u32 %v738, %v739
    %v742 = vsel %vm335, %v734, %v741
    %v743 = vrot.slane %v738, 4
    %v745 = vshrl.u32 %v318, 16
    %v747 = vrot.slane %v745, 7
    %v748 = vshll.u32 %v318, 16
    %v750 = vor.u32 %v747, %v748
    %v751 = vrot.slane %v747, 4
    %v753 = vshrl.u32 %v319, 16
    %v755 = vrot.slane %v753, 7
    %v756 = vshll.u32 %v319, 16
    %v758 = vor.u32 %v755, %v756
    %v759 = vsel %vm335, %v751, %v758
    %v760 = vrot.slane %v755, 4
    %v762 = vshrl.u32 %v320, 16
    %v764 = vrot.slane %v762, 7
    %v765 = vshll.u32 %v320, 16
    %v767 = vor.u32 %v764, %v765
    %v768 = vrot.slane %v764, 4
    %v770 = vshrl.u32 %v321, 16
    %v772 = vrot.slane %v770, 7
    %v773 = vshll.u32 %v321, 16
    %v775 = vor.u32 %v772, %v773
    %v776 = vsel %vm335, %v768, %v775
    %v777 = vrot.slane %v772, 4
    %v779 = vshrl.u32 %v322, 16
    %v781 = vrot.slane %v779, 7
    %v782 = vshll.u32 %v322, 16
    %v784 = vor.u32 %v781, %v782
    %v785 = vrot.slane %v781, 4
    %v787 = vshrl.u32 %v323, 16
    %v789 = vrot.slane %v787, 7
    %v790 = vshll.u32 %v323, 16
    %v792 = vor.u32 %v789, %v790
    %v793 = vsel %vm335, %v785, %v792
    %v794 = vrot.slane %v789, 4
    %v796 = vshrl.u32 %v324, 16
    %v798 = vrot.slane %v796, 7
    %v799 = vshll.u32 %v324, 16
    %v801 = vor.u32 %v798, %v799
    %v802 = vrot.slane %v798, 4
    %v804 = vshrl.u32 %v325, 16
    %v806 = vrot.slane %v804, 7
    %v807 = vshll.u32 %v325, 16
    %v809 = vor.u32 %v806, %v807
    %v810 = vsel %vm335, %v802, %v809
    %v811 = vrot.slane %v806, 4
    %v813 = vshrl.u32 %v326, 16
    %v815 = vrot.slane %v813, 7
    %v816 = vshll.u32 %v326, 16
    %v818 = vor.u32 %v815, %v816
    %v819 = vrot.slane %v815, 4
    %v821 = vshrl.u32 %v327, 16
    %v823 = vrot.slane %v821, 7
    %v824 = vshll.u32 %v327, 16
    %v826 = vor.u32 %v823, %v824
    %v827 = vsel %vm335, %v819, %v826
    %v828 = vrot.slane %v823, 4
    %v830 = vshrl.u32 %v328, 16
    %v832 = vrot.slane %v830, 7
    %v833 = vshll.u32 %v328, 16
    %v835 = vor.u32 %v832, %v833
    %v836 = vrot.slane %v832, 4
    %v838 = vshrl.u32 %v329, 16
    %v840 = vrot.slane %v838, 7
    %v841 = vshll.u32 %v329, 16
    %v843 = vor.u32 %v840, %v841
    %v844 = vsel %vm335, %v836, %v843
    %v845 = vrot.slane %v840, 4
    %v847 = vshrl.u32 %v330, 16
    %v849 = vrot.slane %v847, 7
    %v850 = vshll.u32 %v330, 16
    %v852 = vor.u32 %v849, %v850
    %v853 = vrot.slane %v849, 4
    %v855 = vshrl.u32 %v331, 16
    %v857 = vrot.slane %v855, 7
    %v858 = vshll.u32 %v331, 16
    %v860 = vor.u32 %v857, %v858
    %v861 = vsel %vm335, %v853, %v860
    %v862 = vrot.slane %v857, 4
    %v864 = vshrl.u32 %v332, 16
    %v866 = vrot.slane %v864, 7
    %v867 = vshll.u32 %v332, 16
    %v869 = vor.u32 %v866, %v867
    %v870 = vrot.slane %v866, 4
    %v872 = vshrl.u32 %v333, 16
    %v874 = vrot.slane %v872, 7
    %v875 = vshll.u32 %v333, 16
    %v877 = vor.u32 %v874, %v875
    %v878 = vsel %vm335, %v870, %v877
    %v879 = vrot.slane %v874, 4
    %s976 = scalar_lea.vmem [#allocation2], 12
    %vm977 = vcmask 19456
    %vm978 = vmand %vm977, %vm160
    %v979 = vld [vmem:[%s976] sm:$0xf]
    %v980 = vsel %vm978, %v342, %v979
    %981 = vst [vmem:[%s976] sm:$0xf] %v980
    %982 = vst.msk [vmem:[%s976 + $0x4] sm:$0xf] %vm34, %v351
    %v983 = vld [vmem:[%s976 + $0x8] sm:$0x1]
    %v984 = vsel %vm51, %v352, %v983
    %985 = vst [vmem:[%s976 + $0x8] sm:$0x1] %v984
    %v986 = vld [vmem:[%s976 + $0xc] sm:$0xf]
    %v987 = vsel %vm978, %v359, %v986
    %988 = vst [vmem:[%s976 + $0xc] sm:$0xf] %v987
    %989 = vst.msk [vmem:[%s976 + $0x10] sm:$0xf] %vm34, %v368
    %v990 = vld [vmem:[%s976 + $0x14] sm:$0x1]
    %v991 = vsel %vm51, %v369, %v990
    %992 = vst [vmem:[%s976 + $0x14] sm:$0x1] %v991
    %v993 = vld [vmem:[%s976 + $0x18] sm:$0xf]
    %v994 = vsel %vm978, %v376, %v993
    %995 = vst [vmem:[%s976 + $0x18] sm:$0xf] %v994
    %996 = vst.msk [vmem:[%s976 + $0x1c] sm:$0xf] %vm34, %v385
    %v997 = vld [vmem:[%s976 + $0x20] sm:$0x1]
    %v998 = vsel %vm51, %v386, %v997
    %999 = vst [vmem:[%s976 + $0x20] sm:$0x1] %v998
    %v1000 = vld [vmem:[%s976 + $0x24] sm:$0xf]
    %v1001 = vsel %vm978, %v393, %v1000
    %1002 = vst [vmem:[%s976 + $0x24] sm:$0xf] %v1001
    %1003 = vst.msk [vmem:[%s976 + $0x28] sm:$0xf] %vm34, %v402
    %v1004 = vld [vmem:[%s976 + $0x2c] sm:$0x1]
    %v1005 = vsel %vm51, %v403, %v1004
    %1006 = vst [vmem:[%s976 + $0x2c] sm:$0x1] %v1005
    %v1007 = vld [vmem:[%s976 + $0x30] sm:$0xf]
    %v1008 = vsel %vm978, %v410, %v1007
    %1009 = vst [vmem:[%s976 + $0x30] sm:$0xf] %v1008
    %1010 = vst.msk [vmem:[%s976 + $0x34] sm:$0xf] %vm34, %v419
    %v1011 = vld [vmem:[%s976 + $0x38] sm:$0x1]
    %v1012 = vsel %vm51, %v420, %v1011
    %1013 = vst [vmem:[%s976 + $0x38] sm:$0x1] %v1012
    %v1014 = vld [vmem:[%s976 + $0x3c] sm:$0xf]
    %v1015 = vsel %vm978, %v427, %v1014
    %1016 = vst [vmem:[%s976 + $0x3c] sm:$0xf] %v1015
    %1017 = vst.msk [vmem:[%s976 + $0x40] sm:$0xf] %vm34, %v436
    %v1018 = vld [vmem:[%s976 + $0x44] sm:$0x1]
    %v1019 = vsel %vm51, %v437, %v1018
    %1020 = vst [vmem:[%s976 + $0x44] sm:$0x1] %v1019
    %v1021 = vld [vmem:[%s976 + $0x48] sm:$0xf]
    %v1022 = vsel %vm978, %v444, %v1021
    %1023 = vst [vmem:[%s976 + $0x48] sm:$0xf] %v1022
    %1024 = vst.msk [vmem:[%s976 + $0x4c] sm:$0xf] %vm34, %v453
    %v1025 = vld [vmem:[%s976 + $0x50] sm:$0x1]
    %v1026 = vsel %vm51, %v454, %v1025
    %1027 = vst [vmem:[%s976 + $0x50] sm:$0x1] %v1026
    %v1028 = vld [vmem:[%s976 + $0x54] sm:$0xf]
    %v1029 = vsel %vm978, %v461, %v1028
    %1030 = vst [vmem:[%s976 + $0x54] sm:$0xf] %v1029
    %1031 = vst.msk [vmem:[%s976 + $0x58] sm:$0xf] %vm34, %v470
    %v1032 = vld [vmem:[%s976 + $0x5c] sm:$0x1]
    %v1033 = vsel %vm51, %v471, %v1032
    %1034 = vst [vmem:[%s976 + $0x5c] sm:$0x1] %v1033
    %v1035 = vld [vmem:[%s976 + $0x60] sm:$0xf]
    %v1036 = vsel %vm978, %v478, %v1035
    %1037 = vst [vmem:[%s976 + $0x60] sm:$0xf] %v1036
    %1038 = vst.msk [vmem:[%s976 + $0x64] sm:$0xf] %vm34, %v487
    %v1039 = vld [vmem:[%s976 + $0x68] sm:$0x1]
    %v1040 = vsel %vm51, %v488, %v1039
    %1041 = vst [vmem:[%s976 + $0x68] sm:$0x1] %v1040
    %v1042 = vld [vmem:[%s976 + $0x6c] sm:$0xf]
    %v1043 = vsel %vm978, %v495, %v1042
    %1044 = vst [vmem:[%s976 + $0x6c] sm:$0xf] %v1043
    %1045 = vst.msk [vmem:[%s976 + $0x70] sm:$0xf] %vm34, %v504
    %v1046 = vld [vmem:[%s976 + $0x74] sm:$0x1]
    %v1047 = vsel %vm51, %v505, %v1046
    %1048 = vst [vmem:[%s976 + $0x74] sm:$0x1] %v1047
    %v1049 = vld [vmem:[%s976 + $0x78] sm:$0xf]
    %v1050 = vsel %vm978, %v512, %v1049
    %1051 = vst [vmem:[%s976 + $0x78] sm:$0xf] %v1050
    %1052 = vst.msk [vmem:[%s976 + $0x7c] sm:$0xf] %vm34, %v521
    %v1053 = vld [vmem:[%s976 + $0x80] sm:$0x1]
    %v1054 = vsel %vm51, %v522, %v1053
    %1055 = vst [vmem:[%s976 + $0x80] sm:$0x1] %v1054
    %v1056 = vld [vmem:[%s976 + $0x84] sm:$0xf]
    %v1057 = vsel %vm978, %v529, %v1056
    %1058 = vst [vmem:[%s976 + $0x84] sm:$0xf] %v1057
    %1059 = vst.msk [vmem:[%s976 + $0x88] sm:$0xf] %vm34, %v538
    %v1060 = vld [vmem:[%s976 + $0x8c] sm:$0x1]
    %v1061 = vsel %vm51, %v539, %v1060
    %1062 = vst [vmem:[%s976 + $0x8c] sm:$0x1] %v1061
    %v1063 = vld [vmem:[%s976 + $0x90] sm:$0xf]
    %v1064 = vsel %vm978, %v546, %v1063
    %1065 = vst [vmem:[%s976 + $0x90] sm:$0xf] %v1064
    %1066 = vst.msk [vmem:[%s976 + $0x94] sm:$0xf] %vm34, %v555
    %v1067 = vld [vmem:[%s976 + $0x98] sm:$0x1]
    %v1068 = vsel %vm51, %v556, %v1067
    %1069 = vst [vmem:[%s976 + $0x98] sm:$0x1] %v1068
    %v1070 = vld [vmem:[%s976 + $0x9c] sm:$0xf]
    %v1071 = vsel %vm978, %v563, %v1070
    %1072 = vst [vmem:[%s976 + $0x9c] sm:$0xf] %v1071
    %1073 = vst.msk [vmem:[%s976 + $0xa0] sm:$0xf] %vm34, %v572
    %v1074 = vld [vmem:[%s976 + $0xa4] sm:$0x1]
    %v1075 = vsel %vm51, %v573, %v1074
    %1076 = vst [vmem:[%s976 + $0xa4] sm:$0x1] %v1075
    %v1077 = vld [vmem:[%s976 + $0xa8] sm:$0xf]
    %v1078 = vsel %vm978, %v580, %v1077
    %1079 = vst [vmem:[%s976 + $0xa8] sm:$0xf] %v1078
    %1080 = vst.msk [vmem:[%s976 + $0xac] sm:$0xf] %vm34, %v589
    %v1081 = vld [vmem:[%s976 + $0xb0] sm:$0x1]
    %v1082 = vsel %vm51, %v590, %v1081
    %1083 = vst [vmem:[%s976 + $0xb0] sm:$0x1] %v1082
    %v1084 = vld [vmem:[%s976 + $0xb4] sm:$0xf]
    %v1085 = vsel %vm978, %v597, %v1084
    %1086 = vst [vmem:[%s976 + $0xb4] sm:$0xf] %v1085
    %1087 = vst.msk [vmem:[%s976 + $0xb8] sm:$0xf] %vm34, %v606
    %v1088 = vld [vmem:[%s976 + $0xbc] sm:$0x1]
    %v1089 = vsel %vm51, %v607, %v1088
    %1090 = vst [vmem:[%s976 + $0xbc] sm:$0x1] %v1089
    %v1091 = vld [vmem:[%s976 + $0xd8] sm:$0xf]
    %v1092 = vsel %vm978, %v614, %v1091
    %1093 = vst [vmem:[%s976 + $0xd8] sm:$0xf] %v1092
    %1094 = vst.msk [vmem:[%s976 + $0xdc] sm:$0xf] %vm34, %v623
    %v1095 = vld [vmem:[%s976 + $0xe0] sm:$0x1]
    %v1096 = vsel %vm51, %v624, %v1095
    %1097 = vst [vmem:[%s976 + $0xe0] sm:$0x1] %v1096
    %v1098 = vld [vmem:[%s976 + $0xe4] sm:$0xf]
    %v1099 = vsel %vm978, %v631, %v1098
    %1100 = vst [vmem:[%s976 + $0xe4] sm:$0xf] %v1099
    %1101 = vst.msk [vmem:[%s976 + $0xe8] sm:$0xf] %vm34, %v640
    %v1102 = vld [vmem:[%s976 + $0xec] sm:$0x1]
    %v1103 = vsel %vm51, %v641, %v1102
    %1104 = vst [vmem:[%s976 + $0xec] sm:$0x1] %v1103
    %v1105 = vld [vmem:[%s976 + $0xf0] sm:$0xf]
    %v1106 = vsel %vm978, %v648, %v1105
    %1107 = vst [vmem:[%s976 + $0xf0] sm:$0xf] %v1106
    %1108 = vst.msk [vmem:[%s976 + $0xf4] sm:$0xf] %vm34, %v657
    %v1109 = vld [vmem:[%s976 + $0xf8] sm:$0x1]
    %v1110 = vsel %vm51, %v658, %v1109
    %1111 = vst [vmem:[%s976 + $0xf8] sm:$0x1] %v1110
    %v1112 = vld [vmem:[%s976 + $0xfc] sm:$0xf]
    %v1113 = vsel %vm978, %v665, %v1112
    %1114 = vst [vmem:[%s976 + $0xfc] sm:$0xf] %v1113
    %1115 = vst.msk [vmem:[%s976 + $0x100] sm:$0xf] %vm34, %v674
    %v1116 = vld [vmem:[%s976 + $0x104] sm:$0x1]
    %v1117 = vsel %vm51, %v675, %v1116
    %1118 = vst [vmem:[%s976 + $0x104] sm:$0x1] %v1117
    %v1119 = vld [vmem:[%s976 + $0x108] sm:$0xf]
    %v1120 = vsel %vm978, %v682, %v1119
    %1121 = vst [vmem:[%s976 + $0x108] sm:$0xf] %v1120
    %1122 = vst.msk [vmem:[%s976 + $0x10c] sm:$0xf] %vm34, %v691
    %v1123 = vld [vmem:[%s976 + $0x110] sm:$0x1]
    %v1124 = vsel %vm51, %v692, %v1123
    %1125 = vst [vmem:[%s976 + $0x110] sm:$0x1] %v1124
    %v1126 = vld [vmem:[%s976 + $0x114] sm:$0xf]
    %v1127 = vsel %vm978, %v699, %v1126
    %1128 = vst [vmem:[%s976 + $0x114] sm:$0xf] %v1127
    %1129 = vst.msk [vmem:[%s976 + $0x118] sm:$0xf] %vm34, %v708
    %v1130 = vld [vmem:[%s976 + $0x11c] sm:$0x1]
    %v1131 = vsel %vm51, %v709, %v1130
    %1132 = vst [vmem:[%s976 + $0x11c] sm:$0x1] %v1131
    %v1133 = vld [vmem:[%s976 + $0x120] sm:$0xf]
    %v1134 = vsel %vm978, %v716, %v1133
    %1135 = vst [vmem:[%s976 + $0x120] sm:$0xf] %v1134
    %1136 = vst.msk [vmem:[%s976 + $0x124] sm:$0xf] %vm34, %v725
    %v1137 = vld [vmem:[%s976 + $0x128] sm:$0x1]
    %v1138 = vsel %vm51, %v726, %v1137
    %1139 = vst [vmem:[%s976 + $0x128] sm:$0x1] %v1138
    %v1140 = vld [vmem:[%s976 + $0x12c] sm:$0xf]
    %v1141 = vsel %vm978, %v733, %v1140
    %1142 = vst [vmem:[%s976 + $0x12c] sm:$0xf] %v1141
    %1143 = vst.msk [vmem:[%s976 + $0x130] sm:$0xf] %vm34, %v742
    %v1144 = vld [vmem:[%s976 + $0x134] sm:$0x1]
    %v1145 = vsel %vm51, %v743, %v1144
    %1146 = vst [vmem:[%s976 + $0x134] sm:$0x1] %v1145
    %v1147 = vld [vmem:[%s976 + $0x138] sm:$0xf]
    %v1148 = vsel %vm978, %v750, %v1147
    %1149 = vst [vmem:[%s976 + $0x138] sm:$0xf] %v1148
    %1150 = vst.msk [vmem:[%s976 + $0x13c] sm:$0xf] %vm34, %v759
    %v1151 = vld [vmem:[%s976 + $0x140] sm:$0x1]
    %v1152 = vsel %vm51, %v760, %v1151
    %1153 = vst [vmem:[%s976 + $0x140] sm:$0x1] %v1152
    %v1154 = vld [vmem:[%s976 + $0x144] sm:$0xf]
    %v1155 = vsel %vm978, %v767, %v1154
    %1156 = vst [vmem:[%s976 + $0x144] sm:$0xf] %v1155
    %1157 = vst.msk [vmem:[%s976 + $0x148] sm:$0xf] %vm34, %v776
    %v1158 = vld [vmem:[%s976 + $0x14c] sm:$0x1]
    %v1159 = vsel %vm51, %v777, %v1158
    %1160 = vst [vmem:[%s976 + $0x14c] sm:$0x1] %v1159
    %v1161 = vld [vmem:[%s976 + $0x150] sm:$0xf]
    %v1162 = vsel %vm978, %v784, %v1161
    %1163 = vst [vmem:[%s976 + $0x150] sm:$0xf] %v1162
    %1164 = vst.msk [vmem:[%s976 + $0x154] sm:$0xf] %vm34, %v793
    %v1165 = vld [vmem:[%s976 + $0x158] sm:$0x1]
    %v1166 = vsel %vm51, %v794, %v1165
    %1167 = vst [vmem:[%s976 + $0x158] sm:$0x1] %v1166
    %v1168 = vld [vmem:[%s976 + $0x15c] sm:$0xf]
    %v1169 = vsel %vm978, %v801, %v1168
    %1170 = vst [vmem:[%s976 + $0x15c] sm:$0xf] %v1169
    %1171 = vst.msk [vmem:[%s976 + $0x160] sm:$0xf] %vm34, %v810
    %v1172 = vld [vmem:[%s976 + $0x164] sm:$0x1]
    %v1173 = vsel %vm51, %v811, %v1172
    %1174 = vst [vmem:[%s976 + $0x164] sm:$0x1] %v1173
    %v1175 = vld [vmem:[%s976 + $0x168] sm:$0xf]
    %v1176 = vsel %vm978, %v818, %v1175
    %1177 = vst [vmem:[%s976 + $0x168] sm:$0xf] %v1176
    %1178 = vst.msk [vmem:[%s976 + $0x16c] sm:$0xf] %vm34, %v827
    %v1179 = vld [vmem:[%s976 + $0x170] sm:$0x1]
    %v1180 = vsel %vm51, %v828, %v1179
    %1181 = vst [vmem:[%s976 + $0x170] sm:$0x1] %v1180
    %v1182 = vld [vmem:[%s976 + $0x174] sm:$0xf]
    %v1183 = vsel %vm978, %v835, %v1182
    %1184 = vst [vmem:[%s976 + $0x174] sm:$0xf] %v1183
    %1185 = vst.msk [vmem:[%s976 + $0x178] sm:$0xf] %vm34, %v844
    %v1186 = vld [vmem:[%s976 + $0x17c] sm:$0x1]
    %v1187 = vsel %vm51, %v845, %v1186
    %1188 = vst [vmem:[%s976 + $0x17c] sm:$0x1] %v1187
    %v1189 = vld [vmem:[%s976 + $0x180] sm:$0xf]
    %v1190 = vsel %vm978, %v852, %v1189
    %1191 = vst [vmem:[%s976 + $0x180] sm:$0xf] %v1190
    %1192 = vst.msk [vmem:[%s976 + $0x184] sm:$0xf] %vm34, %v861
    %v1193 = vld [vmem:[%s976 + $0x188] sm:$0x1]
    %v1194 = vsel %vm51, %v862, %v1193
    %1195 = vst [vmem:[%s976 + $0x188] sm:$0x1] %v1194
    %v1196 = vld [vmem:[%s976 + $0x18c] sm:$0xf]
    %v1197 = vsel %vm978, %v869, %v1196
    %1198 = vst [vmem:[%s976 + $0x18c] sm:$0xf] %v1197
    %1199 = vst.msk [vmem:[%s976 + $0x190] sm:$0xf] %vm34, %v878
    %v1200 = vld [vmem:[%s976 + $0x194] sm:$0x1]
    %v1201 = vsel %vm51, %v879, %v1200
    %1202 = vst [vmem:[%s976 + $0x194] sm:$0x1] %v1201
    %v1203 = vld [vmem:[#allocation2] sm:$0xf]
    %v1204 = vld [vmem:[#allocation2 + $0x4] sm:$0xf]
    %v1205 = vld [vmem:[#allocation2 + $0xc] sm:$0xf]
    %v1206 = vld [vmem:[#allocation2 + $0x10] sm:$0xf]
    %v1207 = vld [vmem:[#allocation2 + $0x18] sm:$0xf]
    %v1208 = vld [vmem:[#allocation2 + $0x1c] sm:$0xf]
    %v1209 = vld [vmem:[#allocation2 + $0x24] sm:$0xf]
    %v1210 = vld [vmem:[#allocation2 + $0x28] sm:$0xf]
    %v1211 = vld [vmem:[#allocation2 + $0x30] sm:$0xf]
    %v1212 = vld [vmem:[#allocation2 + $0x34] sm:$0xf]
    %v1213 = vld [vmem:[#allocation2 + $0x3c] sm:$0xf]
    %v1214 = vld [vmem:[#allocation2 + $0x40] sm:$0xf]
    %v1215 = vld [vmem:[#allocation2 + $0x48] sm:$0xf]
    %v1216 = vld [vmem:[#allocation2 + $0x4c] sm:$0xf]
    %v1217 = vld [vmem:[#allocation2 + $0x54] sm:$0xf]
    %v1218 = vld [vmem:[#allocation2 + $0x58] sm:$0xf]
    %v1219 = vld [vmem:[#allocation2 + $0x60] sm:$0xf]
    %v1220 = vld [vmem:[#allocation2 + $0x64] sm:$0xf]
    %v1221 = vld [vmem:[#allocation2 + $0x6c] sm:$0xf]
    %v1222 = vld [vmem:[#allocation2 + $0x70] sm:$0xf]
    %v1223 = vld [vmem:[#allocation2 + $0x78] sm:$0xf]
    %v1224 = vld [vmem:[#allocation2 + $0x7c] sm:$0xf]
    %v1225 = vld [vmem:[#allocation2 + $0x84] sm:$0xf]
    %v1226 = vld [vmem:[#allocation2 + $0x88] sm:$0xf]
    %v1227 = vld [vmem:[#allocation2 + $0x90] sm:$0xf]
    %v1228 = vld [vmem:[#allocation2 + $0x94] sm:$0xf]
    %v1229 = vld [vmem:[#allocation2 + $0x9c] sm:$0xf]
    %v1230 = vld [vmem:[#allocation2 + $0xa0] sm:$0xf]
    %v1231 = vld [vmem:[#allocation2 + $0xa8] sm:$0xf]
    %v1232 = vld [vmem:[#allocation2 + $0xac] sm:$0xf]
    %v1233 = vld [vmem:[#allocation2 + $0xb4] sm:$0xf]
    %v1234 = vld [vmem:[#allocation2 + $0xb8] sm:$0xf]
    %v1235 = vld [vmem:[#allocation2 + $0xd8] sm:$0xf]
    %v1236 = vld [vmem:[#allocation2 + $0xdc] sm:$0xf]
    %v1237 = vld [vmem:[#allocation2 + $0xe4] sm:$0xf]
    %v1238 = vld [vmem:[#allocation2 + $0xe8] sm:$0xf]
    %v1239 = vld [vmem:[#allocation2 + $0xf0] sm:$0xf]
    %v1240 = vld [vmem:[#allocation2 + $0xf4] sm:$0xf]
    %v1241 = vld [vmem:[#allocation2 + $0xfc] sm:$0xf]
    %v1242 = vld [vmem:[#allocation2 + $0x100] sm:$0xf]
    %v1243 = vld [vmem:[#allocation2 + $0x108] sm:$0xf]
    %v1244 = vld [vmem:[#allocation2 + $0x10c] sm:$0xf]
    %v1245 = vld [vmem:[#allocation2 + $0x114] sm:$0xf]
    %v1246 = vld [vmem:[#allocation2 + $0x118] sm:$0xf]
    %v1247 = vld [vmem:[#allocation2 + $0x120] sm:$0xf]
    %v1248 = vld [vmem:[#allocation2 + $0x124] sm:$0xf]
    %v1249 = vld [vmem:[#allocation2 + $0x12c] sm:$0xf]
    %v1250 = vld [vmem:[#allocation2 + $0x130] sm:$0xf]
    %v1251 = vld [vmem:[#allocation2 + $0x138] sm:$0xf]
    %v1252 = vld [vmem:[#allocation2 + $0x13c] sm:$0xf]
    %v1253 = vld [vmem:[#allocation2 + $0x144] sm:$0xf]
    %v1254 = vld [vmem:[#allocation2 + $0x148] sm:$0xf]
    %v1255 = vld [vmem:[#allocation2 + $0x150] sm:$0xf]
    %v1256 = vld [vmem:[#allocation2 + $0x154] sm:$0xf]
    %v1257 = vld [vmem:[#allocation2 + $0x15c] sm:$0xf]
    %v1258 = vld [vmem:[#allocation2 + $0x160] sm:$0xf]
    %v1259 = vld [vmem:[#allocation2 + $0x168] sm:$0xf]
    %v1260 = vld [vmem:[#allocation2 + $0x16c] sm:$0xf]
    %v1261 = vld [vmem:[#allocation2 + $0x174] sm:$0xf]
    %v1262 = vld [vmem:[#allocation2 + $0x178] sm:$0xf]
    %v1263 = vld [vmem:[#allocation2 + $0x180] sm:$0xf]
    %v1264 = vld [vmem:[#allocation2 + $0x184] sm:$0xf]
    %v1265 = vld [vmem:[#allocation2 + $0x18c] sm:$0xf]
    %v1266 = vld [vmem:[#allocation2 + $0x190] sm:$0xf]
    %v1267 = vld [vmem:[#allocation2 + $0x8] sm:$0x1]
    %v1268 = vld [vmem:[#allocation2 + $0x14] sm:$0x1]
    %v1269 = vld [vmem:[#allocation2 + $0x20] sm:$0x1]
    %v1270 = vld [vmem:[#allocation2 + $0x2c] sm:$0x1]
    %v1271 = vld [vmem:[#allocation2 + $0x38] sm:$0x1]
    %v1272 = vld [vmem:[#allocation2 + $0x44] sm:$0x1]
    %v1273 = vld [vmem:[#allocation2 + $0x50] sm:$0x1]
    %v1274 = vld [vmem:[#allocation2 + $0x5c] sm:$0x1]
    %v1275 = vld [vmem:[#allocation2 + $0x68] sm:$0x1]
    %v1276 = vld [vmem:[#allocation2 + $0x74] sm:$0x1]
    %v1277 = vld [vmem:[#allocation2 + $0x80] sm:$0x1]
    %v1278 = vld [vmem:[#allocation2 + $0x8c] sm:$0x1]
    %v1279 = vld [vmem:[#allocation2 + $0x98] sm:$0x1]
    %v1280 = vld [vmem:[#allocation2 + $0xa4] sm:$0x1]
    %v1281 = vld [vmem:[#allocation2 + $0xb0] sm:$0x1]
    %v1282 = vld [vmem:[#allocation2 + $0xbc] sm:$0x1]
    %v1283 = vld [vmem:[#allocation2 + $0xe0] sm:$0x1]
    %v1284 = vld [vmem:[#allocation2 + $0xec] sm:$0x1]
    %v1285 = vld [vmem:[#allocation2 + $0xf8] sm:$0x1]
    %v1286 = vld [vmem:[#allocation2 + $0x104] sm:$0x1]
    %v1287 = vld [vmem:[#allocation2 + $0x110] sm:$0x1]
    %v1288 = vld [vmem:[#allocation2 + $0x11c] sm:$0x1]
    %v1289 = vld [vmem:[#allocation2 + $0x128] sm:$0x1]
    %v1290 = vld [vmem:[#allocation2 + $0x134] sm:$0x1]
    %v1291 = vld [vmem:[#allocation2 + $0x140] sm:$0x1]
    %v1292 = vld [vmem:[#allocation2 + $0x14c] sm:$0x1]
    %v1293 = vld [vmem:[#allocation2 + $0x158] sm:$0x1]
    %v1294 = vld [vmem:[#allocation2 + $0x164] sm:$0x1]
    %v1295 = vld [vmem:[#allocation2 + $0x170] sm:$0x1]
    %v1296 = vld [vmem:[#allocation2 + $0x17c] sm:$0x1]
    %v1297 = vld [vmem:[#allocation2 + $0x188] sm:$0x1]
    %v1298 = vld [vmem:[#allocation2 + $0x194] sm:$0x1]
    %vm1299 = vsmask.f32 3328
    %vm1300 = vsmask.f32 7440
    %vm1301 = vmor %vm1299, %vm1300
    %v1303 = vshrl.u32 %v1203, 16
    %v1305 = vrot.slane %v1303, 4
    %v1306 = vshll.u32 %v1203, 16
    %v1308 = vrot.slane %v1306, 5
    %v1309 = vor.u32 %v1305, %v1308
    %v1310 = vrot.slane %v1309, 4
    %v1312 = vshll.u32 %v1204, 16
    %v1314 = vrot.slane %v1312, 5
    %v1315 = vsel %vm1301, %v1310, %v1314
    %v1316 = vshrl.u32 %v1204, 16
    %v1318 = vrot.slane %v1316, 4
    %v1319 = vor.u32 %v1318, %v1314
    %v1320 = vrot.slane %v1319, 4
    %v1322 = vshll.u32 %v1267, 16
    %v1324 = vrot.slane %v1322, 5
    %v1325 = vsel %vm1301, %v1320, %v1324
    %v1327 = vshrl.u32 %v1205, 16
    %v1329 = vrot.slane %v1327, 4
    %v1330 = vshll.u32 %v1205, 16
    %v1332 = vrot.slane %v1330, 5
    %v1333 = vor.u32 %v1329, %v1332
    %v1334 = vrot.slane %v1333, 4
    %v1336 = vshll.u32 %v1206, 16
    %v1338 = vrot.slane %v1336, 5
    %v1339 = vsel %vm1301, %v1334, %v1338
    %v1340 = vshrl.u32 %v1206, 16
    %v1342 = vrot.slane %v1340, 4
    %v1343 = vor.u32 %v1342, %v1338
    %v1344 = vrot.slane %v1343, 4
    %v1346 = vshll.u32 %v1268, 16
    %v1348 = vrot.slane %v1346, 5
    %v1349 = vsel %vm1301, %v1344, %v1348
    %v1351 = vshrl.u32 %v1207, 16
    %v1353 = vrot.slane %v1351, 4
    %v1354 = vshll.u32 %v1207, 16
    %v1356 = vrot.slane %v1354, 5
    %v1357 = vor.u32 %v1353, %v1356
    %v1358 = vrot.slane %v1357, 4
    %v1360 = vshll.u32 %v1208, 16
    %v1362 = vrot.slane %v1360, 5
    %v1363 = vsel %vm1301, %v1358, %v1362
    %v1364 = vshrl.u32 %v1208, 16
    %v1366 = vrot.slane %v1364, 4
    %v1367 = vor.u32 %v1366, %v1362
    %v1368 = vrot.slane %v1367, 4
    %v1370 = vshll.u32 %v1269, 16
    %v1372 = vrot.slane %v1370, 5
    %v1373 = vsel %vm1301, %v1368, %v1372
    %v1375 = vshrl.u32 %v1209, 16
    %v1377 = vrot.slane %v1375, 4
    %v1378 = vshll.u32 %v1209, 16
    %v1380 = vrot.slane %v1378, 5
    %v1381 = vor.u32 %v1377, %v1380
    %v1382 = vrot.slane %v1381, 4
    %v1384 = vshll.u32 %v1210, 16
    %v1386 = vrot.slane %v1384, 5
    %v1387 = vsel %vm1301, %v1382, %v1386
    %v1388 = vshrl.u32 %v1210, 16
    %v1390 = vrot.slane %v1388, 4
    %v1391 = vor.u32 %v1390, %v1386
    %v1392 = vrot.slane %v1391, 4
    %v1394 = vshll.u32 %v1270, 16
    %v1396 = vrot.slane %v1394, 5
    %v1397 = vsel %vm1301, %v1392, %v1396
    %v1399 = vshrl.u32 %v1211, 16
    %v1401 = vrot.slane %v1399, 4
    %v1402 = vshll.u32 %v1211, 16
    %v1404 = vrot.slane %v1402, 5
    %v1405 = vor.u32 %v1401, %v1404
    %v1406 = vrot.slane %v1405, 4
    %v1408 = vshll.u32 %v1212, 16
    %v1410 = vrot.slane %v1408, 5
    %v1411 = vsel %vm1301, %v1406, %v1410
    %v1412 = vshrl.u32 %v1212, 16
    %v1414 = vrot.slane %v1412, 4
    %v1415 = vor.u32 %v1414, %v1410
    %v1416 = vrot.slane %v1415, 4
    %v1418 = vshll.u32 %v1271, 16
    %v1420 = vrot.slane %v1418, 5
    %v1421 = vsel %vm1301, %v1416, %v1420
    %v1423 = vshrl.u32 %v1213, 16
    %v1425 = vrot.slane %v1423, 4
    %v1426 = vshll.u32 %v1213, 16
    %v1428 = vrot.slane %v1426, 5
    %v1429 = vor.u32 %v1425, %v1428
    %v1430 = vrot.slane %v1429, 4
    %v1432 = vshll.u32 %v1214, 16
    %v1434 = vrot.slane %v1432, 5
    %v1435 = vsel %vm1301, %v1430, %v1434
    %v1436 = vshrl.u32 %v1214, 16
    %v1438 = vrot.slane %v1436, 4
    %v1439 = vor.u32 %v1438, %v1434
    %v1440 = vrot.slane %v1439, 4
    %v1442 = vshll.u32 %v1272, 16
    %v1444 = vrot.slane %v1442, 5
    %v1445 = vsel %vm1301, %v1440, %v1444
    %v1447 = vshrl.u32 %v1215, 16
    %v1449 = vrot.slane %v1447, 4
    %v1450 = vshll.u32 %v1215, 16
    %v1452 = vrot.slane %v1450, 5
    %v1453 = vor.u32 %v1449, %v1452
    %v1454 = vrot.slane %v1453, 4
    %v1456 = vshll.u32 %v1216, 16
    %v1458 = vrot.slane %v1456, 5
    %v1459 = vsel %vm1301, %v1454, %v1458
    %v1460 = vshrl.u32 %v1216, 16
    %v1462 = vrot.slane %v1460, 4
    %v1463 = vor.u32 %v1462, %v1458
    %v1464 = vrot.slane %v1463, 4
    %v1466 = vshll.u32 %v1273, 16
    %v1468 = vrot.slane %v1466, 5
    %v1469 = vsel %vm1301, %v1464, %v1468
    %v1471 = vshrl.u32 %v1217, 16
    %v1473 = vrot.slane %v1471, 4
    %v1474 = vshll.u32 %v1217, 16
    %v1476 = vrot.slane %v1474, 5
    %v1477 = vor.u32 %v1473, %v1476
    %v1478 = vrot.slane %v1477, 4
    %v1480 = vshll.u32 %v1218, 16
    %v1482 = vrot.slane %v1480, 5
    %v1483 = vsel %vm1301, %v1478, %v1482
    %v1484 = vshrl.u32 %v1218, 16
    %v1486 = vrot.slane %v1484, 4
    %v1487 = vor.u32 %v1486, %v1482
    %v1488 = vrot.slane %v1487, 4
    %v1490 = vshll.u32 %v1274, 16
    %v1492 = vrot.slane %v1490, 5
    %v1493 = vsel %vm1301, %v1488, %v1492
    %v1495 = vshrl.u32 %v1219, 16
    %v1497 = vrot.slane %v1495, 4
    %v1498 = vshll.u32 %v1219, 16
    %v1500 = vrot.slane %v1498, 5
    %v1501 = vor.u32 %v1497, %v1500
    %v1502 = vrot.slane %v1501, 4
    %v1504 = vshll.u32 %v1220, 16
    %v1506 = vrot.slane %v1504, 5
    %v1507 = vsel %vm1301, %v1502, %v1506
    %v1508 = vshrl.u32 %v1220, 16
    %v1510 = vrot.slane %v1508, 4
    %v1511 = vor.u32 %v1510, %v1506
    %v1512 = vrot.slane %v1511, 4
    %v1514 = vshll.u32 %v1275, 16
    %v1516 = vrot.slane %v1514, 5
    %v1517 = vsel %vm1301, %v1512, %v1516
    %v1519 = vshrl.u32 %v1221, 16
    %v1521 = vrot.slane %v1519, 4
    %v1522 = vshll.u32 %v1221, 16
    %v1524 = vrot.slane %v1522, 5
    %v1525 = vor.u32 %v1521, %v1524
    %v1526 = vrot.slane %v1525, 4
    %v1528 = vshll.u32 %v1222, 16
    %v1530 = vrot.slane %v1528, 5
    %v1531 = vsel %vm1301, %v1526, %v1530
    %v1532 = vshrl.u32 %v1222, 16
    %v1534 = vrot.slane %v1532, 4
    %v1535 = vor.u32 %v1534, %v1530
    %v1536 = vrot.slane %v1535, 4
    %v1538 = vshll.u32 %v1276, 16
    %v1540 = vrot.slane %v1538, 5
    %v1541 = vsel %vm1301, %v1536, %v1540
    %v1543 = vshrl.u32 %v1223, 16
    %v1545 = vrot.slane %v1543, 4
    %v1546 = vshll.u32 %v1223, 16
    %v1548 = vrot.slane %v1546, 5
    %v1549 = vor.u32 %v1545, %v1548
    %v1550 = vrot.slane %v1549, 4
    %v1552 = vshll.u32 %v1224, 16
    %v1554 = vrot.slane %v1552, 5
    %v1555 = vsel %vm1301, %v1550, %v1554
    %v1556 = vshrl.u32 %v1224, 16
    %v1558 = vrot.slane %v1556, 4
    %v1559 = vor.u32 %v1558, %v1554
    %v1560 = vrot.slane %v1559, 4
    %v1562 = vshll.u32 %v1277, 16
    %v1564 = vrot.slane %v1562, 5
    %v1565 = vsel %vm1301, %v1560, %v1564
    %v1567 = vshrl.u32 %v1225, 16
    %v1569 = vrot.slane %v1567, 4
    %v1570 = vshll.u32 %v1225, 16
    %v1572 = vrot.slane %v1570, 5
    %v1573 = vor.u32 %v1569, %v1572
    %v1574 = vrot.slane %v1573, 4
    %v1576 = vshll.u32 %v1226, 16
    %v1578 = vrot.slane %v1576, 5
    %v1579 = vsel %vm1301, %v1574, %v1578
    %v1580 = vshrl.u32 %v1226, 16
    %v1582 = vrot.slane %v1580, 4
    %v1583 = vor.u32 %v1582, %v1578
    %v1584 = vrot.slane %v1583, 4
    %v1586 = vshll.u32 %v1278, 16
    %v1588 = vrot.slane %v1586, 5
    %v1589 = vsel %vm1301, %v1584, %v1588
    %v1591 = vshrl.u32 %v1227, 16
    %v1593 = vrot.slane %v1591, 4
    %v1594 = vshll.u32 %v1227, 16
    %v1596 = vrot.slane %v1594, 5
    %v1597 = vor.u32 %v1593, %v1596
    %v1598 = vrot.slane %v1597, 4
    %v1600 = vshll.u32 %v1228, 16
    %v1602 = vrot.slane %v1600, 5
    %v1603 = vsel %vm1301, %v1598, %v1602
    %v1604 = vshrl.u32 %v1228, 16
    %v1606 = vrot.slane %v1604, 4
    %v1607 = vor.u32 %v1606, %v1602
    %v1608 = vrot.slane %v1607, 4
    %v1610 = vshll.u32 %v1279, 16
    %v1612 = vrot.slane %v1610, 5
    %v1613 = vsel %vm1301, %v1608, %v1612
    %v1615 = vshrl.u32 %v1229, 16
    %v1617 = vrot.slane %v1615, 4
    %v1618 = vshll.u32 %v1229, 16
    %v1620 = vrot.slane %v1618, 5
    %v1621 = vor.u32 %v1617, %v1620
    %v1622 = vrot.slane %v1621, 4
    %v1624 = vshll.u32 %v1230, 16
    %v1626 = vrot.slane %v1624, 5
    %v1627 = vsel %vm1301, %v1622, %v1626
    %v1628 = vshrl.u32 %v1230, 16
    %v1630 = vrot.slane %v1628, 4
    %v1631 = vor.u32 %v1630, %v1626
    %v1632 = vrot.slane %v1631, 4
    %v1634 = vshll.u32 %v1280, 16
    %v1636 = vrot.slane %v1634, 5
    %v1637 = vsel %vm1301, %v1632, %v1636
    %v1639 = vshrl.u32 %v1231, 16
    %v1641 = vrot.slane %v1639, 4
    %v1642 = vshll.u32 %v1231, 16
    %v1644 = vrot.slane %v1642, 5
    %v1645 = vor.u32 %v1641, %v1644
    %v1646 = vrot.slane %v1645, 4
    %v1648 = vshll.u32 %v1232, 16
    %v1650 = vrot.slane %v1648, 5
    %v1651 = vsel %vm1301, %v1646, %v1650
    %v1652 = vshrl.u32 %v1232, 16
    %v1654 = vrot.slane %v1652, 4
    %v1655 = vor.u32 %v1654, %v1650
    %v1656 = vrot.slane %v1655, 4
    %v1658 = vshll.u32 %v1281, 16
    %v1660 = vrot.slane %v1658, 5
    %v1661 = vsel %vm1301, %v1656, %v1660
    %v1663 = vshrl.u32 %v1233, 16
    %v1665 = vrot.slane %v1663, 4
    %v1666 = vshll.u32 %v1233, 16
    %v1668 = vrot.slane %v1666, 5
    %v1669 = vor.u32 %v1665, %v1668
    %v1670 = vrot.slane %v1669, 4
    %v1672 = vshll.u32 %v1234, 16
    %v1674 = vrot.slane %v1672, 5
    %v1675 = vsel %vm1301, %v1670, %v1674
    %v1676 = vshrl.u32 %v1234, 16
    %v1678 = vrot.slane %v1676, 4
    %v1679 = vor.u32 %v1678, %v1674
    %v1680 = vrot.slane %v1679, 4
    %v1682 = vshll.u32 %v1282, 16
    %v1684 = vrot.slane %v1682, 5
    %v1685 = vsel %vm1301, %v1680, %v1684
    %v1687 = vshrl.u32 %v1235, 16
    %v1689 = vrot.slane %v1687, 4
    %v1690 = vshll.u32 %v1235, 16
    %v1692 = vrot.slane %v1690, 5
    %v1693 = vor.u32 %v1689, %v1692
    %v1694 = vrot.slane %v1693, 4
    %v1696 = vshll.u32 %v1236, 16
    %v1698 = vrot.slane %v1696, 5
    %v1699 = vsel %vm1301, %v1694, %v1698
    %v1700 = vshrl.u32 %v1236, 16
    %v1702 = vrot.slane %v1700, 4
    %v1703 = vor.u32 %v1702, %v1698
    %v1704 = vrot.slane %v1703, 4
    %v1706 = vshll.u32 %v1283, 16
    %v1708 = vrot.slane %v1706, 5
    %v1709 = vsel %vm1301, %v1704, %v1708
    %v1711 = vshrl.u32 %v1237, 16
    %v1713 = vrot.slane %v1711, 4
    %v1714 = vshll.u32 %v1237, 16
    %v1716 = vrot.slane %v1714, 5
    %v1717 = vor.u32 %v1713, %v1716
    %v1718 = vrot.slane %v1717, 4
    %v1720 = vshll.u32 %v1238, 16
    %v1722 = vrot.slane %v1720, 5
    %v1723 = vsel %vm1301, %v1718, %v1722
    %v1724 = vshrl.u32 %v1238, 16
    %v1726 = vrot.slane %v1724, 4
    %v1727 = vor.u32 %v1726, %v1722
    %v1728 = vrot.slane %v1727, 4
    %v1730 = vshll.u32 %v1284, 16
    %v1732 = vrot.slane %v1730, 5
    %v1733 = vsel %vm1301, %v1728, %v1732
    %v1735 = vshrl.u32 %v1239, 16
    %v1737 = vrot.slane %v1735, 4
    %v1738 = vshll.u32 %v1239, 16
    %v1740 = vrot.slane %v1738, 5
    %v1741 = vor.u32 %v1737, %v1740
    %v1742 = vrot.slane %v1741, 4
    %v1744 = vshll.u32 %v1240, 16
    %v1746 = vrot.slane %v1744, 5
    %v1747 = vsel %vm1301, %v1742, %v1746
    %v1748 = vshrl.u32 %v1240, 16
    %v1750 = vrot.slane %v1748, 4
    %v1751 = vor.u32 %v1750, %v1746
    %v1752 = vrot.slane %v1751, 4
    %v1754 = vshll.u32 %v1285, 16
    %v1756 = vrot.slane %v1754, 5
    %v1757 = vsel %vm1301, %v1752, %v1756
    %v1759 = vshrl.u32 %v1241, 16
    %v1761 = vrot.slane %v1759, 4
    %v1762 = vshll.u32 %v1241, 16
    %v1764 = vrot.slane %v1762, 5
    %v1765 = vor.u32 %v1761, %v1764
    %v1766 = vrot.slane %v1765, 4
    %v1768 = vshll.u32 %v1242, 16
    %v1770 = vrot.slane %v1768, 5
    %v1771 = vsel %vm1301, %v1766, %v1770
    %v1772 = vshrl.u32 %v1242, 16
    %v1774 = vrot.slane %v1772, 4
    %v1775 = vor.u32 %v1774, %v1770
    %v1776 = vrot.slane %v1775, 4
    %v1778 = vshll.u32 %v1286, 16
    %v1780 = vrot.slane %v1778, 5
    %v1781 = vsel %vm1301, %v1776, %v1780
    %v1783 = vshrl.u32 %v1243, 16
    %v1785 = vrot.slane %v1783, 4
    %v1786 = vshll.u32 %v1243, 16
    %v1788 = vrot.slane %v1786, 5
    %v1789 = vor.u32 %v1785, %v1788
    %v1790 = vrot.slane %v1789, 4
    %v1792 = vshll.u32 %v1244, 16
    %v1794 = vrot.slane %v1792, 5
    %v1795 = vsel %vm1301, %v1790, %v1794
    %v1796 = vshrl.u32 %v1244, 16
    %v1798 = vrot.slane %v1796, 4
    %v1799 = vor.u32 %v1798, %v1794
    %v1800 = vrot.slane %v1799, 4
    %v1802 = vshll.u32 %v1287, 16
    %v1804 = vrot.slane %v1802, 5
    %v1805 = vsel %vm1301, %v1800, %v1804
    %v1807 = vshrl.u32 %v1245, 16
    %v1809 = vrot.slane %v1807, 4
    %v1810 = vshll.u32 %v1245, 16
    %v1812 = vrot.slane %v1810, 5
    %v1813 = vor.u32 %v1809, %v1812
    %v1814 = vrot.slane %v1813, 4
    %v1816 = vshll.u32 %v1246, 16
    %v1818 = vrot.slane %v1816, 5
    %v1819 = vsel %vm1301, %v1814, %v1818
    %v1820 = vshrl.u32 %v1246, 16
    %v1822 = vrot.slane %v1820, 4
    %v1823 = vor.u32 %v1822, %v1818
    %v1824 = vrot.slane %v1823, 4
    %v1826 = vshll.u32 %v1288, 16
    %v1828 = vrot.slane %v1826, 5
    %v1829 = vsel %vm1301, %v1824, %v1828
    %v1831 = vshrl.u32 %v1247, 16
    %v1833 = vrot.slane %v1831, 4
    %v1834 = vshll.u32 %v1247, 16
    %v1836 = vrot.slane %v1834, 5
    %v1837 = vor.u32 %v1833, %v1836
    %v1838 = vrot.slane %v1837, 4
    %v1840 = vshll.u32 %v1248, 16
    %v1842 = vrot.slane %v1840, 5
    %v1843 = vsel %vm1301, %v1838, %v1842
    %v1844 = vshrl.u32 %v1248, 16
    %v1846 = vrot.slane %v1844, 4
    %v1847 = vor.u32 %v1846, %v1842
    %v1848 = vrot.slane %v1847, 4
    %v1850 = vshll.u32 %v1289, 16
    %v1852 = vrot.slane %v1850, 5
    %v1853 = vsel %vm1301, %v1848, %v1852
    %v1855 = vshrl.u32 %v1249, 16
    %v1857 = vrot.slane %v1855, 4
    %v1858 = vshll.u32 %v1249, 16
    %v1860 = vrot.slane %v1858, 5
    %v1861 = vor.u32 %v1857, %v1860
    %v1862 = vrot.slane %v1861, 4
    %v1864 = vshll.u32 %v1250, 16
    %v1866 = vrot.slane %v1864, 5
    %v1867 = vsel %vm1301, %v1862, %v1866
    %v1868 = vshrl.u32 %v1250, 16
    %v1870 = vrot.slane %v1868, 4
    %v1871 = vor.u32 %v1870, %v1866
    %v1872 = vrot.slane %v1871, 4
    %v1874 = vshll.u32 %v1290, 16
    %v1876 = vrot.slane %v1874, 5
    %v1877 = vsel %vm1301, %v1872, %v1876
    %v1879 = vshrl.u32 %v1251, 16
    %v1881 = vrot.slane %v1879, 4
    %v1882 = vshll.u32 %v1251, 16
    %v1884 = vrot.slane %v1882, 5
    %v1885 = vor.u32 %v1881, %v1884
    %v1886 = vrot.slane %v1885, 4
    %v1888 = vshll.u32 %v1252, 16
    %v1890 = vrot.slane %v1888, 5
    %v1891 = vsel %vm1301, %v1886, %v1890
    %v1892 = vshrl.u32 %v1252, 16
    %v1894 = vrot.slane %v1892, 4
    %v1895 = vor.u32 %v1894, %v1890
    %v1896 = vrot.slane %v1895, 4
    %v1898 = vshll.u32 %v1291, 16
    %v1900 = vrot.slane %v1898, 5
    %v1901 = vsel %vm1301, %v1896, %v1900
    %v1903 = vshrl.u32 %v1253, 16
    %v1905 = vrot.slane %v1903, 4
    %v1906 = vshll.u32 %v1253, 16
    %v1908 = vrot.slane %v1906, 5
    %v1909 = vor.u32 %v1905, %v1908
    %v1910 = vrot.slane %v1909, 4
    %v1912 = vshll.u32 %v1254, 16
    %v1914 = vrot.slane %v1912, 5
    %v1915 = vsel %vm1301, %v1910, %v1914
    %v1916 = vshrl.u32 %v1254, 16
    %v1918 = vrot.slane %v1916, 4
    %v1919 = vor.u32 %v1918, %v1914
    %v1920 = vrot.slane %v1919, 4
    %v1922 = vshll.u32 %v1292, 16
    %v1924 = vrot.slane %v1922, 5
    %v1925 = vsel %vm1301, %v1920, %v1924
    %v1927 = vshrl.u32 %v1255, 16
    %v1929 = vrot.slane %v1927, 4
    %v1930 = vshll.u32 %v1255, 16
    %v1932 = vrot.slane %v1930, 5
    %v1933 = vor.u32 %v1929, %v1932
    %v1934 = vrot.slane %v1933, 4
    %v1936 = vshll.u32 %v1256, 16
    %v1938 = vrot.slane %v1936, 5
    %v1939 = vsel %vm1301, %v1934, %v1938
    %v1940 = vshrl.u32 %v1256, 16
    %v1942 = vrot.slane %v1940, 4
    %v1943 = vor.u32 %v1942, %v1938
    %v1944 = vrot.slane %v1943, 4
    %v1946 = vshll.u32 %v1293, 16
    %v1948 = vrot.slane %v1946, 5
    %v1949 = vsel %vm1301, %v1944, %v1948
    %v1951 = vshrl.u32 %v1257, 16
    %v1953 = vrot.slane %v1951, 4
    %v1954 = vshll.u32 %v1257, 16
    %v1956 = vrot.slane %v1954, 5
    %v1957 = vor.u32 %v1953, %v1956
    %v1958 = vrot.slane %v1957, 4
    %v1960 = vshll.u32 %v1258, 16
    %v1962 = vrot.slane %v1960, 5
    %v1963 = vsel %vm1301, %v1958, %v1962
    %v1964 = vshrl.u32 %v1258, 16
    %v1966 = vrot.slane %v1964, 4
    %v1967 = vor.u32 %v1966, %v1962
    %v1968 = vrot.slane %v1967, 4
    %v1970 = vshll.u32 %v1294, 16
    %v1972 = vrot.slane %v1970, 5
    %v1973 = vsel %vm1301, %v1968, %v1972
    %v1975 = vshrl.u32 %v1259, 16
    %v1977 = vrot.slane %v1975, 4
    %v1978 = vshll.u32 %v1259, 16
    %v1980 = vrot.slane %v1978, 5
    %v1981 = vor.u32 %v1977, %v1980
    %v1982 = vrot.slane %v1981, 4
    %v1984 = vshll.u32 %v1260, 16
    %v1986 = vrot.slane %v1984, 5
    %v1987 = vsel %vm1301, %v1982, %v1986
    %v1988 = vshrl.u32 %v1260, 16
    %v1990 = vrot.slane %v1988, 4
    %v1991 = vor.u32 %v1990, %v1986
    %v1992 = vrot.slane %v1991, 4
    %v1994 = vshll.u32 %v1295, 16
    %v1996 = vrot.slane %v1994, 5
    %v1997 = vsel %vm1301, %v1992, %v1996
    %v1999 = vshrl.u32 %v1261, 16
    %v2001 = vrot.slane %v1999, 4
    %v2002 = vshll.u32 %v1261, 16
    %v2004 = vrot.slane %v2002, 5
    %v2005 = vor.u32 %v2001, %v2004
    %v2006 = vrot.slane %v2005, 4
    %v2008 = vshll.u32 %v1262, 16
    %v2010 = vrot.slane %v2008, 5
    %v2011 = vsel %vm1301, %v2006, %v2010
    %v2012 = vshrl.u32 %v1262, 16
    %v2014 = vrot.slane %v2012, 4
    %v2015 = vor.u32 %v2014, %v2010
    %v2016 = vrot.slane %v2015, 4
    %v2018 = vshll.u32 %v1296, 16
    %v2020 = vrot.slane %v2018, 5
    %v2021 = vsel %vm1301, %v2016, %v2020
    %v2023 = vshrl.u32 %v1263, 16
    %v2025 = vrot.slane %v2023, 4
    %v2026 = vshll.u32 %v1263, 16
    %v2028 = vrot.slane %v2026, 5
    %v2029 = vor.u32 %v2025, %v2028
    %v2030 = vrot.slane %v2029, 4
    %v2032 = vshll.u32 %v1264, 16
    %v2034 = vrot.slane %v2032, 5
    %v2035 = vsel %vm1301, %v2030, %v2034
    %v2036 = vshrl.u32 %v1264, 16
    %v2038 = vrot.slane %v2036, 4
    %v2039 = vor.u32 %v2038, %v2034
    %v2040 = vrot.slane %v2039, 4
    %v2042 = vshll.u32 %v1297, 16
    %v2044 = vrot.slane %v2042, 5
    %v2045 = vsel %vm1301, %v2040, %v2044
    %v2047 = vshrl.u32 %v1265, 16
    %v2049 = vrot.slane %v2047, 4
    %v2050 = vshll.u32 %v1265, 16
    %v2052 = vrot.slane %v2050, 5
    %v2053 = vor.u32 %v2049, %v2052
    %v2054 = vrot.slane %v2053, 4
    %v2056 = vshll.u32 %v1266, 16
    %v2058 = vrot.slane %v2056, 5
    %v2059 = vsel %vm1301, %v2054, %v2058
    %v2060 = vshrl.u32 %v1266, 16
    %v2062 = vrot.slane %v2060, 4
    %v2063 = vor.u32 %v2062, %v2058
    %v2064 = vrot.slane %v2063, 4
    %v2066 = vshll.u32 %v1298, 16
    %v2068 = vrot.slane %v2066, 5
    %v2069 = vsel %vm1301, %v2064, %v2068
    %v2070 = vld [vmem:[#allocation2] sm:$0xe]
    %v2071 = vld [vmem:[#allocation2 + $0xc] sm:$0xe]
    %v2072 = vld [vmem:[#allocation2 + $0x18] sm:$0xe]
    %v2073 = vld [vmem:[#allocation2 + $0x24] sm:$0xe]
    %v2074 = vld [vmem:[#allocation2 + $0x30] sm:$0xe]
    %v2075 = vld [vmem:[#allocation2 + $0x3c] sm:$0xe]
    %v2076 = vld [vmem:[#allocation2 + $0x48] sm:$0xe]
    %v2077 = vld [vmem:[#allocation2 + $0x54] sm:$0xe]
    %v2078 = vld [vmem:[#allocation2 + $0x60] sm:$0xe]
    %v2079 = vld [vmem:[#allocation2 + $0x6c] sm:$0xe]
    %v2080 = vld [vmem:[#allocation2 + $0x78] sm:$0xe]
    %v2081 = vld [vmem:[#allocation2 + $0x84] sm:$0xe]
    %v2082 = vld [vmem:[#allocation2 + $0x90] sm:$0xe]
    %v2083 = vld [vmem:[#allocation2 + $0x9c] sm:$0xe]
    %v2084 = vld [vmem:[#allocation2 + $0xa8] sm:$0xe]
    %v2085 = vld [vmem:[#allocation2 + $0xb4] sm:$0xe]
    %v2086 = vld [vmem:[#allocation2 + $0xd8] sm:$0xe]
    %v2087 = vld [vmem:[#allocation2 + $0xe4] sm:$0xe]
    %v2088 = vld [vmem:[#allocation2 + $0xf0] sm:$0xe]
    %v2089 = vld [vmem:[#allocation2 + $0xfc] sm:$0xe]
    %v2090 = vld [vmem:[#allocation2 + $0x108] sm:$0xe]
    %v2091 = vld [vmem:[#allocation2 + $0x114] sm:$0xe]
    %v2092 = vld [vmem:[#allocation2 + $0x120] sm:$0xe]
    %v2093 = vld [vmem:[#allocation2 + $0x12c] sm:$0xe]
    %v2094 = vld [vmem:[#allocation2 + $0x138] sm:$0xe]
    %v2095 = vld [vmem:[#allocation2 + $0x144] sm:$0xe]
    %v2096 = vld [vmem:[#allocation2 + $0x150] sm:$0xe]
    %v2097 = vld [vmem:[#allocation2 + $0x15c] sm:$0xe]
    %v2098 = vld [vmem:[#allocation2 + $0x168] sm:$0xe]
    %v2099 = vld [vmem:[#allocation2 + $0x174] sm:$0xe]
    %v2100 = vld [vmem:[#allocation2 + $0x180] sm:$0xe]
    %v2101 = vld [vmem:[#allocation2 + $0x18c] sm:$0xe]
    %vm2198 = vcmask 1042432
    %vm2199 = vcmask 1046532
    %vm2200 = vmor %vm2198, %vm2199
    %v2201 = vrot.slane %v2070, 5
    %v2202 = vrot.slane %v2201, 4
    %v2203 = vrot.slane %v1204, 5
    %v2204 = vsel %vm2200, %v2202, %v2203
    %v2205 = vrot.slane %v2203, 4
    %v2206 = vrot.slane %v1267, 5
    %v2207 = vsel %vm2200, %v2205, %v2206
    %v2208 = vrot.slane %v2071, 5
    %v2209 = vrot.slane %v2208, 4
    %v2210 = vrot.slane %v1206, 5
    %v2211 = vsel %vm2200, %v2209, %v2210
    %v2212 = vrot.slane %v2210, 4
    %v2213 = vrot.slane %v1268, 5
    %v2214 = vsel %vm2200, %v2212, %v2213
    %v2215 = vrot.slane %v2072, 5
    %v2216 = vrot.slane %v2215, 4
    %v2217 = vrot.slane %v1208, 5
    %v2218 = vsel %vm2200, %v2216, %v2217
    %v2219 = vrot.slane %v2217, 4
    %v2220 = vrot.slane %v1269, 5
    %v2221 = vsel %vm2200, %v2219, %v2220
    %v2222 = vrot.slane %v2073, 5
    %v2223 = vrot.slane %v2222, 4
    %v2224 = vrot.slane %v1210, 5
    %v2225 = vsel %vm2200, %v2223, %v2224
    %v2226 = vrot.slane %v2224, 4
    %v2227 = vrot.slane %v1270, 5
    %v2228 = vsel %vm2200, %v2226, %v2227
    %v2229 = vrot.slane %v2074, 5
    %v2230 = vrot.slane %v2229, 4
    %v2231 = vrot.slane %v1212, 5
    %v2232 = vsel %vm2200, %v2230, %v2231
    %v2233 = vrot.slane %v2231, 4
    %v2234 = vrot.slane %v1271, 5
    %v2235 = vsel %vm2200, %v2233, %v2234
    %v2236 = vrot.slane %v2075, 5
    %v2237 = vrot.slane %v2236, 4
    %v2238 = vrot.slane %v1214, 5
    %v2239 = vsel %vm2200, %v2237, %v2238
    %v2240 = vrot.slane %v2238, 4
    %v2241 = vrot.slane %v1272, 5
    %v2242 = vsel %vm2200, %v2240, %v2241
    %v2243 = vrot.slane %v2076, 5
    %v2244 = vrot.slane %v2243, 4
    %v2245 = vrot.slane %v1216, 5
    %v2246 = vsel %vm2200, %v2244, %v2245
    %v2247 = vrot.slane %v2245, 4
    %v2248 = vrot.slane %v1273, 5
    %v2249 = vsel %vm2200, %v2247, %v2248
    %v2250 = vrot.slane %v2077, 5
    %v2251 = vrot.slane %v2250, 4
    %v2252 = vrot.slane %v1218, 5
    %v2253 = vsel %vm2200, %v2251, %v2252
    %v2254 = vrot.slane %v2252, 4
    %v2255 = vrot.slane %v1274, 5
    %v2256 = vsel %vm2200, %v2254, %v2255
    %v2257 = vrot.slane %v2078, 5
    %v2258 = vrot.slane %v2257, 4
    %v2259 = vrot.slane %v1220, 5
    %v2260 = vsel %vm2200, %v2258, %v2259
    %v2261 = vrot.slane %v2259, 4
    %v2262 = vrot.slane %v1275, 5
    %v2263 = vsel %vm2200, %v2261, %v2262
    %v2264 = vrot.slane %v2079, 5
    %v2265 = vrot.slane %v2264, 4
    %v2266 = vrot.slane %v1222, 5
    %v2267 = vsel %vm2200, %v2265, %v2266
    %v2268 = vrot.slane %v2266, 4
    %v2269 = vrot.slane %v1276, 5
    %v2270 = vsel %vm2200, %v2268, %v2269
    %v2271 = vrot.slane %v2080, 5
    %v2272 = vrot.slane %v2271, 4
    %v2273 = vrot.slane %v1224, 5
    %v2274 = vsel %vm2200, %v2272, %v2273
    %v2275 = vrot.slane %v2273, 4
    %v2276 = vrot.slane %v1277, 5
    %v2277 = vsel %vm2200, %v2275, %v2276
    %v2278 = vrot.slane %v2081, 5
    %v2279 = vrot.slane %v2278, 4
    %v2280 = vrot.slane %v1226, 5
    %v2281 = vsel %vm2200, %v2279, %v2280
    %v2282 = vrot.slane %v2280, 4
    %v2283 = vrot.slane %v1278, 5
    %v2284 = vsel %vm2200, %v2282, %v2283
    %v2285 = vrot.slane %v2082, 5
    %v2286 = vrot.slane %v2285, 4
    %v2287 = vrot.slane %v1228, 5
    %v2288 = vsel %vm2200, %v2286, %v2287
    %v2289 = vrot.slane %v2287, 4
    %v2290 = vrot.slane %v1279, 5
    %v2291 = vsel %vm2200, %v2289, %v2290
    %v2292 = vrot.slane %v2083, 5
    %v2293 = vrot.slane %v2292, 4
    %v2294 = vrot.slane %v1230, 5
    %v2295 = vsel %vm2200, %v2293, %v2294
    %v2296 = vrot.slane %v2294, 4
    %v2297 = vrot.slane %v1280, 5
    %v2298 = vsel %vm2200, %v2296, %v2297
    %v2299 = vrot.slane %v2084, 5
    %v2300 = vrot.slane %v2299, 4
    %v2301 = vrot.slane %v1232, 5
    %v2302 = vsel %vm2200, %v2300, %v2301
    %v2303 = vrot.slane %v2301, 4
    %v2304 = vrot.slane %v1281, 5
    %v2305 = vsel %vm2200, %v2303, %v2304
    %v2306 = vrot.slane %v2085, 5
    %v2307 = vrot.slane %v2306, 4
    %v2308 = vrot.slane %v1234, 5
    %v2309 = vsel %vm2200, %v2307, %v2308
    %v2310 = vrot.slane %v2308, 4
    %v2311 = vrot.slane %v1282, 5
    %v2312 = vsel %vm2200, %v2310, %v2311
    %v2313 = vrot.slane %v2086, 5
    %v2314 = vrot.slane %v2313, 4
    %v2315 = vrot.slane %v1236, 5
    %v2316 = vsel %vm2200, %v2314, %v2315
    %v2317 = vrot.slane %v2315, 4
    %v2318 = vrot.slane %v1283, 5
    %v2319 = vsel %vm2200, %v2317, %v2318
    %v2320 = vrot.slane %v2087, 5
    %v2321 = vrot.slane %v2320, 4
    %v2322 = vrot.slane %v1238, 5
    %v2323 = vsel %vm2200, %v2321, %v2322
    %v2324 = vrot.slane %v2322, 4
    %v2325 = vrot.slane %v1284, 5
    %v2326 = vsel %vm2200, %v2324, %v2325
    %v2327 = vrot.slane %v2088, 5
    %v2328 = vrot.slane %v2327, 4
    %v2329 = vrot.slane %v1240, 5
    %v2330 = vsel %vm2200, %v2328, %v2329
    %v2331 = vrot.slane %v2329, 4
    %v2332 = vrot.slane %v1285, 5
    %v2333 = vsel %vm2200, %v2331, %v2332
    %v2334 = vrot.slane %v2089, 5
    %v2335 = vrot.slane %v2334, 4
    %v2336 = vrot.slane %v1242, 5
    %v2337 = vsel %vm2200, %v2335, %v2336
    %v2338 = vrot.slane %v2336, 4
    %v2339 = vrot.slane %v1286, 5
    %v2340 = vsel %vm2200, %v2338, %v2339
    %v2341 = vrot.slane %v2090, 5
    %v2342 = vrot.slane %v2341, 4
    %v2343 = vrot.slane %v1244, 5
    %v2344 = vsel %vm2200, %v2342, %v2343
    %v2345 = vrot.slane %v2343, 4
    %v2346 = vrot.slane %v1287, 5
    %v2347 = vsel %vm2200, %v2345, %v2346
    %v2348 = vrot.slane %v2091, 5
    %v2349 = vrot.slane %v2348, 4
    %v2350 = vrot.slane %v1246, 5
    %v2351 = vsel %vm2200, %v2349, %v2350
    %v2352 = vrot.slane %v2350, 4
    %v2353 = vrot.slane %v1288, 5
    %v2354 = vsel %vm2200, %v2352, %v2353
    %v2355 = vrot.slane %v2092, 5
    %v2356 = vrot.slane %v2355, 4
    %v2357 = vrot.slane %v1248, 5
    %v2358 = vsel %vm2200, %v2356, %v2357
    %v2359 = vrot.slane %v2357, 4
    %v2360 = vrot.slane %v1289, 5
    %v2361 = vsel %vm2200, %v2359, %v2360
    %v2362 = vrot.slane %v2093, 5
    %v2363 = vrot.slane %v2362, 4
    %v2364 = vrot.slane %v1250, 5
    %v2365 = vsel %vm2200, %v2363, %v2364
    %v2366 = vrot.slane %v2364, 4
    %v2367 = vrot.slane %v1290, 5
    %v2368 = vsel %vm2200, %v2366, %v2367
    %v2369 = vrot.slane %v2094, 5
    %v2370 = vrot.slane %v2369, 4
    %v2371 = vrot.slane %v1252, 5
    %v2372 = vsel %vm2200, %v2370, %v2371
    %v2373 = vrot.slane %v2371, 4
    %v2374 = vrot.slane %v1291, 5
    %v2375 = vsel %vm2200, %v2373, %v2374
    %v2376 = vrot.slane %v2095, 5
    %v2377 = vrot.slane %v2376, 4
    %v2378 = vrot.slane %v1254, 5
    %v2379 = vsel %vm2200, %v2377, %v2378
    %v2380 = vrot.slane %v2378, 4
    %v2381 = vrot.slane %v1292, 5
    %v2382 = vsel %vm2200, %v2380, %v2381
    %v2383 = vrot.slane %v2096, 5
    %v2384 = vrot.slane %v2383, 4
    %v2385 = vrot.slane %v1256, 5
    %v2386 = vsel %vm2200, %v2384, %v2385
    %v2387 = vrot.slane %v2385, 4
    %v2388 = vrot.slane %v1293, 5
    %v2389 = vsel %vm2200, %v2387, %v2388
    %v2390 = vrot.slane %v2097, 5
    %v2391 = vrot.slane %v2390, 4
    %v2392 = vrot.slane %v1258, 5
    %v2393 = vsel %vm2200, %v2391, %v2392
    %v2394 = vrot.slane %v2392, 4
    %v2395 = vrot.slane %v1294, 5
    %v2396 = vsel %vm2200, %v2394, %v2395
    %v2397 = vrot.slane %v2098, 5
    %v2398 = vrot.slane %v2397, 4
    %v2399 = vrot.slane %v1260, 5
    %v2400 = vsel %vm2200, %v2398, %v2399
    %v2401 = vrot.slane %v2399, 4
    %v2402 = vrot.slane %v1295, 5
    %v2403 = vsel %vm2200, %v2401, %v2402
    %v2404 = vrot.slane %v2099, 5
    %v2405 = vrot.slane %v2404, 4
    %v2406 = vrot.slane %v1262, 5
    %v2407 = vsel %vm2200, %v2405, %v2406
    %v2408 = vrot.slane %v2406, 4
    %v2409 = vrot.slane %v1296, 5
    %v2410 = vsel %vm2200, %v2408, %v2409
    %v2411 = vrot.slane %v2100, 5
    %v2412 = vrot.slane %v2411, 4
    %v2413 = vrot.slane %v1264, 5
    %v2414 = vsel %vm2200, %v2412, %v2413
    %v2415 = vrot.slane %v2413, 4
    %v2416 = vrot.slane %v1297, 5
    %v2417 = vsel %vm2200, %v2415, %v2416
    %v2418 = vrot.slane %v2101, 5
    %v2419 = vrot.slane %v2418, 4
    %v2420 = vrot.slane %v1266, 5
    %v2421 = vsel %vm2200, %v2419, %v2420
    %v2422 = vrot.slane %v2420, 4
    %v2423 = vrot.slane %v1298, 5
    %v2424 = vsel %vm2200, %v2422, %v2423
    %v2425 = vld [vmem:[%s976] sm:$0xf]
    %v2426 = vld [vmem:[%s976 + $0x4] sm:$0xf]
    %v2427 = vld [vmem:[%s976 + $0xc] sm:$0xf]
    %v2428 = vld [vmem:[%s976 + $0x10] sm:$0xf]
    %v2429 = vld [vmem:[%s976 + $0x18] sm:$0xf]
    %v2430 = vld [vmem:[%s976 + $0x1c] sm:$0xf]
    %v2431 = vld [vmem:[%s976 + $0x24] sm:$0xf]
    %v2432 = vld [vmem:[%s976 + $0x28] sm:$0xf]
    %v2433 = vld [vmem:[%s976 + $0x30] sm:$0xf]
    %v2434 = vld [vmem:[%s976 + $0x34] sm:$0xf]
    %v2435 = vld [vmem:[%s976 + $0x3c] sm:$0xf]
    %v2436 = vld [vmem:[%s976 + $0x40] sm:$0xf]
    %v2437 = vld [vmem:[%s976 + $0x48] sm:$0xf]
    %v2438 = vld [vmem:[%s976 + $0x4c] sm:$0xf]
    %v2439 = vld [vmem:[%s976 + $0x54] sm:$0xf]
    %v2440 = vld [vmem:[%s976 + $0x58] sm:$0xf]
    %v2441 = vld [vmem:[%s976 + $0x60] sm:$0xf]
    %v2442 = vld [vmem:[%s976 + $0x64] sm:$0xf]
    %v2443 = vld [vmem:[%s976 + $0x6c] sm:$0xf]
    %v2444 = vld [vmem:[%s976 + $0x70] sm:$0xf]
    %v2445 = vld [vmem:[%s976 + $0x78] sm:$0xf]
    %v2446 = vld [vmem:[%s976 + $0x7c] sm:$0xf]
    %v2447 = vld [vmem:[%s976 + $0x84] sm:$0xf]
    %v2448 = vld [vmem:[%s976 + $0x88] sm:$0xf]
    %v2449 = vld [vmem:[%s976 + $0x90] sm:$0xf]
    %v2450 = vld [vmem:[%s976 + $0x94] sm:$0xf]
    %v2451 = vld [vmem:[%s976 + $0x9c] sm:$0xf]
    %v2452 = vld [vmem:[%s976 + $0xa0] sm:$0xf]
    %v2453 = vld [vmem:[%s976 + $0xa8] sm:$0xf]
    %v2454 = vld [vmem:[%s976 + $0xac] sm:$0xf]
    %v2455 = vld [vmem:[%s976 + $0xb4] sm:$0xf]
    %v2456 = vld [vmem:[%s976 + $0xb8] sm:$0xf]
    %v2457 = vld [vmem:[%s976 + $0xd8] sm:$0xf]
    %v2458 = vld [vmem:[%s976 + $0xdc] sm:$0xf]
    %v2459 = vld [vmem:[%s976 + $0xe4] sm:$0xf]
    %v2460 = vld [vmem:[%s976 + $0xe8] sm:$0xf]
    %v2461 = vld [vmem:[%s976 + $0xf0] sm:$0xf]
    %v2462 = vld [vmem:[%s976 + $0xf4] sm:$0xf]
    %v2463 = vld [vmem:[%s976 + $0xfc] sm:$0xf]
    %v2464 = vld [vmem:[%s976 + $0x100] sm:$0xf]
    %v2465 = vld [vmem:[%s976 + $0x108] sm:$0xf]
    %v2466 = vld [vmem:[%s976 + $0x10c] sm:$0xf]
    %v2467 = vld [vmem:[%s976 + $0x114] sm:$0xf]
    %v2468 = vld [vmem:[%s976 + $0x118] sm:$0xf]
    %v2469 = vld [vmem:[%s976 + $0x120] sm:$0xf]
    %v2470 = vld [vmem:[%s976 + $0x124] sm:$0xf]
    %v2471 = vld [vmem:[%s976 + $0x12c] sm:$0xf]
    %v2472 = vld [vmem:[%s976 + $0x130] sm:$0xf]
    %v2473 = vld [vmem:[%s976 + $0x138] sm:$0xf]
    %v2474 = vld [vmem:[%s976 + $0x13c] sm:$0xf]
    %v2475 = vld [vmem:[%s976 + $0x144] sm:$0xf]
    %v2476 = vld [vmem:[%s976 + $0x148] sm:$0xf]
    %v2477 = vld [vmem:[%s976 + $0x150] sm:$0xf]
    %v2478 = vld [vmem:[%s976 + $0x154] sm:$0xf]
    %v2479 = vld [vmem:[%s976 + $0x15c] sm:$0xf]
    %v2480 = vld [vmem:[%s976 + $0x160] sm:$0xf]
    %v2481 = vld [vmem:[%s976 + $0x168] sm:$0xf]
    %v2482 = vld [vmem:[%s976 + $0x16c] sm:$0xf]
    %v2483 = vld [vmem:[%s976 + $0x174] sm:$0xf]
    %v2484 = vld [vmem:[%s976 + $0x178] sm:$0xf]
    %v2485 = vld [vmem:[%s976 + $0x180] sm:$0xf]
    %v2486 = vld [vmem:[%s976 + $0x184] sm:$0xf]
    %v2487 = vld [vmem:[%s976 + $0x18c] sm:$0xf]
    %v2488 = vld [vmem:[%s976 + $0x190] sm:$0xf]
    %v2489 = vld [vmem:[%s976 + $0x8] sm:$0x1]
    %v2490 = vld [vmem:[%s976 + $0x14] sm:$0x1]
    %v2491 = vld [vmem:[%s976 + $0x20] sm:$0x1]
    %v2492 = vld [vmem:[%s976 + $0x2c] sm:$0x1]
    %v2493 = vld [vmem:[%s976 + $0x38] sm:$0x1]
    %v2494 = vld [vmem:[%s976 + $0x44] sm:$0x1]
    %v2495 = vld [vmem:[%s976 + $0x50] sm:$0x1]
    %v2496 = vld [vmem:[%s976 + $0x5c] sm:$0x1]
    %v2497 = vld [vmem:[%s976 + $0x68] sm:$0x1]
    %v2498 = vld [vmem:[%s976 + $0x74] sm:$0x1]
    %v2499 = vld [vmem:[%s976 + $0x80] sm:$0x1]
    %v2500 = vld [vmem:[%s976 + $0x8c] sm:$0x1]
    %v2501 = vld [vmem:[%s976 + $0x98] sm:$0x1]
    %v2502 = vld [vmem:[%s976 + $0xa4] sm:$0x1]
    %v2503 = vld [vmem:[%s976 + $0xb0] sm:$0x1]
    %v2504 = vld [vmem:[%s976 + $0xbc] sm:$0x1]
    %v2505 = vld [vmem:[%s976 + $0xe0] sm:$0x1]
    %v2506 = vld [vmem:[%s976 + $0xec] sm:$0x1]
    %v2507 = vld [vmem:[%s976 + $0xf8] sm:$0x1]
    %v2508 = vld [vmem:[%s976 + $0x104] sm:$0x1]
    %v2509 = vld [vmem:[%s976 + $0x110] sm:$0x1]
    %v2510 = vld [vmem:[%s976 + $0x11c] sm:$0x1]
    %v2511 = vld [vmem:[%s976 + $0x128] sm:$0x1]
    %v2512 = vld [vmem:[%s976 + $0x134] sm:$0x1]
    %v2513 = vld [vmem:[%s976 + $0x140] sm:$0x1]
    %v2514 = vld [vmem:[%s976 + $0x14c] sm:$0x1]
    %v2515 = vld [vmem:[%s976 + $0x158] sm:$0x1]
    %v2516 = vld [vmem:[%s976 + $0x164] sm:$0x1]
    %v2517 = vld [vmem:[%s976 + $0x170] sm:$0x1]
    %v2518 = vld [vmem:[%s976 + $0x17c] sm:$0x1]
    %v2519 = vld [vmem:[%s976 + $0x188] sm:$0x1]
    %v2520 = vld [vmem:[%s976 + $0x194] sm:$0x1]
    %v2522 = vshrl.u32 %v2425, 16
    %v2524 = vrot.slane %v2522, 4
    %v2525 = vshll.u32 %v2425, 16
    %v2527 = vrot.slane %v2525, 5
    %v2528 = vor.u32 %v2524, %v2527
    %v2529 = vrot.slane %v2528, 4
    %v2531 = vshll.u32 %v2426, 16
    %v2533 = vrot.slane %v2531, 5
    %v2534 = vsel %vm1301, %v2529, %v2533
    %v2535 = vshrl.u32 %v2426, 16
    %v2537 = vrot.slane %v2535, 4
    %v2538 = vor.u32 %v2537, %v2533
    %v2539 = vrot.slane %v2538, 4
    %v2541 = vshll.u32 %v2489, 16
    %v2543 = vrot.slane %v2541, 5
    %v2544 = vsel %vm1301, %v2539, %v2543
    %v2546 = vshrl.u32 %v2427, 16
    %v2548 = vrot.slane %v2546, 4
    %v2549 = vshll.u32 %v2427, 16
    %v2551 = vrot.slane %v2549, 5
    %v2552 = vor.u32 %v2548, %v2551
    %v2553 = vrot.slane %v2552, 4
    %v2555 = vshll.u32 %v2428, 16
    %v2557 = vrot.slane %v2555, 5
    %v2558 = vsel %vm1301, %v2553, %v2557
    %v2559 = vshrl.u32 %v2428, 16
    %v2561 = vrot.slane %v2559, 4
    %v2562 = vor.u32 %v2561, %v2557
    %v2563 = vrot.slane %v2562, 4
    %v2565 = vshll.u32 %v2490, 16
    %v2567 = vrot.slane %v2565, 5
    %v2568 = vsel %vm1301, %v2563, %v2567
    %v2570 = vshrl.u32 %v2429, 16
    %v2572 = vrot.slane %v2570, 4
    %v2573 = vshll.u32 %v2429, 16
    %v2575 = vrot.slane %v2573, 5
    %v2576 = vor.u32 %v2572, %v2575
    %v2577 = vrot.slane %v2576, 4
    %v2579 = vshll.u32 %v2430, 16
    %v2581 = vrot.slane %v2579, 5
    %v2582 = vsel %vm1301, %v2577, %v2581
    %v2583 = vshrl.u32 %v2430, 16
    %v2585 = vrot.slane %v2583, 4
    %v2586 = vor.u32 %v2585, %v2581
    %v2587 = vrot.slane %v2586, 4
    %v2589 = vshll.u32 %v2491, 16
    %v2591 = vrot.slane %v2589, 5
    %v2592 = vsel %vm1301, %v2587, %v2591
    %v2594 = vshrl.u32 %v2431, 16
    %v2596 = vrot.slane %v2594, 4
    %v2597 = vshll.u32 %v2431, 16
    %v2599 = vrot.slane %v2597, 5
    %v2600 = vor.u32 %v2596, %v2599
    %v2601 = vrot.slane %v2600, 4
    %v2603 = vshll.u32 %v2432, 16
    %v2605 = vrot.slane %v2603, 5
    %v2606 = vsel %vm1301, %v2601, %v2605
    %v2607 = vshrl.u32 %v2432, 16
    %v2609 = vrot.slane %v2607, 4
    %v2610 = vor.u32 %v2609, %v2605
    %v2611 = vrot.slane %v2610, 4
    %v2613 = vshll.u32 %v2492, 16
    %v2615 = vrot.slane %v2613, 5
    %v2616 = vsel %vm1301, %v2611, %v2615
    %v2618 = vshrl.u32 %v2433, 16
    %v2620 = vrot.slane %v2618, 4
    %v2621 = vshll.u32 %v2433, 16
    %v2623 = vrot.slane %v2621, 5
    %v2624 = vor.u32 %v2620, %v2623
    %v2625 = vrot.slane %v2624, 4
    %v2627 = vshll.u32 %v2434, 16
    %v2629 = vrot.slane %v2627, 5
    %v2630 = vsel %vm1301, %v2625, %v2629
    %v2631 = vshrl.u32 %v2434, 16
    %v2633 = vrot.slane %v2631, 4
    %v2634 = vor.u32 %v2633, %v2629
    %v2635 = vrot.slane %v2634, 4
    %v2637 = vshll.u32 %v2493, 16
    %v2639 = vrot.slane %v2637, 5
    %v2640 = vsel %vm1301, %v2635, %v2639
    %v2642 = vshrl.u32 %v2435, 16
    %v2644 = vrot.slane %v2642, 4
    %v2645 = vshll.u32 %v2435, 16
    %v2647 = vrot.slane %v2645, 5
    %v2648 = vor.u32 %v2644, %v2647
    %v2649 = vrot.slane %v2648, 4
    %v2651 = vshll.u32 %v2436, 16
    %v2653 = vrot.slane %v2651, 5
    %v2654 = vsel %vm1301, %v2649, %v2653
    %v2655 = vshrl.u32 %v2436, 16
    %v2657 = vrot.slane %v2655, 4
    %v2658 = vor.u32 %v2657, %v2653
    %v2659 = vrot.slane %v2658, 4
    %v2661 = vshll.u32 %v2494, 16
    %v2663 = vrot.slane %v2661, 5
    %v2664 = vsel %vm1301, %v2659, %v2663
    %v2666 = vshrl.u32 %v2437, 16
    %v2668 = vrot.slane %v2666, 4
    %v2669 = vshll.u32 %v2437, 16
    %v2671 = vrot.slane %v2669, 5
    %v2672 = vor.u32 %v2668, %v2671
    %v2673 = vrot.slane %v2672, 4
    %v2675 = vshll.u32 %v2438, 16
    %v2677 = vrot.slane %v2675, 5
    %v2678 = vsel %vm1301, %v2673, %v2677
    %v2679 = vshrl.u32 %v2438, 16
    %v2681 = vrot.slane %v2679, 4
    %v2682 = vor.u32 %v2681, %v2677
    %v2683 = vrot.slane %v2682, 4
    %v2685 = vshll.u32 %v2495, 16
    %v2687 = vrot.slane %v2685, 5
    %v2688 = vsel %vm1301, %v2683, %v2687
    %v2690 = vshrl.u32 %v2439, 16
    %v2692 = vrot.slane %v2690, 4
    %v2693 = vshll.u32 %v2439, 16
    %v2695 = vrot.slane %v2693, 5
    %v2696 = vor.u32 %v2692, %v2695
    %v2697 = vrot.slane %v2696, 4
    %v2699 = vshll.u32 %v2440, 16
    %v2701 = vrot.slane %v2699, 5
    %v2702 = vsel %vm1301, %v2697, %v2701
    %v2703 = vshrl.u32 %v2440, 16
    %v2705 = vrot.slane %v2703, 4
    %v2706 = vor.u32 %v2705, %v2701
    %v2707 = vrot.slane %v2706, 4
    %v2709 = vshll.u32 %v2496, 16
    %v2711 = vrot.slane %v2709, 5
    %v2712 = vsel %vm1301, %v2707, %v2711
    %v2714 = vshrl.u32 %v2441, 16
    %v2716 = vrot.slane %v2714, 4
    %v2717 = vshll.u32 %v2441, 16
    %v2719 = vrot.slane %v2717, 5
    %v2720 = vor.u32 %v2716, %v2719
    %v2721 = vrot.slane %v2720, 4
    %v2723 = vshll.u32 %v2442, 16
    %v2725 = vrot.slane %v2723, 5
    %v2726 = vsel %vm1301, %v2721, %v2725
    %v2727 = vshrl.u32 %v2442, 16
    %v2729 = vrot.slane %v2727, 4
    %v2730 = vor.u32 %v2729, %v2725
    %v2731 = vrot.slane %v2730, 4
    %v2733 = vshll.u32 %v2497, 16
    %v2735 = vrot.slane %v2733, 5
    %v2736 = vsel %vm1301, %v2731, %v2735
    %v2738 = vshrl.u32 %v2443, 16
    %v2740 = vrot.slane %v2738, 4
    %v2741 = vshll.u32 %v2443, 16
    %v2743 = vrot.slane %v2741, 5
    %v2744 = vor.u32 %v2740, %v2743
    %v2745 = vrot.slane %v2744, 4
    %v2747 = vshll.u32 %v2444, 16
    %v2749 = vrot.slane %v2747, 5
    %v2750 = vsel %vm1301, %v2745, %v2749
    %v2751 = vshrl.u32 %v2444, 16
    %v2753 = vrot.slane %v2751, 4
    %v2754 = vor.u32 %v2753, %v2749
    %v2755 = vrot.slane %v2754, 4
    %v2757 = vshll.u32 %v2498, 16
    %v2759 = vrot.slane %v2757, 5
    %v2760 = vsel %vm1301, %v2755, %v2759
    %v2762 = vshrl.u32 %v2445, 16
    %v2764 = vrot.slane %v2762, 4
    %v2765 = vshll.u32 %v2445, 16
    %v2767 = vrot.slane %v2765, 5
    %v2768 = vor.u32 %v2764, %v2767
    %v2769 = vrot.slane %v2768, 4
    %v2771 = vshll.u32 %v2446, 16
    %v2773 = vrot.slane %v2771, 5
    %v2774 = vsel %vm1301, %v2769, %v2773
    %v2775 = vshrl.u32 %v2446, 16
    %v2777 = vrot.slane %v2775, 4
    %v2778 = vor.u32 %v2777, %v2773
    %v2779 = vrot.slane %v2778, 4
    %v2781 = vshll.u32 %v2499, 16
    %v2783 = vrot.slane %v2781, 5
    %v2784 = vsel %vm1301, %v2779, %v2783
    %v2786 = vshrl.u32 %v2447, 16
    %v2788 = vrot.slane %v2786, 4
    %v2789 = vshll.u32 %v2447, 16
    %v2791 = vrot.slane %v2789, 5
    %v2792 = vor.u32 %v2788, %v2791
    %v2793 = vrot.slane %v2792, 4
    %v2795 = vshll.u32 %v2448, 16
    %v2797 = vrot.slane %v2795, 5
    %v2798 = vsel %vm1301, %v2793, %v2797
    %v2799 = vshrl.u32 %v2448, 16
    %v2801 = vrot.slane %v2799, 4
    %v2802 = vor.u32 %v2801, %v2797
    %v2803 = vrot.slane %v2802, 4
    %v2805 = vshll.u32 %v2500, 16
    %v2807 = vrot.slane %v2805, 5
    %v2808 = vsel %vm1301, %v2803, %v2807
    %v2810 = vshrl.u32 %v2449, 16
    %v2812 = vrot.slane %v2810, 4
    %v2813 = vshll.u32 %v2449, 16
    %v2815 = vrot.slane %v2813, 5
    %v2816 = vor.u32 %v2812, %v2815
    %v2817 = vrot.slane %v2816, 4
    %v2819 = vshll.u32 %v2450, 16
    %v2821 = vrot.slane %v2819, 5
    %v2822 = vsel %vm1301, %v2817, %v2821
    %v2823 = vshrl.u32 %v2450, 16
    %v2825 = vrot.slane %v2823, 4
    %v2826 = vor.u32 %v2825, %v2821
    %v2827 = vrot.slane %v2826, 4
    %v2829 = vshll.u32 %v2501, 16
    %v2831 = vrot.slane %v2829, 5
    %v2832 = vsel %vm1301, %v2827, %v2831
    %v2834 = vshrl.u32 %v2451, 16
    %v2836 = vrot.slane %v2834, 4
    %v2837 = vshll.u32 %v2451, 16
    %v2839 = vrot.slane %v2837, 5
    %v2840 = vor.u32 %v2836, %v2839
    %v2841 = vrot.slane %v2840, 4
    %v2843 = vshll.u32 %v2452, 16
    %v2845 = vrot.slane %v2843, 5
    %v2846 = vsel %vm1301, %v2841, %v2845
    %v2847 = vshrl.u32 %v2452, 16
    %v2849 = vrot.slane %v2847, 4
    %v2850 = vor.u32 %v2849, %v2845
    %v2851 = vrot.slane %v2850, 4
    %v2853 = vshll.u32 %v2502, 16
    %v2855 = vrot.slane %v2853, 5
    %v2856 = vsel %vm1301, %v2851, %v2855
    %v2858 = vshrl.u32 %v2453, 16
    %v2860 = vrot.slane %v2858, 4
    %v2861 = vshll.u32 %v2453, 16
    %v2863 = vrot.slane %v2861, 5
    %v2864 = vor.u32 %v2860, %v2863
    %v2865 = vrot.slane %v2864, 4
    %v2867 = vshll.u32 %v2454, 16
    %v2869 = vrot.slane %v2867, 5
    %v2870 = vsel %vm1301, %v2865, %v2869
    %v2871 = vshrl.u32 %v2454, 16
    %v2873 = vrot.slane %v2871, 4
    %v2874 = vor.u32 %v2873, %v2869
    %v2875 = vrot.slane %v2874, 4
    %v2877 = vshll.u32 %v2503, 16
    %v2879 = vrot.slane %v2877, 5
    %v2880 = vsel %vm1301, %v2875, %v2879
    %v2882 = vshrl.u32 %v2455, 16
    %v2884 = vrot.slane %v2882, 4
    %v2885 = vshll.u32 %v2455, 16
    %v2887 = vrot.slane %v2885, 5
    %v2888 = vor.u32 %v2884, %v2887
    %v2889 = vrot.slane %v2888, 4
    %v2891 = vshll.u32 %v2456, 16
    %v2893 = vrot.slane %v2891, 5
    %v2894 = vsel %vm1301, %v2889, %v2893
    %v2895 = vshrl.u32 %v2456, 16
    %v2897 = vrot.slane %v2895, 4
    %v2898 = vor.u32 %v2897, %v2893
    %v2899 = vrot.slane %v2898, 4
    %v2901 = vshll.u32 %v2504, 16
    %v2903 = vrot.slane %v2901, 5
    %v2904 = vsel %vm1301, %v2899, %v2903
    %v2906 = vshrl.u32 %v2457, 16
    %v2908 = vrot.slane %v2906, 4
    %v2909 = vshll.u32 %v2457, 16
    %v2911 = vrot.slane %v2909, 5
    %v2912 = vor.u32 %v2908, %v2911
    %v2913 = vrot.slane %v2912, 4
    %v2915 = vshll.u32 %v2458, 16
    %v2917 = vrot.slane %v2915, 5
    %v2918 = vsel %vm1301, %v2913, %v2917
    %v2919 = vshrl.u32 %v2458, 16
    %v2921 = vrot.slane %v2919, 4
    %v2922 = vor.u32 %v2921, %v2917
    %v2923 = vrot.slane %v2922, 4
    %v2925 = vshll.u32 %v2505, 16
    %v2927 = vrot.slane %v2925, 5
    %v2928 = vsel %vm1301, %v2923, %v2927
    %v2930 = vshrl.u32 %v2459, 16
    %v2932 = vrot.slane %v2930, 4
    %v2933 = vshll.u32 %v2459, 16
    %v2935 = vrot.slane %v2933, 5
    %v2936 = vor.u32 %v2932, %v2935
    %v2937 = vrot.slane %v2936, 4
    %v2939 = vshll.u32 %v2460, 16
    %v2941 = vrot.slane %v2939, 5
    %v2942 = vsel %vm1301, %v2937, %v2941
    %v2943 = vshrl.u32 %v2460, 16
    %v2945 = vrot.slane %v2943, 4
    %v2946 = vor.u32 %v2945, %v2941
    %v2947 = vrot.slane %v2946, 4
    %v2949 = vshll.u32 %v2506, 16
    %v2951 = vrot.slane %v2949, 5
    %v2952 = vsel %vm1301, %v2947, %v2951
    %v2954 = vshrl.u32 %v2461, 16
    %v2956 = vrot.slane %v2954, 4
    %v2957 = vshll.u32 %v2461, 16
    %v2959 = vrot.slane %v2957, 5
    %v2960 = vor.u32 %v2956, %v2959
    %v2961 = vrot.slane %v2960, 4
    %v2963 = vshll.u32 %v2462, 16
    %v2965 = vrot.slane %v2963, 5
    %v2966 = vsel %vm1301, %v2961, %v2965
    %v2967 = vshrl.u32 %v2462, 16
    %v2969 = vrot.slane %v2967, 4
    %v2970 = vor.u32 %v2969, %v2965
    %v2971 = vrot.slane %v2970, 4
    %v2973 = vshll.u32 %v2507, 16
    %v2975 = vrot.slane %v2973, 5
    %v2976 = vsel %vm1301, %v2971, %v2975
    %v2978 = vshrl.u32 %v2463, 16
    %v2980 = vrot.slane %v2978, 4
    %v2981 = vshll.u32 %v2463, 16
    %v2983 = vrot.slane %v2981, 5
    %v2984 = vor.u32 %v2980, %v2983
    %v2985 = vrot.slane %v2984, 4
    %v2987 = vshll.u32 %v2464, 16
    %v2989 = vrot.slane %v2987, 5
    %v2990 = vsel %vm1301, %v2985, %v2989
    %v2991 = vshrl.u32 %v2464, 16
    %v2993 = vrot.slane %v2991, 4
    %v2994 = vor.u32 %v2993, %v2989
    %v2995 = vrot.slane %v2994, 4
    %v2997 = vshll.u32 %v2508, 16
    %v2999 = vrot.slane %v2997, 5
    %v3000 = vsel %vm1301, %v2995, %v2999
    %v3002 = vshrl.u32 %v2465, 16
    %v3004 = vrot.slane %v3002, 4
    %v3005 = vshll.u32 %v2465, 16
    %v3007 = vrot.slane %v3005, 5
    %v3008 = vor.u32 %v3004, %v3007
    %v3009 = vrot.slane %v3008, 4
    %v3011 = vshll.u32 %v2466, 16
    %v3013 = vrot.slane %v3011, 5
    %v3014 = vsel %vm1301, %v3009, %v3013
    %v3015 = vshrl.u32 %v2466, 16
    %v3017 = vrot.slane %v3015, 4
    %v3018 = vor.u32 %v3017, %v3013
    %v3019 = vrot.slane %v3018, 4
    %v3021 = vshll.u32 %v2509, 16
    %v3023 = vrot.slane %v3021, 5
    %v3024 = vsel %vm1301, %v3019, %v3023
    %v3026 = vshrl.u32 %v2467, 16
    %v3028 = vrot.slane %v3026, 4
    %v3029 = vshll.u32 %v2467, 16
    %v3031 = vrot.slane %v3029, 5
    %v3032 = vor.u32 %v3028, %v3031
    %v3033 = vrot.slane %v3032, 4
    %v3035 = vshll.u32 %v2468, 16
    %v3037 = vrot.slane %v3035, 5
    %v3038 = vsel %vm1301, %v3033, %v3037
    %v3039 = vshrl.u32 %v2468, 16
    %v3041 = vrot.slane %v3039, 4
    %v3042 = vor.u32 %v3041, %v3037
    %v3043 = vrot.slane %v3042, 4
    %v3045 = vshll.u32 %v2510, 16
    %v3047 = vrot.slane %v3045, 5
    %v3048 = vsel %vm1301, %v3043, %v3047
    %v3050 = vshrl.u32 %v2469, 16
    %v3052 = vrot.slane %v3050, 4
    %v3053 = vshll.u32 %v2469, 16
    %v3055 = vrot.slane %v3053, 5
    %v3056 = vor.u32 %v3052, %v3055
    %v3057 = vrot.slane %v3056, 4
    %v3059 = vshll.u32 %v2470, 16
    %v3061 = vrot.slane %v3059, 5
    %v3062 = vsel %vm1301, %v3057, %v3061
    %v3063 = vshrl.u32 %v2470, 16
    %v3065 = vrot.slane %v3063, 4
    %v3066 = vor.u32 %v3065, %v3061
    %v3067 = vrot.slane %v3066, 4
    %v3069 = vshll.u32 %v2511, 16
    %v3071 = vrot.slane %v3069, 5
    %v3072 = vsel %vm1301, %v3067, %v3071
    %v3074 = vshrl.u32 %v2471, 16
    %v3076 = vrot.slane %v3074, 4
    %v3077 = vshll.u32 %v2471, 16
    %v3079 = vrot.slane %v3077, 5
    %v3080 = vor.u32 %v3076, %v3079
    %v3081 = vrot.slane %v3080, 4
    %v3083 = vshll.u32 %v2472, 16
    %v3085 = vrot.slane %v3083, 5
    %v3086 = vsel %vm1301, %v3081, %v3085
    %v3087 = vshrl.u32 %v2472, 16
    %v3089 = vrot.slane %v3087, 4
    %v3090 = vor.u32 %v3089, %v3085
    %v3091 = vrot.slane %v3090, 4
    %v3093 = vshll.u32 %v2512, 16
    %v3095 = vrot.slane %v3093, 5
    %v3096 = vsel %vm1301, %v3091, %v3095
    %v3098 = vshrl.u32 %v2473, 16
    %v3100 = vrot.slane %v3098, 4
    %v3101 = vshll.u32 %v2473, 16
    %v3103 = vrot.slane %v3101, 5
    %v3104 = vor.u32 %v3100, %v3103
    %v3105 = vrot.slane %v3104, 4
    %v3107 = vshll.u32 %v2474, 16
    %v3109 = vrot.slane %v3107, 5
    %v3110 = vsel %vm1301, %v3105, %v3109
    %v3111 = vshrl.u32 %v2474, 16
    %v3113 = vrot.slane %v3111, 4
    %v3114 = vor.u32 %v3113, %v3109
    %v3115 = vrot.slane %v3114, 4
    %v3117 = vshll.u32 %v2513, 16
    %v3119 = vrot.slane %v3117, 5
    %v3120 = vsel %vm1301, %v3115, %v3119
    %v3122 = vshrl.u32 %v2475, 16
    %v3124 = vrot.slane %v3122, 4
    %v3125 = vshll.u32 %v2475, 16
    %v3127 = vrot.slane %v3125, 5
    %v3128 = vor.u32 %v3124, %v3127
    %v3129 = vrot.slane %v3128, 4
    %v3131 = vshll.u32 %v2476, 16
    %v3133 = vrot.slane %v3131, 5
    %v3134 = vsel %vm1301, %v3129, %v3133
    %v3135 = vshrl.u32 %v2476, 16
    %v3137 = vrot.slane %v3135, 4
    %v3138 = vor.u32 %v3137, %v3133
    %v3139 = vrot.slane %v3138, 4
    %v3141 = vshll.u32 %v2514, 16
    %v3143 = vrot.slane %v3141, 5
    %v3144 = vsel %vm1301, %v3139, %v3143
    %v3146 = vshrl.u32 %v2477, 16
    %v3148 = vrot.slane %v3146, 4
    %v3149 = vshll.u32 %v2477, 16
    %v3151 = vrot.slane %v3149, 5
    %v3152 = vor.u32 %v3148, %v3151
    %v3153 = vrot.slane %v3152, 4
    %v3155 = vshll.u32 %v2478, 16
    %v3157 = vrot.slane %v3155, 5
    %v3158 = vsel %vm1301, %v3153, %v3157
    %v3159 = vshrl.u32 %v2478, 16
    %v3161 = vrot.slane %v3159, 4
    %v3162 = vor.u32 %v3161, %v3157
    %v3163 = vrot.slane %v3162, 4
    %v3165 = vshll.u32 %v2515, 16
    %v3167 = vrot.slane %v3165, 5
    %v3168 = vsel %vm1301, %v3163, %v3167
    %v3170 = vshrl.u32 %v2479, 16
    %v3172 = vrot.slane %v3170, 4
    %v3173 = vshll.u32 %v2479, 16
    %v3175 = vrot.slane %v3173, 5
    %v3176 = vor.u32 %v3172, %v3175
    %v3177 = vrot.slane %v3176, 4
    %v3179 = vshll.u32 %v2480, 16
    %v3181 = vrot.slane %v3179, 5
    %v3182 = vsel %vm1301, %v3177, %v3181
    %v3183 = vshrl.u32 %v2480, 16
    %v3185 = vrot.slane %v3183, 4
    %v3186 = vor.u32 %v3185, %v3181
    %v3187 = vrot.slane %v3186, 4
    %v3189 = vshll.u32 %v2516, 16
    %v3191 = vrot.slane %v3189, 5
    %v3192 = vsel %vm1301, %v3187, %v3191
    %v3194 = vshrl.u32 %v2481, 16
    %v3196 = vrot.slane %v3194, 4
    %v3197 = vshll.u32 %v2481, 16
    %v3199 = vrot.slane %v3197, 5
    %v3200 = vor.u32 %v3196, %v3199
    %v3201 = vrot.slane %v3200, 4
    %v3203 = vshll.u32 %v2482, 16
    %v3205 = vrot.slane %v3203, 5
    %v3206 = vsel %vm1301, %v3201, %v3205
    %v3207 = vshrl.u32 %v2482, 16
    %v3209 = vrot.slane %v3207, 4
    %v3210 = vor.u32 %v3209, %v3205
    %v3211 = vrot.slane %v3210, 4
    %v3213 = vshll.u32 %v2517, 16
    %v3215 = vrot.slane %v3213, 5
    %v3216 = vsel %vm1301, %v3211, %v3215
    %v3218 = vshrl.u32 %v2483, 16
    %v3220 = vrot.slane %v3218, 4
    %v3221 = vshll.u32 %v2483, 16
    %v3223 = vrot.slane %v3221, 5
    %v3224 = vor.u32 %v3220, %v3223
    %v3225 = vrot.slane %v3224, 4
    %v3227 = vshll.u32 %v2484, 16
    %v3229 = vrot.slane %v3227, 5
    %v3230 = vsel %vm1301, %v3225, %v3229
    %v3231 = vshrl.u32 %v2484, 16
    %v3233 = vrot.slane %v3231, 4
    %v3234 = vor.u32 %v3233, %v3229
    %v3235 = vrot.slane %v3234, 4
    %v3237 = vshll.u32 %v2518, 16
    %v3239 = vrot.slane %v3237, 5
    %v3240 = vsel %vm1301, %v3235, %v3239
    %v3242 = vshrl.u32 %v2485, 16
    %v3244 = vrot.slane %v3242, 4
    %v3245 = vshll.u32 %v2485, 16
    %v3247 = vrot.slane %v3245, 5
    %v3248 = vor.u32 %v3244, %v3247
    %v3249 = vrot.slane %v3248, 4
    %v3251 = vshll.u32 %v2486, 16
    %v3253 = vrot.slane %v3251, 5
    %v3254 = vsel %vm1301, %v3249, %v3253
    %v3255 = vshrl.u32 %v2486, 16
    %v3257 = vrot.slane %v3255, 4
    %v3258 = vor.u32 %v3257, %v3253
    %v3259 = vrot.slane %v3258, 4
    %v3261 = vshll.u32 %v2519, 16
    %v3263 = vrot.slane %v3261, 5
    %v3264 = vsel %vm1301, %v3259, %v3263
    %v3266 = vshrl.u32 %v2487, 16
    %v3268 = vrot.slane %v3266, 4
    %v3269 = vshll.u32 %v2487, 16
    %v3271 = vrot.slane %v3269, 5
    %v3272 = vor.u32 %v3268, %v3271
    %v3273 = vrot.slane %v3272, 4
    %v3275 = vshll.u32 %v2488, 16
    %v3277 = vrot.slane %v3275, 5
    %v3278 = vsel %vm1301, %v3273, %v3277
    %v3279 = vshrl.u32 %v2488, 16
    %v3281 = vrot.slane %v3279, 4
    %v3282 = vor.u32 %v3281, %v3277
    %v3283 = vrot.slane %v3282, 4
    %v3285 = vshll.u32 %v2520, 16
    %v3287 = vrot.slane %v3285, 5
    %v3288 = vsel %vm1301, %v3283, %v3287
    %v3289 = vld [vmem:[%s976] sm:$0xe]
    %v3290 = vld [vmem:[%s976 + $0xc] sm:$0xe]
    %v3291 = vld [vmem:[%s976 + $0x18] sm:$0xe]
    %v3292 = vld [vmem:[%s976 + $0x24] sm:$0xe]
    %v3293 = vld [vmem:[%s976 + $0x30] sm:$0xe]
    %v3294 = vld [vmem:[%s976 + $0x3c] sm:$0xe]
    %v3295 = vld [vmem:[%s976 + $0x48] sm:$0xe]
    %v3296 = vld [vmem:[%s976 + $0x54] sm:$0xe]
    %v3297 = vld [vmem:[%s976 + $0x60] sm:$0xe]
    %v3298 = vld [vmem:[%s976 + $0x6c] sm:$0xe]
    %v3299 = vld [vmem:[%s976 + $0x78] sm:$0xe]
    %v3300 = vld [vmem:[%s976 + $0x84] sm:$0xe]
    %v3301 = vld [vmem:[%s976 + $0x90] sm:$0xe]
    %v3302 = vld [vmem:[%s976 + $0x9c] sm:$0xe]
    %v3303 = vld [vmem:[%s976 + $0xa8] sm:$0xe]
    %v3304 = vld [vmem:[%s976 + $0xb4] sm:$0xe]
    %v3305 = vld [vmem:[%s976 + $0xd8] sm:$0xe]
    %v3306 = vld [vmem:[%s976 + $0xe4] sm:$0xe]
    %v3307 = vld [vmem:[%s976 + $0xf0] sm:$0xe]
    %v3308 = vld [vmem:[%s976 + $0xfc] sm:$0xe]
    %v3309 = vld [vmem:[%s976 + $0x108] sm:$0xe]
    %v3310 = vld [vmem:[%s976 + $0x114] sm:$0xe]
    %v3311 = vld [vmem:[%s976 + $0x120] sm:$0xe]
    %v3312 = vld [vmem:[%s976 + $0x12c] sm:$0xe]
    %v3313 = vld [vmem:[%s976 + $0x138] sm:$0xe]
    %v3314 = vld [vmem:[%s976 + $0x144] sm:$0xe]
    %v3315 = vld [vmem:[%s976 + $0x150] sm:$0xe]
    %v3316 = vld [vmem:[%s976 + $0x15c] sm:$0xe]
    %v3317 = vld [vmem:[%s976 + $0x168] sm:$0xe]
    %v3318 = vld [vmem:[%s976 + $0x174] sm:$0xe]
    %v3319 = vld [vmem:[%s976 + $0x180] sm:$0xe]
    %v3320 = vld [vmem:[%s976 + $0x18c] sm:$0xe]
    %v3417 = vrot.slane %v3289, 5
    %v3418 = vrot.slane %v3417, 4
    %v3419 = vrot.slane %v2426, 5
    %v3420 = vsel %vm2200, %v3418, %v3419
    %v3421 = vrot.slane %v3419, 4
    %v3422 = vrot.slane %v2489, 5
    %v3423 = vsel %vm2200, %v3421, %v3422
    %v3424 = vrot.slane %v3290, 5
    %v3425 = vrot.slane %v3424, 4
    %v3426 = vrot.slane %v2428, 5
    %v3427 = vsel %vm2200, %v3425, %v3426
    %v3428 = vrot.slane %v3426, 4
    %v3429 = vrot.slane %v2490, 5
    %v3430 = vsel %vm2200, %v3428, %v3429
    %v3431 = vrot.slane %v3291, 5
    %v3432 = vrot.slane %v3431, 4
    %v3433 = vrot.slane %v2430, 5
    %v3434 = vsel %vm2200, %v3432, %v3433
    %v3435 = vrot.slane %v3433, 4
    %v3436 = vrot.slane %v2491, 5
    %v3437 = vsel %vm2200, %v3435, %v3436
    %v3438 = vrot.slane %v3292, 5
    %v3439 = vrot.slane %v3438, 4
    %v3440 = vrot.slane %v2432, 5
    %v3441 = vsel %vm2200, %v3439, %v3440
    %v3442 = vrot.slane %v3440, 4
    %v3443 = vrot.slane %v2492, 5
    %v3444 = vsel %vm2200, %v3442, %v3443
    %v3445 = vrot.slane %v3293, 5
    %v3446 = vrot.slane %v3445, 4
    %v3447 = vrot.slane %v2434, 5
    %v3448 = vsel %vm2200, %v3446, %v3447
    %v3449 = vrot.slane %v3447, 4
    %v3450 = vrot.slane %v2493, 5
    %v3451 = vsel %vm2200, %v3449, %v3450
    %v3452 = vrot.slane %v3294, 5
    %v3453 = vrot.slane %v3452, 4
    %v3454 = vrot.slane %v2436, 5
    %v3455 = vsel %vm2200, %v3453, %v3454
    %v3456 = vrot.slane %v3454, 4
    %v3457 = vrot.slane %v2494, 5
    %v3458 = vsel %vm2200, %v3456, %v3457
    %v3459 = vrot.slane %v3295, 5
    %v3460 = vrot.slane %v3459, 4
    %v3461 = vrot.slane %v2438, 5
    %v3462 = vsel %vm2200, %v3460, %v3461
    %v3463 = vrot.slane %v3461, 4
    %v3464 = vrot.slane %v2495, 5
    %v3465 = vsel %vm2200, %v3463, %v3464
    %v3466 = vrot.slane %v3296, 5
    %v3467 = vrot.slane %v3466, 4
    %v3468 = vrot.slane %v2440, 5
    %v3469 = vsel %vm2200, %v3467, %v3468
    %v3470 = vrot.slane %v3468, 4
    %v3471 = vrot.slane %v2496, 5
    %v3472 = vsel %vm2200, %v3470, %v3471
    %v3473 = vrot.slane %v3297, 5
    %v3474 = vrot.slane %v3473, 4
    %v3475 = vrot.slane %v2442, 5
    %v3476 = vsel %vm2200, %v3474, %v3475
    %v3477 = vrot.slane %v3475, 4
    %v3478 = vrot.slane %v2497, 5
    %v3479 = vsel %vm2200, %v3477, %v3478
    %v3480 = vrot.slane %v3298, 5
    %v3481 = vrot.slane %v3480, 4
    %v3482 = vrot.slane %v2444, 5
    %v3483 = vsel %vm2200, %v3481, %v3482
    %v3484 = vrot.slane %v3482, 4
    %v3485 = vrot.slane %v2498, 5
    %v3486 = vsel %vm2200, %v3484, %v3485
    %v3487 = vrot.slane %v3299, 5
    %v3488 = vrot.slane %v3487, 4
    %v3489 = vrot.slane %v2446, 5
    %v3490 = vsel %vm2200, %v3488, %v3489
    %v3491 = vrot.slane %v3489, 4
    %v3492 = vrot.slane %v2499, 5
    %v3493 = vsel %vm2200, %v3491, %v3492
    %v3494 = vrot.slane %v3300, 5
    %v3495 = vrot.slane %v3494, 4
    %v3496 = vrot.slane %v2448, 5
    %v3497 = vsel %vm2200, %v3495, %v3496
    %v3498 = vrot.slane %v3496, 4
    %v3499 = vrot.slane %v2500, 5
    %v3500 = vsel %vm2200, %v3498, %v3499
    %v3501 = vrot.slane %v3301, 5
    %v3502 = vrot.slane %v3501, 4
    %v3503 = vrot.slane %v2450, 5
    %v3504 = vsel %vm2200, %v3502, %v3503
    %v3505 = vrot.slane %v3503, 4
    %v3506 = vrot.slane %v2501, 5
    %v3507 = vsel %vm2200, %v3505, %v3506
    %v3508 = vrot.slane %v3302, 5
    %v3509 = vrot.slane %v3508, 4
    %v3510 = vrot.slane %v2452, 5
    %v3511 = vsel %vm2200, %v3509, %v3510
    %v3512 = vrot.slane %v3510, 4
    %v3513 = vrot.slane %v2502, 5
    %v3514 = vsel %vm2200, %v3512, %v3513
    %v3515 = vrot.slane %v3303, 5
    %v3516 = vrot.slane %v3515, 4
    %v3517 = vrot.slane %v2454, 5
    %v3518 = vsel %vm2200, %v3516, %v3517
    %v3519 = vrot.slane %v3517, 4
    %v3520 = vrot.slane %v2503, 5
    %v3521 = vsel %vm2200, %v3519, %v3520
    %v3522 = vrot.slane %v3304, 5
    %v3523 = vrot.slane %v3522, 4
    %v3524 = vrot.slane %v2456, 5
    %v3525 = vsel %vm2200, %v3523, %v3524
    %v3526 = vrot.slane %v3524, 4
    %v3527 = vrot.slane %v2504, 5
    %v3528 = vsel %vm2200, %v3526, %v3527
    %v3529 = vrot.slane %v3305, 5
    %v3530 = vrot.slane %v3529, 4
    %v3531 = vrot.slane %v2458, 5
    %v3532 = vsel %vm2200, %v3530, %v3531
    %v3533 = vrot.slane %v3531, 4
    %v3534 = vrot.slane %v2505, 5
    %v3535 = vsel %vm2200, %v3533, %v3534
    %v3536 = vrot.slane %v3306, 5
    %v3537 = vrot.slane %v3536, 4
    %v3538 = vrot.slane %v2460, 5
    %v3539 = vsel %vm2200, %v3537, %v3538
    %v3540 = vrot.slane %v3538, 4
    %v3541 = vrot.slane %v2506, 5
    %v3542 = vsel %vm2200, %v3540, %v3541
    %v3543 = vrot.slane %v3307, 5
    %v3544 = vrot.slane %v3543, 4
    %v3545 = vrot.slane %v2462, 5
    %v3546 = vsel %vm2200, %v3544, %v3545
    %v3547 = vrot.slane %v3545, 4
    %v3548 = vrot.slane %v2507, 5
    %v3549 = vsel %vm2200, %v3547, %v3548
    %v3550 = vrot.slane %v3308, 5
    %v3551 = vrot.slane %v3550, 4
    %v3552 = vrot.slane %v2464, 5
    %v3553 = vsel %vm2200, %v3551, %v3552
    %v3554 = vrot.slane %v3552, 4
    %v3555 = vrot.slane %v2508, 5
    %v3556 = vsel %vm2200, %v3554, %v3555
    %v3557 = vrot.slane %v3309, 5
    %v3558 = vrot.slane %v3557, 4
    %v3559 = vrot.slane %v2466, 5
    %v3560 = vsel %vm2200, %v3558, %v3559
    %v3561 = vrot.slane %v3559, 4
    %v3562 = vrot.slane %v2509, 5
    %v3563 = vsel %vm2200, %v3561, %v3562
    %v3564 = vrot.slane %v3310, 5
    %v3565 = vrot.slane %v3564, 4
    %v3566 = vrot.slane %v2468, 5
    %v3567 = vsel %vm2200, %v3565, %v3566
    %v3568 = vrot.slane %v3566, 4
    %v3569 = vrot.slane %v2510, 5
    %v3570 = vsel %vm2200, %v3568, %v3569
    %v3571 = vrot.slane %v3311, 5
    %v3572 = vrot.slane %v3571, 4
    %v3573 = vrot.slane %v2470, 5
    %v3574 = vsel %vm2200, %v3572, %v3573
    %v3575 = vrot.slane %v3573, 4
    %v3576 = vrot.slane %v2511, 5
    %v3577 = vsel %vm2200, %v3575, %v3576
    %v3578 = vrot.slane %v3312, 5
    %v3579 = vrot.slane %v3578, 4
    %v3580 = vrot.slane %v2472, 5
    %v3581 = vsel %vm2200, %v3579, %v3580
    %v3582 = vrot.slane %v3580, 4
    %v3583 = vrot.slane %v2512, 5
    %v3584 = vsel %vm2200, %v3582, %v3583
    %v3585 = vrot.slane %v3313, 5
    %v3586 = vrot.slane %v3585, 4
    %v3587 = vrot.slane %v2474, 5
    %v3588 = vsel %vm2200, %v3586, %v3587
    %v3589 = vrot.slane %v3587, 4
    %v3590 = vrot.slane %v2513, 5
    %v3591 = vsel %vm2200, %v3589, %v3590
    %v3592 = vrot.slane %v3314, 5
    %v3593 = vrot.slane %v3592, 4
    %v3594 = vrot.slane %v2476, 5
    %v3595 = vsel %vm2200, %v3593, %v3594
    %v3596 = vrot.slane %v3594, 4
    %v3597 = vrot.slane %v2514, 5
    %v3598 = vsel %vm2200, %v3596, %v3597
    %v3599 = vrot.slane %v3315, 5
    %v3600 = vrot.slane %v3599, 4
    %v3601 = vrot.slane %v2478, 5
    %v3602 = vsel %vm2200, %v3600, %v3601
    %v3603 = vrot.slane %v3601, 4
    %v3604 = vrot.slane %v2515, 5
    %v3605 = vsel %vm2200, %v3603, %v3604
    %v3606 = vrot.slane %v3316, 5
    %v3607 = vrot.slane %v3606, 4
    %v3608 = vrot.slane %v2480, 5
    %v3609 = vsel %vm2200, %v3607, %v3608
    %v3610 = vrot.slane %v3608, 4
    %v3611 = vrot.slane %v2516, 5
    %v3612 = vsel %vm2200, %v3610, %v3611
    %v3613 = vrot.slane %v3317, 5
    %v3614 = vrot.slane %v3613, 4
    %v3615 = vrot.slane %v2482, 5
    %v3616 = vsel %vm2200, %v3614, %v3615
    %v3617 = vrot.slane %v3615, 4
    %v3618 = vrot.slane %v2517, 5
    %v3619 = vsel %vm2200, %v3617, %v3618
    %v3620 = vrot.slane %v3318, 5
    %v3621 = vrot.slane %v3620, 4
    %v3622 = vrot.slane %v2484, 5
    %v3623 = vsel %vm2200, %v3621, %v3622
    %v3624 = vrot.slane %v3622, 4
    %v3625 = vrot.slane %v2518, 5
    %v3626 = vsel %vm2200, %v3624, %v3625
    %v3627 = vrot.slane %v3319, 5
    %v3628 = vrot.slane %v3627, 4
    %v3629 = vrot.slane %v2486, 5
    %v3630 = vsel %vm2200, %v3628, %v3629
    %v3631 = vrot.slane %v3629, 4
    %v3632 = vrot.slane %v2519, 5
    %v3633 = vsel %vm2200, %v3631, %v3632
    %v3634 = vrot.slane %v3320, 5
    %v3635 = vrot.slane %v3634, 4
    %v3636 = vrot.slane %v2488, 5
    %v3637 = vsel %vm2200, %v3635, %v3636
    %v3638 = vrot.slane %v3636, 4
    %v3639 = vrot.slane %v2520, 5
    %v3640 = vsel %vm2200, %v3638, %v3639
    %s3641 = scalar_lea.vmem [#allocation2], 24
    %v3642 = vld [vmem:[%s3641] sm:$0xf]
    %v3643 = vld [vmem:[%s3641 + $0x4] sm:$0xf]
    %v3644 = vld [vmem:[%s3641 + $0xc] sm:$0xf]
    %v3645 = vld [vmem:[%s3641 + $0x10] sm:$0xf]
    %v3646 = vld [vmem:[%s3641 + $0x18] sm:$0xf]
    %v3647 = vld [vmem:[%s3641 + $0x1c] sm:$0xf]
    %v3648 = vld [vmem:[%s3641 + $0x24] sm:$0xf]
    %v3649 = vld [vmem:[%s3641 + $0x28] sm:$0xf]
    %v3650 = vld [vmem:[%s3641 + $0x30] sm:$0xf]
    %v3651 = vld [vmem:[%s3641 + $0x34] sm:$0xf]
    %v3652 = vld [vmem:[%s3641 + $0x3c] sm:$0xf]
    %v3653 = vld [vmem:[%s3641 + $0x40] sm:$0xf]
    %v3654 = vld [vmem:[%s3641 + $0x48] sm:$0xf]
    %v3655 = vld [vmem:[%s3641 + $0x4c] sm:$0xf]
    %v3656 = vld [vmem:[%s3641 + $0x54] sm:$0xf]
    %v3657 = vld [vmem:[%s3641 + $0x58] sm:$0xf]
    %v3658 = vld [vmem:[%s3641 + $0x60] sm:$0xf]
    %v3659 = vld [vmem:[%s3641 + $0x64] sm:$0xf]
    %v3660 = vld [vmem:[%s3641 + $0x6c] sm:$0xf]
    %v3661 = vld [vmem:[%s3641 + $0x70] sm:$0xf]
    %v3662 = vld [vmem:[%s3641 + $0x78] sm:$0xf]
    %v3663 = vld [vmem:[%s3641 + $0x7c] sm:$0xf]
    %v3664 = vld [vmem:[%s3641 + $0x84] sm:$0xf]
    %v3665 = vld [vmem:[%s3641 + $0x88] sm:$0xf]
    %v3666 = vld [vmem:[%s3641 + $0x90] sm:$0xf]
    %v3667 = vld [vmem:[%s3641 + $0x94] sm:$0xf]
    %v3668 = vld [vmem:[%s3641 + $0x9c] sm:$0xf]
    %v3669 = vld [vmem:[%s3641 + $0xa0] sm:$0xf]
    %v3670 = vld [vmem:[%s3641 + $0xa8] sm:$0xf]
    %v3671 = vld [vmem:[%s3641 + $0xac] sm:$0xf]
    %v3672 = vld [vmem:[%s3641 + $0xb4] sm:$0xf]
    %v3673 = vld [vmem:[%s3641 + $0xb8] sm:$0xf]
    %v3674 = vld [vmem:[%s3641 + $0xd8] sm:$0xf]
    %v3675 = vld [vmem:[%s3641 + $0xdc] sm:$0xf]
    %v3676 = vld [vmem:[%s3641 + $0xe4] sm:$0xf]
    %v3677 = vld [vmem:[%s3641 + $0xe8] sm:$0xf]
    %v3678 = vld [vmem:[%s3641 + $0xf0] sm:$0xf]
    %v3679 = vld [vmem:[%s3641 + $0xf4] sm:$0xf]
    %v3680 = vld [vmem:[%s3641 + $0xfc] sm:$0xf]
    %v3681 = vld [vmem:[%s3641 + $0x100] sm:$0xf]
    %v3682 = vld [vmem:[%s3641 + $0x108] sm:$0xf]
    %v3683 = vld [vmem:[%s3641 + $0x10c] sm:$0xf]
    %v3684 = vld [vmem:[%s3641 + $0x114] sm:$0xf]
    %v3685 = vld [vmem:[%s3641 + $0x118] sm:$0xf]
    %v3686 = vld [vmem:[%s3641 + $0x120] sm:$0xf]
    %v3687 = vld [vmem:[%s3641 + $0x124] sm:$0xf]
    %v3688 = vld [vmem:[%s3641 + $0x12c] sm:$0xf]
    %v3689 = vld [vmem:[%s3641 + $0x130] sm:$0xf]
    %v3690 = vld [vmem:[%s3641 + $0x138] sm:$0xf]
    %v3691 = vld [vmem:[%s3641 + $0x13c] sm:$0xf]
    %v3692 = vld [vmem:[%s3641 + $0x144] sm:$0xf]
    %v3693 = vld [vmem:[%s3641 + $0x148] sm:$0xf]
    %v3694 = vld [vmem:[%s3641 + $0x150] sm:$0xf]
    %v3695 = vld [vmem:[%s3641 + $0x154] sm:$0xf]
    %v3696 = vld [vmem:[%s3641 + $0x15c] sm:$0xf]
    %v3697 = vld [vmem:[%s3641 + $0x160] sm:$0xf]
    %v3698 = vld [vmem:[%s3641 + $0x168] sm:$0xf]
    %v3699 = vld [vmem:[%s3641 + $0x16c] sm:$0xf]
    %v3700 = vld [vmem:[%s3641 + $0x174] sm:$0xf]
    %v3701 = vld [vmem:[%s3641 + $0x178] sm:$0xf]
    %v3702 = vld [vmem:[%s3641 + $0x180] sm:$0xf]
    %v3703 = vld [vmem:[%s3641 + $0x184] sm:$0xf]
    %v3704 = vld [vmem:[%s3641 + $0x18c] sm:$0xf]
    %v3705 = vld [vmem:[%s3641 + $0x190] sm:$0xf]
    %v3706 = vld [vmem:[%s3641 + $0x8] sm:$0x1]
    %v3707 = vld [vmem:[%s3641 + $0x14] sm:$0x1]
    %v3708 = vld [vmem:[%s3641 + $0x20] sm:$0x1]
    %v3709 = vld [vmem:[%s3641 + $0x2c] sm:$0x1]
    %v3710 = vld [vmem:[%s3641 + $0x38] sm:$0x1]
    %v3711 = vld [vmem:[%s3641 + $0x44] sm:$0x1]
    %v3712 = vld [vmem:[%s3641 + $0x50] sm:$0x1]
    %v3713 = vld [vmem:[%s3641 + $0x5c] sm:$0x1]
    %v3714 = vld [vmem:[%s3641 + $0x68] sm:$0x1]
    %v3715 = vld [vmem:[%s3641 + $0x74] sm:$0x1]
    %v3716 = vld [vmem:[%s3641 + $0x80] sm:$0x1]
    %v3717 = vld [vmem:[%s3641 + $0x8c] sm:$0x1]
    %v3718 = vld [vmem:[%s3641 + $0x98] sm:$0x1]
    %v3719 = vld [vmem:[%s3641 + $0xa4] sm:$0x1]
    %v3720 = vld [vmem:[%s3641 + $0xb0] sm:$0x1]
    %v3721 = vld [vmem:[%s3641 + $0xbc] sm:$0x1]
    %v3722 = vld [vmem:[%s3641 + $0xe0] sm:$0x1]
    %v3723 = vld [vmem:[%s3641 + $0xec] sm:$0x1]
    %v3724 = vld [vmem:[%s3641 + $0xf8] sm:$0x1]
    %v3725 = vld [vmem:[%s3641 + $0x104] sm:$0x1]
    %v3726 = vld [vmem:[%s3641 + $0x110] sm:$0x1]
    %v3727 = vld [vmem:[%s3641 + $0x11c] sm:$0x1]
    %v3728 = vld [vmem:[%s3641 + $0x128] sm:$0x1]
    %v3729 = vld [vmem:[%s3641 + $0x134] sm:$0x1]
    %v3730 = vld [vmem:[%s3641 + $0x140] sm:$0x1]
    %v3731 = vld [vmem:[%s3641 + $0x14c] sm:$0x1]
    %v3732 = vld [vmem:[%s3641 + $0x158] sm:$0x1]
    %v3733 = vld [vmem:[%s3641 + $0x164] sm:$0x1]
    %v3734 = vld [vmem:[%s3641 + $0x170] sm:$0x1]
    %v3735 = vld [vmem:[%s3641 + $0x17c] sm:$0x1]
    %v3736 = vld [vmem:[%s3641 + $0x188] sm:$0x1]
    %v3737 = vld [vmem:[%s3641 + $0x194] sm:$0x1]
    %v3739 = vshrl.u32 %v3642, 16
    %v3741 = vrot.slane %v3739, 4
    %v3742 = vshll.u32 %v3642, 16
    %v3744 = vrot.slane %v3742, 5
    %v3745 = vor.u32 %v3741, %v3744
    %v3746 = vrot.slane %v3745, 4
    %v3748 = vshll.u32 %v3643, 16
    %v3750 = vrot.slane %v3748, 5
    %v3751 = vsel %vm1301, %v3746, %v3750
    %v3752 = vshrl.u32 %v3643, 16
    %v3754 = vrot.slane %v3752, 4
    %v3755 = vor.u32 %v3754, %v3750
    %v3756 = vrot.slane %v3755, 4
    %v3758 = vshll.u32 %v3706, 16
    %v3760 = vrot.slane %v3758, 5
    %v3761 = vsel %vm1301, %v3756, %v3760
    %v3763 = vshrl.u32 %v3644, 16
    %v3765 = vrot.slane %v3763, 4
    %v3766 = vshll.u32 %v3644, 16
    %v3768 = vrot.slane %v3766, 5
    %v3769 = vor.u32 %v3765, %v3768
    %v3770 = vrot.slane %v3769, 4
    %v3772 = vshll.u32 %v3645, 16
    %v3774 = vrot.slane %v3772, 5
    %v3775 = vsel %vm1301, %v3770, %v3774
    %v3776 = vshrl.u32 %v3645, 16
    %v3778 = vrot.slane %v3776, 4
    %v3779 = vor.u32 %v3778, %v3774
    %v3780 = vrot.slane %v3779, 4
    %v3782 = vshll.u32 %v3707, 16
    %v3784 = vrot.slane %v3782, 5
    %v3785 = vsel %vm1301, %v3780, %v3784
    %v3787 = vshrl.u32 %v3646, 16
    %v3789 = vrot.slane %v3787, 4
    %v3790 = vshll.u32 %v3646, 16
    %v3792 = vrot.slane %v3790, 5
    %v3793 = vor.u32 %v3789, %v3792
    %v3794 = vrot.slane %v3793, 4
    %v3796 = vshll.u32 %v3647, 16
    %v3798 = vrot.slane %v3796, 5
    %v3799 = vsel %vm1301, %v3794, %v3798
    %v3800 = vshrl.u32 %v3647, 16
    %v3802 = vrot.slane %v3800, 4
    %v3803 = vor.u32 %v3802, %v3798
    %v3804 = vrot.slane %v3803, 4
    %v3806 = vshll.u32 %v3708, 16
    %v3808 = vrot.slane %v3806, 5
    %v3809 = vsel %vm1301, %v3804, %v3808
    %v3811 = vshrl.u32 %v3648, 16
    %v3813 = vrot.slane %v3811, 4
    %v3814 = vshll.u32 %v3648, 16
    %v3816 = vrot.slane %v3814, 5
    %v3817 = vor.u32 %v3813, %v3816
    %v3818 = vrot.slane %v3817, 4
    %v3820 = vshll.u32 %v3649, 16
    %v3822 = vrot.slane %v3820, 5
    %v3823 = vsel %vm1301, %v3818, %v3822
    %v3824 = vshrl.u32 %v3649, 16
    %v3826 = vrot.slane %v3824, 4
    %v3827 = vor.u32 %v3826, %v3822
    %v3828 = vrot.slane %v3827, 4
    %v3830 = vshll.u32 %v3709, 16
    %v3832 = vrot.slane %v3830, 5
    %v3833 = vsel %vm1301, %v3828, %v3832
    %v3835 = vshrl.u32 %v3650, 16
    %v3837 = vrot.slane %v3835, 4
    %v3838 = vshll.u32 %v3650, 16
    %v3840 = vrot.slane %v3838, 5
    %v3841 = vor.u32 %v3837, %v3840
    %v3842 = vrot.slane %v3841, 4
    %v3844 = vshll.u32 %v3651, 16
    %v3846 = vrot.slane %v3844, 5
    %v3847 = vsel %vm1301, %v3842, %v3846
    %v3848 = vshrl.u32 %v3651, 16
    %v3850 = vrot.slane %v3848, 4
    %v3851 = vor.u32 %v3850, %v3846
    %v3852 = vrot.slane %v3851, 4
    %v3854 = vshll.u32 %v3710, 16
    %v3856 = vrot.slane %v3854, 5
    %v3857 = vsel %vm1301, %v3852, %v3856
    %v3859 = vshrl.u32 %v3652, 16
    %v3861 = vrot.slane %v3859, 4
    %v3862 = vshll.u32 %v3652, 16
    %v3864 = vrot.slane %v3862, 5
    %v3865 = vor.u32 %v3861, %v3864
    %v3866 = vrot.slane %v3865, 4
    %v3868 = vshll.u32 %v3653, 16
    %v3870 = vrot.slane %v3868, 5
    %v3871 = vsel %vm1301, %v3866, %v3870
    %v3872 = vshrl.u32 %v3653, 16
    %v3874 = vrot.slane %v3872, 4
    %v3875 = vor.u32 %v3874, %v3870
    %v3876 = vrot.slane %v3875, 4
    %v3878 = vshll.u32 %v3711, 16
    %v3880 = vrot.slane %v3878, 5
    %v3881 = vsel %vm1301, %v3876, %v3880
    %v3883 = vshrl.u32 %v3654, 16
    %v3885 = vrot.slane %v3883, 4
    %v3886 = vshll.u32 %v3654, 16
    %v3888 = vrot.slane %v3886, 5
    %v3889 = vor.u32 %v3885, %v3888
    %v3890 = vrot.slane %v3889, 4
    %v3892 = vshll.u32 %v3655, 16
    %v3894 = vrot.slane %v3892, 5
    %v3895 = vsel %vm1301, %v3890, %v3894
    %v3896 = vshrl.u32 %v3655, 16
    %v3898 = vrot.slane %v3896, 4
    %v3899 = vor.u32 %v3898, %v3894
    %v3900 = vrot.slane %v3899, 4
    %v3902 = vshll.u32 %v3712, 16
    %v3904 = vrot.slane %v3902, 5
    %v3905 = vsel %vm1301, %v3900, %v3904
    %v3907 = vshrl.u32 %v3656, 16
    %v3909 = vrot.slane %v3907, 4
    %v3910 = vshll.u32 %v3656, 16
    %v3912 = vrot.slane %v3910, 5
    %v3913 = vor.u32 %v3909, %v3912
    %v3914 = vrot.slane %v3913, 4
    %v3916 = vshll.u32 %v3657, 16
    %v3918 = vrot.slane %v3916, 5
    %v3919 = vsel %vm1301, %v3914, %v3918
    %v3920 = vshrl.u32 %v3657, 16
    %v3922 = vrot.slane %v3920, 4
    %v3923 = vor.u32 %v3922, %v3918
    %v3924 = vrot.slane %v3923, 4
    %v3926 = vshll.u32 %v3713, 16
    %v3928 = vrot.slane %v3926, 5
    %v3929 = vsel %vm1301, %v3924, %v3928
    %v3931 = vshrl.u32 %v3658, 16
    %v3933 = vrot.slane %v3931, 4
    %v3934 = vshll.u32 %v3658, 16
    %v3936 = vrot.slane %v3934, 5
    %v3937 = vor.u32 %v3933, %v3936
    %v3938 = vrot.slane %v3937, 4
    %v3940 = vshll.u32 %v3659, 16
    %v3942 = vrot.slane %v3940, 5
    %v3943 = vsel %vm1301, %v3938, %v3942
    %v3944 = vshrl.u32 %v3659, 16
    %v3946 = vrot.slane %v3944, 4
    %v3947 = vor.u32 %v3946, %v3942
    %v3948 = vrot.slane %v3947, 4
    %v3950 = vshll.u32 %v3714, 16
    %v3952 = vrot.slane %v3950, 5
    %v3953 = vsel %vm1301, %v3948, %v3952
    %v3955 = vshrl.u32 %v3660, 16
    %v3957 = vrot.slane %v3955, 4
    %v3958 = vshll.u32 %v3660, 16
    %v3960 = vrot.slane %v3958, 5
    %v3961 = vor.u32 %v3957, %v3960
    %v3962 = vrot.slane %v3961, 4
    %v3964 = vshll.u32 %v3661, 16
    %v3966 = vrot.slane %v3964, 5
    %v3967 = vsel %vm1301, %v3962, %v3966
    %v3968 = vshrl.u32 %v3661, 16
    %v3970 = vrot.slane %v3968, 4
    %v3971 = vor.u32 %v3970, %v3966
    %v3972 = vrot.slane %v3971, 4
    %v3974 = vshll.u32 %v3715, 16
    %v3976 = vrot.slane %v3974, 5
    %v3977 = vsel %vm1301, %v3972, %v3976
    %v3979 = vshrl.u32 %v3662, 16
    %v3981 = vrot.slane %v3979, 4
    %v3982 = vshll.u32 %v3662, 16
    %v3984 = vrot.slane %v3982, 5
    %v3985 = vor.u32 %v3981, %v3984
    %v3986 = vrot.slane %v3985, 4
    %v3988 = vshll.u32 %v3663, 16
    %v3990 = vrot.slane %v3988, 5
    %v3991 = vsel %vm1301, %v3986, %v3990
    %v3992 = vshrl.u32 %v3663, 16
    %v3994 = vrot.slane %v3992, 4
    %v3995 = vor.u32 %v3994, %v3990
    %v3996 = vrot.slane %v3995, 4
    %v3998 = vshll.u32 %v3716, 16
    %v4000 = vrot.slane %v3998, 5
    %v4001 = vsel %vm1301, %v3996, %v4000
    %v4003 = vshrl.u32 %v3664, 16
    %v4005 = vrot.slane %v4003, 4
    %v4006 = vshll.u32 %v3664, 16
    %v4008 = vrot.slane %v4006, 5
    %v4009 = vor.u32 %v4005, %v4008
    %v4010 = vrot.slane %v4009, 4
    %v4012 = vshll.u32 %v3665, 16
    %v4014 = vrot.slane %v4012, 5
    %v4015 = vsel %vm1301, %v4010, %v4014
    %v4016 = vshrl.u32 %v3665, 16
    %v4018 = vrot.slane %v4016, 4
    %v4019 = vor.u32 %v4018, %v4014
    %v4020 = vrot.slane %v4019, 4
    %v4022 = vshll.u32 %v3717, 16
    %v4024 = vrot.slane %v4022, 5
    %v4025 = vsel %vm1301, %v4020, %v4024
    %v4027 = vshrl.u32 %v3666, 16
    %v4029 = vrot.slane %v4027, 4
    %v4030 = vshll.u32 %v3666, 16
    %v4032 = vrot.slane %v4030, 5
    %v4033 = vor.u32 %v4029, %v4032
    %v4034 = vrot.slane %v4033, 4
    %v4036 = vshll.u32 %v3667, 16
    %v4038 = vrot.slane %v4036, 5
    %v4039 = vsel %vm1301, %v4034, %v4038
    %v4040 = vshrl.u32 %v3667, 16
    %v4042 = vrot.slane %v4040, 4
    %v4043 = vor.u32 %v4042, %v4038
    %v4044 = vrot.slane %v4043, 4
    %v4046 = vshll.u32 %v3718, 16
    %v4048 = vrot.slane %v4046, 5
    %v4049 = vsel %vm1301, %v4044, %v4048
    %v4051 = vshrl.u32 %v3668, 16
    %v4053 = vrot.slane %v4051, 4
    %v4054 = vshll.u32 %v3668, 16
    %v4056 = vrot.slane %v4054, 5
    %v4057 = vor.u32 %v4053, %v4056
    %v4058 = vrot.slane %v4057, 4
    %v4060 = vshll.u32 %v3669, 16
    %v4062 = vrot.slane %v4060, 5
    %v4063 = vsel %vm1301, %v4058, %v4062
    %v4064 = vshrl.u32 %v3669, 16
    %v4066 = vrot.slane %v4064, 4
    %v4067 = vor.u32 %v4066, %v4062
    %v4068 = vrot.slane %v4067, 4
    %v4070 = vshll.u32 %v3719, 16
    %v4072 = vrot.slane %v4070, 5
    %v4073 = vsel %vm1301, %v4068, %v4072
    %v4075 = vshrl.u32 %v3670, 16
    %v4077 = vrot.slane %v4075, 4
    %v4078 = vshll.u32 %v3670, 16
    %v4080 = vrot.slane %v4078, 5
    %v4081 = vor.u32 %v4077, %v4080
    %v4082 = vrot.slane %v4081, 4
    %v4084 = vshll.u32 %v3671, 16
    %v4086 = vrot.slane %v4084, 5
    %v4087 = vsel %vm1301, %v4082, %v4086
    %v4088 = vshrl.u32 %v3671, 16
    %v4090 = vrot.slane %v4088, 4
    %v4091 = vor.u32 %v4090, %v4086
    %v4092 = vrot.slane %v4091, 4
    %v4094 = vshll.u32 %v3720, 16
    %v4096 = vrot.slane %v4094, 5
    %v4097 = vsel %vm1301, %v4092, %v4096
    %v4099 = vshrl.u32 %v3672, 16
    %v4101 = vrot.slane %v4099, 4
    %v4102 = vshll.u32 %v3672, 16
    %v4104 = vrot.slane %v4102, 5
    %v4105 = vor.u32 %v4101, %v4104
    %v4106 = vrot.slane %v4105, 4
    %v4108 = vshll.u32 %v3673, 16
    %v4110 = vrot.slane %v4108, 5
    %v4111 = vsel %vm1301, %v4106, %v4110
    %v4112 = vshrl.u32 %v3673, 16
    %v4114 = vrot.slane %v4112, 4
    %v4115 = vor.u32 %v4114, %v4110
    %v4116 = vrot.slane %v4115, 4
    %v4118 = vshll.u32 %v3721, 16
    %v4120 = vrot.slane %v4118, 5
    %v4121 = vsel %vm1301, %v4116, %v4120
    %v4123 = vshrl.u32 %v3674, 16
    %v4125 = vrot.slane %v4123, 4
    %v4126 = vshll.u32 %v3674, 16
    %v4128 = vrot.slane %v4126, 5
    %v4129 = vor.u32 %v4125, %v4128
    %v4130 = vrot.slane %v4129, 4
    %v4132 = vshll.u32 %v3675, 16
    %v4134 = vrot.slane %v4132, 5
    %v4135 = vsel %vm1301, %v4130, %v4134
    %v4136 = vshrl.u32 %v3675, 16
    %v4138 = vrot.slane %v4136, 4
    %v4139 = vor.u32 %v4138, %v4134
    %v4140 = vrot.slane %v4139, 4
    %v4142 = vshll.u32 %v3722, 16
    %v4144 = vrot.slane %v4142, 5
    %v4145 = vsel %vm1301, %v4140, %v4144
    %v4147 = vshrl.u32 %v3676, 16
    %v4149 = vrot.slane %v4147, 4
    %v4150 = vshll.u32 %v3676, 16
    %v4152 = vrot.slane %v4150, 5
    %v4153 = vor.u32 %v4149, %v4152
    %v4154 = vrot.slane %v4153, 4
    %v4156 = vshll.u32 %v3677, 16
    %v4158 = vrot.slane %v4156, 5
    %v4159 = vsel %vm1301, %v4154, %v4158
    %v4160 = vshrl.u32 %v3677, 16
    %v4162 = vrot.slane %v4160, 4
    %v4163 = vor.u32 %v4162, %v4158
    %v4164 = vrot.slane %v4163, 4
    %v4166 = vshll.u32 %v3723, 16
    %v4168 = vrot.slane %v4166, 5
    %v4169 = vsel %vm1301, %v4164, %v4168
    %v4171 = vshrl.u32 %v3678, 16
    %v4173 = vrot.slane %v4171, 4
    %v4174 = vshll.u32 %v3678, 16
    %v4176 = vrot.slane %v4174, 5
    %v4177 = vor.u32 %v4173, %v4176
    %v4178 = vrot.slane %v4177, 4
    %v4180 = vshll.u32 %v3679, 16
    %v4182 = vrot.slane %v4180, 5
    %v4183 = vsel %vm1301, %v4178, %v4182
    %v4184 = vshrl.u32 %v3679, 16
    %v4186 = vrot.slane %v4184, 4
    %v4187 = vor.u32 %v4186, %v4182
    %v4188 = vrot.slane %v4187, 4
    %v4190 = vshll.u32 %v3724, 16
    %v4192 = vrot.slane %v4190, 5
    %v4193 = vsel %vm1301, %v4188, %v4192
    %v4195 = vshrl.u32 %v3680, 16
    %v4197 = vrot.slane %v4195, 4
    %v4198 = vshll.u32 %v3680, 16
    %v4200 = vrot.slane %v4198, 5
    %v4201 = vor.u32 %v4197, %v4200
    %v4202 = vrot.slane %v4201, 4
    %v4204 = vshll.u32 %v3681, 16
    %v4206 = vrot.slane %v4204, 5
    %v4207 = vsel %vm1301, %v4202, %v4206
    %v4208 = vshrl.u32 %v3681, 16
    %v4210 = vrot.slane %v4208, 4
    %v4211 = vor.u32 %v4210, %v4206
    %v4212 = vrot.slane %v4211, 4
    %v4214 = vshll.u32 %v3725, 16
    %v4216 = vrot.slane %v4214, 5
    %v4217 = vsel %vm1301, %v4212, %v4216
    %v4219 = vshrl.u32 %v3682, 16
    %v4221 = vrot.slane %v4219, 4
    %v4222 = vshll.u32 %v3682, 16
    %v4224 = vrot.slane %v4222, 5
    %v4225 = vor.u32 %v4221, %v4224
    %v4226 = vrot.slane %v4225, 4
    %v4228 = vshll.u32 %v3683, 16
    %v4230 = vrot.slane %v4228, 5
    %v4231 = vsel %vm1301, %v4226, %v4230
    %v4232 = vshrl.u32 %v3683, 16
    %v4234 = vrot.slane %v4232, 4
    %v4235 = vor.u32 %v4234, %v4230
    %v4236 = vrot.slane %v4235, 4
    %v4238 = vshll.u32 %v3726, 16
    %v4240 = vrot.slane %v4238, 5
    %v4241 = vsel %vm1301, %v4236, %v4240
    %v4243 = vshrl.u32 %v3684, 16
    %v4245 = vrot.slane %v4243, 4
    %v4246 = vshll.u32 %v3684, 16
    %v4248 = vrot.slane %v4246, 5
    %v4249 = vor.u32 %v4245, %v4248
    %v4250 = vrot.slane %v4249, 4
    %v4252 = vshll.u32 %v3685, 16
    %v4254 = vrot.slane %v4252, 5
    %v4255 = vsel %vm1301, %v4250, %v4254
    %v4256 = vshrl.u32 %v3685, 16
    %v4258 = vrot.slane %v4256, 4
    %v4259 = vor.u32 %v4258, %v4254
    %v4260 = vrot.slane %v4259, 4
    %v4262 = vshll.u32 %v3727, 16
    %v4264 = vrot.slane %v4262, 5
    %v4265 = vsel %vm1301, %v4260, %v4264
    %v4267 = vshrl.u32 %v3686, 16
    %v4269 = vrot.slane %v4267, 4
    %v4270 = vshll.u32 %v3686, 16
    %v4272 = vrot.slane %v4270, 5
    %v4273 = vor.u32 %v4269, %v4272
    %v4274 = vrot.slane %v4273, 4
    %v4276 = vshll.u32 %v3687, 16
    %v4278 = vrot.slane %v4276, 5
    %v4279 = vsel %vm1301, %v4274, %v4278
    %v4280 = vshrl.u32 %v3687, 16
    %v4282 = vrot.slane %v4280, 4
    %v4283 = vor.u32 %v4282, %v4278
    %v4284 = vrot.slane %v4283, 4
    %v4286 = vshll.u32 %v3728, 16
    %v4288 = vrot.slane %v4286, 5
    %v4289 = vsel %vm1301, %v4284, %v4288
    %v4291 = vshrl.u32 %v3688, 16
    %v4293 = vrot.slane %v4291, 4
    %v4294 = vshll.u32 %v3688, 16
    %v4296 = vrot.slane %v4294, 5
    %v4297 = vor.u32 %v4293, %v4296
    %v4298 = vrot.slane %v4297, 4
    %v4300 = vshll.u32 %v3689, 16
    %v4302 = vrot.slane %v4300, 5
    %v4303 = vsel %vm1301, %v4298, %v4302
    %v4304 = vshrl.u32 %v3689, 16
    %v4306 = vrot.slane %v4304, 4
    %v4307 = vor.u32 %v4306, %v4302
    %v4308 = vrot.slane %v4307, 4
    %v4310 = vshll.u32 %v3729, 16
    %v4312 = vrot.slane %v4310, 5
    %v4313 = vsel %vm1301, %v4308, %v4312
    %v4315 = vshrl.u32 %v3690, 16
    %v4317 = vrot.slane %v4315, 4
    %v4318 = vshll.u32 %v3690, 16
    %v4320 = vrot.slane %v4318, 5
    %v4321 = vor.u32 %v4317, %v4320
    %v4322 = vrot.slane %v4321, 4
    %v4324 = vshll.u32 %v3691, 16
    %v4326 = vrot.slane %v4324, 5
    %v4327 = vsel %vm1301, %v4322, %v4326
    %v4328 = vshrl.u32 %v3691, 16
    %v4330 = vrot.slane %v4328, 4
    %v4331 = vor.u32 %v4330, %v4326
    %v4332 = vrot.slane %v4331, 4
    %v4334 = vshll.u32 %v3730, 16
    %v4336 = vrot.slane %v4334, 5
    %v4337 = vsel %vm1301, %v4332, %v4336
    %v4339 = vshrl.u32 %v3692, 16
    %v4341 = vrot.slane %v4339, 4
    %v4342 = vshll.u32 %v3692, 16
    %v4344 = vrot.slane %v4342, 5
    %v4345 = vor.u32 %v4341, %v4344
    %v4346 = vrot.slane %v4345, 4
    %v4348 = vshll.u32 %v3693, 16
    %v4350 = vrot.slane %v4348, 5
    %v4351 = vsel %vm1301, %v4346, %v4350
    %v4352 = vshrl.u32 %v3693, 16
    %v4354 = vrot.slane %v4352, 4
    %v4355 = vor.u32 %v4354, %v4350
    %v4356 = vrot.slane %v4355, 4
    %v4358 = vshll.u32 %v3731, 16
    %v4360 = vrot.slane %v4358, 5
    %v4361 = vsel %vm1301, %v4356, %v4360
    %v4363 = vshrl.u32 %v3694, 16
    %v4365 = vrot.slane %v4363, 4
    %v4366 = vshll.u32 %v3694, 16
    %v4368 = vrot.slane %v4366, 5
    %v4369 = vor.u32 %v4365, %v4368
    %v4370 = vrot.slane %v4369, 4
    %v4372 = vshll.u32 %v3695, 16
    %v4374 = vrot.slane %v4372, 5
    %v4375 = vsel %vm1301, %v4370, %v4374
    %v4376 = vshrl.u32 %v3695, 16
    %v4378 = vrot.slane %v4376, 4
    %v4379 = vor.u32 %v4378, %v4374
    %v4380 = vrot.slane %v4379, 4
    %v4382 = vshll.u32 %v3732, 16
    %v4384 = vrot.slane %v4382, 5
    %v4385 = vsel %vm1301, %v4380, %v4384
    %v4387 = vshrl.u32 %v3696, 16
    %v4389 = vrot.slane %v4387, 4
    %v4390 = vshll.u32 %v3696, 16
    %v4392 = vrot.slane %v4390, 5
    %v4393 = vor.u32 %v4389, %v4392
    %v4394 = vrot.slane %v4393, 4
    %v4396 = vshll.u32 %v3697, 16
    %v4398 = vrot.slane %v4396, 5
    %v4399 = vsel %vm1301, %v4394, %v4398
    %v4400 = vshrl.u32 %v3697, 16
    %v4402 = vrot.slane %v4400, 4
    %v4403 = vor.u32 %v4402, %v4398
    %v4404 = vrot.slane %v4403, 4
    %v4406 = vshll.u32 %v3733, 16
    %v4408 = vrot.slane %v4406, 5
    %v4409 = vsel %vm1301, %v4404, %v4408
    %v4411 = vshrl.u32 %v3698, 16
    %v4413 = vrot.slane %v4411, 4
    %v4414 = vshll.u32 %v3698, 16
    %v4416 = vrot.slane %v4414, 5
    %v4417 = vor.u32 %v4413, %v4416
    %v4418 = vrot.slane %v4417, 4
    %v4420 = vshll.u32 %v3699, 16
    %v4422 = vrot.slane %v4420, 5
    %v4423 = vsel %vm1301, %v4418, %v4422
    %v4424 = vshrl.u32 %v3699, 16
    %v4426 = vrot.slane %v4424, 4
    %v4427 = vor.u32 %v4426, %v4422
    %v4428 = vrot.slane %v4427, 4
    %v4430 = vshll.u32 %v3734, 16
    %v4432 = vrot.slane %v4430, 5
    %v4433 = vsel %vm1301, %v4428, %v4432
    %v4435 = vshrl.u32 %v3700, 16
    %v4437 = vrot.slane %v4435, 4
    %v4438 = vshll.u32 %v3700, 16
    %v4440 = vrot.slane %v4438, 5
    %v4441 = vor.u32 %v4437, %v4440
    %v4442 = vrot.slane %v4441, 4
    %v4444 = vshll.u32 %v3701, 16
    %v4446 = vrot.slane %v4444, 5
    %v4447 = vsel %vm1301, %v4442, %v4446
    %v4448 = vshrl.u32 %v3701, 16
    %v4450 = vrot.slane %v4448, 4
    %v4451 = vor.u32 %v4450, %v4446
    %v4452 = vrot.slane %v4451, 4
    %v4454 = vshll.u32 %v3735, 16
    %v4456 = vrot.slane %v4454, 5
    %v4457 = vsel %vm1301, %v4452, %v4456
    %v4459 = vshrl.u32 %v3702, 16
    %v4461 = vrot.slane %v4459, 4
    %v4462 = vshll.u32 %v3702, 16
    %v4464 = vrot.slane %v4462, 5
    %v4465 = vor.u32 %v4461, %v4464
    %v4466 = vrot.slane %v4465, 4
    %v4468 = vshll.u32 %v3703, 16
    %v4470 = vrot.slane %v4468, 5
    %v4471 = vsel %vm1301, %v4466, %v4470
    %v4472 = vshrl.u32 %v3703, 16
    %v4474 = vrot.slane %v4472, 4
    %v4475 = vor.u32 %v4474, %v4470
    %v4476 = vrot.slane %v4475, 4
    %v4478 = vshll.u32 %v3736, 16
    %v4480 = vrot.slane %v4478, 5
    %v4481 = vsel %vm1301, %v4476, %v4480
    %v4483 = vshrl.u32 %v3704, 16
    %v4485 = vrot.slane %v4483, 4
    %v4486 = vshll.u32 %v3704, 16
    %v4488 = vrot.slane %v4486, 5
    %v4489 = vor.u32 %v4485, %v4488
    %v4490 = vrot.slane %v4489, 4
    %v4492 = vshll.u32 %v3705, 16
    %v4494 = vrot.slane %v4492, 5
    %v4495 = vsel %vm1301, %v4490, %v4494
    %v4496 = vshrl.u32 %v3705, 16
    %v4498 = vrot.slane %v4496, 4
    %v4499 = vor.u32 %v4498, %v4494
    %v4500 = vrot.slane %v4499, 4
    %v4502 = vshll.u32 %v3737, 16
    %v4504 = vrot.slane %v4502, 5
    %v4505 = vsel %vm1301, %v4500, %v4504
    %v4506 = vld [vmem:[%s3641] sm:$0xe]
    %v4507 = vld [vmem:[%s3641 + $0xc] sm:$0xe]
    %v4508 = vld [vmem:[%s3641 + $0x18] sm:$0xe]
    %v4509 = vld [vmem:[%s3641 + $0x24] sm:$0xe]
    %v4510 = vld [vmem:[%s3641 + $0x30] sm:$0xe]
    %v4511 = vld [vmem:[%s3641 + $0x3c] sm:$0xe]
    %v4512 = vld [vmem:[%s3641 + $0x48] sm:$0xe]
    %v4513 = vld [vmem:[%s3641 + $0x54] sm:$0xe]
    %v4514 = vld [vmem:[%s3641 + $0x60] sm:$0xe]
    %v4515 = vld [vmem:[%s3641 + $0x6c] sm:$0xe]
    %v4516 = vld [vmem:[%s3641 + $0x78] sm:$0xe]
    %v4517 = vld [vmem:[%s3641 + $0x84] sm:$0xe]
    %v4518 = vld [vmem:[%s3641 + $0x90] sm:$0xe]
    %v4519 = vld [vmem:[%s3641 + $0x9c] sm:$0xe]
    %v4520 = vld [vmem:[%s3641 + $0xa8] sm:$0xe]
    %v4521 = vld [vmem:[%s3641 + $0xb4] sm:$0xe]
    %v4522 = vld [vmem:[%s3641 + $0xd8] sm:$0xe]
    %v4523 = vld [vmem:[%s3641 + $0xe4] sm:$0xe]
    %v4524 = vld [vmem:[%s3641 + $0xf0] sm:$0xe]
    %v4525 = vld [vmem:[%s3641 + $0xfc] sm:$0xe]
    %v4526 = vld [vmem:[%s3641 + $0x108] sm:$0xe]
    %v4527 = vld [vmem:[%s3641 + $0x114] sm:$0xe]
    %v4528 = vld [vmem:[%s3641 + $0x120] sm:$0xe]
    %v4529 = vld [vmem:[%s3641 + $0x12c] sm:$0xe]
    %v4530 = vld [vmem:[%s3641 + $0x138] sm:$0xe]
    %v4531 = vld [vmem:[%s3641 + $0x144] sm:$0xe]
    %v4532 = vld [vmem:[%s3641 + $0x150] sm:$0xe]
    %v4533 = vld [vmem:[%s3641 + $0x15c] sm:$0xe]
    %v4534 = vld [vmem:[%s3641 + $0x168] sm:$0xe]
    %v4535 = vld [vmem:[%s3641 + $0x174] sm:$0xe]
    %v4536 = vld [vmem:[%s3641 + $0x180] sm:$0xe]
    %v4537 = vld [vmem:[%s3641 + $0x18c] sm:$0xe]
    %v4634 = vrot.slane %v4506, 5
    %v4635 = vrot.slane %v4634, 4
    %v4636 = vrot.slane %v3643, 5
    %v4637 = vsel %vm2200, %v4635, %v4636
    %v4638 = vrot.slane %v4636, 4
    %v4639 = vrot.slane %v3706, 5
    %v4640 = vsel %vm2200, %v4638, %v4639
    %v4641 = vrot.slane %v4507, 5
    %v4642 = vrot.slane %v4641, 4
    %v4643 = vrot.slane %v3645, 5
    %v4644 = vsel %vm2200, %v4642, %v4643
    %v4645 = vrot.slane %v4643, 4
    %v4646 = vrot.slane %v3707, 5
    %v4647 = vsel %vm2200, %v4645, %v4646
    %v4648 = vrot.slane %v4508, 5
    %v4649 = vrot.slane %v4648, 4
    %v4650 = vrot.slane %v3647, 5
    %v4651 = vsel %vm2200, %v4649, %v4650
    %v4652 = vrot.slane %v4650, 4
    %v4653 = vrot.slane %v3708, 5
    %v4654 = vsel %vm2200, %v4652, %v4653
    %v4655 = vrot.slane %v4509, 5
    %v4656 = vrot.slane %v4655, 4
    %v4657 = vrot.slane %v3649, 5
    %v4658 = vsel %vm2200, %v4656, %v4657
    %v4659 = vrot.slane %v4657, 4
    %v4660 = vrot.slane %v3709, 5
    %v4661 = vsel %vm2200, %v4659, %v4660
    %v4662 = vrot.slane %v4510, 5
    %v4663 = vrot.slane %v4662, 4
    %v4664 = vrot.slane %v3651, 5
    %v4665 = vsel %vm2200, %v4663, %v4664
    %v4666 = vrot.slane %v4664, 4
    %v4667 = vrot.slane %v3710, 5
    %v4668 = vsel %vm2200, %v4666, %v4667
    %v4669 = vrot.slane %v4511, 5
    %v4670 = vrot.slane %v4669, 4
    %v4671 = vrot.slane %v3653, 5
    %v4672 = vsel %vm2200, %v4670, %v4671
    %v4673 = vrot.slane %v4671, 4
    %v4674 = vrot.slane %v3711, 5
    %v4675 = vsel %vm2200, %v4673, %v4674
    %v4676 = vrot.slane %v4512, 5
    %v4677 = vrot.slane %v4676, 4
    %v4678 = vrot.slane %v3655, 5
    %v4679 = vsel %vm2200, %v4677, %v4678
    %v4680 = vrot.slane %v4678, 4
    %v4681 = vrot.slane %v3712, 5
    %v4682 = vsel %vm2200, %v4680, %v4681
    %v4683 = vrot.slane %v4513, 5
    %v4684 = vrot.slane %v4683, 4
    %v4685 = vrot.slane %v3657, 5
    %v4686 = vsel %vm2200, %v4684, %v4685
    %v4687 = vrot.slane %v4685, 4
    %v4688 = vrot.slane %v3713, 5
    %v4689 = vsel %vm2200, %v4687, %v4688
    %v4690 = vrot.slane %v4514, 5
    %v4691 = vrot.slane %v4690, 4
    %v4692 = vrot.slane %v3659, 5
    %v4693 = vsel %vm2200, %v4691, %v4692
    %v4694 = vrot.slane %v4692, 4
    %v4695 = vrot.slane %v3714, 5
    %v4696 = vsel %vm2200, %v4694, %v4695
    %v4697 = vrot.slane %v4515, 5
    %v4698 = vrot.slane %v4697, 4
    %v4699 = vrot.slane %v3661, 5
    %v4700 = vsel %vm2200, %v4698, %v4699
    %v4701 = vrot.slane %v4699, 4
    %v4702 = vrot.slane %v3715, 5
    %v4703 = vsel %vm2200, %v4701, %v4702
    %v4704 = vrot.slane %v4516, 5
    %v4705 = vrot.slane %v4704, 4
    %v4706 = vrot.slane %v3663, 5
    %v4707 = vsel %vm2200, %v4705, %v4706
    %v4708 = vrot.slane %v4706, 4
    %v4709 = vrot.slane %v3716, 5
    %v4710 = vsel %vm2200, %v4708, %v4709
    %v4711 = vrot.slane %v4517, 5
    %v4712 = vrot.slane %v4711, 4
    %v4713 = vrot.slane %v3665, 5
    %v4714 = vsel %vm2200, %v4712, %v4713
    %v4715 = vrot.slane %v4713, 4
    %v4716 = vrot.slane %v3717, 5
    %v4717 = vsel %vm2200, %v4715, %v4716
    %v4718 = vrot.slane %v4518, 5
    %v4719 = vrot.slane %v4718, 4
    %v4720 = vrot.slane %v3667, 5
    %v4721 = vsel %vm2200, %v4719, %v4720
    %v4722 = vrot.slane %v4720, 4
    %v4723 = vrot.slane %v3718, 5
    %v4724 = vsel %vm2200, %v4722, %v4723
    %v4725 = vrot.slane %v4519, 5
    %v4726 = vrot.slane %v4725, 4
    %v4727 = vrot.slane %v3669, 5
    %v4728 = vsel %vm2200, %v4726, %v4727
    %v4729 = vrot.slane %v4727, 4
    %v4730 = vrot.slane %v3719, 5
    %v4731 = vsel %vm2200, %v4729, %v4730
    %v4732 = vrot.slane %v4520, 5
    %v4733 = vrot.slane %v4732, 4
    %v4734 = vrot.slane %v3671, 5
    %v4735 = vsel %vm2200, %v4733, %v4734
    %v4736 = vrot.slane %v4734, 4
    %v4737 = vrot.slane %v3720, 5
    %v4738 = vsel %vm2200, %v4736, %v4737
    %v4739 = vrot.slane %v4521, 5
    %v4740 = vrot.slane %v4739, 4
    %v4741 = vrot.slane %v3673, 5
    %v4742 = vsel %vm2200, %v4740, %v4741
    %v4743 = vrot.slane %v4741, 4
    %v4744 = vrot.slane %v3721, 5
    %v4745 = vsel %vm2200, %v4743, %v4744
    %v4746 = vrot.slane %v4522, 5
    %v4747 = vrot.slane %v4746, 4
    %v4748 = vrot.slane %v3675, 5
    %v4749 = vsel %vm2200, %v4747, %v4748
    %v4750 = vrot.slane %v4748, 4
    %v4751 = vrot.slane %v3722, 5
    %v4752 = vsel %vm2200, %v4750, %v4751
    %v4753 = vrot.slane %v4523, 5
    %v4754 = vrot.slane %v4753, 4
    %v4755 = vrot.slane %v3677, 5
    %v4756 = vsel %vm2200, %v4754, %v4755
    %v4757 = vrot.slane %v4755, 4
    %v4758 = vrot.slane %v3723, 5
    %v4759 = vsel %vm2200, %v4757, %v4758
    %v4760 = vrot.slane %v4524, 5
    %v4761 = vrot.slane %v4760, 4
    %v4762 = vrot.slane %v3679, 5
    %v4763 = vsel %vm2200, %v4761, %v4762
    %v4764 = vrot.slane %v4762, 4
    %v4765 = vrot.slane %v3724, 5
    %v4766 = vsel %vm2200, %v4764, %v4765
    %v4767 = vrot.slane %v4525, 5
    %v4768 = vrot.slane %v4767, 4
    %v4769 = vrot.slane %v3681, 5
    %v4770 = vsel %vm2200, %v4768, %v4769
    %v4771 = vrot.slane %v4769, 4
    %v4772 = vrot.slane %v3725, 5
    %v4773 = vsel %vm2200, %v4771, %v4772
    %v4774 = vrot.slane %v4526, 5
    %v4775 = vrot.slane %v4774, 4
    %v4776 = vrot.slane %v3683, 5
    %v4777 = vsel %vm2200, %v4775, %v4776
    %v4778 = vrot.slane %v4776, 4
    %v4779 = vrot.slane %v3726, 5
    %v4780 = vsel %vm2200, %v4778, %v4779
    %v4781 = vrot.slane %v4527, 5
    %v4782 = vrot.slane %v4781, 4
    %v4783 = vrot.slane %v3685, 5
    %v4784 = vsel %vm2200, %v4782, %v4783
    %v4785 = vrot.slane %v4783, 4
    %v4786 = vrot.slane %v3727, 5
    %v4787 = vsel %vm2200, %v4785, %v4786
    %v4788 = vrot.slane %v4528, 5
    %v4789 = vrot.slane %v4788, 4
    %v4790 = vrot.slane %v3687, 5
    %v4791 = vsel %vm2200, %v4789, %v4790
    %v4792 = vrot.slane %v4790, 4
    %v4793 = vrot.slane %v3728, 5
    %v4794 = vsel %vm2200, %v4792, %v4793
    %v4795 = vrot.slane %v4529, 5
    %v4796 = vrot.slane %v4795, 4
    %v4797 = vrot.slane %v3689, 5
    %v4798 = vsel %vm2200, %v4796, %v4797
    %v4799 = vrot.slane %v4797, 4
    %v4800 = vrot.slane %v3729, 5
    %v4801 = vsel %vm2200, %v4799, %v4800
    %v4802 = vrot.slane %v4530, 5
    %v4803 = vrot.slane %v4802, 4
    %v4804 = vrot.slane %v3691, 5
    %v4805 = vsel %vm2200, %v4803, %v4804
    %v4806 = vrot.slane %v4804, 4
    %v4807 = vrot.slane %v3730, 5
    %v4808 = vsel %vm2200, %v4806, %v4807
    %v4809 = vrot.slane %v4531, 5
    %v4810 = vrot.slane %v4809, 4
    %v4811 = vrot.slane %v3693, 5
    %v4812 = vsel %vm2200, %v4810, %v4811
    %v4813 = vrot.slane %v4811, 4
    %v4814 = vrot.slane %v3731, 5
    %v4815 = vsel %vm2200, %v4813, %v4814
    %v4816 = vrot.slane %v4532, 5
    %v4817 = vrot.slane %v4816, 4
    %v4818 = vrot.slane %v3695, 5
    %v4819 = vsel %vm2200, %v4817, %v4818
    %v4820 = vrot.slane %v4818, 4
    %v4821 = vrot.slane %v3732, 5
    %v4822 = vsel %vm2200, %v4820, %v4821
    %v4823 = vrot.slane %v4533, 5
    %v4824 = vrot.slane %v4823, 4
    %v4825 = vrot.slane %v3697, 5
    %v4826 = vsel %vm2200, %v4824, %v4825
    %v4827 = vrot.slane %v4825, 4
    %v4828 = vrot.slane %v3733, 5
    %v4829 = vsel %vm2200, %v4827, %v4828
    %v4830 = vrot.slane %v4534, 5
    %v4831 = vrot.slane %v4830, 4
    %v4832 = vrot.slane %v3699, 5
    %v4833 = vsel %vm2200, %v4831, %v4832
    %v4834 = vrot.slane %v4832, 4
    %v4835 = vrot.slane %v3734, 5
    %v4836 = vsel %vm2200, %v4834, %v4835
    %v4837 = vrot.slane %v4535, 5
    %v4838 = vrot.slane %v4837, 4
    %v4839 = vrot.slane %v3701, 5
    %v4840 = vsel %vm2200, %v4838, %v4839
    %v4841 = vrot.slane %v4839, 4
    %v4842 = vrot.slane %v3735, 5
    %v4843 = vsel %vm2200, %v4841, %v4842
    %v4844 = vrot.slane %v4536, 5
    %v4845 = vrot.slane %v4844, 4
    %v4846 = vrot.slane %v3703, 5
    %v4847 = vsel %vm2200, %v4845, %v4846
    %v4848 = vrot.slane %v4846, 4
    %v4849 = vrot.slane %v3736, 5
    %v4850 = vsel %vm2200, %v4848, %v4849
    %v4851 = vrot.slane %v4537, 5
    %v4852 = vrot.slane %v4851, 4
    %v4853 = vrot.slane %v3705, 5
    %v4854 = vsel %vm2200, %v4852, %v4853
    %v4855 = vrot.slane %v4853, 4
    %v4856 = vrot.slane %v3737, 5
    %v4857 = vsel %vm2200, %v4855, %v4856
    %v4890 = vunpack.c.l.b16 %v1203
    %v4891 = vunpack.c.l.b16 %v1204
    %v4892 = vunpack.c.l.b16 %v1205
    %v4893 = vunpack.c.l.b16 %v1206
    %v4894 = vunpack.c.l.b16 %v1207
    %v4895 = vunpack.c.l.b16 %v1208
    %v4896 = vunpack.c.l.b16 %v1209
    %v4897 = vunpack.c.l.b16 %v1210
    %v4898 = vunpack.c.l.b16 %v1211
    %v4899 = vunpack.c.l.b16 %v1212
    %v4900 = vunpack.c.l.b16 %v1213
    %v4901 = vunpack.c.l.b16 %v1214
    %v4902 = vunpack.c.l.b16 %v1215
    %v4903 = vunpack.c.l.b16 %v1216
    %v4904 = vunpack.c.l.b16 %v1217
    %v4905 = vunpack.c.l.b16 %v1218
    %v4906 = vunpack.c.l.b16 %v1219
    %v4907 = vunpack.c.l.b16 %v1220
    %v4908 = vunpack.c.l.b16 %v1221
    %v4909 = vunpack.c.l.b16 %v1222
    %v4910 = vunpack.c.l.b16 %v1223
    %v4911 = vunpack.c.l.b16 %v1224
    %v4912 = vunpack.c.l.b16 %v1225
    %v4913 = vunpack.c.l.b16 %v1226
    %v4914 = vunpack.c.l.b16 %v1227
    %v4915 = vunpack.c.l.b16 %v1228
    %v4916 = vunpack.c.l.b16 %v1229
    %v4917 = vunpack.c.l.b16 %v1230
    %v4918 = vunpack.c.l.b16 %v1231
    %v4919 = vunpack.c.l.b16 %v1232
    %v4920 = vunpack.c.l.b16 %v1233
    %v4921 = vunpack.c.l.b16 %v1234
    %v4922 = vunpack.c.l.b16 %v1235
    %v4923 = vunpack.c.l.b16 %v1236
    %v4924 = vunpack.c.l.b16 %v1237
    %v4925 = vunpack.c.l.b16 %v1238
    %v4926 = vunpack.c.l.b16 %v1239
    %v4927 = vunpack.c.l.b16 %v1240
    %v4928 = vunpack.c.l.b16 %v1241
    %v4929 = vunpack.c.l.b16 %v1242
    %v4930 = vunpack.c.l.b16 %v1243
    %v4931 = vunpack.c.l.b16 %v1244
    %v4932 = vunpack.c.l.b16 %v1245
    %v4933 = vunpack.c.l.b16 %v1246
    %v4934 = vunpack.c.l.b16 %v1247
    %v4935 = vunpack.c.l.b16 %v1248
    %v4936 = vunpack.c.l.b16 %v1249
    %v4937 = vunpack.c.l.b16 %v1250
    %v4938 = vunpack.c.l.b16 %v1251
    %v4939 = vunpack.c.l.b16 %v1252
    %v4940 = vunpack.c.l.b16 %v1253
    %v4941 = vunpack.c.l.b16 %v1254
    %v4942 = vunpack.c.l.b16 %v1255
    %v4943 = vunpack.c.l.b16 %v1256
    %v4944 = vunpack.c.l.b16 %v1257
    %v4945 = vunpack.c.l.b16 %v1258
    %v4946 = vunpack.c.l.b16 %v1259
    %v4947 = vunpack.c.l.b16 %v1260
    %v4948 = vunpack.c.l.b16 %v1261
    %v4949 = vunpack.c.l.b16 %v1262
    %v4950 = vunpack.c.l.b16 %v1263
    %v4951 = vunpack.c.l.b16 %v1264
    %v4952 = vunpack.c.l.b16 %v1265
    %v4953 = vunpack.c.l.b16 %v1266
    %v4954 = vpack.c.b16 %v4891, %v4890
    %v4955 = vpack.c.b16 %v4893, %v4892
    %v4956 = vpack.c.b16 %v4895, %v4894
    %v4957 = vpack.c.b16 %v4897, %v4896
    %v4958 = vpack.c.b16 %v4899, %v4898
    %v4959 = vpack.c.b16 %v4901, %v4900
    %v4960 = vpack.c.b16 %v4903, %v4902
    %v4961 = vpack.c.b16 %v4905, %v4904
    %v4962 = vpack.c.b16 %v4907, %v4906
    %v4963 = vpack.c.b16 %v4909, %v4908
    %v4964 = vpack.c.b16 %v4911, %v4910
    %v4965 = vpack.c.b16 %v4913, %v4912
    %v4966 = vpack.c.b16 %v4915, %v4914
    %v4967 = vpack.c.b16 %v4917, %v4916
    %v4968 = vpack.c.b16 %v4919, %v4918
    %v4969 = vpack.c.b16 %v4921, %v4920
    %v4970 = vpack.c.b16 %v4923, %v4922
    %v4971 = vpack.c.b16 %v4925, %v4924
    %v4972 = vpack.c.b16 %v4927, %v4926
    %v4973 = vpack.c.b16 %v4929, %v4928
    %v4974 = vpack.c.b16 %v4931, %v4930
    %v4975 = vpack.c.b16 %v4933, %v4932
    %v4976 = vpack.c.b16 %v4935, %v4934
    %v4977 = vpack.c.b16 %v4937, %v4936
    %v4978 = vpack.c.b16 %v4939, %v4938
    %v4979 = vpack.c.b16 %v4941, %v4940
    %v4980 = vpack.c.b16 %v4943, %v4942
    %v4981 = vpack.c.b16 %v4945, %v4944
    %v4982 = vpack.c.b16 %v4947, %v4946
    %v4983 = vpack.c.b16 %v4949, %v4948
    %v4984 = vpack.c.b16 %v4951, %v4950
    %v4985 = vpack.c.b16 %v4953, %v4952
    %v4986 = vunpack.c.l.b16 %v1315
    %v4987 = vunpack.c.l.b16 %v1325
    %v4988 = vunpack.c.l.b16 %v1339
    %v4989 = vunpack.c.l.b16 %v1349
    %v4990 = vunpack.c.l.b16 %v1363
    %v4991 = vunpack.c.l.b16 %v1373
    %v4992 = vunpack.c.l.b16 %v1387
    %v4993 = vunpack.c.l.b16 %v1397
    %v4994 = vunpack.c.l.b16 %v1411
    %v4995 = vunpack.c.l.b16 %v1421
    %v4996 = vunpack.c.l.b16 %v1435
    %v4997 = vunpack.c.l.b16 %v1445
    %v4998 = vunpack.c.l.b16 %v1459
    %v4999 = vunpack.c.l.b16 %v1469
    %v5000 = vunpack.c.l.b16 %v1483
    %v5001 = vunpack.c.l.b16 %v1493
    %v5002 = vunpack.c.l.b16 %v1507
    %v5003 = vunpack.c.l.b16 %v1517
    %v5004 = vunpack.c.l.b16 %v1531
    %v5005 = vunpack.c.l.b16 %v1541
    %v5006 = vunpack.c.l.b16 %v1555
    %v5007 = vunpack.c.l.b16 %v1565
    %v5008 = vunpack.c.l.b16 %v1579
    %v5009 = vunpack.c.l.b16 %v1589
    %v5010 = vunpack.c.l.b16 %v1603
    %v5011 = vunpack.c.l.b16 %v1613
    %v5012 = vunpack.c.l.b16 %v1627
    %v5013 = vunpack.c.l.b16 %v1637
    %v5014 = vunpack.c.l.b16 %v1651
    %v5015 = vunpack.c.l.b16 %v1661
    %v5016 = vunpack.c.l.b16 %v1675
    %v5017 = vunpack.c.l.b16 %v1685
    %v5018 = vunpack.c.l.b16 %v1699
    %v5019 = vunpack.c.l.b16 %v1709
    %v5020 = vunpack.c.l.b16 %v1723
    %v5021 = vunpack.c.l.b16 %v1733
    %v5022 = vunpack.c.l.b16 %v1747
    %v5023 = vunpack.c.l.b16 %v1757
    %v5024 = vunpack.c.l.b16 %v1771
    %v5025 = vunpack.c.l.b16 %v1781
    %v5026 = vunpack.c.l.b16 %v1795
    %v5027 = vunpack.c.l.b16 %v1805
    %v5028 = vunpack.c.l.b16 %v1819
    %v5029 = vunpack.c.l.b16 %v1829
    %v5030 = vunpack.c.l.b16 %v1843
    %v5031 = vunpack.c.l.b16 %v1853
    %v5032 = vunpack.c.l.b16 %v1867
    %v5033 = vunpack.c.l.b16 %v1877
    %v5034 = vunpack.c.l.b16 %v1891
    %v5035 = vunpack.c.l.b16 %v1901
    %v5036 = vunpack.c.l.b16 %v1915
    %v5037 = vunpack.c.l.b16 %v1925
    %v5038 = vunpack.c.l.b16 %v1939
    %v5039 = vunpack.c.l.b16 %v1949
    %v5040 = vunpack.c.l.b16 %v1963
    %v5041 = vunpack.c.l.b16 %v1973
    %v5042 = vunpack.c.l.b16 %v1987
    %v5043 = vunpack.c.l.b16 %v1997
    %v5044 = vunpack.c.l.b16 %v2011
    %v5045 = vunpack.c.l.b16 %v2021
    %v5046 = vunpack.c.l.b16 %v2035
    %v5047 = vunpack.c.l.b16 %v2045
    %v5048 = vunpack.c.l.b16 %v2059
    %v5049 = vunpack.c.l.b16 %v2069
    %v5050 = vpack.c.b16 %v4987, %v4986
    %v5051 = vpack.c.b16 %v4989, %v4988
    %v5052 = vpack.c.b16 %v4991, %v4990
    %v5053 = vpack.c.b16 %v4993, %v4992
    %v5054 = vpack.c.b16 %v4995, %v4994
    %v5055 = vpack.c.b16 %v4997, %v4996
    %v5056 = vpack.c.b16 %v4999, %v4998
    %v5057 = vpack.c.b16 %v5001, %v5000
    %v5058 = vpack.c.b16 %v5003, %v5002
    %v5059 = vpack.c.b16 %v5005, %v5004
    %v5060 = vpack.c.b16 %v5007, %v5006
    %v5061 = vpack.c.b16 %v5009, %v5008
    %v5062 = vpack.c.b16 %v5011, %v5010
    %v5063 = vpack.c.b16 %v5013, %v5012
    %v5064 = vpack.c.b16 %v5015, %v5014
    %v5065 = vpack.c.b16 %v5017, %v5016
    %v5066 = vpack.c.b16 %v5019, %v5018
    %v5067 = vpack.c.b16 %v5021, %v5020
    %v5068 = vpack.c.b16 %v5023, %v5022
    %v5069 = vpack.c.b16 %v5025, %v5024
    %v5070 = vpack.c.b16 %v5027, %v5026
    %v5071 = vpack.c.b16 %v5029, %v5028
    %v5072 = vpack.c.b16 %v5031, %v5030
    %v5073 = vpack.c.b16 %v5033, %v5032
    %v5074 = vpack.c.b16 %v5035, %v5034
    %v5075 = vpack.c.b16 %v5037, %v5036
    %v5076 = vpack.c.b16 %v5039, %v5038
    %v5077 = vpack.c.b16 %v5041, %v5040
    %v5078 = vpack.c.b16 %v5043, %v5042
    %v5079 = vpack.c.b16 %v5045, %v5044
    %v5080 = vpack.c.b16 %v5047, %v5046
    %v5081 = vpack.c.b16 %v5049, %v5048
    %5082 = vrot.lane.b32.xlu0 %v5050, 3
    %v5083 = vpop.permute.xlu0 %5082
    %5084 = vrot.lane.b32.xlu0 %v5051, 3
    %v5085 = vpop.permute.xlu0 %5084
    %5086 = vrot.lane.b32.xlu0 %v5052, 3
    %v5087 = vpop.permute.xlu0 %5086
    %5088 = vrot.lane.b32.xlu0 %v5053, 3
    %v5089 = vpop.permute.xlu0 %5088
    %5090 = vrot.lane.b32.xlu0 %v5054, 3
    %v5091 = vpop.permute.xlu0 %5090
    %5092 = vrot.lane.b32.xlu0 %v5055, 3
    %v5093 = vpop.permute.xlu0 %5092
    %5094 = vrot.lane.b32.xlu0 %v5056, 3
    %v5095 = vpop.permute.xlu0 %5094
    %5096 = vrot.lane.b32.xlu0 %v5057, 3
    %v5097 = vpop.permute.xlu0 %5096
    %5098 = vrot.lane.b32.xlu0 %v5058, 3
    %v5099 = vpop.permute.xlu0 %5098
    %5100 = vrot.lane.b32.xlu0 %v5059, 3
    %v5101 = vpop.permute.xlu0 %5100
    %5102 = vrot.lane.b32.xlu0 %v5060, 3
    %v5103 = vpop.permute.xlu0 %5102
    %5104 = vrot.lane.b32.xlu0 %v5061, 3
    %v5105 = vpop.permute.xlu0 %5104
    %5106 = vrot.lane.b32.xlu0 %v5062, 3
    %v5107 = vpop.permute.xlu0 %5106
    %5108 = vrot.lane.b32.xlu0 %v5063, 3
    %v5109 = vpop.permute.xlu0 %5108
    %5110 = vrot.lane.b32.xlu0 %v5064, 3
    %v5111 = vpop.permute.xlu0 %5110
    %5112 = vrot.lane.b32.xlu0 %v5065, 3
    %v5113 = vpop.permute.xlu0 %5112
    %5114 = vrot.lane.b32.xlu0 %v5066, 3
    %v5115 = vpop.permute.xlu0 %5114
    %5116 = vrot.lane.b32.xlu0 %v5067, 3
    %v5117 = vpop.permute.xlu0 %5116
    %5118 = vrot.lane.b32.xlu0 %v5068, 3
    %v5119 = vpop.permute.xlu0 %5118
    %5120 = vrot.lane.b32.xlu0 %v5069, 3
    %v5121 = vpop.permute.xlu0 %5120
    %5122 = vrot.lane.b32.xlu0 %v5070, 3
    %v5123 = vpop.permute.xlu0 %5122
    %5124 = vrot.lane.b32.xlu0 %v5071, 3
    %v5125 = vpop.permute.xlu0 %5124
    %5126 = vrot.lane.b32.xlu0 %v5072, 3
    %v5127 = vpop.permute.xlu0 %5126
    %5128 = vrot.lane.b32.xlu0 %v5073, 3
    %v5129 = vpop.permute.xlu0 %5128
    %5130 = vrot.lane.b32.xlu0 %v5074, 3
    %v5131 = vpop.permute.xlu0 %5130
    %5132 = vrot.lane.b32.xlu0 %v5075, 3
    %v5133 = vpop.permute.xlu0 %5132
    %5134 = vrot.lane.b32.xlu0 %v5076, 3
    %v5135 = vpop.permute.xlu0 %5134
    %5136 = vrot.lane.b32.xlu0 %v5077, 3
    %v5137 = vpop.permute.xlu0 %5136
    %5138 = vrot.lane.b32.xlu0 %v5078, 3
    %v5139 = vpop.permute.xlu0 %5138
    %5140 = vrot.lane.b32.xlu0 %v5079, 3
    %v5141 = vpop.permute.xlu0 %5140
    %5142 = vrot.lane.b32.xlu0 %v5080, 3
    %v5143 = vpop.permute.xlu0 %5142
    %5144 = vrot.lane.b32.xlu0 %v5081, 3
    %v5145 = vpop.permute.xlu0 %5144
    %v5146 = vunpack.c.l.b16 %v2204
    %v5147 = vunpack.c.l.b16 %v2207
    %v5148 = vunpack.c.l.b16 %v2211
    %v5149 = vunpack.c.l.b16 %v2214
    %v5150 = vunpack.c.l.b16 %v2218
    %v5151 = vunpack.c.l.b16 %v2221
    %v5152 = vunpack.c.l.b16 %v2225
    %v5153 = vunpack.c.l.b16 %v2228
    %v5154 = vunpack.c.l.b16 %v2232
    %v5155 = vunpack.c.l.b16 %v2235
    %v5156 = vunpack.c.l.b16 %v2239
    %v5157 = vunpack.c.l.b16 %v2242
    %v5158 = vunpack.c.l.b16 %v2246
    %v5159 = vunpack.c.l.b16 %v2249
    %v5160 = vunpack.c.l.b16 %v2253
    %v5161 = vunpack.c.l.b16 %v2256
    %v5162 = vunpack.c.l.b16 %v2260
    %v5163 = vunpack.c.l.b16 %v2263
    %v5164 = vunpack.c.l.b16 %v2267
    %v5165 = vunpack.c.l.b16 %v2270
    %v5166 = vunpack.c.l.b16 %v2274
    %v5167 = vunpack.c.l.b16 %v2277
    %v5168 = vunpack.c.l.b16 %v2281
    %v5169 = vunpack.c.l.b16 %v2284
    %v5170 = vunpack.c.l.b16 %v2288
    %v5171 = vunpack.c.l.b16 %v2291
    %v5172 = vunpack.c.l.b16 %v2295
    %v5173 = vunpack.c.l.b16 %v2298
    %v5174 = vunpack.c.l.b16 %v2302
    %v5175 = vunpack.c.l.b16 %v2305
    %v5176 = vunpack.c.l.b16 %v2309
    %v5177 = vunpack.c.l.b16 %v2312
    %v5178 = vunpack.c.l.b16 %v2316
    %v5179 = vunpack.c.l.b16 %v2319
    %v5180 = vunpack.c.l.b16 %v2323
    %v5181 = vunpack.c.l.b16 %v2326
    %v5182 = vunpack.c.l.b16 %v2330
    %v5183 = vunpack.c.l.b16 %v2333
    %v5184 = vunpack.c.l.b16 %v2337
    %v5185 = vunpack.c.l.b16 %v2340
    %v5186 = vunpack.c.l.b16 %v2344
    %v5187 = vunpack.c.l.b16 %v2347
    %v5188 = vunpack.c.l.b16 %v2351
    %v5189 = vunpack.c.l.b16 %v2354
    %v5190 = vunpack.c.l.b16 %v2358
    %v5191 = vunpack.c.l.b16 %v2361
    %v5192 = vunpack.c.l.b16 %v2365
    %v5193 = vunpack.c.l.b16 %v2368
    %v5194 = vunpack.c.l.b16 %v2372
    %v5195 = vunpack.c.l.b16 %v2375
    %v5196 = vunpack.c.l.b16 %v2379
    %v5197 = vunpack.c.l.b16 %v2382
    %v5198 = vunpack.c.l.b16 %v2386
    %v5199 = vunpack.c.l.b16 %v2389
    %v5200 = vunpack.c.l.b16 %v2393
    %v5201 = vunpack.c.l.b16 %v2396
    %v5202 = vunpack.c.l.b16 %v2400
    %v5203 = vunpack.c.l.b16 %v2403
    %v5204 = vunpack.c.l.b16 %v2407
    %v5205 = vunpack.c.l.b16 %v2410
    %v5206 = vunpack.c.l.b16 %v2414
    %v5207 = vunpack.c.l.b16 %v2417
    %v5208 = vunpack.c.l.b16 %v2421
    %v5209 = vunpack.c.l.b16 %v2424
    %v5210 = vpack.c.b16 %v5147, %v5146
    %v5211 = vpack.c.b16 %v5149, %v5148
    %v5212 = vpack.c.b16 %v5151, %v5150
    %v5213 = vpack.c.b16 %v5153, %v5152
    %v5214 = vpack.c.b16 %v5155, %v5154
    %v5215 = vpack.c.b16 %v5157, %v5156
    %v5216 = vpack.c.b16 %v5159, %v5158
    %v5217 = vpack.c.b16 %v5161, %v5160
    %v5218 = vpack.c.b16 %v5163, %v5162
    %v5219 = vpack.c.b16 %v5165, %v5164
    %v5220 = vpack.c.b16 %v5167, %v5166
    %v5221 = vpack.c.b16 %v5169, %v5168
    %v5222 = vpack.c.b16 %v5171, %v5170
    %v5223 = vpack.c.b16 %v5173, %v5172
    %v5224 = vpack.c.b16 %v5175, %v5174
    %v5225 = vpack.c.b16 %v5177, %v5176
    %v5226 = vpack.c.b16 %v5179, %v5178
    %v5227 = vpack.c.b16 %v5181, %v5180
    %v5228 = vpack.c.b16 %v5183, %v5182
    %v5229 = vpack.c.b16 %v5185, %v5184
    %v5230 = vpack.c.b16 %v5187, %v5186
    %v5231 = vpack.c.b16 %v5189, %v5188
    %v5232 = vpack.c.b16 %v5191, %v5190
    %v5233 = vpack.c.b16 %v5193, %v5192
    %v5234 = vpack.c.b16 %v5195, %v5194
    %v5235 = vpack.c.b16 %v5197, %v5196
    %v5236 = vpack.c.b16 %v5199, %v5198
    %v5237 = vpack.c.b16 %v5201, %v5200
    %v5238 = vpack.c.b16 %v5203, %v5202
    %v5239 = vpack.c.b16 %v5205, %v5204
    %v5240 = vpack.c.b16 %v5207, %v5206
    %v5241 = vpack.c.b16 %v5209, %v5208
    %5242 = vrot.lane.b32.xlu0 %v5210, 6
    %v5243 = vpop.permute.xlu0 %5242
    %5244 = vrot.lane.b32.xlu0 %v5211, 6
    %v5245 = vpop.permute.xlu0 %5244
    %5246 = vrot.lane.b32.xlu0 %v5212, 6
    %v5247 = vpop.permute.xlu0 %5246
    %5248 = vrot.lane.b32.xlu0 %v5213, 6
    %v5249 = vpop.permute.xlu0 %5248
    %5250 = vrot.lane.b32.xlu0 %v5214, 6
    %v5251 = vpop.permute.xlu0 %5250
    %5252 = vrot.lane.b32.xlu0 %v5215, 6
    %v5253 = vpop.permute.xlu0 %5252
    %5254 = vrot.lane.b32.xlu0 %v5216, 6
    %v5255 = vpop.permute.xlu0 %5254
    %5256 = vrot.lane.b32.xlu0 %v5217, 6
    %v5257 = vpop.permute.xlu0 %5256
    %5258 = vrot.lane.b32.xlu0 %v5218, 6
    %v5259 = vpop.permute.xlu0 %5258
    %5260 = vrot.lane.b32.xlu0 %v5219, 6
    %v5261 = vpop.permute.xlu0 %5260
    %5262 = vrot.lane.b32.xlu0 %v5220, 6
    %v5263 = vpop.permute.xlu0 %5262
    %5264 = vrot.lane.b32.xlu0 %v5221, 6
    %v5265 = vpop.permute.xlu0 %5264
    %5266 = vrot.lane.b32.xlu0 %v5222, 6
    %v5267 = vpop.permute.xlu0 %5266
    %5268 = vrot.lane.b32.xlu0 %v5223, 6
    %v5269 = vpop.permute.xlu0 %5268
    %5270 = vrot.lane.b32.xlu0 %v5224, 6
    %v5271 = vpop.permute.xlu0 %5270
    %5272 = vrot.lane.b32.xlu0 %v5225, 6
    %v5273 = vpop.permute.xlu0 %5272
    %5274 = vrot.lane.b32.xlu0 %v5226, 6
    %v5275 = vpop.permute.xlu0 %5274
    %5276 = vrot.lane.b32.xlu0 %v5227, 6
    %v5277 = vpop.permute.xlu0 %5276
    %5278 = vrot.lane.b32.xlu0 %v5228, 6
    %v5279 = vpop.permute.xlu0 %5278
    %5280 = vrot.lane.b32.xlu0 %v5229, 6
    %v5281 = vpop.permute.xlu0 %5280
    %5282 = vrot.lane.b32.xlu0 %v5230, 6
    %v5283 = vpop.permute.xlu0 %5282
    %5284 = vrot.lane.b32.xlu0 %v5231, 6
    %v5285 = vpop.permute.xlu0 %5284
    %5286 = vrot.lane.b32.xlu0 %v5232, 6
    %v5287 = vpop.permute.xlu0 %5286
    %5288 = vrot.lane.b32.xlu0 %v5233, 6
    %v5289 = vpop.permute.xlu0 %5288
    %5290 = vrot.lane.b32.xlu0 %v5234, 6
    %v5291 = vpop.permute.xlu0 %5290
    %5292 = vrot.lane.b32.xlu0 %v5235, 6
    %v5293 = vpop.permute.xlu0 %5292
    %5294 = vrot.lane.b32.xlu0 %v5236, 6
    %v5295 = vpop.permute.xlu0 %5294
    %5296 = vrot.lane.b32.xlu0 %v5237, 6
    %v5297 = vpop.permute.xlu0 %5296
    %5298 = vrot.lane.b32.xlu0 %v5238, 6
    %v5299 = vpop.permute.xlu0 %5298
    %5300 = vrot.lane.b32.xlu0 %v5239, 6
    %v5301 = vpop.permute.xlu0 %5300
    %5302 = vrot.lane.b32.xlu0 %v5240, 6
    %v5303 = vpop.permute.xlu0 %5302
    %5304 = vrot.lane.b32.xlu0 %v5241, 6
    %v5305 = vpop.permute.xlu0 %5304
    %v5338 = vunpack.c.l.b16 %v2425
    %v5339 = vunpack.c.l.b16 %v2426
    %v5340 = vunpack.c.l.b16 %v2427
    %v5341 = vunpack.c.l.b16 %v2428
    %v5342 = vunpack.c.l.b16 %v2429
    %v5343 = vunpack.c.l.b16 %v2430
    %v5344 = vunpack.c.l.b16 %v2431
    %v5345 = vunpack.c.l.b16 %v2432
    %v5346 = vunpack.c.l.b16 %v2433
    %v5347 = vunpack.c.l.b16 %v2434
    %v5348 = vunpack.c.l.b16 %v2435
    %v5349 = vunpack.c.l.b16 %v2436
    %v5350 = vunpack.c.l.b16 %v2437
    %v5351 = vunpack.c.l.b16 %v2438
    %v5352 = vunpack.c.l.b16 %v2439
    %v5353 = vunpack.c.l.b16 %v2440
    %v5354 = vunpack.c.l.b16 %v2441
    %v5355 = vunpack.c.l.b16 %v2442
    %v5356 = vunpack.c.l.b16 %v2443
    %v5357 = vunpack.c.l.b16 %v2444
    %v5358 = vunpack.c.l.b16 %v2445
    %v5359 = vunpack.c.l.b16 %v2446
    %v5360 = vunpack.c.l.b16 %v2447
    %v5361 = vunpack.c.l.b16 %v2448
    %v5362 = vunpack.c.l.b16 %v2449
    %v5363 = vunpack.c.l.b16 %v2450
    %v5364 = vunpack.c.l.b16 %v2451
    %v5365 = vunpack.c.l.b16 %v2452
    %v5366 = vunpack.c.l.b16 %v2453
    %v5367 = vunpack.c.l.b16 %v2454
    %v5368 = vunpack.c.l.b16 %v2455
    %v5369 = vunpack.c.l.b16 %v2456
    %v5370 = vunpack.c.l.b16 %v2457
    %v5371 = vunpack.c.l.b16 %v2458
    %v5372 = vunpack.c.l.b16 %v2459
    %v5373 = vunpack.c.l.b16 %v2460
    %v5374 = vunpack.c.l.b16 %v2461
    %v5375 = vunpack.c.l.b16 %v2462
    %v5376 = vunpack.c.l.b16 %v2463
    %v5377 = vunpack.c.l.b16 %v2464
    %v5378 = vunpack.c.l.b16 %v2465
    %v5379 = vunpack.c.l.b16 %v2466
    %v5380 = vunpack.c.l.b16 %v2467
    %v5381 = vunpack.c.l.b16 %v2468
    %v5382 = vunpack.c.l.b16 %v2469
    %v5383 = vunpack.c.l.b16 %v2470
    %v5384 = vunpack.c.l.b16 %v2471
    %v5385 = vunpack.c.l.b16 %v2472
    %v5386 = vunpack.c.l.b16 %v2473
    %v5387 = vunpack.c.l.b16 %v2474
    %v5388 = vunpack.c.l.b16 %v2475
    %v5389 = vunpack.c.l.b16 %v2476
    %v5390 = vunpack.c.l.b16 %v2477
    %v5391 = vunpack.c.l.b16 %v2478
    %v5392 = vunpack.c.l.b16 %v2479
    %v5393 = vunpack.c.l.b16 %v2480
    %v5394 = vunpack.c.l.b16 %v2481
    %v5395 = vunpack.c.l.b16 %v2482
    %v5396 = vunpack.c.l.b16 %v2483
    %v5397 = vunpack.c.l.b16 %v2484
    %v5398 = vunpack.c.l.b16 %v2485
    %v5399 = vunpack.c.l.b16 %v2486
    %v5400 = vunpack.c.l.b16 %v2487
    %v5401 = vunpack.c.l.b16 %v2488
    %v5402 = vpack.c.b16 %v5339, %v5338
    %v5403 = vpack.c.b16 %v5341, %v5340
    %v5404 = vpack.c.b16 %v5343, %v5342
    %v5405 = vpack.c.b16 %v5345, %v5344
    %v5406 = vpack.c.b16 %v5347, %v5346
    %v5407 = vpack.c.b16 %v5349, %v5348
    %v5408 = vpack.c.b16 %v5351, %v5350
    %v5409 = vpack.c.b16 %v5353, %v5352
    %v5410 = vpack.c.b16 %v5355, %v5354
    %v5411 = vpack.c.b16 %v5357, %v5356
    %v5412 = vpack.c.b16 %v5359, %v5358
    %v5413 = vpack.c.b16 %v5361, %v5360
    %v5414 = vpack.c.b16 %v5363, %v5362
    %v5415 = vpack.c.b16 %v5365, %v5364
    %v5416 = vpack.c.b16 %v5367, %v5366
    %v5417 = vpack.c.b16 %v5369, %v5368
    %v5418 = vpack.c.b16 %v5371, %v5370
    %v5419 = vpack.c.b16 %v5373, %v5372
    %v5420 = vpack.c.b16 %v5375, %v5374
    %v5421 = vpack.c.b16 %v5377, %v5376
    %v5422 = vpack.c.b16 %v5379, %v5378
    %v5423 = vpack.c.b16 %v5381, %v5380
    %v5424 = vpack.c.b16 %v5383, %v5382
    %v5425 = vpack.c.b16 %v5385, %v5384
    %v5426 = vpack.c.b16 %v5387, %v5386
    %v5427 = vpack.c.b16 %v5389, %v5388
    %v5428 = vpack.c.b16 %v5391, %v5390
    %v5429 = vpack.c.b16 %v5393, %v5392
    %v5430 = vpack.c.b16 %v5395, %v5394
    %v5431 = vpack.c.b16 %v5397, %v5396
    %v5432 = vpack.c.b16 %v5399, %v5398
    %v5433 = vpack.c.b16 %v5401, %v5400
    %5434 = vrot.lane.b32.xlu0 %v5402, 9
    %v5435 = vpop.permute.xlu0 %5434
    %5436 = vrot.lane.b32.xlu0 %v5403, 9
    %v5437 = vpop.permute.xlu0 %5436
    %5438 = vrot.lane.b32.xlu0 %v5404, 9
    %v5439 = vpop.permute.xlu0 %5438
    %5440 = vrot.lane.b32.xlu0 %v5405, 9
    %v5441 = vpop.permute.xlu0 %5440
    %5442 = vrot.lane.b32.xlu0 %v5406, 9
    %v5443 = vpop.permute.xlu0 %5442
    %5444 = vrot.lane.b32.xlu0 %v5407, 9
    %v5445 = vpop.permute.xlu0 %5444
    %5446 = vrot.lane.b32.xlu0 %v5408, 9
    %v5447 = vpop.permute.xlu0 %5446
    %5448 = vrot.lane.b32.xlu0 %v5409, 9
    %v5449 = vpop.permute.xlu0 %5448
    %5450 = vrot.lane.b32.xlu0 %v5410, 9
    %v5451 = vpop.permute.xlu0 %5450
    %5452 = vrot.lane.b32.xlu0 %v5411, 9
    %v5453 = vpop.permute.xlu0 %5452
    %5454 = vrot.lane.b32.xlu0 %v5412, 9
    %v5455 = vpop.permute.xlu0 %5454
    %5456 = vrot.lane.b32.xlu0 %v5413, 9
    %v5457 = vpop.permute.xlu0 %5456
    %5458 = vrot.lane.b32.xlu0 %v5414, 9
    %v5459 = vpop.permute.xlu0 %5458
    %5460 = vrot.lane.b32.xlu0 %v5415, 9
    %v5461 = vpop.permute.xlu0 %5460
    %5462 = vrot.lane.b32.xlu0 %v5416, 9
    %v5463 = vpop.permute.xlu0 %5462
    %5464 = vrot.lane.b32.xlu0 %v5417, 9
    %v5465 = vpop.permute.xlu0 %5464
    %5466 = vrot.lane.b32.xlu0 %v5418, 9
    %v5467 = vpop.permute.xlu0 %5466
    %5468 = vrot.lane.b32.xlu0 %v5419, 9
    %v5469 = vpop.permute.xlu0 %5468
    %5470 = vrot.lane.b32.xlu0 %v5420, 9
    %v5471 = vpop.permute.xlu0 %5470
    %5472 = vrot.lane.b32.xlu0 %v5421, 9
    %v5473 = vpop.permute.xlu0 %5472
    %5474 = vrot.lane.b32.xlu0 %v5422, 9
    %v5475 = vpop.permute.xlu0 %5474
    %5476 = vrot.lane.b32.xlu0 %v5423, 9
    %v5477 = vpop.permute.xlu0 %5476
    %5478 = vrot.lane.b32.xlu0 %v5424, 9
    %v5479 = vpop.permute.xlu0 %5478
    %5480 = vrot.lane.b32.xlu0 %v5425, 9
    %v5481 = vpop.permute.xlu0 %5480
    %5482 = vrot.lane.b32.xlu0 %v5426, 9
    %v5483 = vpop.permute.xlu0 %5482
    %5484 = vrot.lane.b32.xlu0 %v5427, 9
    %v5485 = vpop.permute.xlu0 %5484
    %5486 = vrot.lane.b32.xlu0 %v5428, 9
    %v5487 = vpop.permute.xlu0 %5486
    %5488 = vrot.lane.b32.xlu0 %v5429, 9
    %v5489 = vpop.permute.xlu0 %5488
    %5490 = vrot.lane.b32.xlu0 %v5430, 9
    %v5491 = vpop.permute.xlu0 %5490
    %5492 = vrot.lane.b32.xlu0 %v5431, 9
    %v5493 = vpop.permute.xlu0 %5492
    %5494 = vrot.lane.b32.xlu0 %v5432, 9
    %v5495 = vpop.permute.xlu0 %5494
    %5496 = vrot.lane.b32.xlu0 %v5433, 9
    %v5497 = vpop.permute.xlu0 %5496
    %v5498 = vunpack.c.l.b16 %v2534
    %v5499 = vunpack.c.l.b16 %v2544
    %v5500 = vunpack.c.l.b16 %v2558
    %v5501 = vunpack.c.l.b16 %v2568
    %v5502 = vunpack.c.l.b16 %v2582
    %v5503 = vunpack.c.l.b16 %v2592
    %v5504 = vunpack.c.l.b16 %v2606
    %v5505 = vunpack.c.l.b16 %v2616
    %v5506 = vunpack.c.l.b16 %v2630
    %v5507 = vunpack.c.l.b16 %v2640
    %v5508 = vunpack.c.l.b16 %v2654
    %v5509 = vunpack.c.l.b16 %v2664
    %v5510 = vunpack.c.l.b16 %v2678
    %v5511 = vunpack.c.l.b16 %v2688
    %v5512 = vunpack.c.l.b16 %v2702
    %v5513 = vunpack.c.l.b16 %v2712
    %v5514 = vunpack.c.l.b16 %v2726
    %v5515 = vunpack.c.l.b16 %v2736
    %v5516 = vunpack.c.l.b16 %v2750
    %v5517 = vunpack.c.l.b16 %v2760
    %v5518 = vunpack.c.l.b16 %v2774
    %v5519 = vunpack.c.l.b16 %v2784
    %v5520 = vunpack.c.l.b16 %v2798
    %v5521 = vunpack.c.l.b16 %v2808
    %v5522 = vunpack.c.l.b16 %v2822
    %v5523 = vunpack.c.l.b16 %v2832
    %v5524 = vunpack.c.l.b16 %v2846
    %v5525 = vunpack.c.l.b16 %v2856
    %v5526 = vunpack.c.l.b16 %v2870
    %v5527 = vunpack.c.l.b16 %v2880
    %v5528 = vunpack.c.l.b16 %v2894
    %v5529 = vunpack.c.l.b16 %v2904
    %v5530 = vunpack.c.l.b16 %v2918
    %v5531 = vunpack.c.l.b16 %v2928
    %v5532 = vunpack.c.l.b16 %v2942
    %v5533 = vunpack.c.l.b16 %v2952
    %v5534 = vunpack.c.l.b16 %v2966
    %v5535 = vunpack.c.l.b16 %v2976
    %v5536 = vunpack.c.l.b16 %v2990
    %v5537 = vunpack.c.l.b16 %v3000
    %v5538 = vunpack.c.l.b16 %v3014
    %v5539 = vunpack.c.l.b16 %v3024
    %v5540 = vunpack.c.l.b16 %v3038
    %v5541 = vunpack.c.l.b16 %v3048
    %v5542 = vunpack.c.l.b16 %v3062
    %v5543 = vunpack.c.l.b16 %v3072
    %v5544 = vunpack.c.l.b16 %v3086
    %v5545 = vunpack.c.l.b16 %v3096
    %v5546 = vunpack.c.l.b16 %v3110
    %v5547 = vunpack.c.l.b16 %v3120
    %v5548 = vunpack.c.l.b16 %v3134
    %v5549 = vunpack.c.l.b16 %v3144
    %v5550 = vunpack.c.l.b16 %v3158
    %v5551 = vunpack.c.l.b16 %v3168
    %v5552 = vunpack.c.l.b16 %v3182
    %v5553 = vunpack.c.l.b16 %v3192
    %v5554 = vunpack.c.l.b16 %v3206
    %v5555 = vunpack.c.l.b16 %v3216
    %v5556 = vunpack.c.l.b16 %v3230
    %v5557 = vunpack.c.l.b16 %v3240
    %v5558 = vunpack.c.l.b16 %v3254
    %v5559 = vunpack.c.l.b16 %v3264
    %v5560 = vunpack.c.l.b16 %v3278
    %v5561 = vunpack.c.l.b16 %v3288
    %v5562 = vpack.c.b16 %v5499, %v5498
    %v5563 = vpack.c.b16 %v5501, %v5500
    %v5564 = vpack.c.b16 %v5503, %v5502
    %v5565 = vpack.c.b16 %v5505, %v5504
    %v5566 = vpack.c.b16 %v5507, %v5506
    %v5567 = vpack.c.b16 %v5509, %v5508
    %v5568 = vpack.c.b16 %v5511, %v5510
    %v5569 = vpack.c.b16 %v5513, %v5512
    %v5570 = vpack.c.b16 %v5515, %v5514
    %v5571 = vpack.c.b16 %v5517, %v5516
    %v5572 = vpack.c.b16 %v5519, %v5518
    %v5573 = vpack.c.b16 %v5521, %v5520
    %v5574 = vpack.c.b16 %v5523, %v5522
    %v5575 = vpack.c.b16 %v5525, %v5524
    %v5576 = vpack.c.b16 %v5527, %v5526
    %v5577 = vpack.c.b16 %v5529, %v5528
    %v5578 = vpack.c.b16 %v5531, %v5530
    %v5579 = vpack.c.b16 %v5533, %v5532
    %v5580 = vpack.c.b16 %v5535, %v5534
    %v5581 = vpack.c.b16 %v5537, %v5536
    %v5582 = vpack.c.b16 %v5539, %v5538
    %v5583 = vpack.c.b16 %v5541, %v5540
    %v5584 = vpack.c.b16 %v5543, %v5542
    %v5585 = vpack.c.b16 %v5545, %v5544
    %v5586 = vpack.c.b16 %v5547, %v5546
    %v5587 = vpack.c.b16 %v5549, %v5548
    %v5588 = vpack.c.b16 %v5551, %v5550
    %v5589 = vpack.c.b16 %v5553, %v5552
    %v5590 = vpack.c.b16 %v5555, %v5554
    %v5591 = vpack.c.b16 %v5557, %v5556
    %v5592 = vpack.c.b16 %v5559, %v5558
    %v5593 = vpack.c.b16 %v5561, %v5560
    %5594 = vrot.lane.b32.xlu0 %v5562, 12
    %v5595 = vpop.permute.xlu0 %5594
    %5596 = vrot.lane.b32.xlu0 %v5563, 12
    %v5597 = vpop.permute.xlu0 %5596
    %5598 = vrot.lane.b32.xlu0 %v5564, 12
    %v5599 = vpop.permute.xlu0 %5598
    %5600 = vrot.lane.b32.xlu0 %v5565, 12
    %v5601 = vpop.permute.xlu0 %5600
    %5602 = vrot.lane.b32.xlu0 %v5566, 12
    %v5603 = vpop.permute.xlu0 %5602
    %5604 = vrot.lane.b32.xlu0 %v5567, 12
    %v5605 = vpop.permute.xlu0 %5604
    %5606 = vrot.lane.b32.xlu0 %v5568, 12
    %v5607 = vpop.permute.xlu0 %5606
    %5608 = vrot.lane.b32.xlu0 %v5569, 12
    %v5609 = vpop.permute.xlu0 %5608
    %5610 = vrot.lane.b32.xlu0 %v5570, 12
    %v5611 = vpop.permute.xlu0 %5610
    %5612 = vrot.lane.b32.xlu0 %v5571, 12
    %v5613 = vpop.permute.xlu0 %5612
    %5614 = vrot.lane.b32.xlu0 %v5572, 12
    %v5615 = vpop.permute.xlu0 %5614
    %5616 = vrot.lane.b32.xlu0 %v5573, 12
    %v5617 = vpop.permute.xlu0 %5616
    %5618 = vrot.lane.b32.xlu0 %v5574, 12
    %v5619 = vpop.permute.xlu0 %5618
    %5620 = vrot.lane.b32.xlu0 %v5575, 12
    %v5621 = vpop.permute.xlu0 %5620
    %5622 = vrot.lane.b32.xlu0 %v5576, 12
    %v5623 = vpop.permute.xlu0 %5622
    %5624 = vrot.lane.b32.xlu0 %v5577, 12
    %v5625 = vpop.permute.xlu0 %5624
    %5626 = vrot.lane.b32.xlu0 %v5578, 12
    %v5627 = vpop.permute.xlu0 %5626
    %5628 = vrot.lane.b32.xlu0 %v5579, 12
    %v5629 = vpop.permute.xlu0 %5628
    %5630 = vrot.lane.b32.xlu0 %v5580, 12
    %v5631 = vpop.permute.xlu0 %5630
    %5632 = vrot.lane.b32.xlu0 %v5581, 12
    %v5633 = vpop.permute.xlu0 %5632
    %5634 = vrot.lane.b32.xlu0 %v5582, 12
    %v5635 = vpop.permute.xlu0 %5634
    %5636 = vrot.lane.b32.xlu0 %v5583, 12
    %v5637 = vpop.permute.xlu0 %5636
    %5638 = vrot.lane.b32.xlu0 %v5584, 12
    %v5639 = vpop.permute.xlu0 %5638
    %5640 = vrot.lane.b32.xlu0 %v5585, 12
    %v5641 = vpop.permute.xlu0 %5640
    %5642 = vrot.lane.b32.xlu0 %v5586, 12
    %v5643 = vpop.permute.xlu0 %5642
    %5644 = vrot.lane.b32.xlu0 %v5587, 12
    %v5645 = vpop.permute.xlu0 %5644
    %5646 = vrot.lane.b32.xlu0 %v5588, 12
    %v5647 = vpop.permute.xlu0 %5646
    %5648 = vrot.lane.b32.xlu0 %v5589, 12
    %v5649 = vpop.permute.xlu0 %5648
    %5650 = vrot.lane.b32.xlu0 %v5590, 12
    %v5651 = vpop.permute.xlu0 %5650
    %5652 = vrot.lane.b32.xlu0 %v5591, 12
    %v5653 = vpop.permute.xlu0 %5652
    %5654 = vrot.lane.b32.xlu0 %v5592, 12
    %v5655 = vpop.permute.xlu0 %5654
    %5656 = vrot.lane.b32.xlu0 %v5593, 12
    %v5657 = vpop.permute.xlu0 %5656
    %v5658 = vunpack.c.l.b16 %v3420
    %v5659 = vunpack.c.l.b16 %v3423
    %v5660 = vunpack.c.l.b16 %v3427
    %v5661 = vunpack.c.l.b16 %v3430
    %v5662 = vunpack.c.l.b16 %v3434
    %v5663 = vunpack.c.l.b16 %v3437
    %v5664 = vunpack.c.l.b16 %v3441
    %v5665 = vunpack.c.l.b16 %v3444
    %v5666 = vunpack.c.l.b16 %v3448
    %v5667 = vunpack.c.l.b16 %v3451
    %v5668 = vunpack.c.l.b16 %v3455
    %v5669 = vunpack.c.l.b16 %v3458
    %v5670 = vunpack.c.l.b16 %v3462
    %v5671 = vunpack.c.l.b16 %v3465
    %v5672 = vunpack.c.l.b16 %v3469
    %v5673 = vunpack.c.l.b16 %v3472
    %v5674 = vunpack.c.l.b16 %v3476
    %v5675 = vunpack.c.l.b16 %v3479
    %v5676 = vunpack.c.l.b16 %v3483
    %v5677 = vunpack.c.l.b16 %v3486
    %v5678 = vunpack.c.l.b16 %v3490
    %v5679 = vunpack.c.l.b16 %v3493
    %v5680 = vunpack.c.l.b16 %v3497
    %v5681 = vunpack.c.l.b16 %v3500
    %v5682 = vunpack.c.l.b16 %v3504
    %v5683 = vunpack.c.l.b16 %v3507
    %v5684 = vunpack.c.l.b16 %v3511
    %v5685 = vunpack.c.l.b16 %v3514
    %v5686 = vunpack.c.l.b16 %v3518
    %v5687 = vunpack.c.l.b16 %v3521
    %v5688 = vunpack.c.l.b16 %v3525
    %v5689 = vunpack.c.l.b16 %v3528
    %v5690 = vunpack.c.l.b16 %v3532
    %v5691 = vunpack.c.l.b16 %v3535
    %v5692 = vunpack.c.l.b16 %v3539
    %v5693 = vunpack.c.l.b16 %v3542
    %v5694 = vunpack.c.l.b16 %v3546
    %v5695 = vunpack.c.l.b16 %v3549
    %v5696 = vunpack.c.l.b16 %v3553
    %v5697 = vunpack.c.l.b16 %v3556
    %v5698 = vunpack.c.l.b16 %v3560
    %v5699 = vunpack.c.l.b16 %v3563
    %v5700 = vunpack.c.l.b16 %v3567
    %v5701 = vunpack.c.l.b16 %v3570
    %v5702 = vunpack.c.l.b16 %v3574
    %v5703 = vunpack.c.l.b16 %v3577
    %v5704 = vunpack.c.l.b16 %v3581
    %v5705 = vunpack.c.l.b16 %v3584
    %v5706 = vunpack.c.l.b16 %v3588
    %v5707 = vunpack.c.l.b16 %v3591
    %v5708 = vunpack.c.l.b16 %v3595
    %v5709 = vunpack.c.l.b16 %v3598
    %v5710 = vunpack.c.l.b16 %v3602
    %v5711 = vunpack.c.l.b16 %v3605
    %v5712 = vunpack.c.l.b16 %v3609
    %v5713 = vunpack.c.l.b16 %v3612
    %v5714 = vunpack.c.l.b16 %v3616
    %v5715 = vunpack.c.l.b16 %v3619
    %v5716 = vunpack.c.l.b16 %v3623
    %v5717 = vunpack.c.l.b16 %v3626
    %v5718 = vunpack.c.l.b16 %v3630
    %v5719 = vunpack.c.l.b16 %v3633
    %v5720 = vunpack.c.l.b16 %v3637
    %v5721 = vunpack.c.l.b16 %v3640
    %v5722 = vpack.c.b16 %v5659, %v5658
    %v5723 = vpack.c.b16 %v5661, %v5660
    %v5724 = vpack.c.b16 %v5663, %v5662
    %v5725 = vpack.c.b16 %v5665, %v5664
    %v5726 = vpack.c.b16 %v5667, %v5666
    %v5727 = vpack.c.b16 %v5669, %v5668
    %v5728 = vpack.c.b16 %v5671, %v5670
    %v5729 = vpack.c.b16 %v5673, %v5672
    %v5730 = vpack.c.b16 %v5675, %v5674
    %v5731 = vpack.c.b16 %v5677, %v5676
    %v5732 = vpack.c.b16 %v5679, %v5678
    %v5733 = vpack.c.b16 %v5681, %v5680
    %v5734 = vpack.c.b16 %v5683, %v5682
    %v5735 = vpack.c.b16 %v5685, %v5684
    %v5736 = vpack.c.b16 %v5687, %v5686
    %v5737 = vpack.c.b16 %v5689, %v5688
    %v5738 = vpack.c.b16 %v5691, %v5690
    %v5739 = vpack.c.b16 %v5693, %v5692
    %v5740 = vpack.c.b16 %v5695, %v5694
    %v5741 = vpack.c.b16 %v5697, %v5696
    %v5742 = vpack.c.b16 %v5699, %v5698
    %v5743 = vpack.c.b16 %v5701, %v5700
    %v5744 = vpack.c.b16 %v5703, %v5702
    %v5745 = vpack.c.b16 %v5705, %v5704
    %v5746 = vpack.c.b16 %v5707, %v5706
    %v5747 = vpack.c.b16 %v5709, %v5708
    %v5748 = vpack.c.b16 %v5711, %v5710
    %v5749 = vpack.c.b16 %v5713, %v5712
    %v5750 = vpack.c.b16 %v5715, %v5714
    %v5751 = vpack.c.b16 %v5717, %v5716
    %v5752 = vpack.c.b16 %v5719, %v5718
    %v5753 = vpack.c.b16 %v5721, %v5720
    %5754 = vrot.lane.b32.xlu0 %v5722, 15
    %v5755 = vpop.permute.xlu0 %5754
    %5756 = vrot.lane.b32.xlu0 %v5723, 15
    %v5757 = vpop.permute.xlu0 %5756
    %5758 = vrot.lane.b32.xlu0 %v5724, 15
    %v5759 = vpop.permute.xlu0 %5758
    %5760 = vrot.lane.b32.xlu0 %v5725, 15
    %v5761 = vpop.permute.xlu0 %5760
    %5762 = vrot.lane.b32.xlu0 %v5726, 15
    %v5763 = vpop.permute.xlu0 %5762
    %5764 = vrot.lane.b32.xlu0 %v5727, 15
    %v5765 = vpop.permute.xlu0 %5764
    %5766 = vrot.lane.b32.xlu0 %v5728, 15
    %v5767 = vpop.permute.xlu0 %5766
    %5768 = vrot.lane.b32.xlu0 %v5729, 15
    %v5769 = vpop.permute.xlu0 %5768
    %5770 = vrot.lane.b32.xlu0 %v5730, 15
    %v5771 = vpop.permute.xlu0 %5770
    %5772 = vrot.lane.b32.xlu0 %v5731, 15
    %v5773 = vpop.permute.xlu0 %5772
    %5774 = vrot.lane.b32.xlu0 %v5732, 15
    %v5775 = vpop.permute.xlu0 %5774
    %5776 = vrot.lane.b32.xlu0 %v5733, 15
    %v5777 = vpop.permute.xlu0 %5776
    %5778 = vrot.lane.b32.xlu0 %v5734, 15
    %v5779 = vpop.permute.xlu0 %5778
    %5780 = vrot.lane.b32.xlu0 %v5735, 15
    %v5781 = vpop.permute.xlu0 %5780
    %5782 = vrot.lane.b32.xlu0 %v5736, 15
    %v5783 = vpop.permute.xlu0 %5782
    %5784 = vrot.lane.b32.xlu0 %v5737, 15
    %v5785 = vpop.permute.xlu0 %5784
    %5786 = vrot.lane.b32.xlu0 %v5738, 15
    %v5787 = vpop.permute.xlu0 %5786
    %5788 = vrot.lane.b32.xlu0 %v5739, 15
    %v5789 = vpop.permute.xlu0 %5788
    %5790 = vrot.lane.b32.xlu0 %v5740, 15
    %v5791 = vpop.permute.xlu0 %5790
    %5792 = vrot.lane.b32.xlu0 %v5741, 15
    %v5793 = vpop.permute.xlu0 %5792
    %5794 = vrot.lane.b32.xlu0 %v5742, 15
    %v5795 = vpop.permute.xlu0 %5794
    %5796 = vrot.lane.b32.xlu0 %v5743, 15
    %v5797 = vpop.permute.xlu0 %5796
    %5798 = vrot.lane.b32.xlu0 %v5744, 15
    %v5799 = vpop.permute.xlu0 %5798
    %5800 = vrot.lane.b32.xlu0 %v5745, 15
    %v5801 = vpop.permute.xlu0 %5800
    %5802 = vrot.lane.b32.xlu0 %v5746, 15
    %v5803 = vpop.permute.xlu0 %5802
    %5804 = vrot.lane.b32.xlu0 %v5747, 15
    %v5805 = vpop.permute.xlu0 %5804
    %5806 = vrot.lane.b32.xlu0 %v5748, 15
    %v5807 = vpop.permute.xlu0 %5806
    %5808 = vrot.lane.b32.xlu0 %v5749, 15
    %v5809 = vpop.permute.xlu0 %5808
    %5810 = vrot.lane.b32.xlu0 %v5750, 15
    %v5811 = vpop.permute.xlu0 %5810
    %5812 = vrot.lane.b32.xlu0 %v5751, 15
    %v5813 = vpop.permute.xlu0 %5812
    %5814 = vrot.lane.b32.xlu0 %v5752, 15
    %v5815 = vpop.permute.xlu0 %5814
    %5816 = vrot.lane.b32.xlu0 %v5753, 15
    %v5817 = vpop.permute.xlu0 %5816
    %v5850 = vunpack.c.l.b16 %v3642
    %v5851 = vunpack.c.l.b16 %v3643
    %v5852 = vunpack.c.l.b16 %v3644
    %v5853 = vunpack.c.l.b16 %v3645
    %v5854 = vunpack.c.l.b16 %v3646
    %v5855 = vunpack.c.l.b16 %v3647
    %v5856 = vunpack.c.l.b16 %v3648
    %v5857 = vunpack.c.l.b16 %v3649
    %v5858 = vunpack.c.l.b16 %v3650
    %v5859 = vunpack.c.l.b16 %v3651
    %v5860 = vunpack.c.l.b16 %v3652
    %v5861 = vunpack.c.l.b16 %v3653
    %v5862 = vunpack.c.l.b16 %v3654
    %v5863 = vunpack.c.l.b16 %v3655
    %v5864 = vunpack.c.l.b16 %v3656
    %v5865 = vunpack.c.l.b16 %v3657
    %v5866 = vunpack.c.l.b16 %v3658
    %v5867 = vunpack.c.l.b16 %v3659
    %v5868 = vunpack.c.l.b16 %v3660
    %v5869 = vunpack.c.l.b16 %v3661
    %v5870 = vunpack.c.l.b16 %v3662
    %v5871 = vunpack.c.l.b16 %v3663
    %v5872 = vunpack.c.l.b16 %v3664
    %v5873 = vunpack.c.l.b16 %v3665
    %v5874 = vunpack.c.l.b16 %v3666
    %v5875 = vunpack.c.l.b16 %v3667
    %v5876 = vunpack.c.l.b16 %v3668
    %v5877 = vunpack.c.l.b16 %v3669
    %v5878 = vunpack.c.l.b16 %v3670
    %v5879 = vunpack.c.l.b16 %v3671
    %v5880 = vunpack.c.l.b16 %v3672
    %v5881 = vunpack.c.l.b16 %v3673
    %v5882 = vunpack.c.l.b16 %v3674
    %v5883 = vunpack.c.l.b16 %v3675
    %v5884 = vunpack.c.l.b16 %v3676
    %v5885 = vunpack.c.l.b16 %v3677
    %v5886 = vunpack.c.l.b16 %v3678
    %v5887 = vunpack.c.l.b16 %v3679
    %v5888 = vunpack.c.l.b16 %v3680
    %v5889 = vunpack.c.l.b16 %v3681
    %v5890 = vunpack.c.l.b16 %v3682
    %v5891 = vunpack.c.l.b16 %v3683
    %v5892 = vunpack.c.l.b16 %v3684
    %v5893 = vunpack.c.l.b16 %v3685
    %v5894 = vunpack.c.l.b16 %v3686
    %v5895 = vunpack.c.l.b16 %v3687
    %v5896 = vunpack.c.l.b16 %v3688
    %v5897 = vunpack.c.l.b16 %v3689
    %v5898 = vunpack.c.l.b16 %v3690
    %v5899 = vunpack.c.l.b16 %v3691
    %v5900 = vunpack.c.l.b16 %v3692
    %v5901 = vunpack.c.l.b16 %v3693
    %v5902 = vunpack.c.l.b16 %v3694
    %v5903 = vunpack.c.l.b16 %v3695
    %v5904 = vunpack.c.l.b16 %v3696
    %v5905 = vunpack.c.l.b16 %v3697
    %v5906 = vunpack.c.l.b16 %v3698
    %v5907 = vunpack.c.l.b16 %v3699
    %v5908 = vunpack.c.l.b16 %v3700
    %v5909 = vunpack.c.l.b16 %v3701
    %v5910 = vunpack.c.l.b16 %v3702
    %v5911 = vunpack.c.l.b16 %v3703
    %v5912 = vunpack.c.l.b16 %v3704
    %v5913 = vunpack.c.l.b16 %v3705
    %v5914 = vpack.c.b16 %v5851, %v5850
    %v5915 = vpack.c.b16 %v5853, %v5852
    %v5916 = vpack.c.b16 %v5855, %v5854
    %v5917 = vpack.c.b16 %v5857, %v5856
    %v5918 = vpack.c.b16 %v5859, %v5858
    %v5919 = vpack.c.b16 %v5861, %v5860
    %v5920 = vpack.c.b16 %v5863, %v5862
    %v5921 = vpack.c.b16 %v5865, %v5864
    %v5922 = vpack.c.b16 %v5867, %v5866
    %v5923 = vpack.c.b16 %v5869, %v5868
    %v5924 = vpack.c.b16 %v5871, %v5870
    %v5925 = vpack.c.b16 %v5873, %v5872
    %v5926 = vpack.c.b16 %v5875, %v5874
    %v5927 = vpack.c.b16 %v5877, %v5876
    %v5928 = vpack.c.b16 %v5879, %v5878
    %v5929 = vpack.c.b16 %v5881, %v5880
    %v5930 = vpack.c.b16 %v5883, %v5882
    %v5931 = vpack.c.b16 %v5885, %v5884
    %v5932 = vpack.c.b16 %v5887, %v5886
    %v5933 = vpack.c.b16 %v5889, %v5888
    %v5934 = vpack.c.b16 %v5891, %v5890
    %v5935 = vpack.c.b16 %v5893, %v5892
    %v5936 = vpack.c.b16 %v5895, %v5894
    %v5937 = vpack.c.b16 %v5897, %v5896
    %v5938 = vpack.c.b16 %v5899, %v5898
    %v5939 = vpack.c.b16 %v5901, %v5900
    %v5940 = vpack.c.b16 %v5903, %v5902
    %v5941 = vpack.c.b16 %v5905, %v5904
    %v5942 = vpack.c.b16 %v5907, %v5906
    %v5943 = vpack.c.b16 %v5909, %v5908
    %v5944 = vpack.c.b16 %v5911, %v5910
    %v5945 = vpack.c.b16 %v5913, %v5912
    %5946 = vrot.lane.b32.xlu0 %v5914, 18
    %v5947 = vpop.permute.xlu0 %5946
    %5948 = vrot.lane.b32.xlu0 %v5915, 18
    %v5949 = vpop.permute.xlu0 %5948
    %5950 = vrot.lane.b32.xlu0 %v5916, 18
    %v5951 = vpop.permute.xlu0 %5950
    %5952 = vrot.lane.b32.xlu0 %v5917, 18
    %v5953 = vpop.permute.xlu0 %5952
    %5954 = vrot.lane.b32.xlu0 %v5918, 18
    %v5955 = vpop.permute.xlu0 %5954
    %5956 = vrot.lane.b32.xlu0 %v5919, 18
    %v5957 = vpop.permute.xlu0 %5956
    %5958 = vrot.lane.b32.xlu0 %v5920, 18
    %v5959 = vpop.permute.xlu0 %5958
    %5960 = vrot.lane.b32.xlu0 %v5921, 18
    %v5961 = vpop.permute.xlu0 %5960
    %5962 = vrot.lane.b32.xlu0 %v5922, 18
    %v5963 = vpop.permute.xlu0 %5962
    %5964 = vrot.lane.b32.xlu0 %v5923, 18
    %v5965 = vpop.permute.xlu0 %5964
    %5966 = vrot.lane.b32.xlu0 %v5924, 18
    %v5967 = vpop.permute.xlu0 %5966
    %5968 = vrot.lane.b32.xlu0 %v5925, 18
    %v5969 = vpop.permute.xlu0 %5968
    %5970 = vrot.lane.b32.xlu0 %v5926, 18
    %v5971 = vpop.permute.xlu0 %5970
    %5972 = vrot.lane.b32.xlu0 %v5927, 18
    %v5973 = vpop.permute.xlu0 %5972
    %5974 = vrot.lane.b32.xlu0 %v5928, 18
    %v5975 = vpop.permute.xlu0 %5974
    %5976 = vrot.lane.b32.xlu0 %v5929, 18
    %v5977 = vpop.permute.xlu0 %5976
    %5978 = vrot.lane.b32.xlu0 %v5930, 18
    %v5979 = vpop.permute.xlu0 %5978
    %5980 = vrot.lane.b32.xlu0 %v5931, 18
    %v5981 = vpop.permute.xlu0 %5980
    %5982 = vrot.lane.b32.xlu0 %v5932, 18
    %v5983 = vpop.permute.xlu0 %5982
    %5984 = vrot.lane.b32.xlu0 %v5933, 18
    %v5985 = vpop.permute.xlu0 %5984
    %5986 = vrot.lane.b32.xlu0 %v5934, 18
    %v5987 = vpop.permute.xlu0 %5986
    %5988 = vrot.lane.b32.xlu0 %v5935, 18
    %v5989 = vpop.permute.xlu0 %5988
    %5990 = vrot.lane.b32.xlu0 %v5936, 18
    %v5991 = vpop.permute.xlu0 %5990
    %5992 = vrot.lane.b32.xlu0 %v5937, 18
    %v5993 = vpop.permute.xlu0 %5992
    %5994 = vrot.lane.b32.xlu0 %v5938, 18
    %v5995 = vpop.permute.xlu0 %5994
    %5996 = vrot.lane.b32.xlu0 %v5939, 18
    %v5997 = vpop.permute.xlu0 %5996
    %5998 = vrot.lane.b32.xlu0 %v5940, 18
    %v5999 = vpop.permute.xlu0 %5998
    %6000 = vrot.lane.b32.xlu0 %v5941, 18
    %v6001 = vpop.permute.xlu0 %6000
    %6002 = vrot.lane.b32.xlu0 %v5942, 18
    %v6003 = vpop.permute.xlu0 %6002
    %6004 = vrot.lane.b32.xlu0 %v5943, 18
    %v6005 = vpop.permute.xlu0 %6004
    %6006 = vrot.lane.b32.xlu0 %v5944, 18
    %v6007 = vpop.permute.xlu0 %6006
    %6008 = vrot.lane.b32.xlu0 %v5945, 18
    %v6009 = vpop.permute.xlu0 %6008
    %v6010 = vunpack.c.l.b16 %v3751
    %v6011 = vunpack.c.l.b16 %v3761
    %v6012 = vunpack.c.l.b16 %v3775
    %v6013 = vunpack.c.l.b16 %v3785
    %v6014 = vunpack.c.l.b16 %v3799
    %v6015 = vunpack.c.l.b16 %v3809
    %v6016 = vunpack.c.l.b16 %v3823
    %v6017 = vunpack.c.l.b16 %v3833
    %v6018 = vunpack.c.l.b16 %v3847
    %v6019 = vunpack.c.l.b16 %v3857
    %v6020 = vunpack.c.l.b16 %v3871
    %v6021 = vunpack.c.l.b16 %v3881
    %v6022 = vunpack.c.l.b16 %v3895
    %v6023 = vunpack.c.l.b16 %v3905
    %v6024 = vunpack.c.l.b16 %v3919
    %v6025 = vunpack.c.l.b16 %v3929
    %v6026 = vunpack.c.l.b16 %v3943
    %v6027 = vunpack.c.l.b16 %v3953
    %v6028 = vunpack.c.l.b16 %v3967
    %v6029 = vunpack.c.l.b16 %v3977
    %v6030 = vunpack.c.l.b16 %v3991
    %v6031 = vunpack.c.l.b16 %v4001
    %v6032 = vunpack.c.l.b16 %v4015
    %v6033 = vunpack.c.l.b16 %v4025
    %v6034 = vunpack.c.l.b16 %v4039
    %v6035 = vunpack.c.l.b16 %v4049
    %v6036 = vunpack.c.l.b16 %v4063
    %v6037 = vunpack.c.l.b16 %v4073
    %v6038 = vunpack.c.l.b16 %v4087
    %v6039 = vunpack.c.l.b16 %v4097
    %v6040 = vunpack.c.l.b16 %v4111
    %v6041 = vunpack.c.l.b16 %v4121
    %v6042 = vunpack.c.l.b16 %v4135
    %v6043 = vunpack.c.l.b16 %v4145
    %v6044 = vunpack.c.l.b16 %v4159
    %v6045 = vunpack.c.l.b16 %v4169
    %v6046 = vunpack.c.l.b16 %v4183
    %v6047 = vunpack.c.l.b16 %v4193
    %v6048 = vunpack.c.l.b16 %v4207
    %v6049 = vunpack.c.l.b16 %v4217
    %v6050 = vunpack.c.l.b16 %v4231
    %v6051 = vunpack.c.l.b16 %v4241
    %v6052 = vunpack.c.l.b16 %v4255
    %v6053 = vunpack.c.l.b16 %v4265
    %v6054 = vunpack.c.l.b16 %v4279
    %v6055 = vunpack.c.l.b16 %v4289
    %v6056 = vunpack.c.l.b16 %v4303
    %v6057 = vunpack.c.l.b16 %v4313
    %v6058 = vunpack.c.l.b16 %v4327
    %v6059 = vunpack.c.l.b16 %v4337
    %v6060 = vunpack.c.l.b16 %v4351
    %v6061 = vunpack.c.l.b16 %v4361
    %v6062 = vunpack.c.l.b16 %v4375
    %v6063 = vunpack.c.l.b16 %v4385
    %v6064 = vunpack.c.l.b16 %v4399
    %v6065 = vunpack.c.l.b16 %v4409
    %v6066 = vunpack.c.l.b16 %v4423
    %v6067 = vunpack.c.l.b16 %v4433
    %v6068 = vunpack.c.l.b16 %v4447
    %v6069 = vunpack.c.l.b16 %v4457
    %v6070 = vunpack.c.l.b16 %v4471
    %v6071 = vunpack.c.l.b16 %v4481
    %v6072 = vunpack.c.l.b16 %v4495
    %v6073 = vunpack.c.l.b16 %v4505
    %v6074 = vpack.c.b16 %v6011, %v6010
    %v6075 = vpack.c.b16 %v6013, %v6012
    %v6076 = vpack.c.b16 %v6015, %v6014
    %v6077 = vpack.c.b16 %v6017, %v6016
    %v6078 = vpack.c.b16 %v6019, %v6018
    %v6079 = vpack.c.b16 %v6021, %v6020
    %v6080 = vpack.c.b16 %v6023, %v6022
    %v6081 = vpack.c.b16 %v6025, %v6024
    %v6082 = vpack.c.b16 %v6027, %v6026
    %v6083 = vpack.c.b16 %v6029, %v6028
    %v6084 = vpack.c.b16 %v6031, %v6030
    %v6085 = vpack.c.b16 %v6033, %v6032
    %v6086 = vpack.c.b16 %v6035, %v6034
    %v6087 = vpack.c.b16 %v6037, %v6036
    %v6088 = vpack.c.b16 %v6039, %v6038
    %v6089 = vpack.c.b16 %v6041, %v6040
    %v6090 = vpack.c.b16 %v6043, %v6042
    %v6091 = vpack.c.b16 %v6045, %v6044
    %v6092 = vpack.c.b16 %v6047, %v6046
    %v6093 = vpack.c.b16 %v6049, %v6048
    %v6094 = vpack.c.b16 %v6051, %v6050
    %v6095 = vpack.c.b16 %v6053, %v6052
    %v6096 = vpack.c.b16 %v6055, %v6054
    %v6097 = vpack.c.b16 %v6057, %v6056
    %v6098 = vpack.c.b16 %v6059, %v6058
    %v6099 = vpack.c.b16 %v6061, %v6060
    %v6100 = vpack.c.b16 %v6063, %v6062
    %v6101 = vpack.c.b16 %v6065, %v6064
    %v6102 = vpack.c.b16 %v6067, %v6066
    %v6103 = vpack.c.b16 %v6069, %v6068
    %v6104 = vpack.c.b16 %v6071, %v6070
    %v6105 = vpack.c.b16 %v6073, %v6072
    %6106 = vrot.lane.b32.xlu0 %v6074, 21
    %v6107 = vpop.permute.xlu0 %6106
    %6108 = vrot.lane.b32.xlu0 %v6075, 21
    %v6109 = vpop.permute.xlu0 %6108
    %6110 = vrot.lane.b32.xlu0 %v6076, 21
    %v6111 = vpop.permute.xlu0 %6110
    %6112 = vrot.lane.b32.xlu0 %v6077, 21
    %v6113 = vpop.permute.xlu0 %6112
    %6114 = vrot.lane.b32.xlu0 %v6078, 21
    %v6115 = vpop.permute.xlu0 %6114
    %6116 = vrot.lane.b32.xlu0 %v6079, 21
    %v6117 = vpop.permute.xlu0 %6116
    %6118 = vrot.lane.b32.xlu0 %v6080, 21
    %v6119 = vpop.permute.xlu0 %6118
    %6120 = vrot.lane.b32.xlu0 %v6081, 21
    %v6121 = vpop.permute.xlu0 %6120
    %6122 = vrot.lane.b32.xlu0 %v6082, 21
    %v6123 = vpop.permute.xlu0 %6122
    %6124 = vrot.lane.b32.xlu0 %v6083, 21
    %v6125 = vpop.permute.xlu0 %6124
    %6126 = vrot.lane.b32.xlu0 %v6084, 21
    %v6127 = vpop.permute.xlu0 %6126
    %6128 = vrot.lane.b32.xlu0 %v6085, 21
    %v6129 = vpop.permute.xlu0 %6128
    %6130 = vrot.lane.b32.xlu0 %v6086, 21
    %v6131 = vpop.permute.xlu0 %6130
    %6132 = vrot.lane.b32.xlu0 %v6087, 21
    %v6133 = vpop.permute.xlu0 %6132
    %6134 = vrot.lane.b32.xlu0 %v6088, 21
    %v6135 = vpop.permute.xlu0 %6134
    %6136 = vrot.lane.b32.xlu0 %v6089, 21
    %v6137 = vpop.permute.xlu0 %6136
    %6138 = vrot.lane.b32.xlu0 %v6090, 21
    %v6139 = vpop.permute.xlu0 %6138
    %6140 = vrot.lane.b32.xlu0 %v6091, 21
    %v6141 = vpop.permute.xlu0 %6140
    %6142 = vrot.lane.b32.xlu0 %v6092, 21
    %v6143 = vpop.permute.xlu0 %6142
    %6144 = vrot.lane.b32.xlu0 %v6093, 21
    %v6145 = vpop.permute.xlu0 %6144
    %6146 = vrot.lane.b32.xlu0 %v6094, 21
    %v6147 = vpop.permute.xlu0 %6146
    %6148 = vrot.lane.b32.xlu0 %v6095, 21
    %v6149 = vpop.permute.xlu0 %6148
    %6150 = vrot.lane.b32.xlu0 %v6096, 21
    %v6151 = vpop.permute.xlu0 %6150
    %6152 = vrot.lane.b32.xlu0 %v6097, 21
    %v6153 = vpop.permute.xlu0 %6152
    %6154 = vrot.lane.b32.xlu0 %v6098, 21
    %v6155 = vpop.permute.xlu0 %6154
    %6156 = vrot.lane.b32.xlu0 %v6099, 21
    %v6157 = vpop.permute.xlu0 %6156
    %6158 = vrot.lane.b32.xlu0 %v6100, 21
    %v6159 = vpop.permute.xlu0 %6158
    %6160 = vrot.lane.b32.xlu0 %v6101, 21
    %v6161 = vpop.permute.xlu0 %6160
    %6162 = vrot.lane.b32.xlu0 %v6102, 21
    %v6163 = vpop.permute.xlu0 %6162
    %6164 = vrot.lane.b32.xlu0 %v6103, 21
    %v6165 = vpop.permute.xlu0 %6164
    %6166 = vrot.lane.b32.xlu0 %v6104, 21
    %v6167 = vpop.permute.xlu0 %6166
    %6168 = vrot.lane.b32.xlu0 %v6105, 21
    %v6169 = vpop.permute.xlu0 %6168
    %v6170 = vunpack.c.l.b16 %v4637
    %v6171 = vunpack.c.l.b16 %v4640
    %v6172 = vunpack.c.l.b16 %v4644
    %v6173 = vunpack.c.l.b16 %v4647
    %v6174 = vunpack.c.l.b16 %v4651
    %v6175 = vunpack.c.l.b16 %v4654
    %v6176 = vunpack.c.l.b16 %v4658
    %v6177 = vunpack.c.l.b16 %v4661
    %v6178 = vunpack.c.l.b16 %v4665
    %v6179 = vunpack.c.l.b16 %v4668
    %v6180 = vunpack.c.l.b16 %v4672
    %v6181 = vunpack.c.l.b16 %v4675
    %v6182 = vunpack.c.l.b16 %v4679
    %v6183 = vunpack.c.l.b16 %v4682
    %v6184 = vunpack.c.l.b16 %v4686
    %v6185 = vunpack.c.l.b16 %v4689
    %v6186 = vunpack.c.l.b16 %v4693
    %v6187 = vunpack.c.l.b16 %v4696
    %v6188 = vunpack.c.l.b16 %v4700
    %v6189 = vunpack.c.l.b16 %v4703
    %v6190 = vunpack.c.l.b16 %v4707
    %v6191 = vunpack.c.l.b16 %v4710
    %v6192 = vunpack.c.l.b16 %v4714
    %v6193 = vunpack.c.l.b16 %v4717
    %v6194 = vunpack.c.l.b16 %v4721
    %v6195 = vunpack.c.l.b16 %v4724
    %v6196 = vunpack.c.l.b16 %v4728
    %v6197 = vunpack.c.l.b16 %v4731
    %v6198 = vunpack.c.l.b16 %v4735
    %v6199 = vunpack.c.l.b16 %v4738
    %v6200 = vunpack.c.l.b16 %v4742
    %v6201 = vunpack.c.l.b16 %v4745
    %v6202 = vunpack.c.l.b16 %v4749
    %v6203 = vunpack.c.l.b16 %v4752
    %v6204 = vunpack.c.l.b16 %v4756
    %v6205 = vunpack.c.l.b16 %v4759
    %v6206 = vunpack.c.l.b16 %v4763
    %v6207 = vunpack.c.l.b16 %v4766
    %v6208 = vunpack.c.l.b16 %v4770
    %v6209 = vunpack.c.l.b16 %v4773
    %v6210 = vunpack.c.l.b16 %v4777
    %v6211 = vunpack.c.l.b16 %v4780
    %v6212 = vunpack.c.l.b16 %v4784
    %v6213 = vunpack.c.l.b16 %v4787
    %v6214 = vunpack.c.l.b16 %v4791
    %v6215 = vunpack.c.l.b16 %v4794
    %v6216 = vunpack.c.l.b16 %v4798
    %v6217 = vunpack.c.l.b16 %v4801
    %v6218 = vunpack.c.l.b16 %v4805
    %v6219 = vunpack.c.l.b16 %v4808
    %v6220 = vunpack.c.l.b16 %v4812
    %v6221 = vunpack.c.l.b16 %v4815
    %v6222 = vunpack.c.l.b16 %v4819
    %v6223 = vunpack.c.l.b16 %v4822
    %v6224 = vunpack.c.l.b16 %v4826
    %v6225 = vunpack.c.l.b16 %v4829
    %v6226 = vunpack.c.l.b16 %v4833
    %v6227 = vunpack.c.l.b16 %v4836
    %v6228 = vunpack.c.l.b16 %v4840
    %v6229 = vunpack.c.l.b16 %v4843
    %v6230 = vunpack.c.l.b16 %v4847
    %v6231 = vunpack.c.l.b16 %v4850
    %v6232 = vunpack.c.l.b16 %v4854
    %v6233 = vunpack.c.l.b16 %v4857
    %v6234 = vpack.c.b16 %v6171, %v6170
    %v6235 = vpack.c.b16 %v6173, %v6172
    %v6236 = vpack.c.b16 %v6175, %v6174
    %v6237 = vpack.c.b16 %v6177, %v6176
    %v6238 = vpack.c.b16 %v6179, %v6178
    %v6239 = vpack.c.b16 %v6181, %v6180
    %v6240 = vpack.c.b16 %v6183, %v6182
    %v6241 = vpack.c.b16 %v6185, %v6184
    %v6242 = vpack.c.b16 %v6187, %v6186
    %v6243 = vpack.c.b16 %v6189, %v6188
    %v6244 = vpack.c.b16 %v6191, %v6190
    %v6245 = vpack.c.b16 %v6193, %v6192
    %v6246 = vpack.c.b16 %v6195, %v6194
    %v6247 = vpack.c.b16 %v6197, %v6196
    %v6248 = vpack.c.b16 %v6199, %v6198
    %v6249 = vpack.c.b16 %v6201, %v6200
    %v6250 = vpack.c.b16 %v6203, %v6202
    %v6251 = vpack.c.b16 %v6205, %v6204
    %v6252 = vpack.c.b16 %v6207, %v6206
    %v6253 = vpack.c.b16 %v6209, %v6208
    %v6254 = vpack.c.b16 %v6211, %v6210
    %v6255 = vpack.c.b16 %v6213, %v6212
    %v6256 = vpack.c.b16 %v6215, %v6214
    %v6257 = vpack.c.b16 %v6217, %v6216
    %v6258 = vpack.c.b16 %v6219, %v6218
    %v6259 = vpack.c.b16 %v6221, %v6220
    %v6260 = vpack.c.b16 %v6223, %v6222
    %v6261 = vpack.c.b16 %v6225, %v6224
    %v6262 = vpack.c.b16 %v6227, %v6226
    %v6263 = vpack.c.b16 %v6229, %v6228
    %v6264 = vpack.c.b16 %v6231, %v6230
    %v6265 = vpack.c.b16 %v6233, %v6232
    %6266 = vrot.lane.b32.xlu0 %v6234, 24
    %v6267 = vpop.permute.xlu0 %6266
    %6268 = vrot.lane.b32.xlu0 %v6235, 24
    %v6269 = vpop.permute.xlu0 %6268
    %6270 = vrot.lane.b32.xlu0 %v6236, 24
    %v6271 = vpop.permute.xlu0 %6270
    %6272 = vrot.lane.b32.xlu0 %v6237, 24
    %v6273 = vpop.permute.xlu0 %6272
    %6274 = vrot.lane.b32.xlu0 %v6238, 24
    %v6275 = vpop.permute.xlu0 %6274
    %6276 = vrot.lane.b32.xlu0 %v6239, 24
    %v6277 = vpop.permute.xlu0 %6276
    %6278 = vrot.lane.b32.xlu0 %v6240, 24
    %v6279 = vpop.permute.xlu0 %6278
    %6280 = vrot.lane.b32.xlu0 %v6241, 24
    %v6281 = vpop.permute.xlu0 %6280
    %6282 = vrot.lane.b32.xlu0 %v6242, 24
    %v6283 = vpop.permute.xlu0 %6282
    %6284 = vrot.lane.b32.xlu0 %v6243, 24
    %v6285 = vpop.permute.xlu0 %6284
    %6286 = vrot.lane.b32.xlu0 %v6244, 24
    %v6287 = vpop.permute.xlu0 %6286
    %6288 = vrot.lane.b32.xlu0 %v6245, 24
    %v6289 = vpop.permute.xlu0 %6288
    %6290 = vrot.lane.b32.xlu0 %v6246, 24
    %v6291 = vpop.permute.xlu0 %6290
    %6292 = vrot.lane.b32.xlu0 %v6247, 24
    %v6293 = vpop.permute.xlu0 %6292
    %6294 = vrot.lane.b32.xlu0 %v6248, 24
    %v6295 = vpop.permute.xlu0 %6294
    %6296 = vrot.lane.b32.xlu0 %v6249, 24
    %v6297 = vpop.permute.xlu0 %6296
    %6298 = vrot.lane.b32.xlu0 %v6250, 24
    %v6299 = vpop.permute.xlu0 %6298
    %6300 = vrot.lane.b32.xlu0 %v6251, 24
    %v6301 = vpop.permute.xlu0 %6300
    %6302 = vrot.lane.b32.xlu0 %v6252, 24
    %v6303 = vpop.permute.xlu0 %6302
    %6304 = vrot.lane.b32.xlu0 %v6253, 24
    %v6305 = vpop.permute.xlu0 %6304
    %6306 = vrot.lane.b32.xlu0 %v6254, 24
    %v6307 = vpop.permute.xlu0 %6306
    %6308 = vrot.lane.b32.xlu0 %v6255, 24
    %v6309 = vpop.permute.xlu0 %6308
    %6310 = vrot.lane.b32.xlu0 %v6256, 24
    %v6311 = vpop.permute.xlu0 %6310
    %6312 = vrot.lane.b32.xlu0 %v6257, 24
    %v6313 = vpop.permute.xlu0 %6312
    %6314 = vrot.lane.b32.xlu0 %v6258, 24
    %v6315 = vpop.permute.xlu0 %6314
    %6316 = vrot.lane.b32.xlu0 %v6259, 24
    %v6317 = vpop.permute.xlu0 %6316
    %6318 = vrot.lane.b32.xlu0 %v6260, 24
    %v6319 = vpop.permute.xlu0 %6318
    %6320 = vrot.lane.b32.xlu0 %v6261, 24
    %v6321 = vpop.permute.xlu0 %6320
    %6322 = vrot.lane.b32.xlu0 %v6262, 24
    %v6323 = vpop.permute.xlu0 %6322
    %6324 = vrot.lane.b32.xlu0 %v6263, 24
    %v6325 = vpop.permute.xlu0 %6324
    %6326 = vrot.lane.b32.xlu0 %v6264, 24
    %v6327 = vpop.permute.xlu0 %6326
    %6328 = vrot.lane.b32.xlu0 %v6265, 24
    %v6329 = vpop.permute.xlu0 %6328
    %vm6330 = vcmask 23552
    %v6333 = vsel %vm6330, %v4954, %v5083
    %v6336 = vsel %vm6330, %v4955, %v5085
    %v6339 = vsel %vm6330, %v4956, %v5087
    %v6342 = vsel %vm6330, %v4957, %v5089
    %v6345 = vsel %vm6330, %v4958, %v5091
    %v6348 = vsel %vm6330, %v4959, %v5093
    %v6351 = vsel %vm6330, %v4960, %v5095
    %v6354 = vsel %vm6330, %v4961, %v5097
    %v6357 = vsel %vm6330, %v4962, %v5099
    %v6360 = vsel %vm6330, %v4963, %v5101
    %v6363 = vsel %vm6330, %v4964, %v5103
    %v6366 = vsel %vm6330, %v4965, %v5105
    %v6369 = vsel %vm6330, %v4966, %v5107
    %v6372 = vsel %vm6330, %v4967, %v5109
    %v6375 = vsel %vm6330, %v4968, %v5111
    %v6378 = vsel %vm6330, %v4969, %v5113
    %v6381 = vsel %vm6330, %v4970, %v5115
    %v6384 = vsel %vm6330, %v4971, %v5117
    %v6387 = vsel %vm6330, %v4972, %v5119
    %v6390 = vsel %vm6330, %v4973, %v5121
    %v6393 = vsel %vm6330, %v4974, %v5123
    %v6396 = vsel %vm6330, %v4975, %v5125
    %v6399 = vsel %vm6330, %v4976, %v5127
    %v6402 = vsel %vm6330, %v4977, %v5129
    %v6405 = vsel %vm6330, %v4978, %v5131
    %v6408 = vsel %vm6330, %v4979, %v5133
    %v6411 = vsel %vm6330, %v4980, %v5135
    %v6414 = vsel %vm6330, %v4981, %v5137
    %v6417 = vsel %vm6330, %v4982, %v5139
    %v6420 = vsel %vm6330, %v4983, %v5141
    %v6423 = vsel %vm6330, %v4984, %v5143
    %v6426 = vsel %vm6330, %v4985, %v5145
    %vm6427 = vcmask 48128
    %v6429 = vsel %vm6427, %v6333, %v5243
    %v6431 = vsel %vm6427, %v6336, %v5245
    %v6433 = vsel %vm6427, %v6339, %v5247
    %v6435 = vsel %vm6427, %v6342, %v5249
    %v6437 = vsel %vm6427, %v6345, %v5251
    %v6439 = vsel %vm6427, %v6348, %v5253
    %v6441 = vsel %vm6427, %v6351, %v5255
    %v6443 = vsel %vm6427, %v6354, %v5257
    %v6445 = vsel %vm6427, %v6357, %v5259
    %v6447 = vsel %vm6427, %v6360, %v5261
    %v6449 = vsel %vm6427, %v6363, %v5263
    %v6451 = vsel %vm6427, %v6366, %v5265
    %v6453 = vsel %vm6427, %v6369, %v5267
    %v6455 = vsel %vm6427, %v6372, %v5269
    %v6457 = vsel %vm6427, %v6375, %v5271
    %v6459 = vsel %vm6427, %v6378, %v5273
    %v6461 = vsel %vm6427, %v6381, %v5275
    %v6463 = vsel %vm6427, %v6384, %v5277
    %v6465 = vsel %vm6427, %v6387, %v5279
    %v6467 = vsel %vm6427, %v6390, %v5281
    %v6469 = vsel %vm6427, %v6393, %v5283
    %v6471 = vsel %vm6427, %v6396, %v5285
    %v6473 = vsel %vm6427, %v6399, %v5287
    %v6475 = vsel %vm6427, %v6402, %v5289
    %v6477 = vsel %vm6427, %v6405, %v5291
    %v6479 = vsel %vm6427, %v6408, %v5293
    %v6481 = vsel %vm6427, %v6411, %v5295
    %v6483 = vsel %vm6427, %v6414, %v5297
    %v6485 = vsel %vm6427, %v6417, %v5299
    %v6487 = vsel %vm6427, %v6420, %v5301
    %v6489 = vsel %vm6427, %v6423, %v5303
    %v6491 = vsel %vm6427, %v6426, %v5305
    %vm6492 = vcmask 72704
    %v6494 = vsel %vm6492, %v6429, %v5435
    %v6496 = vsel %vm6492, %v6431, %v5437
    %v6498 = vsel %vm6492, %v6433, %v5439
    %v6500 = vsel %vm6492, %v6435, %v5441
    %v6502 = vsel %vm6492, %v6437, %v5443
    %v6504 = vsel %vm6492, %v6439, %v5445
    %v6506 = vsel %vm6492, %v6441, %v5447
    %v6508 = vsel %vm6492, %v6443, %v5449
    %v6510 = vsel %vm6492, %v6445, %v5451
    %v6512 = vsel %vm6492, %v6447, %v5453
    %v6514 = vsel %vm6492, %v6449, %v5455
    %v6516 = vsel %vm6492, %v6451, %v5457
    %v6518 = vsel %vm6492, %v6453, %v5459
    %v6520 = vsel %vm6492, %v6455, %v5461
    %v6522 = vsel %vm6492, %v6457, %v5463
    %v6524 = vsel %vm6492, %v6459, %v5465
    %v6526 = vsel %vm6492, %v6461, %v5467
    %v6528 = vsel %vm6492, %v6463, %v5469
    %v6530 = vsel %vm6492, %v6465, %v5471
    %v6532 = vsel %vm6492, %v6467, %v5473
    %v6534 = vsel %vm6492, %v6469, %v5475
    %v6536 = vsel %vm6492, %v6471, %v5477
    %v6538 = vsel %vm6492, %v6473, %v5479
    %v6540 = vsel %vm6492, %v6475, %v5481
    %v6542 = vsel %vm6492, %v6477, %v5483
    %v6544 = vsel %vm6492, %v6479, %v5485
    %v6546 = vsel %vm6492, %v6481, %v5487
    %v6548 = vsel %vm6492, %v6483, %v5489
    %v6550 = vsel %vm6492, %v6485, %v5491
    %v6552 = vsel %vm6492, %v6487, %v5493
    %v6554 = vsel %vm6492, %v6489, %v5495
    %v6556 = vsel %vm6492, %v6491, %v5497
    %vm6557 = vcmask 97280
    %v6559 = vsel %vm6557, %v6494, %v5595
    %v6561 = vsel %vm6557, %v6496, %v5597
    %v6563 = vsel %vm6557, %v6498, %v5599
    %v6565 = vsel %vm6557, %v6500, %v5601
    %v6567 = vsel %vm6557, %v6502, %v5603
    %v6569 = vsel %vm6557, %v6504, %v5605
    %v6571 = vsel %vm6557, %v6506, %v5607
    %v6573 = vsel %vm6557, %v6508, %v5609
    %v6575 = vsel %vm6557, %v6510, %v5611
    %v6577 = vsel %vm6557, %v6512, %v5613
    %v6579 = vsel %vm6557, %v6514, %v5615
    %v6581 = vsel %vm6557, %v6516, %v5617
    %v6583 = vsel %vm6557, %v6518, %v5619
    %v6585 = vsel %vm6557, %v6520, %v5621
    %v6587 = vsel %vm6557, %v6522, %v5623
    %v6589 = vsel %vm6557, %v6524, %v5625
    %v6591 = vsel %vm6557, %v6526, %v5627
    %v6593 = vsel %vm6557, %v6528, %v5629
    %v6595 = vsel %vm6557, %v6530, %v5631
    %v6597 = vsel %vm6557, %v6532, %v5633
    %v6599 = vsel %vm6557, %v6534, %v5635
    %v6601 = vsel %vm6557, %v6536, %v5637
    %v6603 = vsel %vm6557, %v6538, %v5639
    %v6605 = vsel %vm6557, %v6540, %v5641
    %v6607 = vsel %vm6557, %v6542, %v5643
    %v6609 = vsel %vm6557, %v6544, %v5645
    %v6611 = vsel %vm6557, %v6546, %v5647
    %v6613 = vsel %vm6557, %v6548, %v5649
    %v6615 = vsel %vm6557, %v6550, %v5651
    %v6617 = vsel %vm6557, %v6552, %v5653
    %v6619 = vsel %vm6557, %v6554, %v5655
    %v6621 = vsel %vm6557, %v6556, %v5657
    %vm6622 = vcmask 121856
    %v6624 = vsel %vm6622, %v6559, %v5755
    %v6626 = vsel %vm6622, %v6561, %v5757
    %v6628 = vsel %vm6622, %v6563, %v5759
    %v6630 = vsel %vm6622, %v6565, %v5761
    %v6632 = vsel %vm6622, %v6567, %v5763
    %v6634 = vsel %vm6622, %v6569, %v5765
    %v6636 = vsel %vm6622, %v6571, %v5767
    %v6638 = vsel %vm6622, %v6573, %v5769
    %v6640 = vsel %vm6622, %v6575, %v5771
    %v6642 = vsel %vm6622, %v6577, %v5773
    %v6644 = vsel %vm6622, %v6579, %v5775
    %v6646 = vsel %vm6622, %v6581, %v5777
    %v6648 = vsel %vm6622, %v6583, %v5779
    %v6650 = vsel %vm6622, %v6585, %v5781
    %v6652 = vsel %vm6622, %v6587, %v5783
    %v6654 = vsel %vm6622, %v6589, %v5785
    %v6656 = vsel %vm6622, %v6591, %v5787
    %v6658 = vsel %vm6622, %v6593, %v5789
    %v6660 = vsel %vm6622, %v6595, %v5791
    %v6662 = vsel %vm6622, %v6597, %v5793
    %v6664 = vsel %vm6622, %v6599, %v5795
    %v6666 = vsel %vm6622, %v6601, %v5797
    %v6668 = vsel %vm6622, %v6603, %v5799
    %v6670 = vsel %vm6622, %v6605, %v5801
    %v6672 = vsel %vm6622, %v6607, %v5803
    %v6674 = vsel %vm6622, %v6609, %v5805
    %v6676 = vsel %vm6622, %v6611, %v5807
    %v6678 = vsel %vm6622, %v6613, %v5809
    %v6680 = vsel %vm6622, %v6615, %v5811
    %v6682 = vsel %vm6622, %v6617, %v5813
    %v6684 = vsel %vm6622, %v6619, %v5815
    %v6686 = vsel %vm6622, %v6621, %v5817
    %vm6687 = vcmask 146432
    %v6689 = vsel %vm6687, %v6624, %v5947
    %v6691 = vsel %vm6687, %v6626, %v5949
    %v6693 = vsel %vm6687, %v6628, %v5951
    %v6695 = vsel %vm6687, %v6630, %v5953
    %v6697 = vsel %vm6687, %v6632, %v5955
    %v6699 = vsel %vm6687, %v6634, %v5957
    %v6701 = vsel %vm6687, %v6636, %v5959
    %v6703 = vsel %vm6687, %v6638, %v5961
    %v6705 = vsel %vm6687, %v6640, %v5963
    %v6707 = vsel %vm6687, %v6642, %v5965
    %v6709 = vsel %vm6687, %v6644, %v5967
    %v6711 = vsel %vm6687, %v6646, %v5969
    %v6713 = vsel %vm6687, %v6648, %v5971
    %v6715 = vsel %vm6687, %v6650, %v5973
    %v6717 = vsel %vm6687, %v6652, %v5975
    %v6719 = vsel %vm6687, %v6654, %v5977
    %v6721 = vsel %vm6687, %v6656, %v5979
    %v6723 = vsel %vm6687, %v6658, %v5981
    %v6725 = vsel %vm6687, %v6660, %v5983
    %v6727 = vsel %vm6687, %v6662, %v5985
    %v6729 = vsel %vm6687, %v6664, %v5987
    %v6731 = vsel %vm6687, %v6666, %v5989
    %v6733 = vsel %vm6687, %v6668, %v5991
    %v6735 = vsel %vm6687, %v6670, %v5993
    %v6737 = vsel %vm6687, %v6672, %v5995
    %v6739 = vsel %vm6687, %v6674, %v5997
    %v6741 = vsel %vm6687, %v6676, %v5999
    %v6743 = vsel %vm6687, %v6678, %v6001
    %v6745 = vsel %vm6687, %v6680, %v6003
    %v6747 = vsel %vm6687, %v6682, %v6005
    %v6749 = vsel %vm6687, %v6684, %v6007
    %v6751 = vsel %vm6687, %v6686, %v6009
    %vm6752 = vcmask 171008
    %v6754 = vsel %vm6752, %v6689, %v6107
    %v6756 = vsel %vm6752, %v6691, %v6109
    %v6758 = vsel %vm6752, %v6693, %v6111
    %v6760 = vsel %vm6752, %v6695, %v6113
    %v6762 = vsel %vm6752, %v6697, %v6115
    %v6764 = vsel %vm6752, %v6699, %v6117
    %v6766 = vsel %vm6752, %v6701, %v6119
    %v6768 = vsel %vm6752, %v6703, %v6121
    %v6770 = vsel %vm6752, %v6705, %v6123
    %v6772 = vsel %vm6752, %v6707, %v6125
    %v6774 = vsel %vm6752, %v6709, %v6127
    %v6776 = vsel %vm6752, %v6711, %v6129
    %v6778 = vsel %vm6752, %v6713, %v6131
    %v6780 = vsel %vm6752, %v6715, %v6133
    %v6782 = vsel %vm6752, %v6717, %v6135
    %v6784 = vsel %vm6752, %v6719, %v6137
    %v6786 = vsel %vm6752, %v6721, %v6139
    %v6788 = vsel %vm6752, %v6723, %v6141
    %v6790 = vsel %vm6752, %v6725, %v6143
    %v6792 = vsel %vm6752, %v6727, %v6145
    %v6794 = vsel %vm6752, %v6729, %v6147
    %v6796 = vsel %vm6752, %v6731, %v6149
    %v6798 = vsel %vm6752, %v6733, %v6151
    %v6800 = vsel %vm6752, %v6735, %v6153
    %v6802 = vsel %vm6752, %v6737, %v6155
    %v6804 = vsel %vm6752, %v6739, %v6157
    %v6806 = vsel %vm6752, %v6741, %v6159
    %v6808 = vsel %vm6752, %v6743, %v6161
    %v6810 = vsel %vm6752, %v6745, %v6163
    %v6812 = vsel %vm6752, %v6747, %v6165
    %v6814 = vsel %vm6752, %v6749, %v6167
    %v6816 = vsel %vm6752, %v6751, %v6169
    %vm6817 = vcmask 195584
    %v6819 = vsel %vm6817, %v6754, %v6267
    %v6821 = vsel %vm6817, %v6756, %v6269
    %v6823 = vsel %vm6817, %v6758, %v6271
    %v6825 = vsel %vm6817, %v6760, %v6273
    %v6827 = vsel %vm6817, %v6762, %v6275
    %v6829 = vsel %vm6817, %v6764, %v6277
    %v6831 = vsel %vm6817, %v6766, %v6279
    %v6833 = vsel %vm6817, %v6768, %v6281
    %v6835 = vsel %vm6817, %v6770, %v6283
    %v6837 = vsel %vm6817, %v6772, %v6285
    %v6839 = vsel %vm6817, %v6774, %v6287
    %v6841 = vsel %vm6817, %v6776, %v6289
    %v6843 = vsel %vm6817, %v6778, %v6291
    %v6845 = vsel %vm6817, %v6780, %v6293
    %v6847 = vsel %vm6817, %v6782, %v6295
    %v6849 = vsel %vm6817, %v6784, %v6297
    %v6851 = vsel %vm6817, %v6786, %v6299
    %v6853 = vsel %vm6817, %v6788, %v6301
    %v6855 = vsel %vm6817, %v6790, %v6303
    %v6857 = vsel %vm6817, %v6792, %v6305
    %v6859 = vsel %vm6817, %v6794, %v6307
    %v6861 = vsel %vm6817, %v6796, %v6309
    %v6863 = vsel %vm6817, %v6798, %v6311
    %v6865 = vsel %vm6817, %v6800, %v6313
    %v6867 = vsel %vm6817, %v6802, %v6315
    %v6869 = vsel %vm6817, %v6804, %v6317
    %v6871 = vsel %vm6817, %v6806, %v6319
    %v6873 = vsel %vm6817, %v6808, %v6321
    %v6875 = vsel %vm6817, %v6810, %v6323
    %v6877 = vsel %vm6817, %v6812, %v6325
    %v6879 = vsel %vm6817, %v6814, %v6327
    %v6881 = vsel %vm6817, %v6816, %v6329
    %v6882 = vld [vmem:[%s1] sm:$0xf]
    %v6883 = vld [vmem:[%s1 + $0x4] sm:$0xf]
    %v6884 = vld [vmem:[%s1 + $0x8] sm:$0xf]
    %v6885 = vld [vmem:[%s1 + $0xc] sm:$0x3]
    %v6890 = vunpack.c.l.b16 %v6882
    %v6891 = vunpack.c.l.b16 %v6883
    %v6892 = vunpack.c.l.b16 %v6884
    %v6893 = vunpack.c.l.b16 %v6885
    %v6894 = vpack.c.b16 %v6891, %v6890
    %v6895 = vpack.c.b16 %v6893, %v6892
    %vm6897 = vcmask 220160
    %v6898 = vsel %vm6897, %v6819, 0
    %v6900 = vsel %vm6897, %v6821, 0
    %v6902 = vsel %vm6897, %v6823, 0
    %v6904 = vsel %vm6897, %v6825, 0
    %v6906 = vsel %vm6897, %v6827, 0
    %v6908 = vsel %vm6897, %v6829, 0
    %v6910 = vsel %vm6897, %v6831, 0
    %v6912 = vsel %vm6897, %v6833, 0
    %v6914 = vsel %vm6897, %v6835, 0
    %v6916 = vsel %vm6897, %v6837, 0
    %v6918 = vsel %vm6897, %v6839, 0
    %v6920 = vsel %vm6897, %v6841, 0
    %v6922 = vsel %vm6897, %v6843, 0
    %v6924 = vsel %vm6897, %v6845, 0
    %v6926 = vsel %vm6897, %v6847, 0
    %v6928 = vsel %vm6897, %v6849, 0
    %v6930 = vsel %vm6897, %v6851, 0
    %v6932 = vsel %vm6897, %v6853, 0
    %v6934 = vsel %vm6897, %v6855, 0
    %v6936 = vsel %vm6897, %v6857, 0
    %v6938 = vsel %vm6897, %v6859, 0
    %v6940 = vsel %vm6897, %v6861, 0
    %v6942 = vsel %vm6897, %v6863, 0
    %v6944 = vsel %vm6897, %v6865, 0
    %v6946 = vsel %vm6897, %v6867, 0
    %v6948 = vsel %vm6897, %v6869, 0
    %v6950 = vsel %vm6897, %v6871, 0
    %v6952 = vsel %vm6897, %v6873, 0
    %v6954 = vsel %vm6897, %v6875, 0
    %v6956 = vsel %vm6897, %v6877, 0
    %v6958 = vsel %vm6897, %v6879, 0
    %v6960 = vsel %vm6897, %v6881, 0
    %vm6962 = vcmask 1044480
    %vm6963 = vcmask 1045504
    %v6964 = vsel %vm6962, 4294967295, 65535
    %v6965 = vsel %vm6963, %v6964, 0
    %v6967 = vand.u32 %v6895, %v6965
    %6969 = vmatpush.bf16.msra.mxu0 0
    %6970 = vmatpush.bf16.msra.mxu0 0
    %6971 = vmatpush.bf16.msra.mxu0 0
    %6972 = vmatpush.bf16.msra.mxu0 0
    %6973 = vmatpush.bf16.msra.mxu0 0
    %6974 = vmatpush.bf16.msra.mxu0 0
    %6975 = vmatpush.bf16.msra.mxu0 %v6967
    %6976 = vmatpush.bf16.msra.mxu0 %v6894
    %6977 = vmatmul.bf16.gmra.mxu0 %v6898
    %v6978 = vpop.f32.mrf.mxu0
    %v6979 = vadd.f32 0.0, %v6978
    %v6980 = vpop.f32.mrf.mxu0
    %v6981 = vadd.f32 0.0, %v6980
    %6982 = vmatmul.bf16.gmra.mxu0 %v6900
    %v6983 = vpop.f32.mrf.mxu0
    %v6984 = vadd.f32 0.0, %v6983
    %v6985 = vpop.f32.mrf.mxu0
    %v6986 = vadd.f32 0.0, %v6985
    %6987 = vmatmul.bf16.gmra.mxu0 %v6902
    %v6988 = vpop.f32.mrf.mxu0
    %v6989 = vadd.f32 0.0, %v6988
    %v6990 = vpop.f32.mrf.mxu0
    %v6991 = vadd.f32 0.0, %v6990
    %6992 = vmatmul.bf16.gmra.mxu0 %v6904
    %v6993 = vpop.f32.mrf.mxu0
    %v6994 = vadd.f32 0.0, %v6993
    %v6995 = vpop.f32.mrf.mxu0
    %v6996 = vadd.f32 0.0, %v6995
    %6997 = vmatmul.bf16.gmra.mxu0 %v6906
    %v6998 = vpop.f32.mrf.mxu0
    %v6999 = vadd.f32 0.0, %v6998
    %v7000 = vpop.f32.mrf.mxu0
    %v7001 = vadd.f32 0.0, %v7000
    %7002 = vmatmul.bf16.gmra.mxu0 %v6908
    %v7003 = vpop.f32.mrf.mxu0
    %v7004 = vadd.f32 0.0, %v7003
    %v7005 = vpop.f32.mrf.mxu0
    %v7006 = vadd.f32 0.0, %v7005
    %7007 = vmatmul.bf16.gmra.mxu0 %v6910
    %v7008 = vpop.f32.mrf.mxu0
    %v7009 = vadd.f32 0.0, %v7008
    %v7010 = vpop.f32.mrf.mxu0
    %v7011 = vadd.f32 0.0, %v7010
    %7012 = vmatmul.bf16.gmra.mxu0 %v6912
    %v7013 = vpop.f32.mrf.mxu0
    %v7014 = vadd.f32 0.0, %v7013
    %v7015 = vpop.f32.mrf.mxu0
    %v7016 = vadd.f32 0.0, %v7015
    %7017 = vmatmul.bf16.gmra.mxu0 %v6914
    %v7018 = vpop.f32.mrf.mxu0
    %v7019 = vadd.f32 0.0, %v7018
    %v7020 = vpop.f32.mrf.mxu0
    %v7021 = vadd.f32 0.0, %v7020
    %7022 = vmatmul.bf16.gmra.mxu0 %v6916
    %v7023 = vpop.f32.mrf.mxu0
    %v7024 = vadd.f32 0.0, %v7023
    %v7025 = vpop.f32.mrf.mxu0
    %v7026 = vadd.f32 0.0, %v7025
    %7027 = vmatmul.bf16.gmra.mxu0 %v6918
    %v7028 = vpop.f32.mrf.mxu0
    %v7029 = vadd.f32 0.0, %v7028
    %v7030 = vpop.f32.mrf.mxu0
    %v7031 = vadd.f32 0.0, %v7030
    %7032 = vmatmul.bf16.gmra.mxu0 %v6920
    %v7033 = vpop.f32.mrf.mxu0
    %v7034 = vadd.f32 0.0, %v7033
    %v7035 = vpop.f32.mrf.mxu0
    %v7036 = vadd.f32 0.0, %v7035
    %7037 = vmatmul.bf16.gmra.mxu0 %v6922
    %v7038 = vpop.f32.mrf.mxu0
    %v7039 = vadd.f32 0.0, %v7038
    %v7040 = vpop.f32.mrf.mxu0
    %v7041 = vadd.f32 0.0, %v7040
    %7042 = vmatmul.bf16.gmra.mxu0 %v6924
    %v7043 = vpop.f32.mrf.mxu0
    %v7044 = vadd.f32 0.0, %v7043
    %v7045 = vpop.f32.mrf.mxu0
    %v7046 = vadd.f32 0.0, %v7045
    %7047 = vmatmul.bf16.gmra.mxu0 %v6926
    %v7048 = vpop.f32.mrf.mxu0
    %v7049 = vadd.f32 0.0, %v7048
    %v7050 = vpop.f32.mrf.mxu0
    %v7051 = vadd.f32 0.0, %v7050
    %7052 = vmatmul.bf16.gmra.mxu0 %v6928
    %v7053 = vpop.f32.mrf.mxu0
    %v7054 = vadd.f32 0.0, %v7053
    %v7055 = vpop.f32.mrf.mxu0
    %v7056 = vadd.f32 0.0, %v7055
    %7057 = vmatmul.bf16.gmra.mxu0 %v6930
    %v7058 = vpop.f32.mrf.mxu0
    %v7059 = vadd.f32 0.0, %v7058
    %v7060 = vpop.f32.mrf.mxu0
    %v7061 = vadd.f32 0.0, %v7060
    %7062 = vmatmul.bf16.gmra.mxu0 %v6932
    %v7063 = vpop.f32.mrf.mxu0
    %v7064 = vadd.f32 0.0, %v7063
    %v7065 = vpop.f32.mrf.mxu0
    %v7066 = vadd.f32 0.0, %v7065
    %7067 = vmatmul.bf16.gmra.mxu0 %v6934
    %v7068 = vpop.f32.mrf.mxu0
    %v7069 = vadd.f32 0.0, %v7068
    %v7070 = vpop.f32.mrf.mxu0
    %v7071 = vadd.f32 0.0, %v7070
    %7072 = vmatmul.bf16.gmra.mxu0 %v6936
    %v7073 = vpop.f32.mrf.mxu0
    %v7074 = vadd.f32 0.0, %v7073
    %v7075 = vpop.f32.mrf.mxu0
    %v7076 = vadd.f32 0.0, %v7075
    %7077 = vmatmul.bf16.gmra.mxu0 %v6938
    %v7078 = vpop.f32.mrf.mxu0
    %v7079 = vadd.f32 0.0, %v7078
    %v7080 = vpop.f32.mrf.mxu0
    %v7081 = vadd.f32 0.0, %v7080
    %7082 = vmatmul.bf16.gmra.mxu0 %v6940
    %v7083 = vpop.f32.mrf.mxu0
    %v7084 = vadd.f32 0.0, %v7083
    %v7085 = vpop.f32.mrf.mxu0
    %v7086 = vadd.f32 0.0, %v7085
    %7087 = vmatmul.bf16.gmra.mxu0 %v6942
    %v7088 = vpop.f32.mrf.mxu0
    %v7089 = vadd.f32 0.0, %v7088
    %v7090 = vpop.f32.mrf.mxu0
    %v7091 = vadd.f32 0.0, %v7090
    %7092 = vmatmul.bf16.gmra.mxu0 %v6944
    %v7093 = vpop.f32.mrf.mxu0
    %v7094 = vadd.f32 0.0, %v7093
    %v7095 = vpop.f32.mrf.mxu0
    %v7096 = vadd.f32 0.0, %v7095
    %7097 = vmatmul.bf16.gmra.mxu0 %v6946
    %v7098 = vpop.f32.mrf.mxu0
    %v7099 = vadd.f32 0.0, %v7098
    %v7100 = vpop.f32.mrf.mxu0
    %v7101 = vadd.f32 0.0, %v7100
    %7102 = vmatmul.bf16.gmra.mxu0 %v6948
    %v7103 = vpop.f32.mrf.mxu0
    %v7104 = vadd.f32 0.0, %v7103
    %v7105 = vpop.f32.mrf.mxu0
    %v7106 = vadd.f32 0.0, %v7105
    %7107 = vmatmul.bf16.gmra.mxu0 %v6950
    %v7108 = vpop.f32.mrf.mxu0
    %v7109 = vadd.f32 0.0, %v7108
    %v7110 = vpop.f32.mrf.mxu0
    %v7111 = vadd.f32 0.0, %v7110
    %7112 = vmatmul.bf16.gmra.mxu0 %v6952
    %v7113 = vpop.f32.mrf.mxu0
    %v7114 = vadd.f32 0.0, %v7113
    %v7115 = vpop.f32.mrf.mxu0
    %v7116 = vadd.f32 0.0, %v7115
    %7117 = vmatmul.bf16.gmra.mxu0 %v6954
    %v7118 = vpop.f32.mrf.mxu0
    %v7119 = vadd.f32 0.0, %v7118
    %v7120 = vpop.f32.mrf.mxu0
    %v7121 = vadd.f32 0.0, %v7120
    %7122 = vmatmul.bf16.gmra.mxu0 %v6956
    %v7123 = vpop.f32.mrf.mxu0
    %v7124 = vadd.f32 0.0, %v7123
    %v7125 = vpop.f32.mrf.mxu0
    %v7126 = vadd.f32 0.0, %v7125
    %7127 = vmatmul.bf16.gmra.mxu0 %v6958
    %v7128 = vpop.f32.mrf.mxu0
    %v7129 = vadd.f32 0.0, %v7128
    %v7130 = vpop.f32.mrf.mxu0
    %v7131 = vadd.f32 0.0, %v7130
    %7132 = vmatmul.bf16.gmra.mxu0 %v6960
    %v7133 = vpop.f32.mrf.mxu0
    %v7134 = vadd.f32 0.0, %v7133
    %v7135 = vpop.f32.mrf.mxu0
    %v7136 = vadd.f32 0.0, %v7135
    %7137 = vdwg.mxu0
    %vm7138 = vcmask 261120
    %v7139 = vsel %vm7138, %v6979, 0.0
    %v7140 = vsel %vm7138, %v6981, 0.0
    %v7141 = vadd.f32 %v7139, %v7140
    %v7142 = vsel %vm7138, %v6984, 0.0
    %v7143 = vadd.f32 %v7141, %v7142
    %v7144 = vsel %vm7138, %v6986, 0.0
    %v7145 = vadd.f32 %v7143, %v7144
    %v7146 = vsel %vm7138, %v6989, 0.0
    %v7147 = vadd.f32 %v7145, %v7146
    %v7148 = vsel %vm7138, %v6991, 0.0
    %v7149 = vadd.f32 %v7147, %v7148
    %v7150 = vsel %vm7138, %v6994, 0.0
    %v7151 = vadd.f32 %v7149, %v7150
    %v7152 = vsel %vm7138, %v6996, 0.0
    %v7153 = vadd.f32 %v7151, %v7152
    %v7154 = vsel %vm7138, %v6999, 0.0
    %v7155 = vadd.f32 %v7153, %v7154
    %v7156 = vsel %vm7138, %v7001, 0.0
    %v7157 = vadd.f32 %v7155, %v7156
    %v7158 = vsel %vm7138, %v7004, 0.0
    %v7159 = vadd.f32 %v7157, %v7158
    %v7160 = vsel %vm7138, %v7006, 0.0
    %v7161 = vadd.f32 %v7159, %v7160
    %v7162 = vsel %vm7138, %v7009, 0.0
    %v7163 = vadd.f32 %v7161, %v7162
    %v7164 = vsel %vm7138, %v7011, 0.0
    %v7165 = vadd.f32 %v7163, %v7164
    %v7166 = vsel %vm7138, %v7014, 0.0
    %v7167 = vadd.f32 %v7165, %v7166
    %v7168 = vsel %vm7138, %v7016, 0.0
    %v7169 = vadd.f32 %v7167, %v7168
    %v7170 = vsel %vm7138, %v7019, 0.0
    %v7171 = vadd.f32 %v7169, %v7170
    %v7172 = vsel %vm7138, %v7021, 0.0
    %v7173 = vadd.f32 %v7171, %v7172
    %v7174 = vsel %vm7138, %v7024, 0.0
    %v7175 = vadd.f32 %v7173, %v7174
    %v7176 = vsel %vm7138, %v7026, 0.0
    %v7177 = vadd.f32 %v7175, %v7176
    %v7178 = vsel %vm7138, %v7029, 0.0
    %v7179 = vadd.f32 %v7177, %v7178
    %v7180 = vsel %vm7138, %v7031, 0.0
    %v7181 = vadd.f32 %v7179, %v7180
    %v7182 = vsel %vm7138, %v7034, 0.0
    %v7183 = vadd.f32 %v7181, %v7182
    %v7184 = vsel %vm7138, %v7036, 0.0
    %v7185 = vadd.f32 %v7183, %v7184
    %v7186 = vsel %vm7138, %v7039, 0.0
    %v7187 = vadd.f32 %v7185, %v7186
    %v7188 = vsel %vm7138, %v7041, 0.0
    %v7189 = vadd.f32 %v7187, %v7188
    %v7190 = vsel %vm7138, %v7044, 0.0
    %v7191 = vadd.f32 %v7189, %v7190
    %v7192 = vsel %vm7138, %v7046, 0.0
    %v7193 = vadd.f32 %v7191, %v7192
    %v7194 = vsel %vm7138, %v7049, 0.0
    %v7195 = vadd.f32 %v7193, %v7194
    %v7196 = vsel %vm7138, %v7051, 0.0
    %v7197 = vadd.f32 %v7195, %v7196
    %v7198 = vsel %vm7138, %v7054, 0.0
    %v7199 = vadd.f32 %v7197, %v7198
    %v7200 = vsel %vm7138, %v7056, 0.0
    %v7201 = vadd.f32 %v7199, %v7200
    %v7202 = vsel %vm7138, %v7059, 0.0
    %v7203 = vadd.f32 %v7201, %v7202
    %v7204 = vsel %vm7138, %v7061, 0.0
    %v7205 = vadd.f32 %v7203, %v7204
    %v7206 = vsel %vm7138, %v7064, 0.0
    %v7207 = vadd.f32 %v7205, %v7206
    %v7208 = vsel %vm7138, %v7066, 0.0
    %v7209 = vadd.f32 %v7207, %v7208
    %v7210 = vsel %vm7138, %v7069, 0.0
    %v7211 = vadd.f32 %v7209, %v7210
    %v7212 = vsel %vm7138, %v7071, 0.0
    %v7213 = vadd.f32 %v7211, %v7212
    %v7214 = vsel %vm7138, %v7074, 0.0
    %v7215 = vadd.f32 %v7213, %v7214
    %v7216 = vsel %vm7138, %v7076, 0.0
    %v7217 = vadd.f32 %v7215, %v7216
    %v7218 = vsel %vm7138, %v7079, 0.0
    %v7219 = vadd.f32 %v7217, %v7218
    %v7220 = vsel %vm7138, %v7081, 0.0
    %v7221 = vadd.f32 %v7219, %v7220
    %v7222 = vsel %vm7138, %v7084, 0.0
    %v7223 = vadd.f32 %v7221, %v7222
    %v7224 = vsel %vm7138, %v7086, 0.0
    %v7225 = vadd.f32 %v7223, %v7224
    %v7226 = vsel %vm7138, %v7089, 0.0
    %v7227 = vadd.f32 %v7225, %v7226
    %v7228 = vsel %vm7138, %v7091, 0.0
    %v7229 = vadd.f32 %v7227, %v7228
    %v7230 = vsel %vm7138, %v7094, 0.0
    %v7231 = vadd.f32 %v7229, %v7230
    %v7232 = vsel %vm7138, %v7096, 0.0
    %v7233 = vadd.f32 %v7231, %v7232
    %v7234 = vsel %vm7138, %v7099, 0.0
    %v7235 = vadd.f32 %v7233, %v7234
    %v7236 = vsel %vm7138, %v7101, 0.0
    %v7237 = vadd.f32 %v7235, %v7236
    %v7238 = vsel %vm7138, %v7104, 0.0
    %v7239 = vadd.f32 %v7237, %v7238
    %v7240 = vsel %vm7138, %v7106, 0.0
    %v7241 = vadd.f32 %v7239, %v7240
    %v7242 = vsel %vm7138, %v7109, 0.0
    %v7243 = vadd.f32 %v7241, %v7242
    %v7244 = vsel %vm7138, %v7111, 0.0
    %v7245 = vadd.f32 %v7243, %v7244
    %v7246 = vsel %vm7138, %v7114, 0.0
    %v7247 = vadd.f32 %v7245, %v7246
    %v7248 = vsel %vm7138, %v7116, 0.0
    %v7249 = vadd.f32 %v7247, %v7248
    %v7250 = vsel %vm7138, %v7119, 0.0
    %v7251 = vadd.f32 %v7249, %v7250
    %v7252 = vsel %vm7138, %v7121, 0.0
    %v7253 = vadd.f32 %v7251, %v7252
    %v7254 = vsel %vm7138, %v7124, 0.0
    %v7255 = vadd.f32 %v7253, %v7254
    %v7256 = vsel %vm7138, %v7126, 0.0
    %v7257 = vadd.f32 %v7255, %v7256
    %v7258 = vsel %vm7138, %v7129, 0.0
    %v7259 = vadd.f32 %v7257, %v7258
    %v7260 = vsel %vm7138, %v7131, 0.0
    %v7261 = vadd.f32 %v7259, %v7260
    %v7262 = vsel %vm7138, %v7134, 0.0
    %v7263 = vadd.f32 %v7261, %v7262
    %v7264 = vsel %vm7138, %v7136, 0.0
    %v7265 = vadd.f32 %v7263, %v7264
    %v7266 = vrot.slane %v7265, 4
    %v7267 = vadd.f32 %v7265, %v7266
    %v7268 = vrot.slane %v7267, 2
    %v7269 = vadd.f32 %v7267, %v7268
    %v7270 = vrot.slane %v7269, 1
    %v7271 = vadd.f32 %v7269, %v7270
    %v7272 = vmul.f32 %v7271, 0.001953125
    %v7273 = vmul.f32 %v6979, %v6979
    %v7274 = vmul.f32 %v6981, %v6981
    %v7275 = vmul.f32 %v6984, %v6984
    %v7276 = vmul.f32 %v6986, %v6986
    %v7277 = vmul.f32 %v6989, %v6989
    %v7278 = vmul.f32 %v6991, %v6991
    %v7279 = vmul.f32 %v6994, %v6994
    %v7280 = vmul.f32 %v6996, %v6996
    %v7281 = vmul.f32 %v6999, %v6999
    %v7282 = vmul.f32 %v7001, %v7001
    %v7283 = vmul.f32 %v7004, %v7004
    %v7284 = vmul.f32 %v7006, %v7006
    %v7285 = vmul.f32 %v7009, %v7009
    %v7286 = vmul.f32 %v7011, %v7011
    %v7287 = vmul.f32 %v7014, %v7014
    %v7288 = vmul.f32 %v7016, %v7016
    %v7289 = vmul.f32 %v7019, %v7019
    %v7290 = vmul.f32 %v7021, %v7021
    %v7291 = vmul.f32 %v7024, %v7024
    %v7292 = vmul.f32 %v7026, %v7026
    %v7293 = vmul.f32 %v7029, %v7029
    %v7294 = vmul.f32 %v7031, %v7031
    %v7295 = vmul.f32 %v7034, %v7034
    %v7296 = vmul.f32 %v7036, %v7036
    %v7297 = vmul.f32 %v7039, %v7039
    %v7298 = vmul.f32 %v7041, %v7041
    %v7299 = vmul.f32 %v7044, %v7044
    %v7300 = vmul.f32 %v7046, %v7046
    %v7301 = vmul.f32 %v7049, %v7049
    %v7302 = vmul.f32 %v7051, %v7051
    %v7303 = vmul.f32 %v7054, %v7054
    %v7304 = vmul.f32 %v7056, %v7056
    %v7305 = vmul.f32 %v7059, %v7059
    %v7306 = vmul.f32 %v7061, %v7061
    %v7307 = vmul.f32 %v7064, %v7064
    %v7308 = vmul.f32 %v7066, %v7066
    %v7309 = vmul.f32 %v7069, %v7069
    %v7310 = vmul.f32 %v7071, %v7071
    %v7311 = vmul.f32 %v7074, %v7074
    %v7312 = vmul.f32 %v7076, %v7076
    %v7313 = vmul.f32 %v7079, %v7079
    %v7314 = vmul.f32 %v7081, %v7081
    %v7315 = vmul.f32 %v7084, %v7084
    %v7316 = vmul.f32 %v7086, %v7086
    %v7317 = vmul.f32 %v7089, %v7089
    %v7318 = vmul.f32 %v7091, %v7091
    %v7319 = vmul.f32 %v7094, %v7094
    %v7320 = vmul.f32 %v7096, %v7096
    %v7321 = vmul.f32 %v7099, %v7099
    %v7322 = vmul.f32 %v7101, %v7101
    %v7323 = vmul.f32 %v7104, %v7104
    %v7324 = vmul.f32 %v7106, %v7106
    %v7325 = vmul.f32 %v7109, %v7109
    %v7326 = vmul.f32 %v7111, %v7111
    %v7327 = vmul.f32 %v7114, %v7114
    %v7328 = vmul.f32 %v7116, %v7116
    %v7329 = vmul.f32 %v7119, %v7119
    %v7330 = vmul.f32 %v7121, %v7121
    %v7331 = vmul.f32 %v7124, %v7124
    %v7332 = vmul.f32 %v7126, %v7126
    %v7333 = vmul.f32 %v7129, %v7129
    %v7334 = vmul.f32 %v7131, %v7131
    %v7335 = vmul.f32 %v7134, %v7134
    %v7336 = vmul.f32 %v7136, %v7136
    %v7337 = vsel %vm7138, %v7273, 0.0
    %v7338 = vsel %vm7138, %v7274, 0.0
    %v7339 = vadd.f32 %v7337, %v7338
    %v7340 = vsel %vm7138, %v7275, 0.0
    %v7341 = vadd.f32 %v7339, %v7340
    %v7342 = vsel %vm7138, %v7276, 0.0
    %v7343 = vadd.f32 %v7341, %v7342
    %v7344 = vsel %vm7138, %v7277, 0.0
    %v7345 = vadd.f32 %v7343, %v7344
    %v7346 = vsel %vm7138, %v7278, 0.0
    %v7347 = vadd.f32 %v7345, %v7346
    %v7348 = vsel %vm7138, %v7279, 0.0
    %v7349 = vadd.f32 %v7347, %v7348
    %v7350 = vsel %vm7138, %v7280, 0.0
    %v7351 = vadd.f32 %v7349, %v7350
    %v7352 = vsel %vm7138, %v7281, 0.0
    %v7353 = vadd.f32 %v7351, %v7352
    %v7354 = vsel %vm7138, %v7282, 0.0
    %v7355 = vadd.f32 %v7353, %v7354
    %v7356 = vsel %vm7138, %v7283, 0.0
    %v7357 = vadd.f32 %v7355, %v7356
    %v7358 = vsel %vm7138, %v7284, 0.0
    %v7359 = vadd.f32 %v7357, %v7358
    %v7360 = vsel %vm7138, %v7285, 0.0
    %v7361 = vadd.f32 %v7359, %v7360
    %v7362 = vsel %vm7138, %v7286, 0.0
    %v7363 = vadd.f32 %v7361, %v7362
    %v7364 = vsel %vm7138, %v7287, 0.0
    %v7365 = vadd.f32 %v7363, %v7364
    %v7366 = vsel %vm7138, %v7288, 0.0
    %v7367 = vadd.f32 %v7365, %v7366
    %v7368 = vsel %vm7138, %v7289, 0.0
    %v7369 = vadd.f32 %v7367, %v7368
    %v7370 = vsel %vm7138, %v7290, 0.0
    %v7371 = vadd.f32 %v7369, %v7370
    %v7372 = vsel %vm7138, %v7291, 0.0
    %v7373 = vadd.f32 %v7371, %v7372
    %v7374 = vsel %vm7138, %v7292, 0.0
    %v7375 = vadd.f32 %v7373, %v7374
    %v7376 = vsel %vm7138, %v7293, 0.0
    %v7377 = vadd.f32 %v7375, %v7376
    %v7378 = vsel %vm7138, %v7294, 0.0
    %v7379 = vadd.f32 %v7377, %v7378
    %v7380 = vsel %vm7138, %v7295, 0.0
    %v7381 = vadd.f32 %v7379, %v7380
    %v7382 = vsel %vm7138, %v7296, 0.0
    %v7383 = vadd.f32 %v7381, %v7382
    %v7384 = vsel %vm7138, %v7297, 0.0
    %v7385 = vadd.f32 %v7383, %v7384
    %v7386 = vsel %vm7138, %v7298, 0.0
    %v7387 = vadd.f32 %v7385, %v7386
    %v7388 = vsel %vm7138, %v7299, 0.0
    %v7389 = vadd.f32 %v7387, %v7388
    %v7390 = vsel %vm7138, %v7300, 0.0
    %v7391 = vadd.f32 %v7389, %v7390
    %v7392 = vsel %vm7138, %v7301, 0.0
    %v7393 = vadd.f32 %v7391, %v7392
    %v7394 = vsel %vm7138, %v7302, 0.0
    %v7395 = vadd.f32 %v7393, %v7394
    %v7396 = vsel %vm7138, %v7303, 0.0
    %v7397 = vadd.f32 %v7395, %v7396
    %v7398 = vsel %vm7138, %v7304, 0.0
    %v7399 = vadd.f32 %v7397, %v7398
    %v7400 = vsel %vm7138, %v7305, 0.0
    %v7401 = vadd.f32 %v7399, %v7400
    %v7402 = vsel %vm7138, %v7306, 0.0
    %v7403 = vadd.f32 %v7401, %v7402
    %v7404 = vsel %vm7138, %v7307, 0.0
    %v7405 = vadd.f32 %v7403, %v7404
    %v7406 = vsel %vm7138, %v7308, 0.0
    %v7407 = vadd.f32 %v7405, %v7406
    %v7408 = vsel %vm7138, %v7309, 0.0
    %v7409 = vadd.f32 %v7407, %v7408
    %v7410 = vsel %vm7138, %v7310, 0.0
    %v7411 = vadd.f32 %v7409, %v7410
    %v7412 = vsel %vm7138, %v7311, 0.0
    %v7413 = vadd.f32 %v7411, %v7412
    %v7414 = vsel %vm7138, %v7312, 0.0
    %v7415 = vadd.f32 %v7413, %v7414
    %v7416 = vsel %vm7138, %v7313, 0.0
    %v7417 = vadd.f32 %v7415, %v7416
    %v7418 = vsel %vm7138, %v7314, 0.0
    %v7419 = vadd.f32 %v7417, %v7418
    %v7420 = vsel %vm7138, %v7315, 0.0
    %v7421 = vadd.f32 %v7419, %v7420
    %v7422 = vsel %vm7138, %v7316, 0.0
    %v7423 = vadd.f32 %v7421, %v7422
    %v7424 = vsel %vm7138, %v7317, 0.0
    %v7425 = vadd.f32 %v7423, %v7424
    %v7426 = vsel %vm7138, %v7318, 0.0
    %v7427 = vadd.f32 %v7425, %v7426
    %v7428 = vsel %vm7138, %v7319, 0.0
    %v7429 = vadd.f32 %v7427, %v7428
    %v7430 = vsel %vm7138, %v7320, 0.0
    %v7431 = vadd.f32 %v7429, %v7430
    %v7432 = vsel %vm7138, %v7321, 0.0
    %v7433 = vadd.f32 %v7431, %v7432
    %v7434 = vsel %vm7138, %v7322, 0.0
    %v7435 = vadd.f32 %v7433, %v7434
    %v7436 = vsel %vm7138, %v7323, 0.0
    %v7437 = vadd.f32 %v7435, %v7436
    %v7438 = vsel %vm7138, %v7324, 0.0
    %v7439 = vadd.f32 %v7437, %v7438
    %v7440 = vsel %vm7138, %v7325, 0.0
    %v7441 = vadd.f32 %v7439, %v7440
    %v7442 = vsel %vm7138, %v7326, 0.0
    %v7443 = vadd.f32 %v7441, %v7442
    %v7444 = vsel %vm7138, %v7327, 0.0
    %v7445 = vadd.f32 %v7443, %v7444
    %v7446 = vsel %vm7138, %v7328, 0.0
    %v7447 = vadd.f32 %v7445, %v7446
    %v7448 = vsel %vm7138, %v7329, 0.0
    %v7449 = vadd.f32 %v7447, %v7448
    %v7450 = vsel %vm7138, %v7330, 0.0
    %v7451 = vadd.f32 %v7449, %v7450
    %v7452 = vsel %vm7138, %v7331, 0.0
    %v7453 = vadd.f32 %v7451, %v7452
    %v7454 = vsel %vm7138, %v7332, 0.0
    %v7455 = vadd.f32 %v7453, %v7454
    %v7456 = vsel %vm7138, %v7333, 0.0
    %v7457 = vadd.f32 %v7455, %v7456
    %v7458 = vsel %vm7138, %v7334, 0.0
    %v7459 = vadd.f32 %v7457, %v7458
    %v7460 = vsel %vm7138, %v7335, 0.0
    %v7461 = vadd.f32 %v7459, %v7460
    %v7462 = vsel %vm7138, %v7336, 0.0
    %v7463 = vadd.f32 %v7461, %v7462
    %v7464 = vrot.slane %v7463, 4
    %v7465 = vadd.f32 %v7463, %v7464
    %v7466 = vrot.slane %v7465, 2
    %v7467 = vadd.f32 %v7465, %v7466
    %v7468 = vrot.slane %v7467, 1
    %v7469 = vadd.f32 %v7467, %v7468
    %v7470 = vmul.f32 %v7469, 0.001953125
    %v7471 = vmul.f32 %v7272, %v7272
    %v7472 = vsub.f32 %v7470, %v7471
    %v7473 = vmax.f32 %v7472, 0.0
    %v7474 = vsub.f32 %v6979, %v7272
    %v7475 = vsub.f32 %v6981, %v7272
    %v7476 = vsub.f32 %v6984, %v7272
    %v7477 = vsub.f32 %v6986, %v7272
    %v7478 = vsub.f32 %v6989, %v7272
    %v7479 = vsub.f32 %v6991, %v7272
    %v7480 = vsub.f32 %v6994, %v7272
    %v7481 = vsub.f32 %v6996, %v7272
    %v7482 = vsub.f32 %v6999, %v7272
    %v7483 = vsub.f32 %v7001, %v7272
    %v7484 = vsub.f32 %v7004, %v7272
    %v7485 = vsub.f32 %v7006, %v7272
    %v7486 = vsub.f32 %v7009, %v7272
    %v7487 = vsub.f32 %v7011, %v7272
    %v7488 = vsub.f32 %v7014, %v7272
    %v7489 = vsub.f32 %v7016, %v7272
    %v7490 = vsub.f32 %v7019, %v7272
    %v7491 = vsub.f32 %v7021, %v7272
    %v7492 = vsub.f32 %v7024, %v7272
    %v7493 = vsub.f32 %v7026, %v7272
    %v7494 = vsub.f32 %v7029, %v7272
    %v7495 = vsub.f32 %v7031, %v7272
    %v7496 = vsub.f32 %v7034, %v7272
    %v7497 = vsub.f32 %v7036, %v7272
    %v7498 = vsub.f32 %v7039, %v7272
    %v7499 = vsub.f32 %v7041, %v7272
    %v7500 = vsub.f32 %v7044, %v7272
    %v7501 = vsub.f32 %v7046, %v7272
    %v7502 = vsub.f32 %v7049, %v7272
    %v7503 = vsub.f32 %v7051, %v7272
    %v7504 = vsub.f32 %v7054, %v7272
    %v7505 = vsub.f32 %v7056, %v7272
    %v7506 = vsub.f32 %v7059, %v7272
    %v7507 = vsub.f32 %v7061, %v7272
    %v7508 = vsub.f32 %v7064, %v7272
    %v7509 = vsub.f32 %v7066, %v7272
    %v7510 = vsub.f32 %v7069, %v7272
    %v7511 = vsub.f32 %v7071, %v7272
    %v7512 = vsub.f32 %v7074, %v7272
    %v7513 = vsub.f32 %v7076, %v7272
    %v7514 = vsub.f32 %v7079, %v7272
    %v7515 = vsub.f32 %v7081, %v7272
    %v7516 = vsub.f32 %v7084, %v7272
    %v7517 = vsub.f32 %v7086, %v7272
    %v7518 = vsub.f32 %v7089, %v7272
    %v7519 = vsub.f32 %v7091, %v7272
    %v7520 = vsub.f32 %v7094, %v7272
    %v7521 = vsub.f32 %v7096, %v7272
    %v7522 = vsub.f32 %v7099, %v7272
    %v7523 = vsub.f32 %v7101, %v7272
    %v7524 = vsub.f32 %v7104, %v7272
    %v7525 = vsub.f32 %v7106, %v7272
    %v7526 = vsub.f32 %v7109, %v7272
    %v7527 = vsub.f32 %v7111, %v7272
    %v7528 = vsub.f32 %v7114, %v7272
    %v7529 = vsub.f32 %v7116, %v7272
    %v7530 = vsub.f32 %v7119, %v7272
    %v7531 = vsub.f32 %v7121, %v7272
    %v7532 = vsub.f32 %v7124, %v7272
    %v7533 = vsub.f32 %v7126, %v7272
    %v7534 = vsub.f32 %v7129, %v7272
    %v7535 = vsub.f32 %v7131, %v7272
    %v7536 = vsub.f32 %v7134, %v7272
    %v7537 = vsub.f32 %v7136, %v7272
    %v7538 = vadd.f32 %v7473, 1e-05
    %v7539 = vrsqrt.pop %v7538
    %v7540 = vmul.f32 %v7539, %v7538
    %v7541 = vmul.f32 %v7540, %v7539
    %v7542 = vmul.f32 0.5, %v7541
    %v7543 = vsub.f32 1.5, %v7542
    %v7544 = vmul.f32 %v7539, %v7543
    %vm7545 = vweird.f32 %v7538
    %vm7546 = vweird.f32 %v7539
    %vm7547 = vmor %vm7545, %vm7546
    %v7548 = vsel %vm7547, %v7539, %v7544
    %v7549 = vmul.f32 %v7474, %v7548
    %v7550 = vmul.f32 %v7475, %v7548
    %v7551 = vmul.f32 %v7476, %v7548
    %v7552 = vmul.f32 %v7477, %v7548
    %v7553 = vmul.f32 %v7478, %v7548
    %v7554 = vmul.f32 %v7479, %v7548
    %v7555 = vmul.f32 %v7480, %v7548
    %v7556 = vmul.f32 %v7481, %v7548
    %v7557 = vmul.f32 %v7482, %v7548
    %v7558 = vmul.f32 %v7483, %v7548
    %v7559 = vmul.f32 %v7484, %v7548
    %v7560 = vmul.f32 %v7485, %v7548
    %v7561 = vmul.f32 %v7486, %v7548
    %v7562 = vmul.f32 %v7487, %v7548
    %v7563 = vmul.f32 %v7488, %v7548
    %v7564 = vmul.f32 %v7489, %v7548
    %v7565 = vmul.f32 %v7490, %v7548
    %v7566 = vmul.f32 %v7491, %v7548
    %v7567 = vmul.f32 %v7492, %v7548
    %v7568 = vmul.f32 %v7493, %v7548
    %v7569 = vmul.f32 %v7494, %v7548
    %v7570 = vmul.f32 %v7495, %v7548
    %v7571 = vmul.f32 %v7496, %v7548
    %v7572 = vmul.f32 %v7497, %v7548
    %v7573 = vmul.f32 %v7498, %v7548
    %v7574 = vmul.f32 %v7499, %v7548
    %v7575 = vmul.f32 %v7500, %v7548
    %v7576 = vmul.f32 %v7501, %v7548
    %v7577 = vmul.f32 %v7502, %v7548
    %v7578 = vmul.f32 %v7503, %v7548
    %v7579 = vmul.f32 %v7504, %v7548
    %v7580 = vmul.f32 %v7505, %v7548
    %v7581 = vmul.f32 %v7506, %v7548
    %v7582 = vmul.f32 %v7507, %v7548
    %v7583 = vmul.f32 %v7508, %v7548
    %v7584 = vmul.f32 %v7509, %v7548
    %v7585 = vmul.f32 %v7510, %v7548
    %v7586 = vmul.f32 %v7511, %v7548
    %v7587 = vmul.f32 %v7512, %v7548
    %v7588 = vmul.f32 %v7513, %v7548
    %v7589 = vmul.f32 %v7514, %v7548
    %v7590 = vmul.f32 %v7515, %v7548
    %v7591 = vmul.f32 %v7516, %v7548
    %v7592 = vmul.f32 %v7517, %v7548
    %v7593 = vmul.f32 %v7518, %v7548
    %v7594 = vmul.f32 %v7519, %v7548
    %v7595 = vmul.f32 %v7520, %v7548
    %v7596 = vmul.f32 %v7521, %v7548
    %v7597 = vmul.f32 %v7522, %v7548
    %v7598 = vmul.f32 %v7523, %v7548
    %v7599 = vmul.f32 %v7524, %v7548
    %v7600 = vmul.f32 %v7525, %v7548
    %v7601 = vmul.f32 %v7526, %v7548
    %v7602 = vmul.f32 %v7527, %v7548
    %v7603 = vmul.f32 %v7528, %v7548
    %v7604 = vmul.f32 %v7529, %v7548
    %v7605 = vmul.f32 %v7530, %v7548
    %v7606 = vmul.f32 %v7531, %v7548
    %v7607 = vmul.f32 %v7532, %v7548
    %v7608 = vmul.f32 %v7533, %v7548
    %v7609 = vmul.f32 %v7534, %v7548
    %v7610 = vmul.f32 %v7535, %v7548
    %v7611 = vmul.f32 %v7536, %v7548
    %v7612 = vmul.f32 %v7537, %v7548
    %v7613 = vld [vmem:[%s2] sm:$0x1]
    %v7615 = vperm.slane %v7613, 0
    %v7617 = vmul.f32 %v7549, %v7615
    %v7618 = vmul.f32 %v7550, %v7615
    %v7619 = vmul.f32 %v7551, %v7615
    %v7620 = vmul.f32 %v7552, %v7615
    %v7621 = vmul.f32 %v7553, %v7615
    %v7622 = vmul.f32 %v7554, %v7615
    %v7623 = vmul.f32 %v7555, %v7615
    %v7624 = vmul.f32 %v7556, %v7615
    %v7625 = vmul.f32 %v7557, %v7615
    %v7626 = vmul.f32 %v7558, %v7615
    %v7627 = vmul.f32 %v7559, %v7615
    %v7628 = vmul.f32 %v7560, %v7615
    %v7629 = vmul.f32 %v7561, %v7615
    %v7630 = vmul.f32 %v7562, %v7615
    %v7631 = vmul.f32 %v7563, %v7615
    %v7632 = vmul.f32 %v7564, %v7615
    %v7633 = vmul.f32 %v7565, %v7615
    %v7634 = vmul.f32 %v7566, %v7615
    %v7635 = vmul.f32 %v7567, %v7615
    %v7636 = vmul.f32 %v7568, %v7615
    %v7637 = vmul.f32 %v7569, %v7615
    %v7638 = vmul.f32 %v7570, %v7615
    %v7639 = vmul.f32 %v7571, %v7615
    %v7640 = vmul.f32 %v7572, %v7615
    %v7641 = vmul.f32 %v7573, %v7615
    %v7642 = vmul.f32 %v7574, %v7615
    %v7643 = vmul.f32 %v7575, %v7615
    %v7644 = vmul.f32 %v7576, %v7615
    %v7645 = vmul.f32 %v7577, %v7615
    %v7646 = vmul.f32 %v7578, %v7615
    %v7647 = vmul.f32 %v7579, %v7615
    %v7648 = vmul.f32 %v7580, %v7615
    %v7649 = vmul.f32 %v7581, %v7615
    %v7650 = vmul.f32 %v7582, %v7615
    %v7651 = vmul.f32 %v7583, %v7615
    %v7652 = vmul.f32 %v7584, %v7615
    %v7653 = vmul.f32 %v7585, %v7615
    %v7654 = vmul.f32 %v7586, %v7615
    %v7655 = vmul.f32 %v7587, %v7615
    %v7656 = vmul.f32 %v7588, %v7615
    %v7657 = vmul.f32 %v7589, %v7615
    %v7658 = vmul.f32 %v7590, %v7615
    %v7659 = vmul.f32 %v7591, %v7615
    %v7660 = vmul.f32 %v7592, %v7615
    %v7661 = vmul.f32 %v7593, %v7615
    %v7662 = vmul.f32 %v7594, %v7615
    %v7663 = vmul.f32 %v7595, %v7615
    %v7664 = vmul.f32 %v7596, %v7615
    %v7665 = vmul.f32 %v7597, %v7615
    %v7666 = vmul.f32 %v7598, %v7615
    %v7667 = vmul.f32 %v7599, %v7615
    %v7668 = vmul.f32 %v7600, %v7615
    %v7669 = vmul.f32 %v7601, %v7615
    %v7670 = vmul.f32 %v7602, %v7615
    %v7671 = vmul.f32 %v7603, %v7615
    %v7672 = vmul.f32 %v7604, %v7615
    %v7673 = vmul.f32 %v7605, %v7615
    %v7674 = vmul.f32 %v7606, %v7615
    %v7675 = vmul.f32 %v7607, %v7615
    %v7676 = vmul.f32 %v7608, %v7615
    %v7677 = vmul.f32 %v7609, %v7615
    %v7678 = vmul.f32 %v7610, %v7615
    %v7679 = vmul.f32 %v7611, %v7615
    %v7680 = vmul.f32 %v7612, %v7615
    %v7681 = vld [vmem:[%s3] sm:$0x1]
    %v7683 = vperm.slane %v7681, 0
    %v7685 = vadd.f32 %v7617, %v7683
    %v7686 = vadd.f32 %v7618, %v7683
    %v7687 = vadd.f32 %v7619, %v7683
    %v7688 = vadd.f32 %v7620, %v7683
    %v7689 = vadd.f32 %v7621, %v7683
    %v7690 = vadd.f32 %v7622, %v7683
    %v7691 = vadd.f32 %v7623, %v7683
    %v7692 = vadd.f32 %v7624, %v7683
    %v7693 = vadd.f32 %v7625, %v7683
    %v7694 = vadd.f32 %v7626, %v7683
    %v7695 = vadd.f32 %v7627, %v7683
    %v7696 = vadd.f32 %v7628, %v7683
    %v7697 = vadd.f32 %v7629, %v7683
    %v7698 = vadd.f32 %v7630, %v7683
    %v7699 = vadd.f32 %v7631, %v7683
    %v7700 = vadd.f32 %v7632, %v7683
    %v7701 = vadd.f32 %v7633, %v7683
    %v7702 = vadd.f32 %v7634, %v7683
    %v7703 = vadd.f32 %v7635, %v7683
    %v7704 = vadd.f32 %v7636, %v7683
    %v7705 = vadd.f32 %v7637, %v7683
    %v7706 = vadd.f32 %v7638, %v7683
    %v7707 = vadd.f32 %v7639, %v7683
    %v7708 = vadd.f32 %v7640, %v7683
    %v7709 = vadd.f32 %v7641, %v7683
    %v7710 = vadd.f32 %v7642, %v7683
    %v7711 = vadd.f32 %v7643, %v7683
    %v7712 = vadd.f32 %v7644, %v7683
    %v7713 = vadd.f32 %v7645, %v7683
    %v7714 = vadd.f32 %v7646, %v7683
    %v7715 = vadd.f32 %v7647, %v7683
    %v7716 = vadd.f32 %v7648, %v7683
    %v7717 = vadd.f32 %v7649, %v7683
    %v7718 = vadd.f32 %v7650, %v7683
    %v7719 = vadd.f32 %v7651, %v7683
    %v7720 = vadd.f32 %v7652, %v7683
    %v7721 = vadd.f32 %v7653, %v7683
    %v7722 = vadd.f32 %v7654, %v7683
    %v7723 = vadd.f32 %v7655, %v7683
    %v7724 = vadd.f32 %v7656, %v7683
    %v7725 = vadd.f32 %v7657, %v7683
    %v7726 = vadd.f32 %v7658, %v7683
    %v7727 = vadd.f32 %v7659, %v7683
    %v7728 = vadd.f32 %v7660, %v7683
    %v7729 = vadd.f32 %v7661, %v7683
    %v7730 = vadd.f32 %v7662, %v7683
    %v7731 = vadd.f32 %v7663, %v7683
    %v7732 = vadd.f32 %v7664, %v7683
    %v7733 = vadd.f32 %v7665, %v7683
    %v7734 = vadd.f32 %v7666, %v7683
    %v7735 = vadd.f32 %v7667, %v7683
    %v7736 = vadd.f32 %v7668, %v7683
    %v7737 = vadd.f32 %v7669, %v7683
    %v7738 = vadd.f32 %v7670, %v7683
    %v7739 = vadd.f32 %v7671, %v7683
    %v7740 = vadd.f32 %v7672, %v7683
    %v7741 = vadd.f32 %v7673, %v7683
    %v7742 = vadd.f32 %v7674, %v7683
    %v7743 = vadd.f32 %v7675, %v7683
    %v7744 = vadd.f32 %v7676, %v7683
    %v7745 = vadd.f32 %v7677, %v7683
    %v7746 = vadd.f32 %v7678, %v7683
    %v7747 = vadd.f32 %v7679, %v7683
    %v7748 = vadd.f32 %v7680, %v7683
    %v7749 = vmax.f32 %v7685, 0.0
    %v7750 = vmax.f32 %v7686, 0.0
    %v7751 = vmax.f32 %v7687, 0.0
    %v7752 = vmax.f32 %v7688, 0.0
    %v7753 = vmax.f32 %v7689, 0.0
    %v7754 = vmax.f32 %v7690, 0.0
    %v7755 = vmax.f32 %v7691, 0.0
    %v7756 = vmax.f32 %v7692, 0.0
    %v7757 = vmax.f32 %v7693, 0.0
    %v7758 = vmax.f32 %v7694, 0.0
    %v7759 = vmax.f32 %v7695, 0.0
    %v7760 = vmax.f32 %v7696, 0.0
    %v7761 = vmax.f32 %v7697, 0.0
    %v7762 = vmax.f32 %v7698, 0.0
    %v7763 = vmax.f32 %v7699, 0.0
    %v7764 = vmax.f32 %v7700, 0.0
    %v7765 = vmax.f32 %v7701, 0.0
    %v7766 = vmax.f32 %v7702, 0.0
    %v7767 = vmax.f32 %v7703, 0.0
    %v7768 = vmax.f32 %v7704, 0.0
    %v7769 = vmax.f32 %v7705, 0.0
    %v7770 = vmax.f32 %v7706, 0.0
    %v7771 = vmax.f32 %v7707, 0.0
    %v7772 = vmax.f32 %v7708, 0.0
    %v7773 = vmax.f32 %v7709, 0.0
    %v7774 = vmax.f32 %v7710, 0.0
    %v7775 = vmax.f32 %v7711, 0.0
    %v7776 = vmax.f32 %v7712, 0.0
    %v7777 = vmax.f32 %v7713, 0.0
    %v7778 = vmax.f32 %v7714, 0.0
    %v7779 = vmax.f32 %v7715, 0.0
    %v7780 = vmax.f32 %v7716, 0.0
    %v7781 = vmax.f32 %v7717, 0.0
    %v7782 = vmax.f32 %v7718, 0.0
    %v7783 = vmax.f32 %v7719, 0.0
    %v7784 = vmax.f32 %v7720, 0.0
    %v7785 = vmax.f32 %v7721, 0.0
    %v7786 = vmax.f32 %v7722, 0.0
    %v7787 = vmax.f32 %v7723, 0.0
    %v7788 = vmax.f32 %v7724, 0.0
    %v7789 = vmax.f32 %v7725, 0.0
    %v7790 = vmax.f32 %v7726, 0.0
    %v7791 = vmax.f32 %v7727, 0.0
    %v7792 = vmax.f32 %v7728, 0.0
    %v7793 = vmax.f32 %v7729, 0.0
    %v7794 = vmax.f32 %v7730, 0.0
    %v7795 = vmax.f32 %v7731, 0.0
    %v7796 = vmax.f32 %v7732, 0.0
    %v7797 = vmax.f32 %v7733, 0.0
    %v7798 = vmax.f32 %v7734, 0.0
    %v7799 = vmax.f32 %v7735, 0.0
    %v7800 = vmax.f32 %v7736, 0.0
    %v7801 = vmax.f32 %v7737, 0.0
    %v7802 = vmax.f32 %v7738, 0.0
    %v7803 = vmax.f32 %v7739, 0.0
    %v7804 = vmax.f32 %v7740, 0.0
    %v7805 = vmax.f32 %v7741, 0.0
    %v7806 = vmax.f32 %v7742, 0.0
    %v7807 = vmax.f32 %v7743, 0.0
    %v7808 = vmax.f32 %v7744, 0.0
    %v7809 = vmax.f32 %v7745, 0.0
    %v7810 = vmax.f32 %v7746, 0.0
    %v7811 = vmax.f32 %v7747, 0.0
    %v7812 = vmax.f32 %v7748, 0.0
    %v7877 = vrot.slane %v7749, 2
    %v7878 = vrot.slane %v7749, 4
    %v7879 = vrot.slane %v7749, 6
    %v7880 = vrot.slane %v7750, 2
    %v7881 = vrot.slane %v7750, 4
    %v7882 = vrot.slane %v7750, 6
    %v7883 = vrot.slane %v7751, 2
    %v7884 = vrot.slane %v7751, 4
    %v7885 = vrot.slane %v7751, 6
    %v7886 = vrot.slane %v7752, 2
    %v7887 = vrot.slane %v7752, 4
    %v7888 = vrot.slane %v7752, 6
    %v7889 = vrot.slane %v7753, 2
    %v7890 = vrot.slane %v7753, 4
    %v7891 = vrot.slane %v7753, 6
    %v7892 = vrot.slane %v7754, 2
    %v7893 = vrot.slane %v7754, 4
    %v7894 = vrot.slane %v7754, 6
    %v7895 = vrot.slane %v7755, 2
    %v7896 = vrot.slane %v7755, 4
    %v7897 = vrot.slane %v7755, 6
    %v7898 = vrot.slane %v7756, 2
    %v7899 = vrot.slane %v7756, 4
    %v7900 = vrot.slane %v7756, 6
    %v7901 = vrot.slane %v7757, 2
    %v7902 = vrot.slane %v7757, 4
    %v7903 = vrot.slane %v7757, 6
    %v7904 = vrot.slane %v7758, 2
    %v7905 = vrot.slane %v7758, 4
    %v7906 = vrot.slane %v7758, 6
    %v7907 = vrot.slane %v7759, 2
    %v7908 = vrot.slane %v7759, 4
    %v7909 = vrot.slane %v7759, 6
    %v7910 = vrot.slane %v7760, 2
    %v7911 = vrot.slane %v7760, 4
    %v7912 = vrot.slane %v7760, 6
    %v7913 = vrot.slane %v7761, 2
    %v7914 = vrot.slane %v7761, 4
    %v7915 = vrot.slane %v7761, 6
    %v7916 = vrot.slane %v7762, 2
    %v7917 = vrot.slane %v7762, 4
    %v7918 = vrot.slane %v7762, 6
    %v7919 = vrot.slane %v7763, 2
    %v7920 = vrot.slane %v7763, 4
    %v7921 = vrot.slane %v7763, 6
    %v7922 = vrot.slane %v7764, 2
    %v7923 = vrot.slane %v7764, 4
    %v7924 = vrot.slane %v7764, 6
    %v7925 = vrot.slane %v7765, 2
    %v7926 = vrot.slane %v7765, 4
    %v7927 = vrot.slane %v7765, 6
    %v7928 = vrot.slane %v7766, 2
    %v7929 = vrot.slane %v7766, 4
    %v7930 = vrot.slane %v7766, 6
    %v7931 = vrot.slane %v7767, 2
    %v7932 = vrot.slane %v7767, 4
    %v7933 = vrot.slane %v7767, 6
    %v7934 = vrot.slane %v7768, 2
    %v7935 = vrot.slane %v7768, 4
    %v7936 = vrot.slane %v7768, 6
    %v7937 = vrot.slane %v7769, 2
    %v7938 = vrot.slane %v7769, 4
    %v7939 = vrot.slane %v7769, 6
    %v7940 = vrot.slane %v7770, 2
    %v7941 = vrot.slane %v7770, 4
    %v7942 = vrot.slane %v7770, 6
    %v7943 = vrot.slane %v7771, 2
    %v7944 = vrot.slane %v7771, 4
    %v7945 = vrot.slane %v7771, 6
    %v7946 = vrot.slane %v7772, 2
    %v7947 = vrot.slane %v7772, 4
    %v7948 = vrot.slane %v7772, 6
    %v7949 = vrot.slane %v7773, 2
    %v7950 = vrot.slane %v7773, 4
    %v7951 = vrot.slane %v7773, 6
    %v7952 = vrot.slane %v7774, 2
    %v7953 = vrot.slane %v7774, 4
    %v7954 = vrot.slane %v7774, 6
    %v7955 = vrot.slane %v7775, 2
    %v7956 = vrot.slane %v7775, 4
    %v7957 = vrot.slane %v7775, 6
    %v7958 = vrot.slane %v7776, 2
    %v7959 = vrot.slane %v7776, 4
    %v7960 = vrot.slane %v7776, 6
    %v7961 = vrot.slane %v7777, 2
    %v7962 = vrot.slane %v7777, 4
    %v7963 = vrot.slane %v7777, 6
    %v7964 = vrot.slane %v7778, 2
    %v7965 = vrot.slane %v7778, 4
    %v7966 = vrot.slane %v7778, 6
    %v7967 = vrot.slane %v7779, 2
    %v7968 = vrot.slane %v7779, 4
    %v7969 = vrot.slane %v7779, 6
    %v7970 = vrot.slane %v7780, 2
    %v7971 = vrot.slane %v7780, 4
    %v7972 = vrot.slane %v7780, 6
    %v7973 = vrot.slane %v7781, 2
    %v7974 = vrot.slane %v7781, 4
    %v7975 = vrot.slane %v7781, 6
    %v7976 = vrot.slane %v7782, 2
    %v7977 = vrot.slane %v7782, 4
    %v7978 = vrot.slane %v7782, 6
    %v7979 = vrot.slane %v7783, 2
    %v7980 = vrot.slane %v7783, 4
    %v7981 = vrot.slane %v7783, 6
    %v7982 = vrot.slane %v7784, 2
    %v7983 = vrot.slane %v7784, 4
    %v7984 = vrot.slane %v7784, 6
    %v7985 = vrot.slane %v7785, 2
    %v7986 = vrot.slane %v7785, 4
    %v7987 = vrot.slane %v7785, 6
    %v7988 = vrot.slane %v7786, 2
    %v7989 = vrot.slane %v7786, 4
    %v7990 = vrot.slane %v7786, 6
    %v7991 = vrot.slane %v7787, 2
    %v7992 = vrot.slane %v7787, 4
    %v7993 = vrot.slane %v7787, 6
    %v7994 = vrot.slane %v7788, 2
    %v7995 = vrot.slane %v7788, 4
    %v7996 = vrot.slane %v7788, 6
    %v7997 = vrot.slane %v7789, 2
    %v7998 = vrot.slane %v7789, 4
    %v7999 = vrot.slane %v7789, 6
    %v8000 = vrot.slane %v7790, 2
    %v8001 = vrot.slane %v7790, 4
    %v8002 = vrot.slane %v7790, 6
    %v8003 = vrot.slane %v7791, 2
    %v8004 = vrot.slane %v7791, 4
    %v8005 = vrot.slane %v7791, 6
    %v8006 = vrot.slane %v7792, 2
    %v8007 = vrot.slane %v7792, 4
    %v8008 = vrot.slane %v7792, 6
    %v8009 = vrot.slane %v7793, 2
    %v8010 = vrot.slane %v7793, 4
    %v8011 = vrot.slane %v7793, 6
    %v8012 = vrot.slane %v7794, 2
    %v8013 = vrot.slane %v7794, 4
    %v8014 = vrot.slane %v7794, 6
    %v8015 = vrot.slane %v7795, 2
    %v8016 = vrot.slane %v7795, 4
    %v8017 = vrot.slane %v7795, 6
    %v8018 = vrot.slane %v7796, 2
    %v8019 = vrot.slane %v7796, 4
    %v8020 = vrot.slane %v7796, 6
    %v8021 = vrot.slane %v7797, 2
    %v8022 = vrot.slane %v7797, 4
    %v8023 = vrot.slane %v7797, 6
    %v8024 = vrot.slane %v7798, 2
    %v8025 = vrot.slane %v7798, 4
    %v8026 = vrot.slane %v7798, 6
    %v8027 = vrot.slane %v7799, 2
    %v8028 = vrot.slane %v7799, 4
    %v8029 = vrot.slane %v7799, 6
    %v8030 = vrot.slane %v7800, 2
    %v8031 = vrot.slane %v7800, 4
    %v8032 = vrot.slane %v7800, 6
    %v8033 = vrot.slane %v7801, 2
    %v8034 = vrot.slane %v7801, 4
    %v8035 = vrot.slane %v7801, 6
    %v8036 = vrot.slane %v7802, 2
    %v8037 = vrot.slane %v7802, 4
    %v8038 = vrot.slane %v7802, 6
    %v8039 = vrot.slane %v7803, 2
    %v8040 = vrot.slane %v7803, 4
    %v8041 = vrot.slane %v7803, 6
    %v8042 = vrot.slane %v7804, 2
    %v8043 = vrot.slane %v7804, 4
    %v8044 = vrot.slane %v7804, 6
    %v8045 = vrot.slane %v7805, 2
    %v8046 = vrot.slane %v7805, 4
    %v8047 = vrot.slane %v7805, 6
    %v8048 = vrot.slane %v7806, 2
    %v8049 = vrot.slane %v7806, 4
    %v8050 = vrot.slane %v7806, 6
    %v8051 = vrot.slane %v7807, 2
    %v8052 = vrot.slane %v7807, 4
    %v8053 = vrot.slane %v7807, 6
    %v8054 = vrot.slane %v7808, 2
    %v8055 = vrot.slane %v7808, 4
    %v8056 = vrot.slane %v7808, 6
    %v8057 = vrot.slane %v7809, 2
    %v8058 = vrot.slane %v7809, 4
    %v8059 = vrot.slane %v7809, 6
    %v8060 = vrot.slane %v7810, 2
    %v8061 = vrot.slane %v7810, 4
    %v8062 = vrot.slane %v7810, 6
    %v8063 = vrot.slane %v7811, 2
    %v8064 = vrot.slane %v7811, 4
    %v8065 = vrot.slane %v7811, 6
    %v8066 = vrot.slane %v7812, 2
    %v8067 = vrot.slane %v7812, 4
    %v8068 = vrot.slane %v7812, 6
    %v8261 = vrot.slane %v7749, 7
    %v8262 = vrot.slane %v8261, 2
    %v8263 = vrot.slane %v7877, 7
    %v8264 = vrot.slane %v8263, 2
    %v8265 = vrot.slane %v7878, 7
    %v8266 = vrot.slane %v8265, 2
    %v8267 = vrot.slane %v7879, 7
    %v8268 = vrot.slane %v8267, 2
    %v8269 = vrot.slane %v7750, 7
    %v8270 = vrot.slane %v8269, 2
    %v8271 = vrot.slane %v7880, 7
    %v8272 = vrot.slane %v8271, 2
    %v8273 = vrot.slane %v7881, 7
    %v8274 = vrot.slane %v8273, 2
    %v8275 = vrot.slane %v7882, 7
    %v8276 = vrot.slane %v8275, 2
    %v8277 = vrot.slane %v7751, 7
    %v8278 = vrot.slane %v8277, 2
    %v8279 = vrot.slane %v7883, 7
    %v8280 = vrot.slane %v8279, 2
    %v8281 = vrot.slane %v7884, 7
    %v8282 = vrot.slane %v8281, 2
    %v8283 = vrot.slane %v7885, 7
    %v8284 = vrot.slane %v8283, 2
    %v8285 = vrot.slane %v7752, 7
    %v8286 = vrot.slane %v8285, 2
    %v8287 = vrot.slane %v7886, 7
    %v8288 = vrot.slane %v8287, 2
    %v8289 = vrot.slane %v7887, 7
    %v8290 = vrot.slane %v8289, 2
    %v8291 = vrot.slane %v7888, 7
    %v8292 = vrot.slane %v8291, 2
    %v8293 = vrot.slane %v7753, 7
    %v8294 = vrot.slane %v8293, 2
    %v8295 = vrot.slane %v7889, 7
    %v8296 = vrot.slane %v8295, 2
    %v8297 = vrot.slane %v7890, 7
    %v8298 = vrot.slane %v8297, 2
    %v8299 = vrot.slane %v7891, 7
    %v8300 = vrot.slane %v8299, 2
    %v8301 = vrot.slane %v7754, 7
    %v8302 = vrot.slane %v8301, 2
    %v8303 = vrot.slane %v7892, 7
    %v8304 = vrot.slane %v8303, 2
    %v8305 = vrot.slane %v7893, 7
    %v8306 = vrot.slane %v8305, 2
    %v8307 = vrot.slane %v7894, 7
    %v8308 = vrot.slane %v8307, 2
    %v8309 = vrot.slane %v7755, 7
    %v8310 = vrot.slane %v8309, 2
    %v8311 = vrot.slane %v7895, 7
    %v8312 = vrot.slane %v8311, 2
    %v8313 = vrot.slane %v7896, 7
    %v8314 = vrot.slane %v8313, 2
    %v8315 = vrot.slane %v7897, 7
    %v8316 = vrot.slane %v8315, 2
    %v8317 = vrot.slane %v7756, 7
    %v8318 = vrot.slane %v8317, 2
    %v8319 = vrot.slane %v7898, 7
    %v8320 = vrot.slane %v8319, 2
    %v8321 = vrot.slane %v7899, 7
    %v8322 = vrot.slane %v8321, 2
    %v8323 = vrot.slane %v7900, 7
    %v8324 = vrot.slane %v8323, 2
    %v8325 = vrot.slane %v7757, 7
    %v8326 = vrot.slane %v8325, 2
    %v8327 = vrot.slane %v7901, 7
    %v8328 = vrot.slane %v8327, 2
    %v8329 = vrot.slane %v7902, 7
    %v8330 = vrot.slane %v8329, 2
    %v8331 = vrot.slane %v7903, 7
    %v8332 = vrot.slane %v8331, 2
    %v8333 = vrot.slane %v7758, 7
    %v8334 = vrot.slane %v8333, 2
    %v8335 = vrot.slane %v7904, 7
    %v8336 = vrot.slane %v8335, 2
    %v8337 = vrot.slane %v7905, 7
    %v8338 = vrot.slane %v8337, 2
    %v8339 = vrot.slane %v7906, 7
    %v8340 = vrot.slane %v8339, 2
    %v8341 = vrot.slane %v7759, 7
    %v8342 = vrot.slane %v8341, 2
    %v8343 = vrot.slane %v7907, 7
    %v8344 = vrot.slane %v8343, 2
    %v8345 = vrot.slane %v7908, 7
    %v8346 = vrot.slane %v8345, 2
    %v8347 = vrot.slane %v7909, 7
    %v8348 = vrot.slane %v8347, 2
    %v8349 = vrot.slane %v7760, 7
    %v8350 = vrot.slane %v8349, 2
    %v8351 = vrot.slane %v7910, 7
    %v8352 = vrot.slane %v8351, 2
    %v8353 = vrot.slane %v7911, 7
    %v8354 = vrot.slane %v8353, 2
    %v8355 = vrot.slane %v7912, 7
    %v8356 = vrot.slane %v8355, 2
    %v8357 = vrot.slane %v7761, 7
    %v8358 = vrot.slane %v8357, 2
    %v8359 = vrot.slane %v7913, 7
    %v8360 = vrot.slane %v8359, 2
    %v8361 = vrot.slane %v7914, 7
    %v8362 = vrot.slane %v8361, 2
    %v8363 = vrot.slane %v7915, 7
    %v8364 = vrot.slane %v8363, 2
    %v8365 = vrot.slane %v7762, 7
    %v8366 = vrot.slane %v8365, 2
    %v8367 = vrot.slane %v7916, 7
    %v8368 = vrot.slane %v8367, 2
    %v8369 = vrot.slane %v7917, 7
    %v8370 = vrot.slane %v8369, 2
    %v8371 = vrot.slane %v7918, 7
    %v8372 = vrot.slane %v8371, 2
    %v8373 = vrot.slane %v7763, 7
    %v8374 = vrot.slane %v8373, 2
    %v8375 = vrot.slane %v7919, 7
    %v8376 = vrot.slane %v8375, 2
    %v8377 = vrot.slane %v7920, 7
    %v8378 = vrot.slane %v8377, 2
    %v8379 = vrot.slane %v7921, 7
    %v8380 = vrot.slane %v8379, 2
    %v8381 = vrot.slane %v7764, 7
    %v8382 = vrot.slane %v8381, 2
    %v8383 = vrot.slane %v7922, 7
    %v8384 = vrot.slane %v8383, 2
    %v8385 = vrot.slane %v7923, 7
    %v8386 = vrot.slane %v8385, 2
    %v8387 = vrot.slane %v7924, 7
    %v8388 = vrot.slane %v8387, 2
    %v8389 = vrot.slane %v7765, 7
    %v8390 = vrot.slane %v8389, 2
    %v8391 = vrot.slane %v7925, 7
    %v8392 = vrot.slane %v8391, 2
    %v8393 = vrot.slane %v7926, 7
    %v8394 = vrot.slane %v8393, 2
    %v8395 = vrot.slane %v7927, 7
    %v8396 = vrot.slane %v8395, 2
    %v8397 = vrot.slane %v7766, 7
    %v8398 = vrot.slane %v8397, 2
    %v8399 = vrot.slane %v7928, 7
    %v8400 = vrot.slane %v8399, 2
    %v8401 = vrot.slane %v7929, 7
    %v8402 = vrot.slane %v8401, 2
    %v8403 = vrot.slane %v7930, 7
    %v8404 = vrot.slane %v8403, 2
    %v8405 = vrot.slane %v7767, 7
    %v8406 = vrot.slane %v8405, 2
    %v8407 = vrot.slane %v7931, 7
    %v8408 = vrot.slane %v8407, 2
    %v8409 = vrot.slane %v7932, 7
    %v8410 = vrot.slane %v8409, 2
    %v8411 = vrot.slane %v7933, 7
    %v8412 = vrot.slane %v8411, 2
    %v8413 = vrot.slane %v7768, 7
    %v8414 = vrot.slane %v8413, 2
    %v8415 = vrot.slane %v7934, 7
    %v8416 = vrot.slane %v8415, 2
    %v8417 = vrot.slane %v7935, 7
    %v8418 = vrot.slane %v8417, 2
    %v8419 = vrot.slane %v7936, 7
    %v8420 = vrot.slane %v8419, 2
    %v8421 = vrot.slane %v7769, 7
    %v8422 = vrot.slane %v8421, 2
    %v8423 = vrot.slane %v7937, 7
    %v8424 = vrot.slane %v8423, 2
    %v8425 = vrot.slane %v7938, 7
    %v8426 = vrot.slane %v8425, 2
    %v8427 = vrot.slane %v7939, 7
    %v8428 = vrot.slane %v8427, 2
    %v8429 = vrot.slane %v7770, 7
    %v8430 = vrot.slane %v8429, 2
    %v8431 = vrot.slane %v7940, 7
    %v8432 = vrot.slane %v8431, 2
    %v8433 = vrot.slane %v7941, 7
    %v8434 = vrot.slane %v8433, 2
    %v8435 = vrot.slane %v7942, 7
    %v8436 = vrot.slane %v8435, 2
    %v8437 = vrot.slane %v7771, 7
    %v8438 = vrot.slane %v8437, 2
    %v8439 = vrot.slane %v7943, 7
    %v8440 = vrot.slane %v8439, 2
    %v8441 = vrot.slane %v7944, 7
    %v8442 = vrot.slane %v8441, 2
    %v8443 = vrot.slane %v7945, 7
    %v8444 = vrot.slane %v8443, 2
    %v8445 = vrot.slane %v7772, 7
    %v8446 = vrot.slane %v8445, 2
    %v8447 = vrot.slane %v7946, 7
    %v8448 = vrot.slane %v8447, 2
    %v8449 = vrot.slane %v7947, 7
    %v8450 = vrot.slane %v8449, 2
    %v8451 = vrot.slane %v7948, 7
    %v8452 = vrot.slane %v8451, 2
    %v8453 = vrot.slane %v7773, 7
    %v8454 = vrot.slane %v8453, 2
    %v8455 = vrot.slane %v7949, 7
    %v8456 = vrot.slane %v8455, 2
    %v8457 = vrot.slane %v7950, 7
    %v8458 = vrot.slane %v8457, 2
    %v8459 = vrot.slane %v7951, 7
    %v8460 = vrot.slane %v8459, 2
    %v8461 = vrot.slane %v7774, 7
    %v8462 = vrot.slane %v8461, 2
    %v8463 = vrot.slane %v7952, 7
    %v8464 = vrot.slane %v8463, 2
    %v8465 = vrot.slane %v7953, 7
    %v8466 = vrot.slane %v8465, 2
    %v8467 = vrot.slane %v7954, 7
    %v8468 = vrot.slane %v8467, 2
    %v8469 = vrot.slane %v7775, 7
    %v8470 = vrot.slane %v8469, 2
    %v8471 = vrot.slane %v7955, 7
    %v8472 = vrot.slane %v8471, 2
    %v8473 = vrot.slane %v7956, 7
    %v8474 = vrot.slane %v8473, 2
    %v8475 = vrot.slane %v7957, 7
    %v8476 = vrot.slane %v8475, 2
    %v8477 = vrot.slane %v7776, 7
    %v8478 = vrot.slane %v8477, 2
    %v8479 = vrot.slane %v7958, 7
    %v8480 = vrot.slane %v8479, 2
    %v8481 = vrot.slane %v7959, 7
    %v8482 = vrot.slane %v8481, 2
    %v8483 = vrot.slane %v7960, 7
    %v8484 = vrot.slane %v8483, 2
    %v8485 = vrot.slane %v7777, 7
    %v8486 = vrot.slane %v8485, 2
    %v8487 = vrot.slane %v7961, 7
    %v8488 = vrot.slane %v8487, 2
    %v8489 = vrot.slane %v7962, 7
    %v8490 = vrot.slane %v8489, 2
    %v8491 = vrot.slane %v7963, 7
    %v8492 = vrot.slane %v8491, 2
    %v8493 = vrot.slane %v7778, 7
    %v8494 = vrot.slane %v8493, 2
    %v8495 = vrot.slane %v7964, 7
    %v8496 = vrot.slane %v8495, 2
    %v8497 = vrot.slane %v7965, 7
    %v8498 = vrot.slane %v8497, 2
    %v8499 = vrot.slane %v7966, 7
    %v8500 = vrot.slane %v8499, 2
    %v8501 = vrot.slane %v7779, 7
    %v8502 = vrot.slane %v8501, 2
    %v8503 = vrot.slane %v7967, 7
    %v8504 = vrot.slane %v8503, 2
    %v8505 = vrot.slane %v7968, 7
    %v8506 = vrot.slane %v8505, 2
    %v8507 = vrot.slane %v7969, 7
    %v8508 = vrot.slane %v8507, 2
    %v8509 = vrot.slane %v7780, 7
    %v8510 = vrot.slane %v8509, 2
    %v8511 = vrot.slane %v7970, 7
    %v8512 = vrot.slane %v8511, 2
    %v8513 = vrot.slane %v7971, 7
    %v8514 = vrot.slane %v8513, 2
    %v8515 = vrot.slane %v7972, 7
    %v8516 = vrot.slane %v8515, 2
    %v8517 = vrot.slane %v7781, 7
    %v8518 = vrot.slane %v8517, 2
    %v8519 = vrot.slane %v7973, 7
    %v8520 = vrot.slane %v8519, 2
    %v8521 = vrot.slane %v7974, 7
    %v8522 = vrot.slane %v8521, 2
    %v8523 = vrot.slane %v7975, 7
    %v8524 = vrot.slane %v8523, 2
    %v8525 = vrot.slane %v7782, 7
    %v8526 = vrot.slane %v8525, 2
    %v8527 = vrot.slane %v7976, 7
    %v8528 = vrot.slane %v8527, 2
    %v8529 = vrot.slane %v7977, 7
    %v8530 = vrot.slane %v8529, 2
    %v8531 = vrot.slane %v7978, 7
    %v8532 = vrot.slane %v8531, 2
    %v8533 = vrot.slane %v7783, 7
    %v8534 = vrot.slane %v8533, 2
    %v8535 = vrot.slane %v7979, 7
    %v8536 = vrot.slane %v8535, 2
    %v8537 = vrot.slane %v7980, 7
    %v8538 = vrot.slane %v8537, 2
    %v8539 = vrot.slane %v7981, 7
    %v8540 = vrot.slane %v8539, 2
    %v8541 = vrot.slane %v7784, 7
    %v8542 = vrot.slane %v8541, 2
    %v8543 = vrot.slane %v7982, 7
    %v8544 = vrot.slane %v8543, 2
    %v8545 = vrot.slane %v7983, 7
    %v8546 = vrot.slane %v8545, 2
    %v8547 = vrot.slane %v7984, 7
    %v8548 = vrot.slane %v8547, 2
    %v8549 = vrot.slane %v7785, 7
    %v8550 = vrot.slane %v8549, 2
    %v8551 = vrot.slane %v7985, 7
    %v8552 = vrot.slane %v8551, 2
    %v8553 = vrot.slane %v7986, 7
    %v8554 = vrot.slane %v8553, 2
    %v8555 = vrot.slane %v7987, 7
    %v8556 = vrot.slane %v8555, 2
    %v8557 = vrot.slane %v7786, 7
    %v8558 = vrot.slane %v8557, 2
    %v8559 = vrot.slane %v7988, 7
    %v8560 = vrot.slane %v8559, 2
    %v8561 = vrot.slane %v7989, 7
    %v8562 = vrot.slane %v8561, 2
    %v8563 = vrot.slane %v7990, 7
    %v8564 = vrot.slane %v8563, 2
    %v8565 = vrot.slane %v7787, 7
    %v8566 = vrot.slane %v8565, 2
    %v8567 = vrot.slane %v7991, 7
    %v8568 = vrot.slane %v8567, 2
    %v8569 = vrot.slane %v7992, 7
    %v8570 = vrot.slane %v8569, 2
    %v8571 = vrot.slane %v7993, 7
    %v8572 = vrot.slane %v8571, 2
    %v8573 = vrot.slane %v7788, 7
    %v8574 = vrot.slane %v8573, 2
    %v8575 = vrot.slane %v7994, 7
    %v8576 = vrot.slane %v8575, 2
    %v8577 = vrot.slane %v7995, 7
    %v8578 = vrot.slane %v8577, 2
    %v8579 = vrot.slane %v7996, 7
    %v8580 = vrot.slane %v8579, 2
    %v8581 = vrot.slane %v7789, 7
    %v8582 = vrot.slane %v8581, 2
    %v8583 = vrot.slane %v7997, 7
    %v8584 = vrot.slane %v8583, 2
    %v8585 = vrot.slane %v7998, 7
    %v8586 = vrot.slane %v8585, 2
    %v8587 = vrot.slane %v7999, 7
    %v8588 = vrot.slane %v8587, 2
    %v8589 = vrot.slane %v7790, 7
    %v8590 = vrot.slane %v8589, 2
    %v8591 = vrot.slane %v8000, 7
    %v8592 = vrot.slane %v8591, 2
    %v8593 = vrot.slane %v8001, 7
    %v8594 = vrot.slane %v8593, 2
    %v8595 = vrot.slane %v8002, 7
    %v8596 = vrot.slane %v8595, 2
    %v8597 = vrot.slane %v7791, 7
    %v8598 = vrot.slane %v8597, 2
    %v8599 = vrot.slane %v8003, 7
    %v8600 = vrot.slane %v8599, 2
    %v8601 = vrot.slane %v8004, 7
    %v8602 = vrot.slane %v8601, 2
    %v8603 = vrot.slane %v8005, 7
    %v8604 = vrot.slane %v8603, 2
    %v8605 = vrot.slane %v7792, 7
    %v8606 = vrot.slane %v8605, 2
    %v8607 = vrot.slane %v8006, 7
    %v8608 = vrot.slane %v8607, 2
    %v8609 = vrot.slane %v8007, 7
    %v8610 = vrot.slane %v8609, 2
    %v8611 = vrot.slane %v8008, 7
    %v8612 = vrot.slane %v8611, 2
    %v8613 = vrot.slane %v7793, 7
    %v8614 = vrot.slane %v8613, 2
    %v8615 = vrot.slane %v8009, 7
    %v8616 = vrot.slane %v8615, 2
    %v8617 = vrot.slane %v8010, 7
    %v8618 = vrot.slane %v8617, 2
    %v8619 = vrot.slane %v8011, 7
    %v8620 = vrot.slane %v8619, 2
    %v8621 = vrot.slane %v7794, 7
    %v8622 = vrot.slane %v8621, 2
    %v8623 = vrot.slane %v8012, 7
    %v8624 = vrot.slane %v8623, 2
    %v8625 = vrot.slane %v8013, 7
    %v8626 = vrot.slane %v8625, 2
    %v8627 = vrot.slane %v8014, 7
    %v8628 = vrot.slane %v8627, 2
    %v8629 = vrot.slane %v7795, 7
    %v8630 = vrot.slane %v8629, 2
    %v8631 = vrot.slane %v8015, 7
    %v8632 = vrot.slane %v8631, 2
    %v8633 = vrot.slane %v8016, 7
    %v8634 = vrot.slane %v8633, 2
    %v8635 = vrot.slane %v8017, 7
    %v8636 = vrot.slane %v8635, 2
    %v8637 = vrot.slane %v7796, 7
    %v8638 = vrot.slane %v8637, 2
    %v8639 = vrot.slane %v8018, 7
    %v8640 = vrot.slane %v8639, 2
    %v8641 = vrot.slane %v8019, 7
    %v8642 = vrot.slane %v8641, 2
    %v8643 = vrot.slane %v8020, 7
    %v8644 = vrot.slane %v8643, 2
    %v8645 = vrot.slane %v7797, 7
    %v8646 = vrot.slane %v8645, 2
    %v8647 = vrot.slane %v8021, 7
    %v8648 = vrot.slane %v8647, 2
    %v8649 = vrot.slane %v8022, 7
    %v8650 = vrot.slane %v8649, 2
    %v8651 = vrot.slane %v8023, 7
    %v8652 = vrot.slane %v8651, 2
    %v8653 = vrot.slane %v7798, 7
    %v8654 = vrot.slane %v8653, 2
    %v8655 = vrot.slane %v8024, 7
    %v8656 = vrot.slane %v8655, 2
    %v8657 = vrot.slane %v8025, 7
    %v8658 = vrot.slane %v8657, 2
    %v8659 = vrot.slane %v8026, 7
    %v8660 = vrot.slane %v8659, 2
    %v8661 = vrot.slane %v7799, 7
    %v8662 = vrot.slane %v8661, 2
    %v8663 = vrot.slane %v8027, 7
    %v8664 = vrot.slane %v8663, 2
    %v8665 = vrot.slane %v8028, 7
    %v8666 = vrot.slane %v8665, 2
    %v8667 = vrot.slane %v8029, 7
    %v8668 = vrot.slane %v8667, 2
    %v8669 = vrot.slane %v7800, 7
    %v8670 = vrot.slane %v8669, 2
    %v8671 = vrot.slane %v8030, 7
    %v8672 = vrot.slane %v8671, 2
    %v8673 = vrot.slane %v8031, 7
    %v8674 = vrot.slane %v8673, 2
    %v8675 = vrot.slane %v8032, 7
    %v8676 = vrot.slane %v8675, 2
    %v8677 = vrot.slane %v7801, 7
    %v8678 = vrot.slane %v8677, 2
    %v8679 = vrot.slane %v8033, 7
    %v8680 = vrot.slane %v8679, 2
    %v8681 = vrot.slane %v8034, 7
    %v8682 = vrot.slane %v8681, 2
    %v8683 = vrot.slane %v8035, 7
    %v8684 = vrot.slane %v8683, 2
    %v8685 = vrot.slane %v7802, 7
    %v8686 = vrot.slane %v8685, 2
    %v8687 = vrot.slane %v8036, 7
    %v8688 = vrot.slane %v8687, 2
    %v8689 = vrot.slane %v8037, 7
    %v8690 = vrot.slane %v8689, 2
    %v8691 = vrot.slane %v8038, 7
    %v8692 = vrot.slane %v8691, 2
    %v8693 = vrot.slane %v7803, 7
    %v8694 = vrot.slane %v8693, 2
    %v8695 = vrot.slane %v8039, 7
    %v8696 = vrot.slane %v8695, 2
    %v8697 = vrot.slane %v8040, 7
    %v8698 = vrot.slane %v8697, 2
    %v8699 = vrot.slane %v8041, 7
    %v8700 = vrot.slane %v8699, 2
    %v8701 = vrot.slane %v7804, 7
    %v8702 = vrot.slane %v8701, 2
    %v8703 = vrot.slane %v8042, 7
    %v8704 = vrot.slane %v8703, 2
    %v8705 = vrot.slane %v8043, 7
    %v8706 = vrot.slane %v8705, 2
    %v8707 = vrot.slane %v8044, 7
    %v8708 = vrot.slane %v8707, 2
    %v8709 = vrot.slane %v7805, 7
    %v8710 = vrot.slane %v8709, 2
    %v8711 = vrot.slane %v8045, 7
    %v8712 = vrot.slane %v8711, 2
    %v8713 = vrot.slane %v8046, 7
    %v8714 = vrot.slane %v8713, 2
    %v8715 = vrot.slane %v8047, 7
    %v8716 = vrot.slane %v8715, 2
    %v8717 = vrot.slane %v7806, 7
    %v8718 = vrot.slane %v8717, 2
    %v8719 = vrot.slane %v8048, 7
    %v8720 = vrot.slane %v8719, 2
    %v8721 = vrot.slane %v8049, 7
    %v8722 = vrot.slane %v8721, 2
    %v8723 = vrot.slane %v8050, 7
    %v8724 = vrot.slane %v8723, 2
    %v8725 = vrot.slane %v7807, 7
    %v8726 = vrot.slane %v8725, 2
    %v8727 = vrot.slane %v8051, 7
    %v8728 = vrot.slane %v8727, 2
    %v8729 = vrot.slane %v8052, 7
    %v8730 = vrot.slane %v8729, 2
    %v8731 = vrot.slane %v8053, 7
    %v8732 = vrot.slane %v8731, 2
    %v8733 = vrot.slane %v7808, 7
    %v8734 = vrot.slane %v8733, 2
    %v8735 = vrot.slane %v8054, 7
    %v8736 = vrot.slane %v8735, 2
    %v8737 = vrot.slane %v8055, 7
    %v8738 = vrot.slane %v8737, 2
    %v8739 = vrot.slane %v8056, 7
    %v8740 = vrot.slane %v8739, 2
    %v8741 = vrot.slane %v7809, 7
    %v8742 = vrot.slane %v8741, 2
    %v8743 = vrot.slane %v8057, 7
    %v8744 = vrot.slane %v8743, 2
    %v8745 = vrot.slane %v8058, 7
    %v8746 = vrot.slane %v8745, 2
    %v8747 = vrot.slane %v8059, 7
    %v8748 = vrot.slane %v8747, 2
    %v8749 = vrot.slane %v7810, 7
    %v8750 = vrot.slane %v8749, 2
    %v8751 = vrot.slane %v8060, 7
    %v8752 = vrot.slane %v8751, 2
    %v8753 = vrot.slane %v8061, 7
    %v8754 = vrot.slane %v8753, 2
    %v8755 = vrot.slane %v8062, 7
    %v8756 = vrot.slane %v8755, 2
    %v8757 = vrot.slane %v7811, 7
    %v8758 = vrot.slane %v8757, 2
    %v8759 = vrot.slane %v8063, 7
    %v8760 = vrot.slane %v8759, 2
    %v8761 = vrot.slane %v8064, 7
    %v8762 = vrot.slane %v8761, 2
    %v8763 = vrot.slane %v8065, 7
    %v8764 = vrot.slane %v8763, 2
    %v8765 = vrot.slane %v7812, 7
    %v8766 = vrot.slane %v8765, 2
    %v8767 = vrot.slane %v8066, 7
    %v8768 = vrot.slane %v8767, 2
    %v8769 = vrot.slane %v8067, 7
    %v8770 = vrot.slane %v8769, 2
    %v8771 = vrot.slane %v8068, 7
    %v8772 = vrot.slane %v8771, 2
    %v9029 = vmax.f32 %v7749, %v8262
    %v9030 = vmax.f32 %v7877, %v8264
    %v9031 = vmax.f32 %v7878, %v8266
    %v9032 = vmax.f32 %v7879, %v8268
    %v9033 = vmax.f32 %v7750, %v8270
    %v9034 = vmax.f32 %v7880, %v8272
    %v9035 = vmax.f32 %v7881, %v8274
    %v9036 = vmax.f32 %v7882, %v8276
    %v9037 = vmax.f32 %v7751, %v8278
    %v9038 = vmax.f32 %v7883, %v8280
    %v9039 = vmax.f32 %v7884, %v8282
    %v9040 = vmax.f32 %v7885, %v8284
    %v9041 = vmax.f32 %v7752, %v8286
    %v9042 = vmax.f32 %v7886, %v8288
    %v9043 = vmax.f32 %v7887, %v8290
    %v9044 = vmax.f32 %v7888, %v8292
    %v9045 = vmax.f32 %v7753, %v8294
    %v9046 = vmax.f32 %v7889, %v8296
    %v9047 = vmax.f32 %v7890, %v8298
    %v9048 = vmax.f32 %v7891, %v8300
    %v9049 = vmax.f32 %v7754, %v8302
    %v9050 = vmax.f32 %v7892, %v8304
    %v9051 = vmax.f32 %v7893, %v8306
    %v9052 = vmax.f32 %v7894, %v8308
    %v9053 = vmax.f32 %v7755, %v8310
    %v9054 = vmax.f32 %v7895, %v8312
    %v9055 = vmax.f32 %v7896, %v8314
    %v9056 = vmax.f32 %v7897, %v8316
    %v9057 = vmax.f32 %v7756, %v8318
    %v9058 = vmax.f32 %v7898, %v8320
    %v9059 = vmax.f32 %v7899, %v8322
    %v9060 = vmax.f32 %v7900, %v8324
    %v9061 = vmax.f32 %v7757, %v8326
    %v9062 = vmax.f32 %v7901, %v8328
    %v9063 = vmax.f32 %v7902, %v8330
    %v9064 = vmax.f32 %v7903, %v8332
    %v9065 = vmax.f32 %v7758, %v8334
    %v9066 = vmax.f32 %v7904, %v8336
    %v9067 = vmax.f32 %v7905, %v8338
    %v9068 = vmax.f32 %v7906, %v8340
    %v9069 = vmax.f32 %v7759, %v8342
    %v9070 = vmax.f32 %v7907, %v8344
    %v9071 = vmax.f32 %v7908, %v8346
    %v9072 = vmax.f32 %v7909, %v8348
    %v9073 = vmax.f32 %v7760, %v8350
    %v9074 = vmax.f32 %v7910, %v8352
    %v9075 = vmax.f32 %v7911, %v8354
    %v9076 = vmax.f32 %v7912, %v8356
    %v9077 = vmax.f32 %v7761, %v8358
    %v9078 = vmax.f32 %v7913, %v8360
    %v9079 = vmax.f32 %v7914, %v8362
    %v9080 = vmax.f32 %v7915, %v8364
    %v9081 = vmax.f32 %v7762, %v8366
    %v9082 = vmax.f32 %v7916, %v8368
    %v9083 = vmax.f32 %v7917, %v8370
    %v9084 = vmax.f32 %v7918, %v8372
    %v9085 = vmax.f32 %v7763, %v8374
    %v9086 = vmax.f32 %v7919, %v8376
    %v9087 = vmax.f32 %v7920, %v8378
    %v9088 = vmax.f32 %v7921, %v8380
    %v9089 = vmax.f32 %v7764, %v8382
    %v9090 = vmax.f32 %v7922, %v8384
    %v9091 = vmax.f32 %v7923, %v8386
    %v9092 = vmax.f32 %v7924, %v8388
    %v9093 = vmax.f32 %v7765, %v8390
    %v9094 = vmax.f32 %v7925, %v8392
    %v9095 = vmax.f32 %v7926, %v8394
    %v9096 = vmax.f32 %v7927, %v8396
    %v9097 = vmax.f32 %v7766, %v8398
    %v9098 = vmax.f32 %v7928, %v8400
    %v9099 = vmax.f32 %v7929, %v8402
    %v9100 = vmax.f32 %v7930, %v8404
    %v9101 = vmax.f32 %v7767, %v8406
    %v9102 = vmax.f32 %v7931, %v8408
    %v9103 = vmax.f32 %v7932, %v8410
    %v9104 = vmax.f32 %v7933, %v8412
    %v9105 = vmax.f32 %v7768, %v8414
    %v9106 = vmax.f32 %v7934, %v8416
    %v9107 = vmax.f32 %v7935, %v8418
    %v9108 = vmax.f32 %v7936, %v8420
    %v9109 = vmax.f32 %v7769, %v8422
    %v9110 = vmax.f32 %v7937, %v8424
    %v9111 = vmax.f32 %v7938, %v8426
    %v9112 = vmax.f32 %v7939, %v8428
    %v9113 = vmax.f32 %v7770, %v8430
    %v9114 = vmax.f32 %v7940, %v8432
    %v9115 = vmax.f32 %v7941, %v8434
    %v9116 = vmax.f32 %v7942, %v8436
    %v9117 = vmax.f32 %v7771, %v8438
    %v9118 = vmax.f32 %v7943, %v8440
    %v9119 = vmax.f32 %v7944, %v8442
    %v9120 = vmax.f32 %v7945, %v8444
    %v9121 = vmax.f32 %v7772, %v8446
    %v9122 = vmax.f32 %v7946, %v8448
    %v9123 = vmax.f32 %v7947, %v8450
    %v9124 = vmax.f32 %v7948, %v8452
    %v9125 = vmax.f32 %v7773, %v8454
    %v9126 = vmax.f32 %v7949, %v8456
    %v9127 = vmax.f32 %v7950, %v8458
    %v9128 = vmax.f32 %v7951, %v8460
    %v9129 = vmax.f32 %v7774, %v8462
    %v9130 = vmax.f32 %v7952, %v8464
    %v9131 = vmax.f32 %v7953, %v8466
    %v9132 = vmax.f32 %v7954, %v8468
    %v9133 = vmax.f32 %v7775, %v8470
    %v9134 = vmax.f32 %v7955, %v8472
    %v9135 = vmax.f32 %v7956, %v8474
    %v9136 = vmax.f32 %v7957, %v8476
    %v9137 = vmax.f32 %v7776, %v8478
    %v9138 = vmax.f32 %v7958, %v8480
    %v9139 = vmax.f32 %v7959, %v8482
    %v9140 = vmax.f32 %v7960, %v8484
    %v9141 = vmax.f32 %v7777, %v8486
    %v9142 = vmax.f32 %v7961, %v8488
    %v9143 = vmax.f32 %v7962, %v8490
    %v9144 = vmax.f32 %v7963, %v8492
    %v9145 = vmax.f32 %v7778, %v8494
    %v9146 = vmax.f32 %v7964, %v8496
    %v9147 = vmax.f32 %v7965, %v8498
    %v9148 = vmax.f32 %v7966, %v8500
    %v9149 = vmax.f32 %v7779, %v8502
    %v9150 = vmax.f32 %v7967, %v8504
    %v9151 = vmax.f32 %v7968, %v8506
    %v9152 = vmax.f32 %v7969, %v8508
    %v9153 = vmax.f32 %v7780, %v8510
    %v9154 = vmax.f32 %v7970, %v8512
    %v9155 = vmax.f32 %v7971, %v8514
    %v9156 = vmax.f32 %v7972, %v8516
    %v9157 = vmax.f32 %v7781, %v8518
    %v9158 = vmax.f32 %v7973, %v8520
    %v9159 = vmax.f32 %v7974, %v8522
    %v9160 = vmax.f32 %v7975, %v8524
    %v9161 = vmax.f32 %v7782, %v8526
    %v9162 = vmax.f32 %v7976, %v8528
    %v9163 = vmax.f32 %v7977, %v8530
    %v9164 = vmax.f32 %v7978, %v8532
    %v9165 = vmax.f32 %v7783, %v8534
    %v9166 = vmax.f32 %v7979, %v8536
    %v9167 = vmax.f32 %v7980, %v8538
    %v9168 = vmax.f32 %v7981, %v8540
    %v9169 = vmax.f32 %v7784, %v8542
    %v9170 = vmax.f32 %v7982, %v8544
    %v9171 = vmax.f32 %v7983, %v8546
    %v9172 = vmax.f32 %v7984, %v8548
    %v9173 = vmax.f32 %v7785, %v8550
    %v9174 = vmax.f32 %v7985, %v8552
    %v9175 = vmax.f32 %v7986, %v8554
    %v9176 = vmax.f32 %v7987, %v8556
    %v9177 = vmax.f32 %v7786, %v8558
    %v9178 = vmax.f32 %v7988, %v8560
    %v9179 = vmax.f32 %v7989, %v8562
    %v9180 = vmax.f32 %v7990, %v8564
    %v9181 = vmax.f32 %v7787, %v8566
    %v9182 = vmax.f32 %v7991, %v8568
    %v9183 = vmax.f32 %v7992, %v8570
    %v9184 = vmax.f32 %v7993, %v8572
    %v9185 = vmax.f32 %v7788, %v8574
    %v9186 = vmax.f32 %v7994, %v8576
    %v9187 = vmax.f32 %v7995, %v8578
    %v9188 = vmax.f32 %v7996, %v8580
    %v9189 = vmax.f32 %v7789, %v8582
    %v9190 = vmax.f32 %v7997, %v8584
    %v9191 = vmax.f32 %v7998, %v8586
    %v9192 = vmax.f32 %v7999, %v8588
    %v9193 = vmax.f32 %v7790, %v8590
    %v9194 = vmax.f32 %v8000, %v8592
    %v9195 = vmax.f32 %v8001, %v8594
    %v9196 = vmax.f32 %v8002, %v8596
    %v9197 = vmax.f32 %v7791, %v8598
    %v9198 = vmax.f32 %v8003, %v8600
    %v9199 = vmax.f32 %v8004, %v8602
    %v9200 = vmax.f32 %v8005, %v8604
    %v9201 = vmax.f32 %v7792, %v8606
    %v9202 = vmax.f32 %v8006, %v8608
    %v9203 = vmax.f32 %v8007, %v8610
    %v9204 = vmax.f32 %v8008, %v8612
    %v9205 = vmax.f32 %v7793, %v8614
    %v9206 = vmax.f32 %v8009, %v8616
    %v9207 = vmax.f32 %v8010, %v8618
    %v9208 = vmax.f32 %v8011, %v8620
    %v9209 = vmax.f32 %v7794, %v8622
    %v9210 = vmax.f32 %v8012, %v8624
    %v9211 = vmax.f32 %v8013, %v8626
    %v9212 = vmax.f32 %v8014, %v8628
    %v9213 = vmax.f32 %v7795, %v8630
    %v9214 = vmax.f32 %v8015, %v8632
    %v9215 = vmax.f32 %v8016, %v8634
    %v9216 = vmax.f32 %v8017, %v8636
    %v9217 = vmax.f32 %v7796, %v8638
    %v9218 = vmax.f32 %v8018, %v8640
    %v9219 = vmax.f32 %v8019, %v8642
    %v9220 = vmax.f32 %v8020, %v8644
    %v9221 = vmax.f32 %v7797, %v8646
    %v9222 = vmax.f32 %v8021, %v8648
    %v9223 = vmax.f32 %v8022, %v8650
    %v9224 = vmax.f32 %v8023, %v8652
    %v9225 = vmax.f32 %v7798, %v8654
    %v9226 = vmax.f32 %v8024, %v8656
    %v9227 = vmax.f32 %v8025, %v8658
    %v9228 = vmax.f32 %v8026, %v8660
    %v9229 = vmax.f32 %v7799, %v8662
    %v9230 = vmax.f32 %v8027, %v8664
    %v9231 = vmax.f32 %v8028, %v8666
    %v9232 = vmax.f32 %v8029, %v8668
    %v9233 = vmax.f32 %v7800, %v8670
    %v9234 = vmax.f32 %v8030, %v8672
    %v9235 = vmax.f32 %v8031, %v8674
    %v9236 = vmax.f32 %v8032, %v8676
    %v9237 = vmax.f32 %v7801, %v8678
    %v9238 = vmax.f32 %v8033, %v8680
    %v9239 = vmax.f32 %v8034, %v8682
    %v9240 = vmax.f32 %v8035, %v8684
    %v9241 = vmax.f32 %v7802, %v8686
    %v9242 = vmax.f32 %v8036, %v8688
    %v9243 = vmax.f32 %v8037, %v8690
    %v9244 = vmax.f32 %v8038, %v8692
    %v9245 = vmax.f32 %v7803, %v8694
    %v9246 = vmax.f32 %v8039, %v8696
    %v9247 = vmax.f32 %v8040, %v8698
    %v9248 = vmax.f32 %v8041, %v8700
    %v9249 = vmax.f32 %v7804, %v8702
    %v9250 = vmax.f32 %v8042, %v8704
    %v9251 = vmax.f32 %v8043, %v8706
    %v9252 = vmax.f32 %v8044, %v8708
    %v9253 = vmax.f32 %v7805, %v8710
    %v9254 = vmax.f32 %v8045, %v8712
    %v9255 = vmax.f32 %v8046, %v8714
    %v9256 = vmax.f32 %v8047, %v8716
    %v9257 = vmax.f32 %v7806, %v8718
    %v9258 = vmax.f32 %v8048, %v8720
    %v9259 = vmax.f32 %v8049, %v8722
    %v9260 = vmax.f32 %v8050, %v8724
    %v9261 = vmax.f32 %v7807, %v8726
    %v9262 = vmax.f32 %v8051, %v8728
    %v9263 = vmax.f32 %v8052, %v8730
    %v9264 = vmax.f32 %v8053, %v8732
    %v9265 = vmax.f32 %v7808, %v8734
    %v9266 = vmax.f32 %v8054, %v8736
    %v9267 = vmax.f32 %v8055, %v8738
    %v9268 = vmax.f32 %v8056, %v8740
    %v9269 = vmax.f32 %v7809, %v8742
    %v9270 = vmax.f32 %v8057, %v8744
    %v9271 = vmax.f32 %v8058, %v8746
    %v9272 = vmax.f32 %v8059, %v8748
    %v9273 = vmax.f32 %v7810, %v8750
    %v9274 = vmax.f32 %v8060, %v8752
    %v9275 = vmax.f32 %v8061, %v8754
    %v9276 = vmax.f32 %v8062, %v8756
    %v9277 = vmax.f32 %v7811, %v8758
    %v9278 = vmax.f32 %v8063, %v8760
    %v9279 = vmax.f32 %v8064, %v8762
    %v9280 = vmax.f32 %v8065, %v8764
    %v9281 = vmax.f32 %v7812, %v8766
    %v9282 = vmax.f32 %v8066, %v8768
    %v9283 = vmax.f32 %v8067, %v8770
    %v9284 = vmax.f32 %v8068, %v8772
    %v9285 = vmax.f32 %v9029, %v9037
    %v9286 = vmax.f32 %v9030, %v9038
    %v9287 = vmax.f32 %v9031, %v9039
    %v9288 = vmax.f32 %v9032, %v9040
    %v9289 = vmax.f32 %v9033, %v9041
    %v9290 = vmax.f32 %v9034, %v9042
    %v9291 = vmax.f32 %v9035, %v9043
    %v9292 = vmax.f32 %v9036, %v9044
    %v9293 = vmax.f32 %v9045, %v9053
    %v9294 = vmax.f32 %v9046, %v9054
    %v9295 = vmax.f32 %v9047, %v9055
    %v9296 = vmax.f32 %v9048, %v9056
    %v9297 = vmax.f32 %v9049, %v9057
    %v9298 = vmax.f32 %v9050, %v9058
    %v9299 = vmax.f32 %v9051, %v9059
    %v9300 = vmax.f32 %v9052, %v9060
    %v9301 = vmax.f32 %v9061, %v9069
    %v9302 = vmax.f32 %v9062, %v9070
    %v9303 = vmax.f32 %v9063, %v9071
    %v9304 = vmax.f32 %v9064, %v9072
    %v9305 = vmax.f32 %v9065, %v9073
    %v9306 = vmax.f32 %v9066, %v9074
    %v9307 = vmax.f32 %v9067, %v9075
    %v9308 = vmax.f32 %v9068, %v9076
    %v9309 = vmax.f32 %v9077, %v9085
    %v9310 = vmax.f32 %v9078, %v9086
    %v9311 = vmax.f32 %v9079, %v9087
    %v9312 = vmax.f32 %v9080, %v9088
    %v9313 = vmax.f32 %v9081, %v9089
    %v9314 = vmax.f32 %v9082, %v9090
    %v9315 = vmax.f32 %v9083, %v9091
    %v9316 = vmax.f32 %v9084, %v9092
    %v9317 = vmax.f32 %v9093, %v9101
    %v9318 = vmax.f32 %v9094, %v9102
    %v9319 = vmax.f32 %v9095, %v9103
    %v9320 = vmax.f32 %v9096, %v9104
    %v9321 = vmax.f32 %v9097, %v9105
    %v9322 = vmax.f32 %v9098, %v9106
    %v9323 = vmax.f32 %v9099, %v9107
    %v9324 = vmax.f32 %v9100, %v9108
    %v9325 = vmax.f32 %v9109, %v9117
    %v9326 = vmax.f32 %v9110, %v9118
    %v9327 = vmax.f32 %v9111, %v9119
    %v9328 = vmax.f32 %v9112, %v9120
    %v9329 = vmax.f32 %v9113, %v9121
    %v9330 = vmax.f32 %v9114, %v9122
    %v9331 = vmax.f32 %v9115, %v9123
    %v9332 = vmax.f32 %v9116, %v9124
    %v9333 = vmax.f32 %v9125, %v9133
    %v9334 = vmax.f32 %v9126, %v9134
    %v9335 = vmax.f32 %v9127, %v9135
    %v9336 = vmax.f32 %v9128, %v9136
    %v9337 = vmax.f32 %v9129, %v9137
    %v9338 = vmax.f32 %v9130, %v9138
    %v9339 = vmax.f32 %v9131, %v9139
    %v9340 = vmax.f32 %v9132, %v9140
    %v9341 = vmax.f32 %v9141, %v9149
    %v9342 = vmax.f32 %v9142, %v9150
    %v9343 = vmax.f32 %v9143, %v9151
    %v9344 = vmax.f32 %v9144, %v9152
    %v9345 = vmax.f32 %v9145, %v9153
    %v9346 = vmax.f32 %v9146, %v9154
    %v9347 = vmax.f32 %v9147, %v9155
    %v9348 = vmax.f32 %v9148, %v9156
    %v9349 = vmax.f32 %v9157, %v9165
    %v9350 = vmax.f32 %v9158, %v9166
    %v9351 = vmax.f32 %v9159, %v9167
    %v9352 = vmax.f32 %v9160, %v9168
    %v9353 = vmax.f32 %v9161, %v9169
    %v9354 = vmax.f32 %v9162, %v9170
    %v9355 = vmax.f32 %v9163, %v9171
    %v9356 = vmax.f32 %v9164, %v9172
    %v9357 = vmax.f32 %v9173, %v9181
    %v9358 = vmax.f32 %v9174, %v9182
    %v9359 = vmax.f32 %v9175, %v9183
    %v9360 = vmax.f32 %v9176, %v9184
    %v9361 = vmax.f32 %v9177, %v9185
    %v9362 = vmax.f32 %v9178, %v9186
    %v9363 = vmax.f32 %v9179, %v9187
    %v9364 = vmax.f32 %v9180, %v9188
    %v9365 = vmax.f32 %v9189, %v9197
    %v9366 = vmax.f32 %v9190, %v9198
    %v9367 = vmax.f32 %v9191, %v9199
    %v9368 = vmax.f32 %v9192, %v9200
    %v9369 = vmax.f32 %v9193, %v9201
    %v9370 = vmax.f32 %v9194, %v9202
    %v9371 = vmax.f32 %v9195, %v9203
    %v9372 = vmax.f32 %v9196, %v9204
    %v9373 = vmax.f32 %v9205, %v9213
    %v9374 = vmax.f32 %v9206, %v9214
    %v9375 = vmax.f32 %v9207, %v9215
    %v9376 = vmax.f32 %v9208, %v9216
    %v9377 = vmax.f32 %v9209, %v9217
    %v9378 = vmax.f32 %v9210, %v9218
    %v9379 = vmax.f32 %v9211, %v9219
    %v9380 = vmax.f32 %v9212, %v9220
    %v9381 = vmax.f32 %v9221, %v9229
    %v9382 = vmax.f32 %v9222, %v9230
    %v9383 = vmax.f32 %v9223, %v9231
    %v9384 = vmax.f32 %v9224, %v9232
    %v9385 = vmax.f32 %v9225, %v9233
    %v9386 = vmax.f32 %v9226, %v9234
    %v9387 = vmax.f32 %v9227, %v9235
    %v9388 = vmax.f32 %v9228, %v9236
    %v9389 = vmax.f32 %v9237, %v9245
    %v9390 = vmax.f32 %v9238, %v9246
    %v9391 = vmax.f32 %v9239, %v9247
    %v9392 = vmax.f32 %v9240, %v9248
    %v9393 = vmax.f32 %v9241, %v9249
    %v9394 = vmax.f32 %v9242, %v9250
    %v9395 = vmax.f32 %v9243, %v9251
    %v9396 = vmax.f32 %v9244, %v9252
    %v9397 = vmax.f32 %v9253, %v9261
    %v9398 = vmax.f32 %v9254, %v9262
    %v9399 = vmax.f32 %v9255, %v9263
    %v9400 = vmax.f32 %v9256, %v9264
    %v9401 = vmax.f32 %v9257, %v9265
    %v9402 = vmax.f32 %v9258, %v9266
    %v9403 = vmax.f32 %v9259, %v9267
    %v9404 = vmax.f32 %v9260, %v9268
    %v9405 = vmax.f32 %v9269, %v9277
    %v9406 = vmax.f32 %v9270, %v9278
    %v9407 = vmax.f32 %v9271, %v9279
    %v9408 = vmax.f32 %v9272, %v9280
    %v9409 = vmax.f32 %v9273, %v9281
    %v9410 = vmax.f32 %v9274, %v9282
    %v9411 = vmax.f32 %v9275, %v9283
    %v9412 = vmax.f32 %v9276, %v9284
    %vm9413 = vcmask 257024
    %9414 = vst.msk [vmem:[#allocation3] sm:$0xf] %vm9413, 0
    %vm9415 = vcmask 253952
    %9416 = vst.msk [vmem:[#allocation3 + $0x4] sm:$0x1] %vm9415, 0
    %9417 = vst.msk [vmem:[#allocation3 + $0x50] sm:$0xf] %vm9413, 0
    %9418 = vst.msk [vmem:[#allocation3 + $0x54] sm:$0x1] %vm9415, 0
    %s9419 = scalar_lea.vmem [#allocation3], 72
    %9420 = vst.msk [vmem:[%s9419] sm:$0xf] %vm9413, 0
    %9421 = vst.msk [vmem:[%s9419 + $0x4] sm:$0x1] %vm9415, 0
    %9422 = vst.msk [vmem:[%s9419 + $0x50] sm:$0xf] %vm9413, 0
    %9423 = vst.msk [vmem:[%s9419 + $0x54] sm:$0x1] %vm9415, 0
    %vm9424 = vcmask 253952
    %vm9425 = vmand %vm9424, %vm50
    %v9426 = vld [vmem:[#allocation3] sm:$0x1]
    %v9427 = vsel %vm9425, 0, %v9426
    %9428 = vst [vmem:[#allocation3] sm:$0x1] %v9427
    %v9429 = vld [vmem:[#allocation3 + $0x8] sm:$0x1]
    %v9430 = vsel %vm9425, 0, %v9429
    %9431 = vst [vmem:[#allocation3 + $0x8] sm:$0x1] %v9430
    %v9432 = vld [vmem:[#allocation3 + $0x10] sm:$0x1]
    %v9433 = vsel %vm9425, 0, %v9432
    %9434 = vst [vmem:[#allocation3 + $0x10] sm:$0x1] %v9433
    %v9435 = vld [vmem:[#allocation3 + $0x18] sm:$0x1]
    %v9436 = vsel %vm9425, 0, %v9435
    %9437 = vst [vmem:[#allocation3 + $0x18] sm:$0x1] %v9436
    %v9438 = vld [vmem:[#allocation3 + $0x20] sm:$0x1]
    %v9439 = vsel %vm9425, 0, %v9438
    %9440 = vst [vmem:[#allocation3 + $0x20] sm:$0x1] %v9439
    %v9441 = vld [vmem:[#allocation3 + $0x28] sm:$0x1]
    %v9442 = vsel %vm9425, 0, %v9441
    %9443 = vst [vmem:[#allocation3 + $0x28] sm:$0x1] %v9442
    %v9444 = vld [vmem:[#allocation3 + $0x30] sm:$0x1]
    %v9445 = vsel %vm9425, 0, %v9444
    %9446 = vst [vmem:[#allocation3 + $0x30] sm:$0x1] %v9445
    %v9447 = vld [vmem:[#allocation3 + $0x38] sm:$0x1]
    %v9448 = vsel %vm9425, 0, %v9447
    %9449 = vst [vmem:[#allocation3 + $0x38] sm:$0x1] %v9448
    %v9450 = vld [vmem:[#allocation3 + $0x40] sm:$0x1]
    %v9451 = vsel %vm9425, 0, %v9450
    %9452 = vst [vmem:[#allocation3 + $0x40] sm:$0x1] %v9451
    %v9453 = vld [vmem:[#allocation3 + $0x48] sm:$0x1]
    %v9454 = vsel %vm9425, 0, %v9453
    %9455 = vst [vmem:[#allocation3 + $0x48] sm:$0x1] %v9454
    %v9456 = vld [vmem:[#allocation3 + $0x50] sm:$0x1]
    %v9457 = vsel %vm9425, 0, %v9456
    %9458 = vst [vmem:[#allocation3 + $0x50] sm:$0x1] %v9457
    %v9459 = vld [vmem:[#allocation3 + $0x58] sm:$0x1]
    %v9460 = vsel %vm9425, 0, %v9459
    %9461 = vst [vmem:[#allocation3 + $0x58] sm:$0x1] %v9460
    %v9462 = vld [vmem:[#allocation3 + $0x60] sm:$0x1]
    %v9463 = vsel %vm9425, 0, %v9462
    %9464 = vst [vmem:[#allocation3 + $0x60] sm:$0x1] %v9463
    %v9465 = vld [vmem:[#allocation3 + $0x68] sm:$0x1]
    %v9466 = vsel %vm9425, 0, %v9465
    %9467 = vst [vmem:[#allocation3 + $0x68] sm:$0x1] %v9466
    %v9468 = vld [vmem:[#allocation3 + $0x70] sm:$0x1]
    %v9469 = vsel %vm9425, 0, %v9468
    %9470 = vst [vmem:[#allocation3 + $0x70] sm:$0x1] %v9469
    %v9471 = vld [vmem:[#allocation3 + $0x78] sm:$0x1]
    %v9472 = vsel %vm9425, 0, %v9471
    %9473 = vst [vmem:[#allocation3 + $0x78] sm:$0x1] %v9472
    %v9474 = vld [vmem:[#allocation3 + $0x80] sm:$0x1]
    %v9475 = vsel %vm9425, 0, %v9474
    %9476 = vst [vmem:[#allocation3 + $0x80] sm:$0x1] %v9475
    %v9477 = vld [vmem:[#allocation3 + $0x88] sm:$0x1]
    %v9478 = vsel %vm9425, 0, %v9477
    %9479 = vst [vmem:[#allocation3 + $0x88] sm:$0x1] %v9478
    %v9480 = vld [vmem:[#allocation3 + $0x90] sm:$0x1]
    %v9481 = vsel %vm9425, 0, %v9480
    %9482 = vst [vmem:[#allocation3 + $0x90] sm:$0x1] %v9481
    %v9483 = vld [vmem:[#allocation3 + $0x98] sm:$0x1]
    %v9484 = vsel %vm9425, 0, %v9483
    %9485 = vst [vmem:[#allocation3 + $0x98] sm:$0x1] %v9484
    %vm9486 = vmand %vm9424, %vm160
    %v9487 = vld [vmem:[#allocation3 + $0x4] sm:$0x1]
    %v9488 = vsel %vm9486, 0, %v9487
    %9489 = vst [vmem:[#allocation3 + $0x4] sm:$0x1] %v9488
    %v9490 = vld [vmem:[#allocation3 + $0xc] sm:$0x1]
    %v9491 = vsel %vm9486, 0, %v9490
    %9492 = vst [vmem:[#allocation3 + $0xc] sm:$0x1] %v9491
    %v9493 = vld [vmem:[#allocation3 + $0x14] sm:$0x1]
    %v9494 = vsel %vm9486, 0, %v9493
    %9495 = vst [vmem:[#allocation3 + $0x14] sm:$0x1] %v9494
    %v9496 = vld [vmem:[#allocation3 + $0x1c] sm:$0x1]
    %v9497 = vsel %vm9486, 0, %v9496
    %9498 = vst [vmem:[#allocation3 + $0x1c] sm:$0x1] %v9497
    %v9499 = vld [vmem:[#allocation3 + $0x24] sm:$0x1]
    %v9500 = vsel %vm9486, 0, %v9499
    %9501 = vst [vmem:[#allocation3 + $0x24] sm:$0x1] %v9500
    %v9502 = vld [vmem:[#allocation3 + $0x2c] sm:$0x1]
    %v9503 = vsel %vm9486, 0, %v9502
    %9504 = vst [vmem:[#allocation3 + $0x2c] sm:$0x1] %v9503
    %v9505 = vld [vmem:[#allocation3 + $0x34] sm:$0x1]
    %v9506 = vsel %vm9486, 0, %v9505
    %9507 = vst [vmem:[#allocation3 + $0x34] sm:$0x1] %v9506
    %v9508 = vld [vmem:[#allocation3 + $0x3c] sm:$0x1]
    %v9509 = vsel %vm9486, 0, %v9508
    %9510 = vst [vmem:[#allocation3 + $0x3c] sm:$0x1] %v9509
    %v9511 = vld [vmem:[#allocation3 + $0x44] sm:$0x1]
    %v9512 = vsel %vm9486, 0, %v9511
    %9513 = vst [vmem:[#allocation3 + $0x44] sm:$0x1] %v9512
    %v9514 = vld [vmem:[#allocation3 + $0x4c] sm:$0x1]
    %v9515 = vsel %vm9486, 0, %v9514
    %9516 = vst [vmem:[#allocation3 + $0x4c] sm:$0x1] %v9515
    %v9517 = vld [vmem:[#allocation3 + $0x54] sm:$0x1]
    %v9518 = vsel %vm9486, 0, %v9517
    %9519 = vst [vmem:[#allocation3 + $0x54] sm:$0x1] %v9518
    %v9520 = vld [vmem:[#allocation3 + $0x5c] sm:$0x1]
    %v9521 = vsel %vm9486, 0, %v9520
    %9522 = vst [vmem:[#allocation3 + $0x5c] sm:$0x1] %v9521
    %v9523 = vld [vmem:[#allocation3 + $0x64] sm:$0x1]
    %v9524 = vsel %vm9486, 0, %v9523
    %9525 = vst [vmem:[#allocation3 + $0x64] sm:$0x1] %v9524
    %v9526 = vld [vmem:[#allocation3 + $0x6c] sm:$0x1]
    %v9527 = vsel %vm9486, 0, %v9526
    %9528 = vst [vmem:[#allocation3 + $0x6c] sm:$0x1] %v9527
    %v9529 = vld [vmem:[#allocation3 + $0x74] sm:$0x1]
    %v9530 = vsel %vm9486, 0, %v9529
    %9531 = vst [vmem:[#allocation3 + $0x74] sm:$0x1] %v9530
    %v9532 = vld [vmem:[#allocation3 + $0x7c] sm:$0x1]
    %v9533 = vsel %vm9486, 0, %v9532
    %9534 = vst [vmem:[#allocation3 + $0x7c] sm:$0x1] %v9533
    %v9535 = vld [vmem:[#allocation3 + $0x84] sm:$0x1]
    %v9536 = vsel %vm9486, 0, %v9535
    %9537 = vst [vmem:[#allocation3 + $0x84] sm:$0x1] %v9536
    %v9538 = vld [vmem:[#allocation3 + $0x8c] sm:$0x1]
    %v9539 = vsel %vm9486, 0, %v9538
    %9540 = vst [vmem:[#allocation3 + $0x8c] sm:$0x1] %v9539
    %v9541 = vld [vmem:[#allocation3 + $0x94] sm:$0x1]
    %v9542 = vsel %vm9486, 0, %v9541
    %9543 = vst [vmem:[#allocation3 + $0x94] sm:$0x1] %v9542
    %v9544 = vld [vmem:[#allocation3 + $0x9c] sm:$0x1]
    %v9545 = vsel %vm9486, 0, %v9544
    %9546 = vst [vmem:[#allocation3 + $0x9c] sm:$0x1] %v9545
    %v9547 = vpack.c.bf16 %v9285, %v9285
    %v9548 = vpack.c.bf16 %v9286, %v9286
    %v9549 = vpack.c.bf16 %v9287, %v9287
    %v9550 = vpack.c.bf16 %v9288, %v9288
    %v9551 = vpack.c.bf16 %v9289, %v9289
    %v9552 = vpack.c.bf16 %v9290, %v9290
    %v9553 = vpack.c.bf16 %v9291, %v9291
    %v9554 = vpack.c.bf16 %v9292, %v9292
    %v9555 = vpack.c.bf16 %v9293, %v9293
    %v9556 = vpack.c.bf16 %v9294, %v9294
    %v9557 = vpack.c.bf16 %v9295, %v9295
    %v9558 = vpack.c.bf16 %v9296, %v9296
    %v9559 = vpack.c.bf16 %v9297, %v9297
    %v9560 = vpack.c.bf16 %v9298, %v9298
    %v9561 = vpack.c.bf16 %v9299, %v9299
    %v9562 = vpack.c.bf16 %v9300, %v9300
    %v9563 = vpack.c.bf16 %v9301, %v9301
    %v9564 = vpack.c.bf16 %v9302, %v9302
    %v9565 = vpack.c.bf16 %v9303, %v9303
    %v9566 = vpack.c.bf16 %v9304, %v9304
    %v9567 = vpack.c.bf16 %v9305, %v9305
    %v9568 = vpack.c.bf16 %v9306, %v9306
    %v9569 = vpack.c.bf16 %v9307, %v9307
    %v9570 = vpack.c.bf16 %v9308, %v9308
    %v9571 = vpack.c.bf16 %v9309, %v9309
    %v9572 = vpack.c.bf16 %v9310, %v9310
    %v9573 = vpack.c.bf16 %v9311, %v9311
    %v9574 = vpack.c.bf16 %v9312, %v9312
    %v9575 = vpack.c.bf16 %v9313, %v9313
    %v9576 = vpack.c.bf16 %v9314, %v9314
    %v9577 = vpack.c.bf16 %v9315, %v9315
    %v9578 = vpack.c.bf16 %v9316, %v9316
    %v9579 = vpack.c.bf16 %v9317, %v9317
    %v9580 = vpack.c.bf16 %v9318, %v9318
    %v9581 = vpack.c.bf16 %v9319, %v9319
    %v9582 = vpack.c.bf16 %v9320, %v9320
    %v9583 = vpack.c.bf16 %v9321, %v9321
    %v9584 = vpack.c.bf16 %v9322, %v9322
    %v9585 = vpack.c.bf16 %v9323, %v9323
    %v9586 = vpack.c.bf16 %v9324, %v9324
    %v9587 = vpack.c.bf16 %v9325, %v9325
    %v9588 = vpack.c.bf16 %v9326, %v9326
    %v9589 = vpack.c.bf16 %v9327, %v9327
    %v9590 = vpack.c.bf16 %v9328, %v9328
    %v9591 = vpack.c.bf16 %v9329, %v9329
    %v9592 = vpack.c.bf16 %v9330, %v9330
    %v9593 = vpack.c.bf16 %v9331, %v9331
    %v9594 = vpack.c.bf16 %v9332, %v9332
    %v9595 = vpack.c.bf16 %v9333, %v9333
    %v9596 = vpack.c.bf16 %v9334, %v9334
    %v9597 = vpack.c.bf16 %v9335, %v9335
    %v9598 = vpack.c.bf16 %v9336, %v9336
    %v9599 = vpack.c.bf16 %v9337, %v9337
    %v9600 = vpack.c.bf16 %v9338, %v9338
    %v9601 = vpack.c.bf16 %v9339, %v9339
    %v9602 = vpack.c.bf16 %v9340, %v9340
    %v9603 = vpack.c.bf16 %v9341, %v9341
    %v9604 = vpack.c.bf16 %v9342, %v9342
    %v9605 = vpack.c.bf16 %v9343, %v9343
    %v9606 = vpack.c.bf16 %v9344, %v9344
    %v9607 = vpack.c.bf16 %v9345, %v9345
    %v9608 = vpack.c.bf16 %v9346, %v9346
    %v9609 = vpack.c.bf16 %v9347, %v9347
    %v9610 = vpack.c.bf16 %v9348, %v9348
    %v9611 = vpack.c.bf16 %v9349, %v9349
    %v9612 = vpack.c.bf16 %v9350, %v9350
    %v9613 = vpack.c.bf16 %v9351, %v9351
    %v9614 = vpack.c.bf16 %v9352, %v9352
    %v9615 = vpack.c.bf16 %v9353, %v9353
    %v9616 = vpack.c.bf16 %v9354, %v9354
    %v9617 = vpack.c.bf16 %v9355, %v9355
    %v9618 = vpack.c.bf16 %v9356, %v9356
    %v9619 = vpack.c.bf16 %v9357, %v9357
    %v9620 = vpack.c.bf16 %v9358, %v9358
    %v9621 = vpack.c.bf16 %v9359, %v9359
    %v9622 = vpack.c.bf16 %v9360, %v9360
    %v9623 = vpack.c.bf16 %v9361, %v9361
    %v9624 = vpack.c.bf16 %v9362, %v9362
    %v9625 = vpack.c.bf16 %v9363, %v9363
    %v9626 = vpack.c.bf16 %v9364, %v9364
    %v9627 = vpack.c.bf16 %v9365, %v9365
    %v9628 = vpack.c.bf16 %v9366, %v9366
    %v9629 = vpack.c.bf16 %v9367, %v9367
    %v9630 = vpack.c.bf16 %v9368, %v9368
    %v9631 = vpack.c.bf16 %v9369, %v9369
    %v9632 = vpack.c.bf16 %v9370, %v9370
    %v9633 = vpack.c.bf16 %v9371, %v9371
    %v9634 = vpack.c.bf16 %v9372, %v9372
    %v9635 = vpack.c.bf16 %v9373, %v9373
    %v9636 = vpack.c.bf16 %v9374, %v9374
    %v9637 = vpack.c.bf16 %v9375, %v9375
    %v9638 = vpack.c.bf16 %v9376, %v9376
    %v9639 = vpack.c.bf16 %v9377, %v9377
    %v9640 = vpack.c.bf16 %v9378, %v9378
    %v9641 = vpack.c.bf16 %v9379, %v9379
    %v9642 = vpack.c.bf16 %v9380, %v9380
    %v9643 = vpack.c.bf16 %v9381, %v9381
    %v9644 = vpack.c.bf16 %v9382, %v9382
    %v9645 = vpack.c.bf16 %v9383, %v9383
    %v9646 = vpack.c.bf16 %v9384, %v9384
    %v9647 = vpack.c.bf16 %v9385, %v9385
    %v9648 = vpack.c.bf16 %v9386, %v9386
    %v9649 = vpack.c.bf16 %v9387, %v9387
    %v9650 = vpack.c.bf16 %v9388, %v9388
    %v9651 = vpack.c.bf16 %v9389, %v9389
    %v9652 = vpack.c.bf16 %v9390, %v9390
    %v9653 = vpack.c.bf16 %v9391, %v9391
    %v9654 = vpack.c.bf16 %v9392, %v9392
    %v9655 = vpack.c.bf16 %v9393, %v9393
    %v9656 = vpack.c.bf16 %v9394, %v9394
    %v9657 = vpack.c.bf16 %v9395, %v9395
    %v9658 = vpack.c.bf16 %v9396, %v9396
    %v9659 = vpack.c.bf16 %v9397, %v9397
    %v9660 = vpack.c.bf16 %v9398, %v9398
    %v9661 = vpack.c.bf16 %v9399, %v9399
    %v9662 = vpack.c.bf16 %v9400, %v9400
    %v9663 = vpack.c.bf16 %v9401, %v9401
    %v9664 = vpack.c.bf16 %v9402, %v9402
    %v9665 = vpack.c.bf16 %v9403, %v9403
    %v9666 = vpack.c.bf16 %v9404, %v9404
    %v9667 = vpack.c.bf16 %v9405, %v9405
    %v9668 = vpack.c.bf16 %v9406, %v9406
    %v9669 = vpack.c.bf16 %v9407, %v9407
    %v9670 = vpack.c.bf16 %v9408, %v9408
    %v9671 = vpack.c.bf16 %v9409, %v9409
    %v9672 = vpack.c.bf16 %v9410, %v9410
    %v9673 = vpack.c.bf16 %v9411, %v9411
    %v9674 = vpack.c.bf16 %v9412, %v9412
    %v9803 = vunpack.c.l.b16 %v9547
    %v9804 = vunpack.c.l.b16 %v9548
    %v9805 = vunpack.c.l.b16 %v9549
    %v9806 = vunpack.c.l.b16 %v9550
    %v9807 = vunpack.c.l.b16 %v9551
    %v9808 = vunpack.c.l.b16 %v9552
    %v9809 = vunpack.c.l.b16 %v9553
    %v9810 = vunpack.c.l.b16 %v9554
    %v9811 = vunpack.c.l.b16 %v9555
    %v9812 = vunpack.c.l.b16 %v9556
    %v9813 = vunpack.c.l.b16 %v9557
    %v9814 = vunpack.c.l.b16 %v9558
    %v9815 = vunpack.c.l.b16 %v9559
    %v9816 = vunpack.c.l.b16 %v9560
    %v9817 = vunpack.c.l.b16 %v9561
    %v9818 = vunpack.c.l.b16 %v9562
    %v9819 = vunpack.c.l.b16 %v9563
    %v9820 = vunpack.c.l.b16 %v9564
    %v9821 = vunpack.c.l.b16 %v9565
    %v9822 = vunpack.c.l.b16 %v9566
    %v9823 = vunpack.c.l.b16 %v9567
    %v9824 = vunpack.c.l.b16 %v9568
    %v9825 = vunpack.c.l.b16 %v9569
    %v9826 = vunpack.c.l.b16 %v9570
    %v9827 = vunpack.c.l.b16 %v9571
    %v9828 = vunpack.c.l.b16 %v9572
    %v9829 = vunpack.c.l.b16 %v9573
    %v9830 = vunpack.c.l.b16 %v9574
    %v9831 = vunpack.c.l.b16 %v9575
    %v9832 = vunpack.c.l.b16 %v9576
    %v9833 = vunpack.c.l.b16 %v9577
    %v9834 = vunpack.c.l.b16 %v9578
    %v9835 = vunpack.c.l.b16 %v9579
    %v9836 = vunpack.c.l.b16 %v9580
    %v9837 = vunpack.c.l.b16 %v9581
    %v9838 = vunpack.c.l.b16 %v9582
    %v9839 = vunpack.c.l.b16 %v9583
    %v9840 = vunpack.c.l.b16 %v9584
    %v9841 = vunpack.c.l.b16 %v9585
    %v9842 = vunpack.c.l.b16 %v9586
    %v9843 = vunpack.c.l.b16 %v9587
    %v9844 = vunpack.c.l.b16 %v9588
    %v9845 = vunpack.c.l.b16 %v9589
    %v9846 = vunpack.c.l.b16 %v9590
    %v9847 = vunpack.c.l.b16 %v9591
    %v9848 = vunpack.c.l.b16 %v9592
    %v9849 = vunpack.c.l.b16 %v9593
    %v9850 = vunpack.c.l.b16 %v9594
    %v9851 = vunpack.c.l.b16 %v9595
    %v9852 = vunpack.c.l.b16 %v9596
    %v9853 = vunpack.c.l.b16 %v9597
    %v9854 = vunpack.c.l.b16 %v9598
    %v9855 = vunpack.c.l.b16 %v9599
    %v9856 = vunpack.c.l.b16 %v9600
    %v9857 = vunpack.c.l.b16 %v9601
    %v9858 = vunpack.c.l.b16 %v9602
    %v9859 = vunpack.c.l.b16 %v9603
    %v9860 = vunpack.c.l.b16 %v9604
    %v9861 = vunpack.c.l.b16 %v9605
    %v9862 = vunpack.c.l.b16 %v9606
    %v9863 = vunpack.c.l.b16 %v9607
    %v9864 = vunpack.c.l.b16 %v9608
    %v9865 = vunpack.c.l.b16 %v9609
    %v9866 = vunpack.c.l.b16 %v9610
    %v9867 = vunpack.c.l.b16 %v9611
    %v9868 = vunpack.c.l.b16 %v9612
    %v9869 = vunpack.c.l.b16 %v9613
    %v9870 = vunpack.c.l.b16 %v9614
    %v9871 = vunpack.c.l.b16 %v9615
    %v9872 = vunpack.c.l.b16 %v9616
    %v9873 = vunpack.c.l.b16 %v9617
    %v9874 = vunpack.c.l.b16 %v9618
    %v9875 = vunpack.c.l.b16 %v9619
    %v9876 = vunpack.c.l.b16 %v9620
    %v9877 = vunpack.c.l.b16 %v9621
    %v9878 = vunpack.c.l.b16 %v9622
    %v9879 = vunpack.c.l.b16 %v9623
    %v9880 = vunpack.c.l.b16 %v9624
    %v9881 = vunpack.c.l.b16 %v9625
    %v9882 = vunpack.c.l.b16 %v9626
    %v9883 = vunpack.c.l.b16 %v9627
    %v9884 = vunpack.c.l.b16 %v9628
    %v9885 = vunpack.c.l.b16 %v9629
    %v9886 = vunpack.c.l.b16 %v9630
    %v9887 = vunpack.c.l.b16 %v9631
    %v9888 = vunpack.c.l.b16 %v9632
    %v9889 = vunpack.c.l.b16 %v9633
    %v9890 = vunpack.c.l.b16 %v9634
    %v9891 = vunpack.c.l.b16 %v9635
    %v9892 = vunpack.c.l.b16 %v9636
    %v9893 = vunpack.c.l.b16 %v9637
    %v9894 = vunpack.c.l.b16 %v9638
    %v9895 = vunpack.c.l.b16 %v9639
    %v9896 = vunpack.c.l.b16 %v9640
    %v9897 = vunpack.c.l.b16 %v9641
    %v9898 = vunpack.c.l.b16 %v9642
    %v9899 = vunpack.c.l.b16 %v9643
    %v9900 = vunpack.c.l.b16 %v9644
    %v9901 = vunpack.c.l.b16 %v9645
    %v9902 = vunpack.c.l.b16 %v9646
    %v9903 = vunpack.c.l.b16 %v9647
    %v9904 = vunpack.c.l.b16 %v9648
    %v9905 = vunpack.c.l.b16 %v9649
    %v9906 = vunpack.c.l.b16 %v9650
    %v9907 = vunpack.c.l.b16 %v9651
    %v9908 = vunpack.c.l.b16 %v9652
    %v9909 = vunpack.c.l.b16 %v9653
    %v9910 = vunpack.c.l.b16 %v9654
    %v9911 = vunpack.c.l.b16 %v9655
    %v9912 = vunpack.c.l.b16 %v9656
    %v9913 = vunpack.c.l.b16 %v9657
    %v9914 = vunpack.c.l.b16 %v9658
    %v9915 = vunpack.c.l.b16 %v9659
    %v9916 = vunpack.c.l.b16 %v9660
    %v9917 = vunpack.c.l.b16 %v9661
    %v9918 = vunpack.c.l.b16 %v9662
    %v9919 = vunpack.c.l.b16 %v9663
    %v9920 = vunpack.c.l.b16 %v9664
    %v9921 = vunpack.c.l.b16 %v9665
    %v9922 = vunpack.c.l.b16 %v9666
    %v9923 = vunpack.c.l.b16 %v9667
    %v9924 = vunpack.c.l.b16 %v9668
    %v9925 = vunpack.c.l.b16 %v9669
    %v9926 = vunpack.c.l.b16 %v9670
    %v9927 = vunpack.c.l.b16 %v9671
    %v9928 = vunpack.c.l.b16 %v9672
    %v9929 = vunpack.c.l.b16 %v9673
    %v9930 = vunpack.c.l.b16 %v9674
    %v9931 = vrot.slane %v9803, 7
    %v9932 = vrot.slane %v9804, 6
    %vm9933 = vcmask 1042434
    %v9934 = vsel %vm9933, %v9932, %v9931
    %v9935 = vrot.slane %v9805, 5
    %vm9936 = vcmask 1043459
    %v9937 = vsel %vm9936, %v9935, %v9934
    %v9938 = vrot.slane %v9806, 4
    %vm9939 = vcmask 1044484
    %v9940 = vsel %vm9939, %v9938, %v9937
    %v9941 = vrot.slane %v9807, 3
    %vm9942 = vcmask 1045509
    %v9943 = vsel %vm9942, %v9941, %v9940
    %v9944 = vrot.slane %v9808, 2
    %vm9945 = vcmask 1046534
    %v9946 = vsel %vm9945, %v9944, %v9943
    %v9947 = vrot.slane %v9809, 1
    %vm9948 = vcmask 1047559
    %v9949 = vsel %vm9948, %v9947, %v9946
    %v9950 = vrot.slane %v9811, 7
    %v9951 = vrot.slane %v9812, 6
    %v9952 = vsel %vm9933, %v9951, %v9950
    %v9953 = vrot.slane %v9813, 5
    %v9954 = vsel %vm9936, %v9953, %v9952
    %v9955 = vrot.slane %v9814, 4
    %v9956 = vsel %vm9939, %v9955, %v9954
    %v9957 = vrot.slane %v9815, 3
    %v9958 = vsel %vm9942, %v9957, %v9956
    %v9959 = vrot.slane %v9816, 2
    %v9960 = vsel %vm9945, %v9959, %v9958
    %v9961 = vrot.slane %v9817, 1
    %v9962 = vsel %vm9948, %v9961, %v9960
    %v9963 = vrot.slane %v9819, 7
    %v9964 = vrot.slane %v9820, 6
    %v9965 = vsel %vm9933, %v9964, %v9963
    %v9966 = vrot.slane %v9821, 5
    %v9967 = vsel %vm9936, %v9966, %v9965
    %v9968 = vrot.slane %v9822, 4
    %v9969 = vsel %vm9939, %v9968, %v9967
    %v9970 = vrot.slane %v9823, 3
    %v9971 = vsel %vm9942, %v9970, %v9969
    %v9972 = vrot.slane %v9824, 2
    %v9973 = vsel %vm9945, %v9972, %v9971
    %v9974 = vrot.slane %v9825, 1
    %v9975 = vsel %vm9948, %v9974, %v9973
    %v9976 = vrot.slane %v9827, 7
    %v9977 = vrot.slane %v9828, 6
    %v9978 = vsel %vm9933, %v9977, %v9976
    %v9979 = vrot.slane %v9829, 5
    %v9980 = vsel %vm9936, %v9979, %v9978
    %v9981 = vrot.slane %v9830, 4
    %v9982 = vsel %vm9939, %v9981, %v9980
    %v9983 = vrot.slane %v9831, 3
    %v9984 = vsel %vm9942, %v9983, %v9982
    %v9985 = vrot.slane %v9832, 2
    %v9986 = vsel %vm9945, %v9985, %v9984
    %v9987 = vrot.slane %v9833, 1
    %v9988 = vsel %vm9948, %v9987, %v9986
    %v9989 = vrot.slane %v9835, 7
    %v9990 = vrot.slane %v9836, 6
    %v9991 = vsel %vm9933, %v9990, %v9989
    %v9992 = vrot.slane %v9837, 5
    %v9993 = vsel %vm9936, %v9992, %v9991
    %v9994 = vrot.slane %v9838, 4
    %v9995 = vsel %vm9939, %v9994, %v9993
    %v9996 = vrot.slane %v9839, 3
    %v9997 = vsel %vm9942, %v9996, %v9995
    %v9998 = vrot.slane %v9840, 2
    %v9999 = vsel %vm9945, %v9998, %v9997
    %v10000 = vrot.slane %v9841, 1
    %v10001 = vsel %vm9948, %v10000, %v9999
    %v10002 = vrot.slane %v9843, 7
    %v10003 = vrot.slane %v9844, 6
    %v10004 = vsel %vm9933, %v10003, %v10002
    %v10005 = vrot.slane %v9845, 5
    %v10006 = vsel %vm9936, %v10005, %v10004
    %v10007 = vrot.slane %v9846, 4
    %v10008 = vsel %vm9939, %v10007, %v10006
    %v10009 = vrot.slane %v9847, 3
    %v10010 = vsel %vm9942, %v10009, %v10008
    %v10011 = vrot.slane %v9848, 2
    %v10012 = vsel %vm9945, %v10011, %v10010
    %v10013 = vrot.slane %v9849, 1
    %v10014 = vsel %vm9948, %v10013, %v10012
    %v10015 = vrot.slane %v9851, 7
    %v10016 = vrot.slane %v9852, 6
    %v10017 = vsel %vm9933, %v10016, %v10015
    %v10018 = vrot.slane %v9853, 5
    %v10019 = vsel %vm9936, %v10018, %v10017
    %v10020 = vrot.slane %v9854, 4
    %v10021 = vsel %vm9939, %v10020, %v10019
    %v10022 = vrot.slane %v9855, 3
    %v10023 = vsel %vm9942, %v10022, %v10021
    %v10024 = vrot.slane %v9856, 2
    %v10025 = vsel %vm9945, %v10024, %v10023
    %v10026 = vrot.slane %v9857, 1
    %v10027 = vsel %vm9948, %v10026, %v10025
    %v10028 = vrot.slane %v9859, 7
    %v10029 = vrot.slane %v9860, 6
    %v10030 = vsel %vm9933, %v10029, %v10028
    %v10031 = vrot.slane %v9861, 5
    %v10032 = vsel %vm9936, %v10031, %v10030
    %v10033 = vrot.slane %v9862, 4
    %v10034 = vsel %vm9939, %v10033, %v10032
    %v10035 = vrot.slane %v9863, 3
    %v10036 = vsel %vm9942, %v10035, %v10034
    %v10037 = vrot.slane %v9864, 2
    %v10038 = vsel %vm9945, %v10037, %v10036
    %v10039 = vrot.slane %v9865, 1
    %v10040 = vsel %vm9948, %v10039, %v10038
    %v10041 = vrot.slane %v9867, 7
    %v10042 = vrot.slane %v9868, 6
    %v10043 = vsel %vm9933, %v10042, %v10041
    %v10044 = vrot.slane %v9869, 5
    %v10045 = vsel %vm9936, %v10044, %v10043
    %v10046 = vrot.slane %v9870, 4
    %v10047 = vsel %vm9939, %v10046, %v10045
    %v10048 = vrot.slane %v9871, 3
    %v10049 = vsel %vm9942, %v10048, %v10047
    %v10050 = vrot.slane %v9872, 2
    %v10051 = vsel %vm9945, %v10050, %v10049
    %v10052 = vrot.slane %v9873, 1
    %v10053 = vsel %vm9948, %v10052, %v10051
    %v10054 = vrot.slane %v9875, 7
    %v10055 = vrot.slane %v9876, 6
    %v10056 = vsel %vm9933, %v10055, %v10054
    %v10057 = vrot.slane %v9877, 5
    %v10058 = vsel %vm9936, %v10057, %v10056
    %v10059 = vrot.slane %v9878, 4
    %v10060 = vsel %vm9939, %v10059, %v10058
    %v10061 = vrot.slane %v9879, 3
    %v10062 = vsel %vm9942, %v10061, %v10060
    %v10063 = vrot.slane %v9880, 2
    %v10064 = vsel %vm9945, %v10063, %v10062
    %v10065 = vrot.slane %v9881, 1
    %v10066 = vsel %vm9948, %v10065, %v10064
    %v10067 = vrot.slane %v9883, 7
    %v10068 = vrot.slane %v9884, 6
    %v10069 = vsel %vm9933, %v10068, %v10067
    %v10070 = vrot.slane %v9885, 5
    %v10071 = vsel %vm9936, %v10070, %v10069
    %v10072 = vrot.slane %v9886, 4
    %v10073 = vsel %vm9939, %v10072, %v10071
    %v10074 = vrot.slane %v9887, 3
    %v10075 = vsel %vm9942, %v10074, %v10073
    %v10076 = vrot.slane %v9888, 2
    %v10077 = vsel %vm9945, %v10076, %v10075
    %v10078 = vrot.slane %v9889, 1
    %v10079 = vsel %vm9948, %v10078, %v10077
    %v10080 = vrot.slane %v9891, 7
    %v10081 = vrot.slane %v9892, 6
    %v10082 = vsel %vm9933, %v10081, %v10080
    %v10083 = vrot.slane %v9893, 5
    %v10084 = vsel %vm9936, %v10083, %v10082
    %v10085 = vrot.slane %v9894, 4
    %v10086 = vsel %vm9939, %v10085, %v10084
    %v10087 = vrot.slane %v9895, 3
    %v10088 = vsel %vm9942, %v10087, %v10086
    %v10089 = vrot.slane %v9896, 2
    %v10090 = vsel %vm9945, %v10089, %v10088
    %v10091 = vrot.slane %v9897, 1
    %v10092 = vsel %vm9948, %v10091, %v10090
    %v10093 = vrot.slane %v9899, 7
    %v10094 = vrot.slane %v9900, 6
    %v10095 = vsel %vm9933, %v10094, %v10093
    %v10096 = vrot.slane %v9901, 5
    %v10097 = vsel %vm9936, %v10096, %v10095
    %v10098 = vrot.slane %v9902, 4
    %v10099 = vsel %vm9939, %v10098, %v10097
    %v10100 = vrot.slane %v9903, 3
    %v10101 = vsel %vm9942, %v10100, %v10099
    %v10102 = vrot.slane %v9904, 2
    %v10103 = vsel %vm9945, %v10102, %v10101
    %v10104 = vrot.slane %v9905, 1
    %v10105 = vsel %vm9948, %v10104, %v10103
    %v10106 = vrot.slane %v9907, 7
    %v10107 = vrot.slane %v9908, 6
    %v10108 = vsel %vm9933, %v10107, %v10106
    %v10109 = vrot.slane %v9909, 5
    %v10110 = vsel %vm9936, %v10109, %v10108
    %v10111 = vrot.slane %v9910, 4
    %v10112 = vsel %vm9939, %v10111, %v10110
    %v10113 = vrot.slane %v9911, 3
    %v10114 = vsel %vm9942, %v10113, %v10112
    %v10115 = vrot.slane %v9912, 2
    %v10116 = vsel %vm9945, %v10115, %v10114
    %v10117 = vrot.slane %v9913, 1
    %v10118 = vsel %vm9948, %v10117, %v10116
    %v10119 = vrot.slane %v9915, 7
    %v10120 = vrot.slane %v9916, 6
    %v10121 = vsel %vm9933, %v10120, %v10119
    %v10122 = vrot.slane %v9917, 5
    %v10123 = vsel %vm9936, %v10122, %v10121
    %v10124 = vrot.slane %v9918, 4
    %v10125 = vsel %vm9939, %v10124, %v10123
    %v10126 = vrot.slane %v9919, 3
    %v10127 = vsel %vm9942, %v10126, %v10125
    %v10128 = vrot.slane %v9920, 2
    %v10129 = vsel %vm9945, %v10128, %v10127
    %v10130 = vrot.slane %v9921, 1
    %v10131 = vsel %vm9948, %v10130, %v10129
    %v10132 = vrot.slane %v9923, 7
    %v10133 = vrot.slane %v9924, 6
    %v10134 = vsel %vm9933, %v10133, %v10132
    %v10135 = vrot.slane %v9925, 5
    %v10136 = vsel %vm9936, %v10135, %v10134
    %v10137 = vrot.slane %v9926, 4
    %v10138 = vsel %vm9939, %v10137, %v10136
    %v10139 = vrot.slane %v9927, 3
    %v10140 = vsel %vm9942, %v10139, %v10138
    %v10141 = vrot.slane %v9928, 2
    %v10142 = vsel %vm9945, %v10141, %v10140
    %v10143 = vrot.slane %v9929, 1
    %v10144 = vsel %vm9948, %v10143, %v10142
    %v10145 = vpack.c.b16 %v9949, %v9949
    %v10146 = vpack.c.b16 %v9810, %v9810
    %v10147 = vpack.c.b16 %v9962, %v9962
    %v10148 = vpack.c.b16 %v9818, %v9818
    %v10149 = vpack.c.b16 %v9975, %v9975
    %v10150 = vpack.c.b16 %v9826, %v9826
    %v10151 = vpack.c.b16 %v9988, %v9988
    %v10152 = vpack.c.b16 %v9834, %v9834
    %v10153 = vpack.c.b16 %v10001, %v10001
    %v10154 = vpack.c.b16 %v9842, %v9842
    %v10155 = vpack.c.b16 %v10014, %v10014
    %v10156 = vpack.c.b16 %v9850, %v9850
    %v10157 = vpack.c.b16 %v10027, %v10027
    %v10158 = vpack.c.b16 %v9858, %v9858
    %v10159 = vpack.c.b16 %v10040, %v10040
    %v10160 = vpack.c.b16 %v9866, %v9866
    %v10161 = vpack.c.b16 %v10053, %v10053
    %v10162 = vpack.c.b16 %v9874, %v9874
    %v10163 = vpack.c.b16 %v10066, %v10066
    %v10164 = vpack.c.b16 %v9882, %v9882
    %v10165 = vpack.c.b16 %v10079, %v10079
    %v10166 = vpack.c.b16 %v9890, %v9890
    %v10167 = vpack.c.b16 %v10092, %v10092
    %v10168 = vpack.c.b16 %v9898, %v9898
    %v10169 = vpack.c.b16 %v10105, %v10105
    %v10170 = vpack.c.b16 %v9906, %v9906
    %v10171 = vpack.c.b16 %v10118, %v10118
    %v10172 = vpack.c.b16 %v9914, %v9914
    %v10173 = vpack.c.b16 %v10131, %v10131
    %v10174 = vpack.c.b16 %v9922, %v9922
    %v10175 = vpack.c.b16 %v10144, %v10144
    %v10176 = vpack.c.b16 %v9930, %v9930
    %s10209 = scalar_lea.vmem [#allocation3], 8
    %vm10210 = vcmask 257024
    %vm10211 = vmand %vm10210, %vm160
    %v10212 = vld [vmem:[%s10209] sm:$0xf]
    %v10213 = vsel %vm10211, %v10145, %v10212
    %10214 = vst [vmem:[%s10209] sm:$0xf] %v10213
    %v10215 = vld [vmem:[%s10209 + $0x4] sm:$0x1]
    %v10216 = vsel %vm9425, %v10146, %v10215
    %10217 = vst [vmem:[%s10209 + $0x4] sm:$0x1] %v10216
    %v10218 = vld [vmem:[%s10209 + $0x8] sm:$0xf]
    %v10219 = vsel %vm10211, %v10147, %v10218
    %10220 = vst [vmem:[%s10209 + $0x8] sm:$0xf] %v10219
    %v10221 = vld [vmem:[%s10209 + $0xc] sm:$0x1]
    %v10222 = vsel %vm9425, %v10148, %v10221
    %10223 = vst [vmem:[%s10209 + $0xc] sm:$0x1] %v10222
    %v10224 = vld [vmem:[%s10209 + $0x10] sm:$0xf]
    %v10225 = vsel %vm10211, %v10149, %v10224
    %10226 = vst [vmem:[%s10209 + $0x10] sm:$0xf] %v10225
    %v10227 = vld [vmem:[%s10209 + $0x14] sm:$0x1]
    %v10228 = vsel %vm9425, %v10150, %v10227
    %10229 = vst [vmem:[%s10209 + $0x14] sm:$0x1] %v10228
    %v10230 = vld [vmem:[%s10209 + $0x18] sm:$0xf]
    %v10231 = vsel %vm10211, %v10151, %v10230
    %10232 = vst [vmem:[%s10209 + $0x18] sm:$0xf] %v10231
    %v10233 = vld [vmem:[%s10209 + $0x1c] sm:$0x1]
    %v10234 = vsel %vm9425, %v10152, %v10233
    %10235 = vst [vmem:[%s10209 + $0x1c] sm:$0x1] %v10234
    %v10236 = vld [vmem:[%s10209 + $0x20] sm:$0xf]
    %v10237 = vsel %vm10211, %v10153, %v10236
    %10238 = vst [vmem:[%s10209 + $0x20] sm:$0xf] %v10237
    %v10239 = vld [vmem:[%s10209 + $0x24] sm:$0x1]
    %v10240 = vsel %vm9425, %v10154, %v10239
    %10241 = vst [vmem:[%s10209 + $0x24] sm:$0x1] %v10240
    %v10242 = vld [vmem:[%s10209 + $0x28] sm:$0xf]
    %v10243 = vsel %vm10211, %v10155, %v10242
    %10244 = vst [vmem:[%s10209 + $0x28] sm:$0xf] %v10243
    %v10245 = vld [vmem:[%s10209 + $0x2c] sm:$0x1]
    %v10246 = vsel %vm9425, %v10156, %v10245
    %10247 = vst [vmem:[%s10209 + $0x2c] sm:$0x1] %v10246
    %v10248 = vld [vmem:[%s10209 + $0x30] sm:$0xf]
    %v10249 = vsel %vm10211, %v10157, %v10248
    %10250 = vst [vmem:[%s10209 + $0x30] sm:$0xf] %v10249
    %v10251 = vld [vmem:[%s10209 + $0x34] sm:$0x1]
    %v10252 = vsel %vm9425, %v10158, %v10251
    %10253 = vst [vmem:[%s10209 + $0x34] sm:$0x1] %v10252
    %v10254 = vld [vmem:[%s10209 + $0x38] sm:$0xf]
    %v10255 = vsel %vm10211, %v10159, %v10254
    %10256 = vst [vmem:[%s10209 + $0x38] sm:$0xf] %v10255
    %v10257 = vld [vmem:[%s10209 + $0x3c] sm:$0x1]
    %v10258 = vsel %vm9425, %v10160, %v10257
    %10259 = vst [vmem:[%s10209 + $0x3c] sm:$0x1] %v10258
    %v10260 = vld [vmem:[%s10209 + $0x50] sm:$0xf]
    %v10261 = vsel %vm10211, %v10161, %v10260
    %10262 = vst [vmem:[%s10209 + $0x50] sm:$0xf] %v10261
    %v10263 = vld [vmem:[%s10209 + $0x54] sm:$0x1]
    %v10264 = vsel %vm9425, %v10162, %v10263
    %10265 = vst [vmem:[%s10209 + $0x54] sm:$0x1] %v10264
    %v10266 = vld [vmem:[%s10209 + $0x58] sm:$0xf]
    %v10267 = vsel %vm10211, %v10163, %v10266
    %10268 = vst [vmem:[%s10209 + $0x58] sm:$0xf] %v10267
    %v10269 = vld [vmem:[%s10209 + $0x5c] sm:$0x1]
    %v10270 = vsel %vm9425, %v10164, %v10269
    %10271 = vst [vmem:[%s10209 + $0x5c] sm:$0x1] %v10270
    %v10272 = vld [vmem:[%s10209 + $0x60] sm:$0xf]
    %v10273 = vsel %vm10211, %v10165, %v10272
    %10274 = vst [vmem:[%s10209 + $0x60] sm:$0xf] %v10273
    %v10275 = vld [vmem:[%s10209 + $0x64] sm:$0x1]
    %v10276 = vsel %vm9425, %v10166, %v10275
    %10277 = vst [vmem:[%s10209 + $0x64] sm:$0x1] %v10276
    %v10278 = vld [vmem:[%s10209 + $0x68] sm:$0xf]
    %v10279 = vsel %vm10211, %v10167, %v10278
    %10280 = vst [vmem:[%s10209 + $0x68] sm:$0xf] %v10279
    %v10281 = vld [vmem:[%s10209 + $0x6c] sm:$0x1]
    %v10282 = vsel %vm9425, %v10168, %v10281
    %10283 = vst [vmem:[%s10209 + $0x6c] sm:$0x1] %v10282
    %v10284 = vld [vmem:[%s10209 + $0x70] sm:$0xf]
    %v10285 = vsel %vm10211, %v10169, %v10284
    %10286 = vst [vmem:[%s10209 + $0x70] sm:$0xf] %v10285
    %v10287 = vld [vmem:[%s10209 + $0x74] sm:$0x1]
    %v10288 = vsel %vm9425, %v10170, %v10287
    %10289 = vst [vmem:[%s10209 + $0x74] sm:$0x1] %v10288
    %v10290 = vld [vmem:[%s10209 + $0x78] sm:$0xf]
    %v10291 = vsel %vm10211, %v10171, %v10290
    %10292 = vst [vmem:[%s10209 + $0x78] sm:$0xf] %v10291
    %v10293 = vld [vmem:[%s10209 + $0x7c] sm:$0x1]
    %v10294 = vsel %vm9425, %v10172, %v10293
    %10295 = vst [vmem:[%s10209 + $0x7c] sm:$0x1] %v10294
    %v10296 = vld [vmem:[%s10209 + $0x80] sm:$0xf]
    %v10297 = vsel %vm10211, %v10173, %v10296
    %10298 = vst [vmem:[%s10209 + $0x80] sm:$0xf] %v10297
    %v10299 = vld [vmem:[%s10209 + $0x84] sm:$0x1]
    %v10300 = vsel %vm9425, %v10174, %v10299
    %10301 = vst [vmem:[%s10209 + $0x84] sm:$0x1] %v10300
    %v10302 = vld [vmem:[%s10209 + $0x88] sm:$0xf]
    %v10303 = vsel %vm10211, %v10175, %v10302
    %10304 = vst [vmem:[%s10209 + $0x88] sm:$0xf] %v10303
    %v10305 = vld [vmem:[%s10209 + $0x8c] sm:$0x1]
    %v10306 = vsel %vm9425, %v10176, %v10305
    %10307 = vst [vmem:[%s10209 + $0x8c] sm:$0x1] %v10306
    %v10308 = vld [vmem:[#allocation3] sm:$0xf]
    %v10309 = vld [vmem:[#allocation3 + $0x8] sm:$0xf]
    %v10310 = vld [vmem:[#allocation3 + $0x10] sm:$0xf]
    %v10311 = vld [vmem:[#allocation3 + $0x18] sm:$0xf]
    %v10312 = vld [vmem:[#allocation3 + $0x20] sm:$0xf]
    %v10313 = vld [vmem:[#allocation3 + $0x28] sm:$0xf]
    %v10314 = vld [vmem:[#allocation3 + $0x30] sm:$0xf]
    %v10315 = vld [vmem:[#allocation3 + $0x38] sm:$0xf]
    %v10316 = vld [vmem:[#allocation3 + $0x50] sm:$0xf]
    %v10317 = vld [vmem:[#allocation3 + $0x58] sm:$0xf]
    %v10318 = vld [vmem:[#allocation3 + $0x60] sm:$0xf]
    %v10319 = vld [vmem:[#allocation3 + $0x68] sm:$0xf]
    %v10320 = vld [vmem:[#allocation3 + $0x70] sm:$0xf]
    %v10321 = vld [vmem:[#allocation3 + $0x78] sm:$0xf]
    %v10322 = vld [vmem:[#allocation3 + $0x80] sm:$0xf]
    %v10323 = vld [vmem:[#allocation3 + $0x88] sm:$0xf]
    %v10324 = vld [vmem:[#allocation3 + $0x4] sm:$0x1]
    %v10325 = vld [vmem:[#allocation3 + $0xc] sm:$0x1]
    %v10326 = vld [vmem:[#allocation3 + $0x14] sm:$0x1]
    %v10327 = vld [vmem:[#allocation3 + $0x1c] sm:$0x1]
    %v10328 = vld [vmem:[#allocation3 + $0x24] sm:$0x1]
    %v10329 = vld [vmem:[#allocation3 + $0x2c] sm:$0x1]
    %v10330 = vld [vmem:[#allocation3 + $0x34] sm:$0x1]
    %v10331 = vld [vmem:[#allocation3 + $0x3c] sm:$0x1]
    %v10332 = vld [vmem:[#allocation3 + $0x54] sm:$0x1]
    %v10333 = vld [vmem:[#allocation3 + $0x5c] sm:$0x1]
    %v10334 = vld [vmem:[#allocation3 + $0x64] sm:$0x1]
    %v10335 = vld [vmem:[#allocation3 + $0x6c] sm:$0x1]
    %v10336 = vld [vmem:[#allocation3 + $0x74] sm:$0x1]
    %v10337 = vld [vmem:[#allocation3 + $0x7c] sm:$0x1]
    %v10338 = vld [vmem:[#allocation3 + $0x84] sm:$0x1]
    %v10339 = vld [vmem:[#allocation3 + $0x8c] sm:$0x1]
    %v10341 = vshrl.u32 %v10308, 16
    %v10343 = vrot.slane %v10341, 4
    %v10344 = vshll.u32 %v10308, 16
    %v10346 = vrot.slane %v10344, 5
    %v10347 = vor.u32 %v10343, %v10346
    %v10348 = vrot.slane %v10347, 4
    %v10350 = vshll.u32 %v10324, 16
    %v10352 = vrot.slane %v10350, 5
    %v10353 = vsel %vm1301, %v10348, %v10352
    %v10355 = vshrl.u32 %v10309, 16
    %v10357 = vrot.slane %v10355, 4
    %v10358 = vshll.u32 %v10309, 16
    %v10360 = vrot.slane %v10358, 5
    %v10361 = vor.u32 %v10357, %v10360
    %v10362 = vrot.slane %v10361, 4
    %v10364 = vshll.u32 %v10325, 16
    %v10366 = vrot.slane %v10364, 5
    %v10367 = vsel %vm1301, %v10362, %v10366
    %v10369 = vshrl.u32 %v10310, 16
    %v10371 = vrot.slane %v10369, 4
    %v10372 = vshll.u32 %v10310, 16
    %v10374 = vrot.slane %v10372, 5
    %v10375 = vor.u32 %v10371, %v10374
    %v10376 = vrot.slane %v10375, 4
    %v10378 = vshll.u32 %v10326, 16
    %v10380 = vrot.slane %v10378, 5
    %v10381 = vsel %vm1301, %v10376, %v10380
    %v10383 = vshrl.u32 %v10311, 16
    %v10385 = vrot.slane %v10383, 4
    %v10386 = vshll.u32 %v10311, 16
    %v10388 = vrot.slane %v10386, 5
    %v10389 = vor.u32 %v10385, %v10388
    %v10390 = vrot.slane %v10389, 4
    %v10392 = vshll.u32 %v10327, 16
    %v10394 = vrot.slane %v10392, 5
    %v10395 = vsel %vm1301, %v10390, %v10394
    %v10397 = vshrl.u32 %v10312, 16
    %v10399 = vrot.slane %v10397, 4
    %v10400 = vshll.u32 %v10312, 16
    %v10402 = vrot.slane %v10400, 5
    %v10403 = vor.u32 %v10399, %v10402
    %v10404 = vrot.slane %v10403, 4
    %v10406 = vshll.u32 %v10328, 16
    %v10408 = vrot.slane %v10406, 5
    %v10409 = vsel %vm1301, %v10404, %v10408
    %v10411 = vshrl.u32 %v10313, 16
    %v10413 = vrot.slane %v10411, 4
    %v10414 = vshll.u32 %v10313, 16
    %v10416 = vrot.slane %v10414, 5
    %v10417 = vor.u32 %v10413, %v10416
    %v10418 = vrot.slane %v10417, 4
    %v10420 = vshll.u32 %v10329, 16
    %v10422 = vrot.slane %v10420, 5
    %v10423 = vsel %vm1301, %v10418, %v10422
    %v10425 = vshrl.u32 %v10314, 16
    %v10427 = vrot.slane %v10425, 4
    %v10428 = vshll.u32 %v10314, 16
    %v10430 = vrot.slane %v10428, 5
    %v10431 = vor.u32 %v10427, %v10430
    %v10432 = vrot.slane %v10431, 4
    %v10434 = vshll.u32 %v10330, 16
    %v10436 = vrot.slane %v10434, 5
    %v10437 = vsel %vm1301, %v10432, %v10436
    %v10439 = vshrl.u32 %v10315, 16
    %v10441 = vrot.slane %v10439, 4
    %v10442 = vshll.u32 %v10315, 16
    %v10444 = vrot.slane %v10442, 5
    %v10445 = vor.u32 %v10441, %v10444
    %v10446 = vrot.slane %v10445, 4
    %v10448 = vshll.u32 %v10331, 16
    %v10450 = vrot.slane %v10448, 5
    %v10451 = vsel %vm1301, %v10446, %v10450
    %v10453 = vshrl.u32 %v10316, 16
    %v10455 = vrot.slane %v10453, 4
    %v10456 = vshll.u32 %v10316, 16
    %v10458 = vrot.slane %v10456, 5
    %v10459 = vor.u32 %v10455, %v10458
    %v10460 = vrot.slane %v10459, 4
    %v10462 = vshll.u32 %v10332, 16
    %v10464 = vrot.slane %v10462, 5
    %v10465 = vsel %vm1301, %v10460, %v10464
    %v10467 = vshrl.u32 %v10317, 16
    %v10469 = vrot.slane %v10467, 4
    %v10470 = vshll.u32 %v10317, 16
    %v10472 = vrot.slane %v10470, 5
    %v10473 = vor.u32 %v10469, %v10472
    %v10474 = vrot.slane %v10473, 4
    %v10476 = vshll.u32 %v10333, 16
    %v10478 = vrot.slane %v10476, 5
    %v10479 = vsel %vm1301, %v10474, %v10478
    %v10481 = vshrl.u32 %v10318, 16
    %v10483 = vrot.slane %v10481, 4
    %v10484 = vshll.u32 %v10318, 16
    %v10486 = vrot.slane %v10484, 5
    %v10487 = vor.u32 %v10483, %v10486
    %v10488 = vrot.slane %v10487, 4
    %v10490 = vshll.u32 %v10334, 16
    %v10492 = vrot.slane %v10490, 5
    %v10493 = vsel %vm1301, %v10488, %v10492
    %v10495 = vshrl.u32 %v10319, 16
    %v10497 = vrot.slane %v10495, 4
    %v10498 = vshll.u32 %v10319, 16
    %v10500 = vrot.slane %v10498, 5
    %v10501 = vor.u32 %v10497, %v10500
    %v10502 = vrot.slane %v10501, 4
    %v10504 = vshll.u32 %v10335, 16
    %v10506 = vrot.slane %v10504, 5
    %v10507 = vsel %vm1301, %v10502, %v10506
    %v10509 = vshrl.u32 %v10320, 16
    %v10511 = vrot.slane %v10509, 4
    %v10512 = vshll.u32 %v10320, 16
    %v10514 = vrot.slane %v10512, 5
    %v10515 = vor.u32 %v10511, %v10514
    %v10516 = vrot.slane %v10515, 4
    %v10518 = vshll.u32 %v10336, 16
    %v10520 = vrot.slane %v10518, 5
    %v10521 = vsel %vm1301, %v10516, %v10520
    %v10523 = vshrl.u32 %v10321, 16
    %v10525 = vrot.slane %v10523, 4
    %v10526 = vshll.u32 %v10321, 16
    %v10528 = vrot.slane %v10526, 5
    %v10529 = vor.u32 %v10525, %v10528
    %v10530 = vrot.slane %v10529, 4
    %v10532 = vshll.u32 %v10337, 16
    %v10534 = vrot.slane %v10532, 5
    %v10535 = vsel %vm1301, %v10530, %v10534
    %v10537 = vshrl.u32 %v10322, 16
    %v10539 = vrot.slane %v10537, 4
    %v10540 = vshll.u32 %v10322, 16
    %v10542 = vrot.slane %v10540, 5
    %v10543 = vor.u32 %v10539, %v10542
    %v10544 = vrot.slane %v10543, 4
    %v10546 = vshll.u32 %v10338, 16
    %v10548 = vrot.slane %v10546, 5
    %v10549 = vsel %vm1301, %v10544, %v10548
    %v10551 = vshrl.u32 %v10323, 16
    %v10553 = vrot.slane %v10551, 4
    %v10554 = vshll.u32 %v10323, 16
    %v10556 = vrot.slane %v10554, 5
    %v10557 = vor.u32 %v10553, %v10556
    %v10558 = vrot.slane %v10557, 4
    %v10560 = vshll.u32 %v10339, 16
    %v10562 = vrot.slane %v10560, 5
    %v10563 = vsel %vm1301, %v10558, %v10562
    %v10564 = vld [vmem:[#allocation3] sm:$0xe]
    %v10565 = vld [vmem:[#allocation3 + $0x8] sm:$0xe]
    %v10566 = vld [vmem:[#allocation3 + $0x10] sm:$0xe]
    %v10567 = vld [vmem:[#allocation3 + $0x18] sm:$0xe]
    %v10568 = vld [vmem:[#allocation3 + $0x20] sm:$0xe]
    %v10569 = vld [vmem:[#allocation3 + $0x28] sm:$0xe]
    %v10570 = vld [vmem:[#allocation3 + $0x30] sm:$0xe]
    %v10571 = vld [vmem:[#allocation3 + $0x38] sm:$0xe]
    %v10572 = vld [vmem:[#allocation3 + $0x50] sm:$0xe]
    %v10573 = vld [vmem:[#allocation3 + $0x58] sm:$0xe]
    %v10574 = vld [vmem:[#allocation3 + $0x60] sm:$0xe]
    %v10575 = vld [vmem:[#allocation3 + $0x68] sm:$0xe]
    %v10576 = vld [vmem:[#allocation3 + $0x70] sm:$0xe]
    %v10577 = vld [vmem:[#allocation3 + $0x78] sm:$0xe]
    %v10578 = vld [vmem:[#allocation3 + $0x80] sm:$0xe]
    %v10579 = vld [vmem:[#allocation3 + $0x88] sm:$0xe]
    %v10612 = vrot.slane %v10564, 5
    %v10613 = vrot.slane %v10612, 4
    %v10614 = vrot.slane %v10324, 5
    %v10615 = vsel %vm2200, %v10613, %v10614
    %v10616 = vrot.slane %v10565, 5
    %v10617 = vrot.slane %v10616, 4
    %v10618 = vrot.slane %v10325, 5
    %v10619 = vsel %vm2200, %v10617, %v10618
    %v10620 = vrot.slane %v10566, 5
    %v10621 = vrot.slane %v10620, 4
    %v10622 = vrot.slane %v10326, 5
    %v10623 = vsel %vm2200, %v10621, %v10622
    %v10624 = vrot.slane %v10567, 5
    %v10625 = vrot.slane %v10624, 4
    %v10626 = vrot.slane %v10327, 5
    %v10627 = vsel %vm2200, %v10625, %v10626
    %v10628 = vrot.slane %v10568, 5
    %v10629 = vrot.slane %v10628, 4
    %v10630 = vrot.slane %v10328, 5
    %v10631 = vsel %vm2200, %v10629, %v10630
    %v10632 = vrot.slane %v10569, 5
    %v10633 = vrot.slane %v10632, 4
    %v10634 = vrot.slane %v10329, 5
    %v10635 = vsel %vm2200, %v10633, %v10634
    %v10636 = vrot.slane %v10570, 5
    %v10637 = vrot.slane %v10636, 4
    %v10638 = vrot.slane %v10330, 5
    %v10639 = vsel %vm2200, %v10637, %v10638
    %v10640 = vrot.slane %v10571, 5
    %v10641 = vrot.slane %v10640, 4
    %v10642 = vrot.slane %v10331, 5
    %v10643 = vsel %vm2200, %v10641, %v10642
    %v10644 = vrot.slane %v10572, 5
    %v10645 = vrot.slane %v10644, 4
    %v10646 = vrot.slane %v10332, 5
    %v10647 = vsel %vm2200, %v10645, %v10646
    %v10648 = vrot.slane %v10573, 5
    %v10649 = vrot.slane %v10648, 4
    %v10650 = vrot.slane %v10333, 5
    %v10651 = vsel %vm2200, %v10649, %v10650
    %v10652 = vrot.slane %v10574, 5
    %v10653 = vrot.slane %v10652, 4
    %v10654 = vrot.slane %v10334, 5
    %v10655 = vsel %vm2200, %v10653, %v10654
    %v10656 = vrot.slane %v10575, 5
    %v10657 = vrot.slane %v10656, 4
    %v10658 = vrot.slane %v10335, 5
    %v10659 = vsel %vm2200, %v10657, %v10658
    %v10660 = vrot.slane %v10576, 5
    %v10661 = vrot.slane %v10660, 4
    %v10662 = vrot.slane %v10336, 5
    %v10663 = vsel %vm2200, %v10661, %v10662
    %v10664 = vrot.slane %v10577, 5
    %v10665 = vrot.slane %v10664, 4
    %v10666 = vrot.slane %v10337, 5
    %v10667 = vsel %vm2200, %v10665, %v10666
    %v10668 = vrot.slane %v10578, 5
    %v10669 = vrot.slane %v10668, 4
    %v10670 = vrot.slane %v10338, 5
    %v10671 = vsel %vm2200, %v10669, %v10670
    %v10672 = vrot.slane %v10579, 5
    %v10673 = vrot.slane %v10672, 4
    %v10674 = vrot.slane %v10339, 5
    %v10675 = vsel %vm2200, %v10673, %v10674
    %v10676 = vld [vmem:[%s10209] sm:$0xf]
    %v10677 = vld [vmem:[%s10209 + $0x8] sm:$0xf]
    %v10678 = vld [vmem:[%s10209 + $0x10] sm:$0xf]
    %v10679 = vld [vmem:[%s10209 + $0x18] sm:$0xf]
    %v10680 = vld [vmem:[%s10209 + $0x20] sm:$0xf]
    %v10681 = vld [vmem:[%s10209 + $0x28] sm:$0xf]
    %v10682 = vld [vmem:[%s10209 + $0x30] sm:$0xf]
    %v10683 = vld [vmem:[%s10209 + $0x38] sm:$0xf]
    %v10684 = vld [vmem:[%s10209 + $0x50] sm:$0xf]
    %v10685 = vld [vmem:[%s10209 + $0x58] sm:$0xf]
    %v10686 = vld [vmem:[%s10209 + $0x60] sm:$0xf]
    %v10687 = vld [vmem:[%s10209 + $0x68] sm:$0xf]
    %v10688 = vld [vmem:[%s10209 + $0x70] sm:$0xf]
    %v10689 = vld [vmem:[%s10209 + $0x78] sm:$0xf]
    %v10690 = vld [vmem:[%s10209 + $0x80] sm:$0xf]
    %v10691 = vld [vmem:[%s10209 + $0x88] sm:$0xf]
    %v10692 = vld [vmem:[%s10209 + $0x4] sm:$0x1]
    %v10693 = vld [vmem:[%s10209 + $0xc] sm:$0x1]
    %v10694 = vld [vmem:[%s10209 + $0x14] sm:$0x1]
    %v10695 = vld [vmem:[%s10209 + $0x1c] sm:$0x1]
    %v10696 = vld [vmem:[%s10209 + $0x24] sm:$0x1]
    %v10697 = vld [vmem:[%s10209 + $0x2c] sm:$0x1]
    %v10698 = vld [vmem:[%s10209 + $0x34] sm:$0x1]
    %v10699 = vld [vmem:[%s10209 + $0x3c] sm:$0x1]
    %v10700 = vld [vmem:[%s10209 + $0x54] sm:$0x1]
    %v10701 = vld [vmem:[%s10209 + $0x5c] sm:$0x1]
    %v10702 = vld [vmem:[%s10209 + $0x64] sm:$0x1]
    %v10703 = vld [vmem:[%s10209 + $0x6c] sm:$0x1]
    %v10704 = vld [vmem:[%s10209 + $0x74] sm:$0x1]
    %v10705 = vld [vmem:[%s10209 + $0x7c] sm:$0x1]
    %v10706 = vld [vmem:[%s10209 + $0x84] sm:$0x1]
    %v10707 = vld [vmem:[%s10209 + $0x8c] sm:$0x1]
    %v10709 = vshrl.u32 %v10676, 16
    %v10711 = vrot.slane %v10709, 4
    %v10712 = vshll.u32 %v10676, 16
    %v10714 = vrot.slane %v10712, 5
    %v10715 = vor.u32 %v10711, %v10714
    %v10716 = vrot.slane %v10715, 4
    %v10718 = vshll.u32 %v10692, 16
    %v10720 = vrot.slane %v10718, 5
    %v10721 = vsel %vm1301, %v10716, %v10720
    %v10723 = vshrl.u32 %v10677, 16
    %v10725 = vrot.slane %v10723, 4
    %v10726 = vshll.u32 %v10677, 16
    %v10728 = vrot.slane %v10726, 5
    %v10729 = vor.u32 %v10725, %v10728
    %v10730 = vrot.slane %v10729, 4
    %v10732 = vshll.u32 %v10693, 16
    %v10734 = vrot.slane %v10732, 5
    %v10735 = vsel %vm1301, %v10730, %v10734
    %v10737 = vshrl.u32 %v10678, 16
    %v10739 = vrot.slane %v10737, 4
    %v10740 = vshll.u32 %v10678, 16
    %v10742 = vrot.slane %v10740, 5
    %v10743 = vor.u32 %v10739, %v10742
    %v10744 = vrot.slane %v10743, 4
    %v10746 = vshll.u32 %v10694, 16
    %v10748 = vrot.slane %v10746, 5
    %v10749 = vsel %vm1301, %v10744, %v10748
    %v10751 = vshrl.u32 %v10679, 16
    %v10753 = vrot.slane %v10751, 4
    %v10754 = vshll.u32 %v10679, 16
    %v10756 = vrot.slane %v10754, 5
    %v10757 = vor.u32 %v10753, %v10756
    %v10758 = vrot.slane %v10757, 4
    %v10760 = vshll.u32 %v10695, 16
    %v10762 = vrot.slane %v10760, 5
    %v10763 = vsel %vm1301, %v10758, %v10762
    %v10765 = vshrl.u32 %v10680, 16
    %v10767 = vrot.slane %v10765, 4
    %v10768 = vshll.u32 %v10680, 16
    %v10770 = vrot.slane %v10768, 5
    %v10771 = vor.u32 %v10767, %v10770
    %v10772 = vrot.slane %v10771, 4
    %v10774 = vshll.u32 %v10696, 16
    %v10776 = vrot.slane %v10774, 5
    %v10777 = vsel %vm1301, %v10772, %v10776
    %v10779 = vshrl.u32 %v10681, 16
    %v10781 = vrot.slane %v10779, 4
    %v10782 = vshll.u32 %v10681, 16
    %v10784 = vrot.slane %v10782, 5
    %v10785 = vor.u32 %v10781, %v10784
    %v10786 = vrot.slane %v10785, 4
    %v10788 = vshll.u32 %v10697, 16
    %v10790 = vrot.slane %v10788, 5
    %v10791 = vsel %vm1301, %v10786, %v10790
    %v10793 = vshrl.u32 %v10682, 16
    %v10795 = vrot.slane %v10793, 4
    %v10796 = vshll.u32 %v10682, 16
    %v10798 = vrot.slane %v10796, 5
    %v10799 = vor.u32 %v10795, %v10798
    %v10800 = vrot.slane %v10799, 4
    %v10802 = vshll.u32 %v10698, 16
    %v10804 = vrot.slane %v10802, 5
    %v10805 = vsel %vm1301, %v10800, %v10804
    %v10807 = vshrl.u32 %v10683, 16
    %v10809 = vrot.slane %v10807, 4
    %v10810 = vshll.u32 %v10683, 16
    %v10812 = vrot.slane %v10810, 5
    %v10813 = vor.u32 %v10809, %v10812
    %v10814 = vrot.slane %v10813, 4
    %v10816 = vshll.u32 %v10699, 16
    %v10818 = vrot.slane %v10816, 5
    %v10819 = vsel %vm1301, %v10814, %v10818
    %v10821 = vshrl.u32 %v10684, 16
    %v10823 = vrot.slane %v10821, 4
    %v10824 = vshll.u32 %v10684, 16
    %v10826 = vrot.slane %v10824, 5
    %v10827 = vor.u32 %v10823, %v10826
    %v10828 = vrot.slane %v10827, 4
    %v10830 = vshll.u32 %v10700, 16
    %v10832 = vrot.slane %v10830, 5
    %v10833 = vsel %vm1301, %v10828, %v10832
    %v10835 = vshrl.u32 %v10685, 16
    %v10837 = vrot.slane %v10835, 4
    %v10838 = vshll.u32 %v10685, 16
    %v10840 = vrot.slane %v10838, 5
    %v10841 = vor.u32 %v10837, %v10840
    %v10842 = vrot.slane %v10841, 4
    %v10844 = vshll.u32 %v10701, 16
    %v10846 = vrot.slane %v10844, 5
    %v10847 = vsel %vm1301, %v10842, %v10846
    %v10849 = vshrl.u32 %v10686, 16
    %v10851 = vrot.slane %v10849, 4
    %v10852 = vshll.u32 %v10686, 16
    %v10854 = vrot.slane %v10852, 5
    %v10855 = vor.u32 %v10851, %v10854
    %v10856 = vrot.slane %v10855, 4
    %v10858 = vshll.u32 %v10702, 16
    %v10860 = vrot.slane %v10858, 5
    %v10861 = vsel %vm1301, %v10856, %v10860
    %v10863 = vshrl.u32 %v10687, 16
    %v10865 = vrot.slane %v10863, 4
    %v10866 = vshll.u32 %v10687, 16
    %v10868 = vrot.slane %v10866, 5
    %v10869 = vor.u32 %v10865, %v10868
    %v10870 = vrot.slane %v10869, 4
    %v10872 = vshll.u32 %v10703, 16
    %v10874 = vrot.slane %v10872, 5
    %v10875 = vsel %vm1301, %v10870, %v10874
    %v10877 = vshrl.u32 %v10688, 16
    %v10879 = vrot.slane %v10877, 4
    %v10880 = vshll.u32 %v10688, 16
    %v10882 = vrot.slane %v10880, 5
    %v10883 = vor.u32 %v10879, %v10882
    %v10884 = vrot.slane %v10883, 4
    %v10886 = vshll.u32 %v10704, 16
    %v10888 = vrot.slane %v10886, 5
    %v10889 = vsel %vm1301, %v10884, %v10888
    %v10891 = vshrl.u32 %v10689, 16
    %v10893 = vrot.slane %v10891, 4
    %v10894 = vshll.u32 %v10689, 16
    %v10896 = vrot.slane %v10894, 5
    %v10897 = vor.u32 %v10893, %v10896
    %v10898 = vrot.slane %v10897, 4
    %v10900 = vshll.u32 %v10705, 16
    %v10902 = vrot.slane %v10900, 5
    %v10903 = vsel %vm1301, %v10898, %v10902
    %v10905 = vshrl.u32 %v10690, 16
    %v10907 = vrot.slane %v10905, 4
    %v10908 = vshll.u32 %v10690, 16
    %v10910 = vrot.slane %v10908, 5
    %v10911 = vor.u32 %v10907, %v10910
    %v10912 = vrot.slane %v10911, 4
    %v10914 = vshll.u32 %v10706, 16
    %v10916 = vrot.slane %v10914, 5
    %v10917 = vsel %vm1301, %v10912, %v10916
    %v10919 = vshrl.u32 %v10691, 16
    %v10921 = vrot.slane %v10919, 4
    %v10922 = vshll.u32 %v10691, 16
    %v10924 = vrot.slane %v10922, 5
    %v10925 = vor.u32 %v10921, %v10924
    %v10926 = vrot.slane %v10925, 4
    %v10928 = vshll.u32 %v10707, 16
    %v10930 = vrot.slane %v10928, 5
    %v10931 = vsel %vm1301, %v10926, %v10930
    %v10932 = vld [vmem:[%s10209] sm:$0xe]
    %v10933 = vld [vmem:[%s10209 + $0x8] sm:$0xe]
    %v10934 = vld [vmem:[%s10209 + $0x10] sm:$0xe]
    %v10935 = vld [vmem:[%s10209 + $0x18] sm:$0xe]
    %v10936 = vld [vmem:[%s10209 + $0x20] sm:$0xe]
    %v10937 = vld [vmem:[%s10209 + $0x28] sm:$0xe]
    %v10938 = vld [vmem:[%s10209 + $0x30] sm:$0xe]
    %v10939 = vld [vmem:[%s10209 + $0x38] sm:$0xe]
    %v10940 = vld [vmem:[%s10209 + $0x50] sm:$0xe]
    %v10941 = vld [vmem:[%s10209 + $0x58] sm:$0xe]
    %v10942 = vld [vmem:[%s10209 + $0x60] sm:$0xe]
    %v10943 = vld [vmem:[%s10209 + $0x68] sm:$0xe]
    %v10944 = vld [vmem:[%s10209 + $0x70] sm:$0xe]
    %v10945 = vld [vmem:[%s10209 + $0x78] sm:$0xe]
    %v10946 = vld [vmem:[%s10209 + $0x80] sm:$0xe]
    %v10947 = vld [vmem:[%s10209 + $0x88] sm:$0xe]
    %v10980 = vrot.slane %v10932, 5
    %v10981 = vrot.slane %v10980, 4
    %v10982 = vrot.slane %v10692, 5
    %v10983 = vsel %vm2200, %v10981, %v10982
    %v10984 = vrot.slane %v10933, 5
    %v10985 = vrot.slane %v10984, 4
    %v10986 = vrot.slane %v10693, 5
    %v10987 = vsel %vm2200, %v10985, %v10986
    %v10988 = vrot.slane %v10934, 5
    %v10989 = vrot.slane %v10988, 4
    %v10990 = vrot.slane %v10694, 5
    %v10991 = vsel %vm2200, %v10989, %v10990
    %v10992 = vrot.slane %v10935, 5
    %v10993 = vrot.slane %v10992, 4
    %v10994 = vrot.slane %v10695, 5
    %v10995 = vsel %vm2200, %v10993, %v10994
    %v10996 = vrot.slane %v10936, 5
    %v10997 = vrot.slane %v10996, 4
    %v10998 = vrot.slane %v10696, 5
    %v10999 = vsel %vm2200, %v10997, %v10998
    %v11000 = vrot.slane %v10937, 5
    %v11001 = vrot.slane %v11000, 4
    %v11002 = vrot.slane %v10697, 5
    %v11003 = vsel %vm2200, %v11001, %v11002
    %v11004 = vrot.slane %v10938, 5
    %v11005 = vrot.slane %v11004, 4
    %v11006 = vrot.slane %v10698, 5
    %v11007 = vsel %vm2200, %v11005, %v11006
    %v11008 = vrot.slane %v10939, 5
    %v11009 = vrot.slane %v11008, 4
    %v11010 = vrot.slane %v10699, 5
    %v11011 = vsel %vm2200, %v11009, %v11010
    %v11012 = vrot.slane %v10940, 5
    %v11013 = vrot.slane %v11012, 4
    %v11014 = vrot.slane %v10700, 5
    %v11015 = vsel %vm2200, %v11013, %v11014
    %v11016 = vrot.slane %v10941, 5
    %v11017 = vrot.slane %v11016, 4
    %v11018 = vrot.slane %v10701, 5
    %v11019 = vsel %vm2200, %v11017, %v11018
    %v11020 = vrot.slane %v10942, 5
    %v11021 = vrot.slane %v11020, 4
    %v11022 = vrot.slane %v10702, 5
    %v11023 = vsel %vm2200, %v11021, %v11022
    %v11024 = vrot.slane %v10943, 5
    %v11025 = vrot.slane %v11024, 4
    %v11026 = vrot.slane %v10703, 5
    %v11027 = vsel %vm2200, %v11025, %v11026
    %v11028 = vrot.slane %v10944, 5
    %v11029 = vrot.slane %v11028, 4
    %v11030 = vrot.slane %v10704, 5
    %v11031 = vsel %vm2200, %v11029, %v11030
    %v11032 = vrot.slane %v10945, 5
    %v11033 = vrot.slane %v11032, 4
    %v11034 = vrot.slane %v10705, 5
    %v11035 = vsel %vm2200, %v11033, %v11034
    %v11036 = vrot.slane %v10946, 5
    %v11037 = vrot.slane %v11036, 4
    %v11038 = vrot.slane %v10706, 5
    %v11039 = vsel %vm2200, %v11037, %v11038
    %v11040 = vrot.slane %v10947, 5
    %v11041 = vrot.slane %v11040, 4
    %v11042 = vrot.slane %v10707, 5
    %v11043 = vsel %vm2200, %v11041, %v11042
    %s11044 = scalar_lea.vmem [#allocation3], 16
    %v11045 = vld [vmem:[%s11044] sm:$0xf]
    %v11046 = vld [vmem:[%s11044 + $0x8] sm:$0xf]
    %v11047 = vld [vmem:[%s11044 + $0x10] sm:$0xf]
    %v11048 = vld [vmem:[%s11044 + $0x18] sm:$0xf]
    %v11049 = vld [vmem:[%s11044 + $0x20] sm:$0xf]
    %v11050 = vld [vmem:[%s11044 + $0x28] sm:$0xf]
    %v11051 = vld [vmem:[%s11044 + $0x30] sm:$0xf]
    %v11052 = vld [vmem:[%s11044 + $0x38] sm:$0xf]
    %v11053 = vld [vmem:[%s11044 + $0x50] sm:$0xf]
    %v11054 = vld [vmem:[%s11044 + $0x58] sm:$0xf]
    %v11055 = vld [vmem:[%s11044 + $0x60] sm:$0xf]
    %v11056 = vld [vmem:[%s11044 + $0x68] sm:$0xf]
    %v11057 = vld [vmem:[%s11044 + $0x70] sm:$0xf]
    %v11058 = vld [vmem:[%s11044 + $0x78] sm:$0xf]
    %v11059 = vld [vmem:[%s11044 + $0x80] sm:$0xf]
    %v11060 = vld [vmem:[%s11044 + $0x88] sm:$0xf]
    %v11061 = vld [vmem:[%s11044 + $0x4] sm:$0x1]
    %v11062 = vld [vmem:[%s11044 + $0xc] sm:$0x1]
    %v11063 = vld [vmem:[%s11044 + $0x14] sm:$0x1]
    %v11064 = vld [vmem:[%s11044 + $0x1c] sm:$0x1]
    %v11065 = vld [vmem:[%s11044 + $0x24] sm:$0x1]
    %v11066 = vld [vmem:[%s11044 + $0x2c] sm:$0x1]
    %v11067 = vld [vmem:[%s11044 + $0x34] sm:$0x1]
    %v11068 = vld [vmem:[%s11044 + $0x3c] sm:$0x1]
    %v11069 = vld [vmem:[%s11044 + $0x54] sm:$0x1]
    %v11070 = vld [vmem:[%s11044 + $0x5c] sm:$0x1]
    %v11071 = vld [vmem:[%s11044 + $0x64] sm:$0x1]
    %v11072 = vld [vmem:[%s11044 + $0x6c] sm:$0x1]
    %v11073 = vld [vmem:[%s11044 + $0x74] sm:$0x1]
    %v11074 = vld [vmem:[%s11044 + $0x7c] sm:$0x1]
    %v11075 = vld [vmem:[%s11044 + $0x84] sm:$0x1]
    %v11076 = vld [vmem:[%s11044 + $0x8c] sm:$0x1]
    %v11078 = vshrl.u32 %v11045, 16
    %v11080 = vrot.slane %v11078, 4
    %v11081 = vshll.u32 %v11045, 16
    %v11083 = vrot.slane %v11081, 5
    %v11084 = vor.u32 %v11080, %v11083
    %v11085 = vrot.slane %v11084, 4
    %v11087 = vshll.u32 %v11061, 16
    %v11089 = vrot.slane %v11087, 5
    %v11090 = vsel %vm1301, %v11085, %v11089
    %v11092 = vshrl.u32 %v11046, 16
    %v11094 = vrot.slane %v11092, 4
    %v11095 = vshll.u32 %v11046, 16
    %v11097 = vrot.slane %v11095, 5
    %v11098 = vor.u32 %v11094, %v11097
    %v11099 = vrot.slane %v11098, 4
    %v11101 = vshll.u32 %v11062, 16
    %v11103 = vrot.slane %v11101, 5
    %v11104 = vsel %vm1301, %v11099, %v11103
    %v11106 = vshrl.u32 %v11047, 16
    %v11108 = vrot.slane %v11106, 4
    %v11109 = vshll.u32 %v11047, 16
    %v11111 = vrot.slane %v11109, 5
    %v11112 = vor.u32 %v11108, %v11111
    %v11113 = vrot.slane %v11112, 4
    %v11115 = vshll.u32 %v11063, 16
    %v11117 = vrot.slane %v11115, 5
    %v11118 = vsel %vm1301, %v11113, %v11117
    %v11120 = vshrl.u32 %v11048, 16
    %v11122 = vrot.slane %v11120, 4
    %v11123 = vshll.u32 %v11048, 16
    %v11125 = vrot.slane %v11123, 5
    %v11126 = vor.u32 %v11122, %v11125
    %v11127 = vrot.slane %v11126, 4
    %v11129 = vshll.u32 %v11064, 16
    %v11131 = vrot.slane %v11129, 5
    %v11132 = vsel %vm1301, %v11127, %v11131
    %v11134 = vshrl.u32 %v11049, 16
    %v11136 = vrot.slane %v11134, 4
    %v11137 = vshll.u32 %v11049, 16
    %v11139 = vrot.slane %v11137, 5
    %v11140 = vor.u32 %v11136, %v11139
    %v11141 = vrot.slane %v11140, 4
    %v11143 = vshll.u32 %v11065, 16
    %v11145 = vrot.slane %v11143, 5
    %v11146 = vsel %vm1301, %v11141, %v11145
    %v11148 = vshrl.u32 %v11050, 16
    %v11150 = vrot.slane %v11148, 4
    %v11151 = vshll.u32 %v11050, 16
    %v11153 = vrot.slane %v11151, 5
    %v11154 = vor.u32 %v11150, %v11153
    %v11155 = vrot.slane %v11154, 4
    %v11157 = vshll.u32 %v11066, 16
    %v11159 = vrot.slane %v11157, 5
    %v11160 = vsel %vm1301, %v11155, %v11159
    %v11162 = vshrl.u32 %v11051, 16
    %v11164 = vrot.slane %v11162, 4
    %v11165 = vshll.u32 %v11051, 16
    %v11167 = vrot.slane %v11165, 5
    %v11168 = vor.u32 %v11164, %v11167
    %v11169 = vrot.slane %v11168, 4
    %v11171 = vshll.u32 %v11067, 16
    %v11173 = vrot.slane %v11171, 5
    %v11174 = vsel %vm1301, %v11169, %v11173
    %v11176 = vshrl.u32 %v11052, 16
    %v11178 = vrot.slane %v11176, 4
    %v11179 = vshll.u32 %v11052, 16
    %v11181 = vrot.slane %v11179, 5
    %v11182 = vor.u32 %v11178, %v11181
    %v11183 = vrot.slane %v11182, 4
    %v11185 = vshll.u32 %v11068, 16
    %v11187 = vrot.slane %v11185, 5
    %v11188 = vsel %vm1301, %v11183, %v11187
    %v11190 = vshrl.u32 %v11053, 16
    %v11192 = vrot.slane %v11190, 4
    %v11193 = vshll.u32 %v11053, 16
    %v11195 = vrot.slane %v11193, 5
    %v11196 = vor.u32 %v11192, %v11195
    %v11197 = vrot.slane %v11196, 4
    %v11199 = vshll.u32 %v11069, 16
    %v11201 = vrot.slane %v11199, 5
    %v11202 = vsel %vm1301, %v11197, %v11201
    %v11204 = vshrl.u32 %v11054, 16
    %v11206 = vrot.slane %v11204, 4
    %v11207 = vshll.u32 %v11054, 16
    %v11209 = vrot.slane %v11207, 5
    %v11210 = vor.u32 %v11206, %v11209
    %v11211 = vrot.slane %v11210, 4
    %v11213 = vshll.u32 %v11070, 16
    %v11215 = vrot.slane %v11213, 5
    %v11216 = vsel %vm1301, %v11211, %v11215
    %v11218 = vshrl.u32 %v11055, 16
    %v11220 = vrot.slane %v11218, 4
    %v11221 = vshll.u32 %v11055, 16
    %v11223 = vrot.slane %v11221, 5
    %v11224 = vor.u32 %v11220, %v11223
    %v11225 = vrot.slane %v11224, 4
    %v11227 = vshll.u32 %v11071, 16
    %v11229 = vrot.slane %v11227, 5
    %v11230 = vsel %vm1301, %v11225, %v11229
    %v11232 = vshrl.u32 %v11056, 16
    %v11234 = vrot.slane %v11232, 4
    %v11235 = vshll.u32 %v11056, 16
    %v11237 = vrot.slane %v11235, 5
    %v11238 = vor.u32 %v11234, %v11237
    %v11239 = vrot.slane %v11238, 4
    %v11241 = vshll.u32 %v11072, 16
    %v11243 = vrot.slane %v11241, 5
    %v11244 = vsel %vm1301, %v11239, %v11243
    %v11246 = vshrl.u32 %v11057, 16
    %v11248 = vrot.slane %v11246, 4
    %v11249 = vshll.u32 %v11057, 16
    %v11251 = vrot.slane %v11249, 5
    %v11252 = vor.u32 %v11248, %v11251
    %v11253 = vrot.slane %v11252, 4
    %v11255 = vshll.u32 %v11073, 16
    %v11257 = vrot.slane %v11255, 5
    %v11258 = vsel %vm1301, %v11253, %v11257
    %v11260 = vshrl.u32 %v11058, 16
    %v11262 = vrot.slane %v11260, 4
    %v11263 = vshll.u32 %v11058, 16
    %v11265 = vrot.slane %v11263, 5
    %v11266 = vor.u32 %v11262, %v11265
    %v11267 = vrot.slane %v11266, 4
    %v11269 = vshll.u32 %v11074, 16
    %v11271 = vrot.slane %v11269, 5
    %v11272 = vsel %vm1301, %v11267, %v11271
    %v11274 = vshrl.u32 %v11059, 16
    %v11276 = vrot.slane %v11274, 4
    %v11277 = vshll.u32 %v11059, 16
    %v11279 = vrot.slane %v11277, 5
    %v11280 = vor.u32 %v11276, %v11279
    %v11281 = vrot.slane %v11280, 4
    %v11283 = vshll.u32 %v11075, 16
    %v11285 = vrot.slane %v11283, 5
    %v11286 = vsel %vm1301, %v11281, %v11285
    %v11288 = vshrl.u32 %v11060, 16
    %v11290 = vrot.slane %v11288, 4
    %v11291 = vshll.u32 %v11060, 16
    %v11293 = vrot.slane %v11291, 5
    %v11294 = vor.u32 %v11290, %v11293
    %v11295 = vrot.slane %v11294, 4
    %v11297 = vshll.u32 %v11076, 16
    %v11299 = vrot.slane %v11297, 5
    %v11300 = vsel %vm1301, %v11295, %v11299
    %v11301 = vld [vmem:[%s11044] sm:$0xe]
    %v11302 = vld [vmem:[%s11044 + $0x8] sm:$0xe]
    %v11303 = vld [vmem:[%s11044 + $0x10] sm:$0xe]
    %v11304 = vld [vmem:[%s11044 + $0x18] sm:$0xe]
    %v11305 = vld [vmem:[%s11044 + $0x20] sm:$0xe]
    %v11306 = vld [vmem:[%s11044 + $0x28] sm:$0xe]
    %v11307 = vld [vmem:[%s11044 + $0x30] sm:$0xe]
    %v11308 = vld [vmem:[%s11044 + $0x38] sm:$0xe]
    %v11309 = vld [vmem:[%s11044 + $0x50] sm:$0xe]
    %v11310 = vld [vmem:[%s11044 + $0x58] sm:$0xe]
    %v11311 = vld [vmem:[%s11044 + $0x60] sm:$0xe]
    %v11312 = vld [vmem:[%s11044 + $0x68] sm:$0xe]
    %v11313 = vld [vmem:[%s11044 + $0x70] sm:$0xe]
    %v11314 = vld [vmem:[%s11044 + $0x78] sm:$0xe]
    %v11315 = vld [vmem:[%s11044 + $0x80] sm:$0xe]
    %v11316 = vld [vmem:[%s11044 + $0x88] sm:$0xe]
    %v11349 = vrot.slane %v11301, 5
    %v11350 = vrot.slane %v11349, 4
    %v11351 = vrot.slane %v11061, 5
    %v11352 = vsel %vm2200, %v11350, %v11351
    %v11353 = vrot.slane %v11302, 5
    %v11354 = vrot.slane %v11353, 4
    %v11355 = vrot.slane %v11062, 5
    %v11356 = vsel %vm2200, %v11354, %v11355
    %v11357 = vrot.slane %v11303, 5
    %v11358 = vrot.slane %v11357, 4
    %v11359 = vrot.slane %v11063, 5
    %v11360 = vsel %vm2200, %v11358, %v11359
    %v11361 = vrot.slane %v11304, 5
    %v11362 = vrot.slane %v11361, 4
    %v11363 = vrot.slane %v11064, 5
    %v11364 = vsel %vm2200, %v11362, %v11363
    %v11365 = vrot.slane %v11305, 5
    %v11366 = vrot.slane %v11365, 4
    %v11367 = vrot.slane %v11065, 5
    %v11368 = vsel %vm2200, %v11366, %v11367
    %v11369 = vrot.slane %v11306, 5
    %v11370 = vrot.slane %v11369, 4
    %v11371 = vrot.slane %v11066, 5
    %v11372 = vsel %vm2200, %v11370, %v11371
    %v11373 = vrot.slane %v11307, 5
    %v11374 = vrot.slane %v11373, 4
    %v11375 = vrot.slane %v11067, 5
    %v11376 = vsel %vm2200, %v11374, %v11375
    %v11377 = vrot.slane %v11308, 5
    %v11378 = vrot.slane %v11377, 4
    %v11379 = vrot.slane %v11068, 5
    %v11380 = vsel %vm2200, %v11378, %v11379
    %v11381 = vrot.slane %v11309, 5
    %v11382 = vrot.slane %v11381, 4
    %v11383 = vrot.slane %v11069, 5
    %v11384 = vsel %vm2200, %v11382, %v11383
    %v11385 = vrot.slane %v11310, 5
    %v11386 = vrot.slane %v11385, 4
    %v11387 = vrot.slane %v11070, 5
    %v11388 = vsel %vm2200, %v11386, %v11387
    %v11389 = vrot.slane %v11311, 5
    %v11390 = vrot.slane %v11389, 4
    %v11391 = vrot.slane %v11071, 5
    %v11392 = vsel %vm2200, %v11390, %v11391
    %v11393 = vrot.slane %v11312, 5
    %v11394 = vrot.slane %v11393, 4
    %v11395 = vrot.slane %v11072, 5
    %v11396 = vsel %vm2200, %v11394, %v11395
    %v11397 = vrot.slane %v11313, 5
    %v11398 = vrot.slane %v11397, 4
    %v11399 = vrot.slane %v11073, 5
    %v11400 = vsel %vm2200, %v11398, %v11399
    %v11401 = vrot.slane %v11314, 5
    %v11402 = vrot.slane %v11401, 4
    %v11403 = vrot.slane %v11074, 5
    %v11404 = vsel %vm2200, %v11402, %v11403
    %v11405 = vrot.slane %v11315, 5
    %v11406 = vrot.slane %v11405, 4
    %v11407 = vrot.slane %v11075, 5
    %v11408 = vsel %vm2200, %v11406, %v11407
    %v11409 = vrot.slane %v11316, 5
    %v11410 = vrot.slane %v11409, 4
    %v11411 = vrot.slane %v11076, 5
    %v11412 = vsel %vm2200, %v11410, %v11411
    %v11429 = vunpack.c.l.b16 %v10308
    %v11430 = vunpack.c.l.b16 %v10309
    %v11431 = vunpack.c.l.b16 %v10310
    %v11432 = vunpack.c.l.b16 %v10311
    %v11433 = vunpack.c.l.b16 %v10312
    %v11434 = vunpack.c.l.b16 %v10313
    %v11435 = vunpack.c.l.b16 %v10314
    %v11436 = vunpack.c.l.b16 %v10315
    %v11437 = vunpack.c.l.b16 %v10316
    %v11438 = vunpack.c.l.b16 %v10317
    %v11439 = vunpack.c.l.b16 %v10318
    %v11440 = vunpack.c.l.b16 %v10319
    %v11441 = vunpack.c.l.b16 %v10320
    %v11442 = vunpack.c.l.b16 %v10321
    %v11443 = vunpack.c.l.b16 %v10322
    %v11444 = vunpack.c.l.b16 %v10323
    %v11445 = vpack.c.b16 %v11430, %v11429
    %v11446 = vpack.c.b16 %v11432, %v11431
    %v11447 = vpack.c.b16 %v11434, %v11433
    %v11448 = vpack.c.b16 %v11436, %v11435
    %v11449 = vpack.c.b16 %v11438, %v11437
    %v11450 = vpack.c.b16 %v11440, %v11439
    %v11451 = vpack.c.b16 %v11442, %v11441
    %v11452 = vpack.c.b16 %v11444, %v11443
    %v11453 = vunpack.c.l.b16 %v10353
    %v11454 = vunpack.c.l.b16 %v10367
    %v11455 = vunpack.c.l.b16 %v10381
    %v11456 = vunpack.c.l.b16 %v10395
    %v11457 = vunpack.c.l.b16 %v10409
    %v11458 = vunpack.c.l.b16 %v10423
    %v11459 = vunpack.c.l.b16 %v10437
    %v11460 = vunpack.c.l.b16 %v10451
    %v11461 = vunpack.c.l.b16 %v10465
    %v11462 = vunpack.c.l.b16 %v10479
    %v11463 = vunpack.c.l.b16 %v10493
    %v11464 = vunpack.c.l.b16 %v10507
    %v11465 = vunpack.c.l.b16 %v10521
    %v11466 = vunpack.c.l.b16 %v10535
    %v11467 = vunpack.c.l.b16 %v10549
    %v11468 = vunpack.c.l.b16 %v10563
    %v11469 = vpack.c.b16 %v11454, %v11453
    %v11470 = vpack.c.b16 %v11456, %v11455
    %v11471 = vpack.c.b16 %v11458, %v11457
    %v11472 = vpack.c.b16 %v11460, %v11459
    %v11473 = vpack.c.b16 %v11462, %v11461
    %v11474 = vpack.c.b16 %v11464, %v11463
    %v11475 = vpack.c.b16 %v11466, %v11465
    %v11476 = vpack.c.b16 %v11468, %v11467
    %11477 = vrot.lane.b32.xlu0 %v11469, 32
    %v11478 = vpop.permute.xlu0 %11477
    %11479 = vrot.lane.b32.xlu0 %v11470, 32
    %v11480 = vpop.permute.xlu0 %11479
    %11481 = vrot.lane.b32.xlu0 %v11471, 32
    %v11482 = vpop.permute.xlu0 %11481
    %11483 = vrot.lane.b32.xlu0 %v11472, 32
    %v11484 = vpop.permute.xlu0 %11483
    %11485 = vrot.lane.b32.xlu0 %v11473, 32
    %v11486 = vpop.permute.xlu0 %11485
    %11487 = vrot.lane.b32.xlu0 %v11474, 32
    %v11488 = vpop.permute.xlu0 %11487
    %11489 = vrot.lane.b32.xlu0 %v11475, 32
    %v11490 = vpop.permute.xlu0 %11489
    %11491 = vrot.lane.b32.xlu0 %v11476, 32
    %v11492 = vpop.permute.xlu0 %11491
    %v11493 = vunpack.c.l.b16 %v10615
    %v11494 = vunpack.c.l.b16 %v10619
    %v11495 = vunpack.c.l.b16 %v10623
    %v11496 = vunpack.c.l.b16 %v10627
    %v11497 = vunpack.c.l.b16 %v10631
    %v11498 = vunpack.c.l.b16 %v10635
    %v11499 = vunpack.c.l.b16 %v10639
    %v11500 = vunpack.c.l.b16 %v10643
    %v11501 = vunpack.c.l.b16 %v10647
    %v11502 = vunpack.c.l.b16 %v10651
    %v11503 = vunpack.c.l.b16 %v10655
    %v11504 = vunpack.c.l.b16 %v10659
    %v11505 = vunpack.c.l.b16 %v10663
    %v11506 = vunpack.c.l.b16 %v10667
    %v11507 = vunpack.c.l.b16 %v10671
    %v11508 = vunpack.c.l.b16 %v10675
    %v11509 = vpack.c.b16 %v11494, %v11493
    %v11510 = vpack.c.b16 %v11496, %v11495
    %v11511 = vpack.c.b16 %v11498, %v11497
    %v11512 = vpack.c.b16 %v11500, %v11499
    %v11513 = vpack.c.b16 %v11502, %v11501
    %v11514 = vpack.c.b16 %v11504, %v11503
    %v11515 = vpack.c.b16 %v11506, %v11505
    %v11516 = vpack.c.b16 %v11508, %v11507
    %11517 = vrot.lane.b32.xlu0 %v11509, 64
    %v11518 = vpop.permute.xlu0 %11517
    %11519 = vrot.lane.b32.xlu0 %v11510, 64
    %v11520 = vpop.permute.xlu0 %11519
    %11521 = vrot.lane.b32.xlu0 %v11511, 64
    %v11522 = vpop.permute.xlu0 %11521
    %11523 = vrot.lane.b32.xlu0 %v11512, 64
    %v11524 = vpop.permute.xlu0 %11523
    %11525 = vrot.lane.b32.xlu0 %v11513, 64
    %v11526 = vpop.permute.xlu0 %11525
    %11527 = vrot.lane.b32.xlu0 %v11514, 64
    %v11528 = vpop.permute.xlu0 %11527
    %11529 = vrot.lane.b32.xlu0 %v11515, 64
    %v11530 = vpop.permute.xlu0 %11529
    %11531 = vrot.lane.b32.xlu0 %v11516, 64
    %v11532 = vpop.permute.xlu0 %11531
    %v11549 = vunpack.c.l.b16 %v10676
    %v11550 = vunpack.c.l.b16 %v10677
    %v11551 = vunpack.c.l.b16 %v10678
    %v11552 = vunpack.c.l.b16 %v10679
    %v11553 = vunpack.c.l.b16 %v10680
    %v11554 = vunpack.c.l.b16 %v10681
    %v11555 = vunpack.c.l.b16 %v10682
    %v11556 = vunpack.c.l.b16 %v10683
    %v11557 = vunpack.c.l.b16 %v10684
    %v11558 = vunpack.c.l.b16 %v10685
    %v11559 = vunpack.c.l.b16 %v10686
    %v11560 = vunpack.c.l.b16 %v10687
    %v11561 = vunpack.c.l.b16 %v10688
    %v11562 = vunpack.c.l.b16 %v10689
    %v11563 = vunpack.c.l.b16 %v10690
    %v11564 = vunpack.c.l.b16 %v10691
    %v11565 = vpack.c.b16 %v11550, %v11549
    %v11566 = vpack.c.b16 %v11552, %v11551
    %v11567 = vpack.c.b16 %v11554, %v11553
    %v11568 = vpack.c.b16 %v11556, %v11555
    %v11569 = vpack.c.b16 %v11558, %v11557
    %v11570 = vpack.c.b16 %v11560, %v11559
    %v11571 = vpack.c.b16 %v11562, %v11561
    %v11572 = vpack.c.b16 %v11564, %v11563
    %11573 = vrot.lane.b32.xlu0 %v11565, 96
    %v11574 = vpop.permute.xlu0 %11573
    %11575 = vrot.lane.b32.xlu0 %v11566, 96
    %v11576 = vpop.permute.xlu0 %11575
    %11577 = vrot.lane.b32.xlu0 %v11567, 96
    %v11578 = vpop.permute.xlu0 %11577
    %11579 = vrot.lane.b32.xlu0 %v11568, 96
    %v11580 = vpop.permute.xlu0 %11579
    %11581 = vrot.lane.b32.xlu0 %v11569, 96
    %v11582 = vpop.permute.xlu0 %11581
    %11583 = vrot.lane.b32.xlu0 %v11570, 96
    %v11584 = vpop.permute.xlu0 %11583
    %11585 = vrot.lane.b32.xlu0 %v11571, 96
    %v11586 = vpop.permute.xlu0 %11585
    %11587 = vrot.lane.b32.xlu0 %v11572, 96
    %v11588 = vpop.permute.xlu0 %11587
    %v11589 = vunpack.c.l.b16 %v10721
    %v11590 = vunpack.c.l.b16 %v10735
    %v11591 = vunpack.c.l.b16 %v10749
    %v11592 = vunpack.c.l.b16 %v10763
    %v11593 = vunpack.c.l.b16 %v10777
    %v11594 = vunpack.c.l.b16 %v10791
    %v11595 = vunpack.c.l.b16 %v10805
    %v11596 = vunpack.c.l.b16 %v10819
    %v11597 = vunpack.c.l.b16 %v10833
    %v11598 = vunpack.c.l.b16 %v10847
    %v11599 = vunpack.c.l.b16 %v10861
    %v11600 = vunpack.c.l.b16 %v10875
    %v11601 = vunpack.c.l.b16 %v10889
    %v11602 = vunpack.c.l.b16 %v10903
    %v11603 = vunpack.c.l.b16 %v10917
    %v11604 = vunpack.c.l.b16 %v10931
    %v11605 = vpack.c.b16 %v11590, %v11589
    %v11606 = vpack.c.b16 %v11592, %v11591
    %v11607 = vpack.c.b16 %v11594, %v11593
    %v11608 = vpack.c.b16 %v11596, %v11595
    %v11609 = vpack.c.b16 %v11598, %v11597
    %v11610 = vpack.c.b16 %v11600, %v11599
    %v11611 = vpack.c.b16 %v11602, %v11601
    %v11612 = vpack.c.b16 %v11604, %v11603
    %v11613 = vunpack.c.l.b16 %v10983
    %v11614 = vunpack.c.l.b16 %v10987
    %v11615 = vunpack.c.l.b16 %v10991
    %v11616 = vunpack.c.l.b16 %v10995
    %v11617 = vunpack.c.l.b16 %v10999
    %v11618 = vunpack.c.l.b16 %v11003
    %v11619 = vunpack.c.l.b16 %v11007
    %v11620 = vunpack.c.l.b16 %v11011
    %v11621 = vunpack.c.l.b16 %v11015
    %v11622 = vunpack.c.l.b16 %v11019
    %v11623 = vunpack.c.l.b16 %v11023
    %v11624 = vunpack.c.l.b16 %v11027
    %v11625 = vunpack.c.l.b16 %v11031
    %v11626 = vunpack.c.l.b16 %v11035
    %v11627 = vunpack.c.l.b16 %v11039
    %v11628 = vunpack.c.l.b16 %v11043
    %v11629 = vpack.c.b16 %v11614, %v11613
    %v11630 = vpack.c.b16 %v11616, %v11615
    %v11631 = vpack.c.b16 %v11618, %v11617
    %v11632 = vpack.c.b16 %v11620, %v11619
    %v11633 = vpack.c.b16 %v11622, %v11621
    %v11634 = vpack.c.b16 %v11624, %v11623
    %v11635 = vpack.c.b16 %v11626, %v11625
    %v11636 = vpack.c.b16 %v11628, %v11627
    %11637 = vrot.lane.b32.xlu0 %v11629, 32
    %v11638 = vpop.permute.xlu0 %11637
    %11639 = vrot.lane.b32.xlu0 %v11630, 32
    %v11640 = vpop.permute.xlu0 %11639
    %11641 = vrot.lane.b32.xlu0 %v11631, 32
    %v11642 = vpop.permute.xlu0 %11641
    %11643 = vrot.lane.b32.xlu0 %v11632, 32
    %v11644 = vpop.permute.xlu0 %11643
    %11645 = vrot.lane.b32.xlu0 %v11633, 32
    %v11646 = vpop.permute.xlu0 %11645
    %11647 = vrot.lane.b32.xlu0 %v11634, 32
    %v11648 = vpop.permute.xlu0 %11647
    %11649 = vrot.lane.b32.xlu0 %v11635, 32
    %v11650 = vpop.permute.xlu0 %11649
    %11651 = vrot.lane.b32.xlu0 %v11636, 32
    %v11652 = vpop.permute.xlu0 %11651
    %v11669 = vunpack.c.l.b16 %v11045
    %v11670 = vunpack.c.l.b16 %v11046
    %v11671 = vunpack.c.l.b16 %v11047
    %v11672 = vunpack.c.l.b16 %v11048
    %v11673 = vunpack.c.l.b16 %v11049
    %v11674 = vunpack.c.l.b16 %v11050
    %v11675 = vunpack.c.l.b16 %v11051
    %v11676 = vunpack.c.l.b16 %v11052
    %v11677 = vunpack.c.l.b16 %v11053
    %v11678 = vunpack.c.l.b16 %v11054
    %v11679 = vunpack.c.l.b16 %v11055
    %v11680 = vunpack.c.l.b16 %v11056
    %v11681 = vunpack.c.l.b16 %v11057
    %v11682 = vunpack.c.l.b16 %v11058
    %v11683 = vunpack.c.l.b16 %v11059
    %v11684 = vunpack.c.l.b16 %v11060
    %v11685 = vpack.c.b16 %v11670, %v11669
    %v11686 = vpack.c.b16 %v11672, %v11671
    %v11687 = vpack.c.b16 %v11674, %v11673
    %v11688 = vpack.c.b16 %v11676, %v11675
    %v11689 = vpack.c.b16 %v11678, %v11677
    %v11690 = vpack.c.b16 %v11680, %v11679
    %v11691 = vpack.c.b16 %v11682, %v11681
    %v11692 = vpack.c.b16 %v11684, %v11683
    %11693 = vrot.lane.b32.xlu0 %v11685, 64
    %v11694 = vpop.permute.xlu0 %11693
    %11695 = vrot.lane.b32.xlu0 %v11686, 64
    %v11696 = vpop.permute.xlu0 %11695
    %11697 = vrot.lane.b32.xlu0 %v11687, 64
    %v11698 = vpop.permute.xlu0 %11697
    %11699 = vrot.lane.b32.xlu0 %v11688, 64
    %v11700 = vpop.permute.xlu0 %11699
    %11701 = vrot.lane.b32.xlu0 %v11689, 64
    %v11702 = vpop.permute.xlu0 %11701
    %11703 = vrot.lane.b32.xlu0 %v11690, 64
    %v11704 = vpop.permute.xlu0 %11703
    %11705 = vrot.lane.b32.xlu0 %v11691, 64
    %v11706 = vpop.permute.xlu0 %11705
    %11707 = vrot.lane.b32.xlu0 %v11692, 64
    %v11708 = vpop.permute.xlu0 %11707
    %v11709 = vunpack.c.l.b16 %v11090
    %v11710 = vunpack.c.l.b16 %v11104
    %v11711 = vunpack.c.l.b16 %v11118
    %v11712 = vunpack.c.l.b16 %v11132
    %v11713 = vunpack.c.l.b16 %v11146
    %v11714 = vunpack.c.l.b16 %v11160
    %v11715 = vunpack.c.l.b16 %v11174
    %v11716 = vunpack.c.l.b16 %v11188
    %v11717 = vunpack.c.l.b16 %v11202
    %v11718 = vunpack.c.l.b16 %v11216
    %v11719 = vunpack.c.l.b16 %v11230
    %v11720 = vunpack.c.l.b16 %v11244
    %v11721 = vunpack.c.l.b16 %v11258
    %v11722 = vunpack.c.l.b16 %v11272
    %v11723 = vunpack.c.l.b16 %v11286
    %v11724 = vunpack.c.l.b16 %v11300
    %v11725 = vpack.c.b16 %v11710, %v11709
    %v11726 = vpack.c.b16 %v11712, %v11711
    %v11727 = vpack.c.b16 %v11714, %v11713
    %v11728 = vpack.c.b16 %v11716, %v11715
    %v11729 = vpack.c.b16 %v11718, %v11717
    %v11730 = vpack.c.b16 %v11720, %v11719
    %v11731 = vpack.c.b16 %v11722, %v11721
    %v11732 = vpack.c.b16 %v11724, %v11723
    %11733 = vrot.lane.b32.xlu0 %v11725, 96
    %v11734 = vpop.permute.xlu0 %11733
    %11735 = vrot.lane.b32.xlu0 %v11726, 96
    %v11736 = vpop.permute.xlu0 %11735
    %11737 = vrot.lane.b32.xlu0 %v11727, 96
    %v11738 = vpop.permute.xlu0 %11737
    %11739 = vrot.lane.b32.xlu0 %v11728, 96
    %v11740 = vpop.permute.xlu0 %11739
    %11741 = vrot.lane.b32.xlu0 %v11729, 96
    %v11742 = vpop.permute.xlu0 %11741
    %11743 = vrot.lane.b32.xlu0 %v11730, 96
    %v11744 = vpop.permute.xlu0 %11743
    %11745 = vrot.lane.b32.xlu0 %v11731, 96
    %v11746 = vpop.permute.xlu0 %11745
    %11747 = vrot.lane.b32.xlu0 %v11732, 96
    %v11748 = vpop.permute.xlu0 %11747
    %v11749 = vunpack.c.l.b16 %v11352
    %v11750 = vunpack.c.l.b16 %v11356
    %v11751 = vunpack.c.l.b16 %v11360
    %v11752 = vunpack.c.l.b16 %v11364
    %v11753 = vunpack.c.l.b16 %v11368
    %v11754 = vunpack.c.l.b16 %v11372
    %v11755 = vunpack.c.l.b16 %v11376
    %v11756 = vunpack.c.l.b16 %v11380
    %v11757 = vunpack.c.l.b16 %v11384
    %v11758 = vunpack.c.l.b16 %v11388
    %v11759 = vunpack.c.l.b16 %v11392
    %v11760 = vunpack.c.l.b16 %v11396
    %v11761 = vunpack.c.l.b16 %v11400
    %v11762 = vunpack.c.l.b16 %v11404
    %v11763 = vunpack.c.l.b16 %v11408
    %v11764 = vunpack.c.l.b16 %v11412
    %v11765 = vpack.c.b16 %v11750, %v11749
    %v11766 = vpack.c.b16 %v11752, %v11751
    %v11767 = vpack.c.b16 %v11754, %v11753
    %v11768 = vpack.c.b16 %v11756, %v11755
    %v11769 = vpack.c.b16 %v11758, %v11757
    %v11770 = vpack.c.b16 %v11760, %v11759
    %v11771 = vpack.c.b16 %v11762, %v11761
    %v11772 = vpack.c.b16 %v11764, %v11763
    %v11775 = vsel %vm7138, %v11445, %v11478
    %v11778 = vsel %vm7138, %v11446, %v11480
    %v11781 = vsel %vm7138, %v11447, %v11482
    %v11784 = vsel %vm7138, %v11448, %v11484
    %v11787 = vsel %vm7138, %v11449, %v11486
    %v11790 = vsel %vm7138, %v11450, %v11488
    %v11793 = vsel %vm7138, %v11451, %v11490
    %v11796 = vsel %vm7138, %v11452, %v11492
    %vm11797 = vcmask 523264
    %v11799 = vsel %vm11797, %v11775, %v11518
    %v11801 = vsel %vm11797, %v11778, %v11520
    %v11803 = vsel %vm11797, %v11781, %v11522
    %v11805 = vsel %vm11797, %v11784, %v11524
    %v11807 = vsel %vm11797, %v11787, %v11526
    %v11809 = vsel %vm11797, %v11790, %v11528
    %v11811 = vsel %vm11797, %v11793, %v11530
    %v11813 = vsel %vm11797, %v11796, %v11532
    %vm11814 = vcmask 785408
    %v11816 = vsel %vm11814, %v11799, %v11574
    %v11819 = vsel %vm11814, %v11801, %v11576
    %v11822 = vsel %vm11814, %v11803, %v11578
    %v11825 = vsel %vm11814, %v11805, %v11580
    %v11828 = vsel %vm11814, %v11807, %v11582
    %v11831 = vsel %vm11814, %v11809, %v11584
    %v11834 = vsel %vm11814, %v11811, %v11586
    %v11837 = vsel %vm11814, %v11813, %v11588
    %v11841 = vsel %vm7138, %v11605, %v11638
    %v11844 = vsel %vm7138, %v11606, %v11640
    %v11847 = vsel %vm7138, %v11607, %v11642
    %v11850 = vsel %vm7138, %v11608, %v11644
    %v11853 = vsel %vm7138, %v11609, %v11646
    %v11856 = vsel %vm7138, %v11610, %v11648
    %v11859 = vsel %vm7138, %v11611, %v11650
    %v11862 = vsel %vm7138, %v11612, %v11652
    %v11864 = vsel %vm11797, %v11841, %v11694
    %v11866 = vsel %vm11797, %v11844, %v11696
    %v11868 = vsel %vm11797, %v11847, %v11698
    %v11870 = vsel %vm11797, %v11850, %v11700
    %v11872 = vsel %vm11797, %v11853, %v11702
    %v11874 = vsel %vm11797, %v11856, %v11704
    %v11876 = vsel %vm11797, %v11859, %v11706
    %v11878 = vsel %vm11797, %v11862, %v11708
    %v11880 = vsel %vm11814, %v11864, %v11734
    %v11883 = vsel %vm11814, %v11866, %v11736
    %v11886 = vsel %vm11814, %v11868, %v11738
    %v11889 = vsel %vm11814, %v11870, %v11740
    %v11892 = vsel %vm11814, %v11872, %v11742
    %v11895 = vsel %vm11814, %v11874, %v11744
    %v11898 = vsel %vm11814, %v11876, %v11746
    %v11901 = vsel %vm11814, %v11878, %v11748
    %v11903 = vld [vmem:[%s4] sm:$0xf]
    %v11904 = vld [vmem:[%s4 + $0x4] sm:$0xf]
    %v11905 = vld [vmem:[%s4 + $0x8] sm:$0xf]
    %v11906 = vld [vmem:[%s4 + $0xc] sm:$0xf]
    %v11907 = vld [vmem:[%s4 + $0x10] sm:$0xf]
    %v11908 = vld [vmem:[%s4 + $0x14] sm:$0xf]
    %v11909 = vld [vmem:[%s4 + $0x18] sm:$0xf]
    %v11910 = vld [vmem:[%s4 + $0x1c] sm:$0xf]
    %v11911 = vld [vmem:[%s4 + $0x20] sm:$0xf]
    %v11912 = vld [vmem:[%s4 + $0x24] sm:$0xf]
    %v11913 = vld [vmem:[%s4 + $0x28] sm:$0xf]
    %v11914 = vld [vmem:[%s4 + $0x2c] sm:$0xf]
    %v11915 = vld [vmem:[%s4 + $0x30] sm:$0xf]
    %v11916 = vld [vmem:[%s4 + $0x34] sm:$0xf]
    %v11917 = vld [vmem:[%s4 + $0x38] sm:$0xf]
    %v11918 = vld [vmem:[%s4 + $0x3c] sm:$0xf]
    %v11919 = vld [vmem:[%s4 + $0x40] sm:$0xf]
    %v11920 = vld [vmem:[%s4 + $0x44] sm:$0xf]
    %v11921 = vld [vmem:[%s4 + $0x48] sm:$0xf]
    %v11922 = vld [vmem:[%s4 + $0x4c] sm:$0xf]
    %v11923 = vld [vmem:[%s4 + $0x50] sm:$0xf]
    %v11924 = vld [vmem:[%s4 + $0x54] sm:$0xf]
    %v11925 = vld [vmem:[%s4 + $0x58] sm:$0xf]
    %v11926 = vld [vmem:[%s4 + $0x5c] sm:$0xf]
    %v11927 = vld [vmem:[%s4 + $0x60] sm:$0xf]
    %v11928 = vld [vmem:[%s4 + $0x64] sm:$0xf]
    %v11929 = vld [vmem:[%s4 + $0x68] sm:$0xf]
    %v11930 = vld [vmem:[%s4 + $0x6c] sm:$0xf]
    %v11931 = vld [vmem:[%s4 + $0x70] sm:$0xf]
    %v11932 = vld [vmem:[%s4 + $0x74] sm:$0xf]
    %v11933 = vld [vmem:[%s4 + $0x78] sm:$0xf]
    %v11934 = vld [vmem:[%s4 + $0x7c] sm:$0xf]
    %v11935 = vld [vmem:[%s4 + $0x80] sm:$0xf]
    %v11936 = vld [vmem:[%s4 + $0x84] sm:$0xf]
    %v11937 = vld [vmem:[%s4 + $0x88] sm:$0xf]
    %v11938 = vld [vmem:[%s4 + $0x8c] sm:$0xf]
    %v11975 = vunpack.c.l.b16 %v11903
    %v11976 = vunpack.c.l.b16 %v11904
    %v11977 = vunpack.c.l.b16 %v11905
    %v11978 = vunpack.c.l.b16 %v11906
    %v11979 = vunpack.c.l.b16 %v11907
    %v11980 = vunpack.c.l.b16 %v11908
    %v11981 = vunpack.c.l.b16 %v11909
    %v11982 = vunpack.c.l.b16 %v11910
    %v11983 = vunpack.c.l.b16 %v11911
    %v11984 = vunpack.c.l.b16 %v11912
    %v11985 = vunpack.c.l.b16 %v11913
    %v11986 = vunpack.c.l.b16 %v11914
    %v11987 = vunpack.c.l.b16 %v11915
    %v11988 = vunpack.c.l.b16 %v11916
    %v11989 = vunpack.c.l.b16 %v11917
    %v11990 = vunpack.c.l.b16 %v11918
    %v11991 = vunpack.c.l.b16 %v11919
    %v11992 = vunpack.c.l.b16 %v11920
    %v11993 = vunpack.c.l.b16 %v11921
    %v11994 = vunpack.c.l.b16 %v11922
    %v11995 = vunpack.c.l.b16 %v11923
    %v11996 = vunpack.c.l.b16 %v11924
    %v11997 = vunpack.c.l.b16 %v11925
    %v11998 = vunpack.c.l.b16 %v11926
    %v11999 = vunpack.c.l.b16 %v11927
    %v12000 = vunpack.c.l.b16 %v11928
    %v12001 = vunpack.c.l.b16 %v11929
    %v12002 = vunpack.c.l.b16 %v11930
    %v12003 = vunpack.c.l.b16 %v11931
    %v12004 = vunpack.c.l.b16 %v11932
    %v12005 = vunpack.c.l.b16 %v11933
    %v12006 = vunpack.c.l.b16 %v11934
    %v12007 = vunpack.c.l.b16 %v11935
    %v12008 = vunpack.c.l.b16 %v11936
    %v12009 = vunpack.c.l.b16 %v11937
    %v12010 = vunpack.c.l.b16 %v11938
    %v12011 = vpack.c.b16 %v11976, %v11975
    %v12012 = vpack.c.b16 %v11978, %v11977
    %v12013 = vpack.c.b16 %v11980, %v11979
    %v12014 = vpack.c.b16 %v11982, %v11981
    %v12015 = vpack.c.b16 %v11984, %v11983
    %v12016 = vpack.c.b16 %v11986, %v11985
    %v12017 = vpack.c.b16 %v11988, %v11987
    %v12018 = vpack.c.b16 %v11990, %v11989
    %v12019 = vpack.c.b16 %v11992, %v11991
    %v12020 = vpack.c.b16 %v11994, %v11993
    %v12021 = vpack.c.b16 %v11996, %v11995
    %v12022 = vpack.c.b16 %v11998, %v11997
    %v12023 = vpack.c.b16 %v12000, %v11999
    %v12024 = vpack.c.b16 %v12002, %v12001
    %v12025 = vpack.c.b16 %v12004, %v12003
    %v12026 = vpack.c.b16 %v12006, %v12005
    %v12027 = vpack.c.b16 %v12008, %v12007
    %v12028 = vpack.c.b16 %v12010, %v12009
    %v12048 = vsel %vm7138, %v11765, 0
    %v12051 = vsel %vm7138, %v11766, 0
    %v12054 = vsel %vm7138, %v11767, 0
    %v12057 = vsel %vm7138, %v11768, 0
    %v12060 = vsel %vm7138, %v11769, 0
    %v12063 = vsel %vm7138, %v11770, 0
    %v12066 = vsel %vm7138, %v11771, 0
    %v12069 = vsel %vm7138, %v11772, 0
    %12071 = vmatpush.bf16.msra.mxu0 %v12018
    %12072 = vmatpush.bf16.msra.mxu0 %v12017
    %12073 = vmatpush.bf16.msra.mxu0 %v12016
    %12074 = vmatpush.bf16.msra.mxu0 %v12015
    %12075 = vmatpush.bf16.msra.mxu0 %v12014
    %12076 = vmatpush.bf16.msra.mxu0 %v12013
    %12077 = vmatpush.bf16.msra.mxu0 %v12012
    %12078 = vmatpush.bf16.msra.mxu0 %v12011
    %12079 = vmatmul.bf16.gmra.mxu0 %v11816
    %v12080 = vpop.f32.mrf.mxu0
    %v12081 = vadd.f32 0.0, %v12080
    %v12082 = vpop.f32.mrf.mxu0
    %v12083 = vadd.f32 0.0, %v12082
    %12084 = vmatmul.bf16.gmra.mxu0 %v11819
    %v12085 = vpop.f32.mrf.mxu0
    %v12086 = vadd.f32 0.0, %v12085
    %v12087 = vpop.f32.mrf.mxu0
    %v12088 = vadd.f32 0.0, %v12087
    %12089 = vmatmul.bf16.gmra.mxu0 %v11822
    %v12090 = vpop.f32.mrf.mxu0
    %v12091 = vadd.f32 0.0, %v12090
    %v12092 = vpop.f32.mrf.mxu0
    %v12093 = vadd.f32 0.0, %v12092
    %12094 = vmatmul.bf16.gmra.mxu0 %v11825
    %v12095 = vpop.f32.mrf.mxu0
    %v12096 = vadd.f32 0.0, %v12095
    %v12097 = vpop.f32.mrf.mxu0
    %v12098 = vadd.f32 0.0, %v12097
    %12099 = vmatmul.bf16.gmra.mxu0 %v11828
    %v12100 = vpop.f32.mrf.mxu0
    %v12101 = vadd.f32 0.0, %v12100
    %v12102 = vpop.f32.mrf.mxu0
    %v12103 = vadd.f32 0.0, %v12102
    %12104 = vmatmul.bf16.gmra.mxu0 %v11831
    %v12105 = vpop.f32.mrf.mxu0
    %v12106 = vadd.f32 0.0, %v12105
    %v12107 = vpop.f32.mrf.mxu0
    %v12108 = vadd.f32 0.0, %v12107
    %12109 = vmatmul.bf16.gmra.mxu0 %v11834
    %v12110 = vpop.f32.mrf.mxu0
    %v12111 = vadd.f32 0.0, %v12110
    %v12112 = vpop.f32.mrf.mxu0
    %v12113 = vadd.f32 0.0, %v12112
    %12114 = vmatmul.bf16.gmra.mxu0 %v11837
    %v12115 = vpop.f32.mrf.mxu0
    %v12116 = vadd.f32 0.0, %v12115
    %v12117 = vpop.f32.mrf.mxu0
    %v12118 = vadd.f32 0.0, %v12117
    %12119 = vdwg.mxu0
    %12120 = vmatpush.bf16.msra.mxu0 %v12026
    %12121 = vmatpush.bf16.msra.mxu0 %v12025
    %12122 = vmatpush.bf16.msra.mxu0 %v12024
    %12123 = vmatpush.bf16.msra.mxu0 %v12023
    %12124 = vmatpush.bf16.msra.mxu0 %v12022
    %12125 = vmatpush.bf16.msra.mxu0 %v12021
    %12126 = vmatpush.bf16.msra.mxu0 %v12020
    %12127 = vmatpush.bf16.msra.mxu0 %v12019
    %12128 = vmatmul.bf16.gmra.mxu0 %v11880
    %v12129 = vpop.f32.mrf.mxu0
    %v12130 = vadd.f32 %v12081, %v12129
    %v12131 = vpop.f32.mrf.mxu0
    %v12132 = vadd.f32 %v12083, %v12131
    %12133 = vmatmul.bf16.gmra.mxu0 %v11883
    %v12134 = vpop.f32.mrf.mxu0
    %v12135 = vadd.f32 %v12086, %v12134
    %v12136 = vpop.f32.mrf.mxu0
    %v12137 = vadd.f32 %v12088, %v12136
    %12138 = vmatmul.bf16.gmra.mxu0 %v11886
    %v12139 = vpop.f32.mrf.mxu0
    %v12140 = vadd.f32 %v12091, %v12139
    %v12141 = vpop.f32.mrf.mxu0
    %v12142 = vadd.f32 %v12093, %v12141
    %12143 = vmatmul.bf16.gmra.mxu0 %v11889
    %v12144 = vpop.f32.mrf.mxu0
    %v12145 = vadd.f32 %v12096, %v12144
    %v12146 = vpop.f32.mrf.mxu0
    %v12147 = vadd.f32 %v12098, %v12146
    %12148 = vmatmul.bf16.gmra.mxu0 %v11892
    %v12149 = vpop.f32.mrf.mxu0
    %v12150 = vadd.f32 %v12101, %v12149
    %v12151 = vpop.f32.mrf.mxu0
    %v12152 = vadd.f32 %v12103, %v12151
    %12153 = vmatmul.bf16.gmra.mxu0 %v11895
    %v12154 = vpop.f32.mrf.mxu0
    %v12155 = vadd.f32 %v12106, %v12154
    %v12156 = vpop.f32.mrf.mxu0
    %v12157 = vadd.f32 %v12108, %v12156
    %12158 = vmatmul.bf16.gmra.mxu0 %v11898
    %v12159 = vpop.f32.mrf.mxu0
    %v12160 = vadd.f32 %v12111, %v12159
    %v12161 = vpop.f32.mrf.mxu0
    %v12162 = vadd.f32 %v12113, %v12161
    %12163 = vmatmul.bf16.gmra.mxu0 %v11901
    %v12164 = vpop.f32.mrf.mxu0
    %v12165 = vadd.f32 %v12116, %v12164
    %v12166 = vpop.f32.mrf.mxu0
    %v12167 = vadd.f32 %v12118, %v12166
    %12168 = vdwg.mxu0
    %12169 = vmatpush.bf16.msra.mxu0 0
    %12170 = vmatpush.bf16.msra.mxu0 0
    %12171 = vmatpush.bf16.msra.mxu0 0
    %12172 = vmatpush.bf16.msra.mxu0 0
    %12173 = vmatpush.bf16.msra.mxu0 0
    %12174 = vmatpush.bf16.msra.mxu0 0
    %12175 = vmatpush.bf16.msra.mxu0 %v12028
    %12176 = vmatpush.bf16.msra.mxu0 %v12027
    %12177 = vmatmul.bf16.gmra.mxu0 %v12048
    %v12178 = vpop.f32.mrf.mxu0
    %v12179 = vadd.f32 %v12130, %v12178
    %v12180 = vpop.f32.mrf.mxu0
    %v12181 = vadd.f32 %v12132, %v12180
    %12182 = vmatmul.bf16.gmra.mxu0 %v12051
    %v12183 = vpop.f32.mrf.mxu0
    %v12184 = vadd.f32 %v12135, %v12183
    %v12185 = vpop.f32.mrf.mxu0
    %v12186 = vadd.f32 %v12137, %v12185
    %12187 = vmatmul.bf16.gmra.mxu0 %v12054
    %v12188 = vpop.f32.mrf.mxu0
    %v12189 = vadd.f32 %v12140, %v12188
    %v12190 = vpop.f32.mrf.mxu0
    %v12191 = vadd.f32 %v12142, %v12190
    %12192 = vmatmul.bf16.gmra.mxu0 %v12057
    %v12193 = vpop.f32.mrf.mxu0
    %v12194 = vadd.f32 %v12145, %v12193
    %v12195 = vpop.f32.mrf.mxu0
    %v12196 = vadd.f32 %v12147, %v12195
    %12197 = vmatmul.bf16.gmra.mxu0 %v12060
    %v12198 = vpop.f32.mrf.mxu0
    %v12199 = vadd.f32 %v12150, %v12198
    %v12200 = vpop.f32.mrf.mxu0
    %v12201 = vadd.f32 %v12152, %v12200
    %12202 = vmatmul.bf16.gmra.mxu0 %v12063
    %v12203 = vpop.f32.mrf.mxu0
    %v12204 = vadd.f32 %v12155, %v12203
    %v12205 = vpop.f32.mrf.mxu0
    %v12206 = vadd.f32 %v12157, %v12205
    %12207 = vmatmul.bf16.gmra.mxu0 %v12066
    %v12208 = vpop.f32.mrf.mxu0
    %v12209 = vadd.f32 %v12160, %v12208
    %v12210 = vpop.f32.mrf.mxu0
    %v12211 = vadd.f32 %v12162, %v12210
    %12212 = vmatmul.bf16.gmra.mxu0 %v12069
    %v12213 = vpop.f32.mrf.mxu0
    %v12214 = vadd.f32 %v12165, %v12213
    %v12215 = vpop.f32.mrf.mxu0
    %v12216 = vadd.f32 %v12167, %v12215
    %12217 = vdwg.mxu0
    %v12218 = vsel %vm11797, %v12179, 0.0
    %v12219 = vsel %vm11797, %v12181, 0.0
    %v12220 = vadd.f32 %v12218, %v12219
    %v12221 = vsel %vm11797, %v12184, 0.0
    %v12222 = vadd.f32 %v12220, %v12221
    %v12223 = vsel %vm11797, %v12186, 0.0
    %v12224 = vadd.f32 %v12222, %v12223
    %v12225 = vsel %vm11797, %v12189, 0.0
    %v12226 = vadd.f32 %v12224, %v12225
    %v12227 = vsel %vm11797, %v12191, 0.0
    %v12228 = vadd.f32 %v12226, %v12227
    %v12229 = vsel %vm11797, %v12194, 0.0
    %v12230 = vadd.f32 %v12228, %v12229
    %v12231 = vsel %vm11797, %v12196, 0.0
    %v12232 = vadd.f32 %v12230, %v12231
    %v12233 = vsel %vm11797, %v12199, 0.0
    %v12234 = vadd.f32 %v12232, %v12233
    %v12235 = vsel %vm11797, %v12201, 0.0
    %v12236 = vadd.f32 %v12234, %v12235
    %v12237 = vsel %vm11797, %v12204, 0.0
    %v12238 = vadd.f32 %v12236, %v12237
    %v12239 = vsel %vm11797, %v12206, 0.0
    %v12240 = vadd.f32 %v12238, %v12239
    %v12241 = vsel %vm11797, %v12209, 0.0
    %v12242 = vadd.f32 %v12240, %v12241
    %v12243 = vsel %vm11797, %v12211, 0.0
    %v12244 = vadd.f32 %v12242, %v12243
    %v12245 = vsel %vm11797, %v12214, 0.0
    %v12246 = vadd.f32 %v12244, %v12245
    %v12247 = vsel %vm11797, %v12216, 0.0
    %v12248 = vadd.f32 %v12246, %v12247
    %v12249 = vrot.slane %v12248, 4
    %v12250 = vadd.f32 %v12248, %v12249
    %v12251 = vrot.slane %v12250, 2
    %v12252 = vadd.f32 %v12250, %v12251
    %v12253 = vrot.slane %v12252, 1
    %v12254 = vadd.f32 %v12252, %v12253
    %v12255 = vmul.f32 %v12254, 0.0078125
    %v12256 = vmul.f32 %v12179, %v12179
    %v12257 = vmul.f32 %v12181, %v12181
    %v12258 = vmul.f32 %v12184, %v12184
    %v12259 = vmul.f32 %v12186, %v12186
    %v12260 = vmul.f32 %v12189, %v12189
    %v12261 = vmul.f32 %v12191, %v12191
    %v12262 = vmul.f32 %v12194, %v12194
    %v12263 = vmul.f32 %v12196, %v12196
    %v12264 = vmul.f32 %v12199, %v12199
    %v12265 = vmul.f32 %v12201, %v12201
    %v12266 = vmul.f32 %v12204, %v12204
    %v12267 = vmul.f32 %v12206, %v12206
    %v12268 = vmul.f32 %v12209, %v12209
    %v12269 = vmul.f32 %v12211, %v12211
    %v12270 = vmul.f32 %v12214, %v12214
    %v12271 = vmul.f32 %v12216, %v12216
    %v12272 = vsel %vm11797, %v12256, 0.0
    %v12273 = vsel %vm11797, %v12257, 0.0
    %v12274 = vadd.f32 %v12272, %v12273
    %v12275 = vsel %vm11797, %v12258, 0.0
    %v12276 = vadd.f32 %v12274, %v12275
    %v12277 = vsel %vm11797, %v12259, 0.0
    %v12278 = vadd.f32 %v12276, %v12277
    %v12279 = vsel %vm11797, %v12260, 0.0
    %v12280 = vadd.f32 %v12278, %v12279
    %v12281 = vsel %vm11797, %v12261, 0.0
    %v12282 = vadd.f32 %v12280, %v12281
    %v12283 = vsel %vm11797, %v12262, 0.0
    %v12284 = vadd.f32 %v12282, %v12283
    %v12285 = vsel %vm11797, %v12263, 0.0
    %v12286 = vadd.f32 %v12284, %v12285
    %v12287 = vsel %vm11797, %v12264, 0.0
    %v12288 = vadd.f32 %v12286, %v12287
    %v12289 = vsel %vm11797, %v12265, 0.0
    %v12290 = vadd.f32 %v12288, %v12289
    %v12291 = vsel %vm11797, %v12266, 0.0
    %v12292 = vadd.f32 %v12290, %v12291
    %v12293 = vsel %vm11797, %v12267, 0.0
    %v12294 = vadd.f32 %v12292, %v12293
    %v12295 = vsel %vm11797, %v12268, 0.0
    %v12296 = vadd.f32 %v12294, %v12295
    %v12297 = vsel %vm11797, %v12269, 0.0
    %v12298 = vadd.f32 %v12296, %v12297
    %v12299 = vsel %vm11797, %v12270, 0.0
    %v12300 = vadd.f32 %v12298, %v12299
    %v12301 = vsel %vm11797, %v12271, 0.0
    %v12302 = vadd.f32 %v12300, %v12301
    %v12303 = vrot.slane %v12302, 4
    %v12304 = vadd.f32 %v12302, %v12303
    %v12305 = vrot.slane %v12304, 2
    %v12306 = vadd.f32 %v12304, %v12305
    %v12307 = vrot.slane %v12306, 1
    %v12308 = vadd.f32 %v12306, %v12307
    %v12309 = vmul.f32 %v12308, 0.0078125
    %v12310 = vmul.f32 %v12255, %v12255
    %v12311 = vsub.f32 %v12309, %v12310
    %v12312 = vmax.f32 %v12311, 0.0
    %v12313 = vsub.f32 %v12179, %v12255
    %v12314 = vsub.f32 %v12181, %v12255
    %v12315 = vsub.f32 %v12184, %v12255
    %v12316 = vsub.f32 %v12186, %v12255
    %v12317 = vsub.f32 %v12189, %v12255
    %v12318 = vsub.f32 %v12191, %v12255
    %v12319 = vsub.f32 %v12194, %v12255
    %v12320 = vsub.f32 %v12196, %v12255
    %v12321 = vsub.f32 %v12199, %v12255
    %v12322 = vsub.f32 %v12201, %v12255
    %v12323 = vsub.f32 %v12204, %v12255
    %v12324 = vsub.f32 %v12206, %v12255
    %v12325 = vsub.f32 %v12209, %v12255
    %v12326 = vsub.f32 %v12211, %v12255
    %v12327 = vsub.f32 %v12214, %v12255
    %v12328 = vsub.f32 %v12216, %v12255
    %v12329 = vadd.f32 %v12312, 1e-05
    %v12330 = vrsqrt.pop %v12329
    %v12331 = vmul.f32 %v12330, %v12329
    %v12332 = vmul.f32 %v12331, %v12330
    %v12333 = vmul.f32 0.5, %v12332
    %v12334 = vsub.f32 1.5, %v12333
    %v12335 = vmul.f32 %v12330, %v12334
    %vm12336 = vweird.f32 %v12329
    %vm12337 = vweird.f32 %v12330
    %vm12338 = vmor %vm12336, %vm12337
    %v12339 = vsel %vm12338, %v12330, %v12335
    %v12340 = vmul.f32 %v12313, %v12339
    %v12341 = vmul.f32 %v12314, %v12339
    %v12342 = vmul.f32 %v12315, %v12339
    %v12343 = vmul.f32 %v12316, %v12339
    %v12344 = vmul.f32 %v12317, %v12339
    %v12345 = vmul.f32 %v12318, %v12339
    %v12346 = vmul.f32 %v12319, %v12339
    %v12347 = vmul.f32 %v12320, %v12339
    %v12348 = vmul.f32 %v12321, %v12339
    %v12349 = vmul.f32 %v12322, %v12339
    %v12350 = vmul.f32 %v12323, %v12339
    %v12351 = vmul.f32 %v12324, %v12339
    %v12352 = vmul.f32 %v12325, %v12339
    %v12353 = vmul.f32 %v12326, %v12339
    %v12354 = vmul.f32 %v12327, %v12339
    %v12355 = vmul.f32 %v12328, %v12339
    %v12356 = vld [vmem:[%s5] sm:$0x1]
    %v12358 = vperm.slane %v12356, 0
    %v12360 = vmul.f32 %v12340, %v12358
    %v12361 = vmul.f32 %v12341, %v12358
    %v12362 = vmul.f32 %v12342, %v12358
    %v12363 = vmul.f32 %v12343, %v12358
    %v12364 = vmul.f32 %v12344, %v12358
    %v12365 = vmul.f32 %v12345, %v12358
    %v12366 = vmul.f32 %v12346, %v12358
    %v12367 = vmul.f32 %v12347, %v12358
    %v12368 = vmul.f32 %v12348, %v12358
    %v12369 = vmul.f32 %v12349, %v12358
    %v12370 = vmul.f32 %v12350, %v12358
    %v12371 = vmul.f32 %v12351, %v12358
    %v12372 = vmul.f32 %v12352, %v12358
    %v12373 = vmul.f32 %v12353, %v12358
    %v12374 = vmul.f32 %v12354, %v12358
    %v12375 = vmul.f32 %v12355, %v12358
    %v12376 = vld [vmem:[%s6] sm:$0x1]
    %v12378 = vperm.slane %v12376, 0
    %v12380 = vadd.f32 %v12360, %v12378
    %v12381 = vadd.f32 %v12361, %v12378
    %v12382 = vadd.f32 %v12362, %v12378
    %v12383 = vadd.f32 %v12363, %v12378
    %v12384 = vadd.f32 %v12364, %v12378
    %v12385 = vadd.f32 %v12365, %v12378
    %v12386 = vadd.f32 %v12366, %v12378
    %v12387 = vadd.f32 %v12367, %v12378
    %v12388 = vadd.f32 %v12368, %v12378
    %v12389 = vadd.f32 %v12369, %v12378
    %v12390 = vadd.f32 %v12370, %v12378
    %v12391 = vadd.f32 %v12371, %v12378
    %v12392 = vadd.f32 %v12372, %v12378
    %v12393 = vadd.f32 %v12373, %v12378
    %v12394 = vadd.f32 %v12374, %v12378
    %v12395 = vadd.f32 %v12375, %v12378
    %v12396 = vmax.f32 %v12380, 0.0
    %v12397 = vmax.f32 %v12381, 0.0
    %v12398 = vmax.f32 %v12382, 0.0
    %v12399 = vmax.f32 %v12383, 0.0
    %v12400 = vmax.f32 %v12384, 0.0
    %v12401 = vmax.f32 %v12385, 0.0
    %v12402 = vmax.f32 %v12386, 0.0
    %v12403 = vmax.f32 %v12387, 0.0
    %v12404 = vmax.f32 %v12388, 0.0
    %v12405 = vmax.f32 %v12389, 0.0
    %v12406 = vmax.f32 %v12390, 0.0
    %v12407 = vmax.f32 %v12391, 0.0
    %v12408 = vmax.f32 %v12392, 0.0
    %v12409 = vmax.f32 %v12393, 0.0
    %v12410 = vmax.f32 %v12394, 0.0
    %v12411 = vmax.f32 %v12395, 0.0
    %v12412 = vsel %vm11797, %v12396, -inf
    %v12413 = vsel %vm11797, %v12397, -inf
    %v12414 = vsel %vm11797, %v12398, -inf
    %v12415 = vmax.f32 %v12412, %v12414
    %v12416 = vsel %vm11797, %v12399, -inf
    %v12417 = vmax.f32 %v12413, %v12416
    %v12418 = vsel %vm11797, %v12400, -inf
    %v12419 = vmax.f32 %v12415, %v12418
    %v12420 = vsel %vm11797, %v12401, -inf
    %v12421 = vmax.f32 %v12417, %v12420
    %v12422 = vsel %vm11797, %v12402, -inf
    %v12423 = vmax.f32 %v12419, %v12422
    %v12424 = vsel %vm11797, %v12403, -inf
    %v12425 = vmax.f32 %v12421, %v12424
    %v12426 = vmax.f32 %v12423, %v12425
    %v12427 = vrot.slane %v12426, 4
    %v12428 = vmax.f32 %v12426, %v12427
    %v12429 = vrot.slane %v12428, 2
    %v12430 = vmax.f32 %v12428, %v12429
    %v12431 = vrot.slane %v12430, 1
    %v12432 = vmax.f32 %v12430, %v12431
    %v12433 = vsel %vm11797, %v12404, -inf
    %v12434 = vsel %vm11797, %v12405, -inf
    %v12435 = vsel %vm11797, %v12406, -inf
    %v12436 = vmax.f32 %v12433, %v12435
    %v12437 = vsel %vm11797, %v12407, -inf
    %v12438 = vmax.f32 %v12434, %v12437
    %v12439 = vsel %vm11797, %v12408, -inf
    %v12440 = vmax.f32 %v12436, %v12439
    %v12441 = vsel %vm11797, %v12409, -inf
    %v12442 = vmax.f32 %v12438, %v12441
    %v12443 = vsel %vm11797, %v12410, -inf
    %v12444 = vmax.f32 %v12440, %v12443
    %v12445 = vsel %vm11797, %v12411, -inf
    %v12446 = vmax.f32 %v12442, %v12445
    %v12447 = vmax.f32 %v12444, %v12446
    %v12448 = vrot.slane %v12447, 4
    %v12449 = vmax.f32 %v12447, %v12448
    %v12450 = vrot.slane %v12449, 2
    %v12451 = vmax.f32 %v12449, %v12450
    %v12452 = vrot.slane %v12451, 1
    %v12453 = vmax.f32 %v12451, %v12452
    %v12454 = vld [vmem:[%s7] sm:$0xff]
    %v12455 = vld [vmem:[%s7 + $0x8] sm:$0xff]
    %v12456 = vld [vmem:[%s7 + $0x10] sm:$0xff]
    %v12457 = vld [vmem:[%s7 + $0x18] sm:$0xff]
    %v12458 = vld [vmem:[%s7 + $0x20] sm:$0xff]
    %v12459 = vld [vmem:[%s7 + $0x28] sm:$0xff]
    %v12460 = vld [vmem:[%s7 + $0x30] sm:$0xff]
    %v12461 = vld [vmem:[%s7 + $0x38] sm:$0xff]
    %v12462 = vld [vmem:[%s8] sm:$0x1]
    %v12464 = vperm.slane %v12462, 0
    %vm12468 = vcmask 1041409
    %v12469 = vsel %vm12468, %v12453, %v12432
    %v12470 = vsel %vm11797, %v12469, 0
    %12472 = vmatpush.msra.mxu0 0.0
    %12473 = vmatpush.msra.mxu0 0.0
    %12474 = vmatpush.msra.mxu0 0.0
    %12475 = vmatpush.msra.mxu0 0.0
    %12476 = vmatpush.msra.mxu0 0.0
    %12477 = vmatpush.msra.mxu0 0.0
    %12478 = vmatpush.msra.mxu0 0.0
    %12479 = vmatpush.msra.mxu0 0.0
    %12480 = vmatpush.msra.mxu0 %v12461
    %12481 = vmatpush.msra.mxu0 %v12460
    %12482 = vmatpush.msra.mxu0 %v12459
    %12483 = vmatpush.msra.mxu0 %v12458
    %12484 = vmatpush.msra.mxu0 %v12457
    %12485 = vmatpush.msra.mxu0 %v12456
    %12486 = vmatpush.msra.mxu0 %v12455
    %12487 = vmatpush.msra.mxu0 %v12454
    %12488 = vmatmul.f32.gmra.mxu0 %v12470
    %v12489 = vpop.f32.mrf.mxu0
    %v12490 = vadd.f32 %v12464, %v12489
    %12491 = vdwg.mxu0
    %v12492 = vsub.f32 0.0, %v12490
    %v12493 = vmul.f32 %v12492, 1.442695
    %v12494 = vpow.pop %v12493
    %v12495 = vadd.f32 %v12494, 1.0
    %v12496 = vrcp.pop %v12495
    %v12497 = vmul.f32 %v12495, %v12496
    %v12498 = vsub.f32 1.0, %v12497
    %v12499 = vmul.f32 %v12496, %v12498
    %v12500 = vadd.f32 %v12496, %v12499
    %vm12501 = vweird.f32 %v12495
    %vm12502 = vweird.f32 %v12496
    %vm12503 = vmor %vm12501, %vm12502
    %v12504 = vsel %vm12503, %v12496, %v12500
    %v12505 = vand.u32 2147483647, %v12495
    %vm12506 = vcmp.eq.f32.partialorder %v12505, 8.507059e+37
    %v12507 = vand.u32 %v12495, 2147483648
    %v12508 = vor.u32 1.1754944e-38, %v12507
    %v12509 = vsel %vm12506, %v12508, %v12504
    %v12510 = vmul.f32 1.0, %v12509
    %vm12511 = vcmask 33792
    %12512 = vst.msk [vmem:[#allocation4] sm:$0x3] %vm12511, %v12510
    // Predicated region
    $region38: #{cnn_model_2_forward.1} parent=1 // pred_check
      _
    $region39: #{cnn_model_2_forward.1} parent=1 // pred_check_branch
      %12514 = sbr.rel (0) target = $region41
    $region40: #{cnn_model_2_forward.1} parent=1 // pred_region
      %12516 = vsyncadd [#allocation5], 0
      %s12518 = sshll.u32 [#allocation4], 4
      %s12519 = int_to_ptr.vmem [resolvable:$true] %s12518
      %s12520 = sshll.u32 %s9, 4
      %s12521 = int_to_ptr.hbm [resolvable:$true] %s12520
      %12523 = dma.vmem_to_hbm [thread:$0]  %s12519, 32, %s12521, [#allocation5]
    $region41: #{cnn_model_2_forward.1} parent=1 // pred_fallthru
      _
    // Predicated region
    $region42: #{cnn_model_2_forward.1} parent=1 // pred_check
      _
    $region43: #{cnn_model_2_forward.1} parent=1 // pred_check_branch
      %12525 = sbr.rel (0) target = $region45
    $region44: #{cnn_model_2_forward.1} parent=1 // pred_region
      %12527 = dma.done [#allocation5], 32
    $region45: #{cnn_model_2_forward.1} parent=1 // pred_fallthru
      _
    %12528 = vsyncpa [#allocation5], 1

</llo_original>
